<compile_context>
chip_gen: v7x
topology: tpu7x:2x2x1
jax: 0.10.0
libtpu: 0.0.40
codegen_flags: <defaults>
</compile_context>

<pallas_src>
import functools

import jax
import jax.numpy as jnp
from jax.experimental import pallas as pl
from jax.experimental.pallas import tpu as pltpu


# ---------------------------------------------------------------------------
# Fused kernel: one grid step == the whole (batch-block of the) batch.
# ---------------------------------------------------------------------------
def _netimp_kernel(
    # per-block data (VMEM)
    bike_node_ref, bike_adj_ref, taxi_node_ref, taxi_adj_ref,
    # tiny scalar parameters (SMEM)
    gcn_w_ref, gcn_b_ref, rn_w_ref, rn_b_ref,
    # LSTM / attention parameters (VMEM)
    wx0_ref, wh0_ref, b0_ref, wf1_ref, b1_ref,
    attn_v_ref, attn_ow_ref, attn_ob_ref,
    # block-diagonal head parameters (VMEM)
    ffn_w_ref, ffn_b_ref, fc_w_ref, fc_b_ref,
    # packed lane-dense output block (BB, 3*OUT_W)
    out_ref,
    *, BB, T, N, Fin, Fo, H, OUT_W):
  f32 = jnp.float32
  D = N * Fo            # LstmAttention input size per stream
  NS = 3                # rnn1 (bike), rnn2 (taxi), rnn3 (reasoning)
  SH = NS * H
  BT = BB * T

  # ---------------- Generator: GCN per stream -------------------------------
  # TODO(synk): Generator internals are not in the spec; a per-stream graph
  # conv relu(adj @ node @ W + b) is used as the skeleton.
  def gcn(node_ref, adj_ref, s):
    adj = adj_ref[...].reshape(BT, N, N)                        # (BT, N, N)
    node = node_ref[...].reshape(BT, N, Fin)                    # (BT, N, Fin)
    # adj @ node[..., f] as VPU multiply + lane reduce (contraction is N=16).
    aggs = [jnp.sum(adj * node[:, :, f][:, None, :], axis=-1)   # (BT, N)
            for f in range(Fin)]
    outs = []
    for o in range(Fo):
      acc = aggs[0] * gcn_w_ref[s, 0 * Fo + o]
      for f in range(1, Fin):
        acc = acc + aggs[f] * gcn_w_ref[s, f * Fo + o]
      outs.append(jnp.maximum(acc + gcn_b_ref[s, o], 0.0))
    return outs                                                 # Fo x (BT, N)

  g_bike = gcn(bike_node_ref, bike_adj_ref, 0)
  g_taxi = gcn(taxi_node_ref, taxi_adj_ref, 1)

  # ---------------- ReasoningNet: cross-stream gating -----------------------
  # TODO(synk): ReasoningNet internals are not in the spec; a softmax gate over
  # the two modalities is used: rn = w1*gcn1 + w2*gcn2, returning w1/w2.
  feats = g_bike + g_taxi                                       # 2*Fo planes
  l0 = rn_b_ref[0, 0]
  l1 = rn_b_ref[0, 1]
  for c, fp in enumerate(feats):
    l0 = l0 + fp * rn_w_ref[c, 0]
    l1 = l1 + fp * rn_w_ref[c, 1]
  m = jnp.maximum(l0, l1)
  e0 = jnp.exp(l0 - m)
  e1 = jnp.exp(l1 - m)
  inv = pl.reciprocal(e0 + e1, approx=True)
  w1 = e0 * inv                                                 # (BT, N)
  w2 = e1 * inv                                                 # (BT, N)
  g_rn = [w1 * g_bike[o] + w2 * g_taxi[o] for o in range(Fo)]

  # ---------------- 3x LstmAttention as one block-diagonal recurrence -------
  # TODO(synk): LstmAttention internals are not in the spec; skeleton =
  # 2-layer LSTM over time + dot-product attention pooling + Linear(H, N).
  # In-register concat of the six (BT, N) planes -> (BT, 3D) LSTM input slab.
  x2d = jnp.concatenate(g_bike + g_taxi + g_rn, axis=-1)        # (BT, 3D)

  # layer-0 input projection for all timesteps and batch rows in ONE matmul.
  xp0 = (jnp.dot(x2d, wx0_ref[...], preferred_element_type=f32)
         + b0_ref[...])                                         # (BT, 4*SH)

  def gate_split(z):
    # gate packing is (i | f | o | g): one contiguous sigmoid + one tanh slice
    sg = jax.nn.sigmoid(z[:, :3 * SH])
    gg = jnp.tanh(z[:, 3 * SH:])
    return sg[:, :SH], sg[:, SH:2 * SH], gg, sg[:, 2 * SH:3 * SH]

  b1 = b1_ref[...]                                              # tiny, hoisted
  h1 = jnp.zeros((BB, SH), f32)
  c1 = jnp.zeros((BB, SH), f32)
  h2 = jnp.zeros((BB, SH), f32)
  c2 = jnp.zeros((BB, SH), f32)
  h_list = []
  for t in range(T):                                            # static unroll
    # gather the batch rows for this timestep (rows b*T + t)
    xt = jnp.concatenate(
        [xp0[b * T + t:b * T + t + 1, :] for b in range(BB)], axis=0)
    # big weights read from VMEM refs at each call site (no hoisting/spills)
    z1 = xt + jnp.dot(h1, wh0_ref[...], preferred_element_type=f32)
    i1, f1, g1, o1 = gate_split(z1)
    c1 = f1 * c1 + i1 * g1
    h1 = o1 * jnp.tanh(c1)
    # fused layer-2: z2 = [h1 | h2] @ Wf + b1   (one matmul instead of two)
    z2 = (jnp.dot(jnp.concatenate([h1, h2], axis=-1), wf1_ref[...],
                  preferred_element_type=f32) + b1)
    i2, f2, g2, o2 = gate_split(z2)
    c2 = f2 * c2 + i2 * g2
    h2 = o2 * jnp.tanh(c2)
    h_list.append(h2)

  # hidden-state sequence kept in registers (no VMEM scratch round trip)
  hs = jnp.concatenate([h[:, None, :] for h in h_list], axis=1)  # (BB, T, SH)

  # attention over time (per stream) + fused block-diag output projection
  prod = hs * attn_v_ref[...][None, :, :]                        # (BB, T, SH)
  ctxs = []
  for s in range(NS):
    sl = slice(s * H, (s + 1) * H)
    sc = jnp.sum(prod[:, :, sl], axis=-1, keepdims=True)         # (BB, T, 1)
    mx = jnp.max(sc, axis=1, keepdims=True)
    e = jnp.exp(sc - mx)
    alpha = e * pl.reciprocal(jnp.sum(e, axis=1, keepdims=True), approx=True)
    ctxs.append(jnp.sum(alpha * hs[:, :, sl], axis=1))           # (BB, H)
  ctx_all = jnp.concatenate(ctxs, axis=-1)                       # (BB, SH)
  proj = (jnp.dot(ctx_all, attn_ow_ref[...], preferred_element_type=f32)
          + attn_ob_ref[...])                                    # (BB, 3N)
  lstm1 = proj[:, 0:N]
  lstm2 = proj[:, N:2 * N]
  lstm3 = proj[:, 2 * N:3 * N]

  # ---------------- ffn1/ffn2 + fc1..fc4 heads (block-diagonal) -------------
  b13 = lstm1 + lstm3
  b23 = lstm2 + lstm3
  shared = jnp.concatenate([b13, b13, b23, b23], axis=-1)        # (BB, 4N)
  # ffn weights are pre-deinterleaved + block-diag, so this IS
  # [bike_output[:,:,0] | bike_output[:,:,1] | taxi_output[:,:,0] | [:, :,1]]
  col = jnp.maximum(
      jnp.dot(shared, ffn_w_ref[...], preferred_element_type=f32)
      + ffn_b_ref[...], 0.0)                                     # (BB, 4N)
  a4 = jnp.concatenate([lstm1, lstm1, lstm2, lstm2], axis=-1)    # (BB, 4N)
  heads = jnp.maximum(
      jnp.dot(a4 + col, fc_w_ref[...], preferred_element_type=f32)
      + fc_b_ref[...], 0.0)                                      # (BB, 4N)

  # ---------------- lane-dense packed output, ONE full-tile store -----------
  # row layout (3*OUT_W lanes):
  #   [0:OUT_W]           = weight1[b] flattened (t*N + n)
  #   [OUT_W:2*OUT_W]     = weight2[b] flattened
  #   [2*OUT_W:2*OUT_W+4N]= bike_start | bike_end | taxi_start | taxi_end
  def time_rows(x):  # (BB*T, N) -> (BB, T*N), row b = concat_t x[b*T + t, :]
    rows = []
    for b in range(BB):
      rows.append(jnp.concatenate(
          [x[b * T + t:b * T + t + 1, :] for t in range(T)], axis=-1))
    return jnp.concatenate(rows, axis=0)

  w1_row = time_rows(w1)                                         # (BB, OUT_W)
  w2_row = time_rows(w2)                                         # (BB, OUT_W)
  pad = OUT_W - 4 * N
  head_row = heads if pad == 0 else jnp.concatenate(
      [heads, jnp.zeros((BB, pad), f32)], axis=-1)               # (BB, OUT_W)
  out_ref[...] = jnp.concatenate([w1_row, w2_row, head_row], axis=-1)


# ---------------------------------------------------------------------------
# Wrapper: one fused pallas_call, outputs split from the packed slab.
# ---------------------------------------------------------------------------
@jax.jit
def netimp_forward(params, bike_node, bike_adj, taxi_node, taxi_adj):
  B, T, N, Fin = bike_node.shape
  Fo = params["gcn_b"].shape[1]
  H = params["attn_v"].shape[1] // 3
  OUT_W = T * N
  assert OUT_W >= 4 * N, "packed row must hold the four heads"

  # Whole batch vectorized in one grid step (best for single-TC v5e/v6e and
  # fine on v7x at these tiny shapes).  For large B on v7x, set BB = B // 2 so
  # the two TensorCores each take one "parallel" grid step.
  BB = B
  grid = (B // BB,)

  kernel = functools.partial(_netimp_kernel, BB=BB, T=T, N=N, Fin=Fin,
                             Fo=Fo, H=H, OUT_W=OUT_W)

  def vmem_full(arr):
    nd = arr.ndim
    return pl.BlockSpec(arr.shape, lambda i, _nd=nd: (0,) * _nd)

  node_spec = pl.BlockSpec((BB, T, N, Fin), lambda i: (i, 0, 0, 0))
  adj_spec = pl.BlockSpec((BB, T, N, N), lambda i: (i, 0, 0, 0))
  smem_spec = pl.BlockSpec(memory_space=pltpu.MemorySpace.SMEM)

  in_specs = [
      node_spec, adj_spec, node_spec, adj_spec,
      smem_spec, smem_spec, smem_spec, smem_spec,
      vmem_full(params["wx0"]), vmem_full(params["wh0"]),
      vmem_full(params["b0"]), vmem_full(params["wf1"]), vmem_full(params["b1"]),
      vmem_full(params["attn_v"]), vmem_full(params["attn_ow"]),
      vmem_full(params["attn_ob"]),
      vmem_full(params["ffn_w"]), vmem_full(params["ffn_b"]),
      vmem_full(params["fc_w"]), vmem_full(params["fc_b"]),
  ]
  out_spec = pl.BlockSpec((BB, 3 * OUT_W), lambda i: (i, 0))

  packed = pl.pallas_call(
      kernel,
      out_shape=jax.ShapeDtypeStruct((B, 3 * OUT_W), jnp.float32),
      grid=grid,
      in_specs=in_specs,
      out_specs=out_spec,
      compiler_params=pltpu.CompilerParams(
          dimension_semantics=("parallel",)),
  )(bike_node, bike_adj, taxi_node, taxi_adj,
    params["gcn_w"], params["gcn_b"], params["rn_w"], params["rn_b"],
    params["wx0"], params["wh0"], params["b0"], params["wf1"], params["b1"],
    params["attn_v"], params["attn_ow"], params["attn_ob"],
    params["ffn_w"], params["ffn_b"], params["fc_w"], params["fc_b"])

  weight1 = packed[:, 0:OUT_W].reshape(B, T, N)
  weight2 = packed[:, OUT_W:2 * OUT_W].reshape(B, T, N)
  heads = packed[:, 2 * OUT_W:2 * OUT_W + 4 * N]
  bike_start = heads[:, 0:N]
  bike_end = heads[:, N:2 * N]
  taxi_start = heads[:, 2 * N:3 * N]
  taxi_end = heads[:, 3 * N:4 * N]
  return bike_start, bike_end, taxi_start, taxi_end, weight1, weight2


# ---------------------------------------------------------------------------
# Synthetic parameter construction (deterministic, PRNGKey-driven).
# ---------------------------------------------------------------------------
def init_params(key, *, node_num, in_features, out_features, lstm_features):
  N, Fin, Fo, H = node_num, in_features, out_features, lstm_features
  D = N * Fo
  NS = 3
  SH = NS * H
  scale = 0.1
  keys = iter(jax.random.split(key, 64))

  def normal(shape):
    return scale * jax.random.normal(next(keys), shape, jnp.float32)

  # Generator (tiny, lives in SMEM; scalar-indexed inside the kernel)
  gcn_w = normal((2, Fin * Fo))          # [stream, fin*Fo + fout]
  gcn_b = normal((2, Fo))

  # ReasoningNet gate: 2*Fo channels -> 2 logits
  rn_w = normal((2 * Fo, 2))
  rn_b = normal((1, 2))

  # Three independent 2-layer LstmAttention modules packed into
  # block-diagonal, gate-grouped (i|f|o|g) matrices; layer 2 is pre-fused as
  # Wf = [[wx1], [wh1]] so each step needs one layer-2 matmul.
  wx0 = jnp.zeros((NS * D, 4 * SH), jnp.float32)
  wh0 = jnp.zeros((SH, 4 * SH), jnp.float32)
  b0 = jnp.zeros((1, 4 * SH), jnp.float32)
  wf1 = jnp.zeros((2 * SH, 4 * SH), jnp.float32)
  b1 = jnp.zeros((1, 4 * SH), jnp.float32)
  for s in range(NS):
    wx_s = normal((D, 4 * H))
    wh_s = normal((H, 4 * H))
    b0_s = normal((4 * H,))
    wx1_s = normal((H, 4 * H))
    wh1_s = normal((H, 4 * H))
    b1_s = normal((4 * H,))
    for g in range(4):                   # gate order i, f, o, g
      c0 = g * SH + s * H
      wx0 = wx0.at[s * D:(s + 1) * D, c0:c0 + H].set(wx_s[:, g * H:(g + 1) * H])
      wh0 = wh0.at[s * H:(s + 1) * H, c0:c0 + H].set(wh_s[:, g * H:(g + 1) * H])
      b0 = b0.at[0, c0:c0 + H].set(b0_s[g * H:(g + 1) * H])
      wf1 = wf1.at[s * H:(s + 1) * H, c0:c0 + H].set(wx1_s[:, g * H:(g + 1) * H])
      wf1 = wf1.at[SH + s * H:SH + (s + 1) * H, c0:c0 + H].set(
          wh1_s[:, g * H:(g + 1) * H])
      b1 = b1.at[0, c0:c0 + H].set(b1_s[g * H:(g + 1) * H])

  attn_v = normal((1, SH))
  # block-diagonal attention output projection: (3H, 3N)
  attn_ow = jnp.zeros((SH, NS * N), jnp.float32)
  attn_ob = jnp.zeros((1, NS * N), jnp.float32)
  for s in range(NS):
    attn_ow = attn_ow.at[s * H:(s + 1) * H, s * N:(s + 1) * N].set(normal((H, N)))
    attn_ob = attn_ob.at[0, s * N:(s + 1) * N].set(normal((N,)))

  # ffn1/ffn2 (Linear(N, 2N)+ReLU) column-deinterleaved and block-diagonalized
  # in head order [bike col0, bike col1, taxi col0, taxi col1].
  ffn_w = jnp.zeros((4 * N, 4 * N), jnp.float32)
  ffn_b = jnp.zeros((1, 4 * N), jnp.float32)
  for stream in range(2):
    w_full = normal((N, 2 * N))
    b_full = normal((2 * N,))
    for k in range(2):
      h = stream * 2 + k
      ffn_w = ffn_w.at[h * N:(h + 1) * N, h * N:(h + 1) * N].set(w_full[:, k::2])
      ffn_b = ffn_b.at[0, h * N:(h + 1) * N].set(b_full[k::2])

  # fc1..fc4 block-diagonal
  fc_w = jnp.zeros((4 * N, 4 * N), jnp.float32)
  fc_b = jnp.zeros((1, 4 * N), jnp.float32)
  for h in range(4):
    fc_w = fc_w.at[h * N:(h + 1) * N, h * N:(h + 1) * N].set(normal((N, N)))
    fc_b = fc_b.at[0, h * N:(h + 1) * N].set(normal((N,)))

  return dict(gcn_w=gcn_w, gcn_b=gcn_b, rn_w=rn_w, rn_b=rn_b,
              wx0=wx0, wh0=wh0, b0=b0, wf1=wf1, b1=b1,
              attn_v=attn_v, attn_ow=attn_ow, attn_ob=attn_ob,
              ffn_w=ffn_w, ffn_b=ffn_b, fc_w=fc_w, fc_b=fc_b)


if __name__ == "__main__":
  batch_size = 2
  window_size = 8
  node_num = 16
  in_features = 2
  out_features = 2
  lstm_features = 32

  key = jax.random.PRNGKey(0)
  kp, k1, k2, k3, k4 = jax.random.split(key, 5)

  params = init_params(kp, node_num=node_num, in_features=in_features,
                       out_features=out_features, lstm_features=lstm_features)

  bike_node = jax.random.normal(
      k1, (batch_size, window_size, node_num, in_features), jnp.float32)
  bike_adj = jax.random.uniform(
      k2, (batch_size, window_size, node_num, node_num), jnp.float32)
  taxi_node = jax.random.normal(
      k3, (batch_size, window_size, node_num, in_features), jnp.float32)
  taxi_adj = jax.random.uniform(
      k4, (batch_size, window_size, node_num, node_num), jnp.float32)

  outs = netimp_forward(params, bike_node, bike_adj, taxi_node, taxi_adj)
  outs = jax.block_until_ready(outs)

  bike_start, bike_end, taxi_start, taxi_end, weight1, weight2 = outs
  assert bike_start.shape == (batch_size, node_num), bike_start.shape
  assert bike_end.shape == (batch_size, node_num), bike_end.shape
  assert taxi_start.shape == (batch_size, node_num), taxi_start.shape
  assert taxi_end.shape == (batch_size, node_num), taxi_end.shape
  assert weight1.shape == (batch_size, window_size, node_num), weight1.shape
  assert weight2.shape == (batch_size, window_size, node_num), weight2.shape
  assert all(bool(jnp.all(jnp.isfinite(o))) for o in outs)
  print("KERNEL_OK")
</pallas_src>

<mosaic_0001>
module attributes {stable_mosaic.version = 11 : i64} {
  func.func @_netimp_kernel(%arg0: i32, %arg1: memref<2x8x16x2xf32, #tpu.memory_space<vmem>>, %arg2: memref<2x8x16x16xf32, #tpu.memory_space<vmem>>, %arg3: memref<2x8x16x2xf32, #tpu.memory_space<vmem>>, %arg4: memref<2x8x16x16xf32, #tpu.memory_space<vmem>>, %arg5: memref<2x4xf32, #tpu.memory_space<smem>>, %arg6: memref<2x2xf32, #tpu.memory_space<smem>>, %arg7: memref<4x2xf32, #tpu.memory_space<smem>>, %arg8: memref<1x2xf32, #tpu.memory_space<smem>>, %arg9: memref<96x384xf32, #tpu.memory_space<vmem>>, %arg10: memref<96x384xf32, #tpu.memory_space<vmem>>, %arg11: memref<1x384xf32, #tpu.memory_space<vmem>>, %arg12: memref<192x384xf32, #tpu.memory_space<vmem>>, %arg13: memref<1x384xf32, #tpu.memory_space<vmem>>, %arg14: memref<1x96xf32, #tpu.memory_space<vmem>>, %arg15: memref<96x48xf32, #tpu.memory_space<vmem>>, %arg16: memref<1x48xf32, #tpu.memory_space<vmem>>, %arg17: memref<64x64xf32, #tpu.memory_space<vmem>>, %arg18: memref<1x64xf32, #tpu.memory_space<vmem>>, %arg19: memref<64x64xf32, #tpu.memory_space<vmem>>, %arg20: memref<1x64xf32, #tpu.memory_space<vmem>>, %arg21: memref<2x384xf32, #tpu.memory_space<vmem>>) attributes {dimension_semantics = [#tpu.dimension_semantics<parallel>], iteration_bounds = array<i64: 1>, scalar_prefetch = 0 : i64, scratch_operands = 0 : i64, tpu.core_type = #tpu.core_type<tc>, window_params = [{transform_indices = @transform_0, window_bounds = array<i64: 2, 8, 16, 2>}, {transform_indices = @transform_1, window_bounds = array<i64: 2, 8, 16, 16>}, {transform_indices = @transform_2, window_bounds = array<i64: 2, 8, 16, 2>}, {transform_indices = @transform_3, window_bounds = array<i64: 2, 8, 16, 16>}, {transform_indices = @transform_4, window_bounds = array<i64: 2, 4>}, {transform_indices = @transform_5, window_bounds = array<i64: 2, 2>}, {transform_indices = @transform_6, window_bounds = array<i64: 4, 2>}, {transform_indices = @transform_7, window_bounds = array<i64: 1, 2>}, {pipeline_mode = #tpu.pipeline_mode<synchronous>, transform_indices = @transform_8, window_bounds = array<i64: 96, 384>}, {pipeline_mode = #tpu.pipeline_mode<synchronous>, transform_indices = @transform_9, window_bounds = array<i64: 96, 384>}, {pipeline_mode = #tpu.pipeline_mode<synchronous>, transform_indices = @transform_10, window_bounds = array<i64: 1, 384>}, {pipeline_mode = #tpu.pipeline_mode<synchronous>, transform_indices = @transform_11, window_bounds = array<i64: 192, 384>}, {pipeline_mode = #tpu.pipeline_mode<synchronous>, transform_indices = @transform_12, window_bounds = array<i64: 1, 384>}, {pipeline_mode = #tpu.pipeline_mode<synchronous>, transform_indices = @transform_13, window_bounds = array<i64: 1, 96>}, {pipeline_mode = #tpu.pipeline_mode<synchronous>, transform_indices = @transform_14, window_bounds = array<i64: 96, 48>}, {pipeline_mode = #tpu.pipeline_mode<synchronous>, transform_indices = @transform_15, window_bounds = array<i64: 1, 48>}, {pipeline_mode = #tpu.pipeline_mode<synchronous>, transform_indices = @transform_16, window_bounds = array<i64: 64, 64>}, {pipeline_mode = #tpu.pipeline_mode<synchronous>, transform_indices = @transform_17, window_bounds = array<i64: 1, 64>}, {pipeline_mode = #tpu.pipeline_mode<synchronous>, transform_indices = @transform_18, window_bounds = array<i64: 64, 64>}, {pipeline_mode = #tpu.pipeline_mode<synchronous>, transform_indices = @transform_19, window_bounds = array<i64: 1, 64>}, {transform_indices = @transform_20, window_bounds = array<i64: 2, 384>}]} {
    %c0 = arith.constant 0 : index
    %c0_0 = arith.constant 0 : index
    %c0_1 = arith.constant 0 : index
    %c0_2 = arith.constant 0 : index
    %0 = vector.load %arg2[%c0, %c0_0, %c0_1, %c0_2] : memref<2x8x16x16xf32, #tpu.memory_space<vmem>>, vector<2x8x16x16xf32>
    %1 = vector.shape_cast %0 : vector<2x8x16x16xf32> to vector<16x16x16xf32>
    %c0_3 = arith.constant 0 : index
    %c0_4 = arith.constant 0 : index
    %c0_5 = arith.constant 0 : index
    %c0_6 = arith.constant 0 : index
    %2 = vector.load %arg1[%c0_3, %c0_4, %c0_5, %c0_6] : memref<2x8x16x2xf32, #tpu.memory_space<vmem>>, vector<2x8x16x2xf32>
    %3 = vector.shape_cast %2 : vector<2x8x16x2xf32> to vector<16x16x2xf32>
    %4 = vector.extract_strided_slice %3 {offsets = [0, 0, 0], sizes = [16, 16, 1], strides = [1, 1, 1]} : vector<16x16x2xf32> to vector<16x16x1xf32>
    %5 = vector.shape_cast %4 : vector<16x16x1xf32> to vector<16x16xf32>
    %6 = vector.shape_cast %5 : vector<16x16xf32> to vector<16x1x16xf32>
    %7 = vector.broadcast %6 : vector<16x1x16xf32> to vector<16x16x16xf32>
    %8 = arith.mulf %1, %7 : vector<16x16x16xf32>
    %cst = arith.constant dense<0.000000e+00> : vector<16x16xf32>
    %9 = vector.multi_reduction <add>, %8, %cst [2] : vector<16x16x16xf32> to vector<16x16xf32>
    %10 = vector.extract_strided_slice %3 {offsets = [0, 0, 1], sizes = [16, 16, 1], strides = [1, 1, 1]} : vector<16x16x2xf32> to vector<16x16x1xf32>
    %11 = vector.shape_cast %10 : vector<16x16x1xf32> to vector<16x16xf32>
    %12 = vector.shape_cast %11 : vector<16x16xf32> to vector<16x1x16xf32>
    %13 = vector.broadcast %12 : vector<16x1x16xf32> to vector<16x16x16xf32>
    %14 = arith.mulf %1, %13 : vector<16x16x16xf32>
    %cst_7 = arith.constant dense<0.000000e+00> : vector<16x16xf32>
    %15 = vector.multi_reduction <add>, %14, %cst_7 [2] : vector<16x16x16xf32> to vector<16x16xf32>
    %c0_8 = arith.constant 0 : index
    %c0_9 = arith.constant 0 : index
    %16 = memref.load %arg5[%c0_8, %c0_9] : memref<2x4xf32, #tpu.memory_space<smem>>
    %17 = vector.broadcast %16 : f32 to vector<16x16xf32>
    %18 = arith.mulf %9, %17 : vector<16x16xf32>
    %c0_10 = arith.constant 0 : index
    %c2 = arith.constant 2 : index
    %19 = memref.load %arg5[%c0_10, %c2] : memref<2x4xf32, #tpu.memory_space<smem>>
    %20 = vector.broadcast %19 : f32 to vector<16x16xf32>
    %21 = arith.mulf %15, %20 : vector<16x16xf32>
    %22 = arith.addf %18, %21 : vector<16x16xf32>
    %c0_11 = arith.constant 0 : index
    %c0_12 = arith.constant 0 : index
    %23 = memref.load %arg6[%c0_11, %c0_12] : memref<2x2xf32, #tpu.memory_space<smem>>
    %24 = vector.broadcast %23 : f32 to vector<16x16xf32>
    %25 = arith.addf %22, %24 : vector<16x16xf32>
    %cst_13 = arith.constant 0.000000e+00 : f32
    %26 = vector.broadcast %cst_13 : f32 to vector<16x16xf32>
    %27 = arith.maximumf %25, %26 : vector<16x16xf32>
    %c0_14 = arith.constant 0 : index
    %c1 = arith.constant 1 : index
    %28 = memref.load %arg5[%c0_14, %c1] : memref<2x4xf32, #tpu.memory_space<smem>>
    %29 = vector.broadcast %28 : f32 to vector<16x16xf32>
    %30 = arith.mulf %9, %29 : vector<16x16xf32>
    %c0_15 = arith.constant 0 : index
    %c3 = arith.constant 3 : index
    %31 = memref.load %arg5[%c0_15, %c3] : memref<2x4xf32, #tpu.memory_space<smem>>
    %32 = vector.broadcast %31 : f32 to vector<16x16xf32>
    %33 = arith.mulf %15, %32 : vector<16x16xf32>
    %34 = arith.addf %30, %33 : vector<16x16xf32>
    %c0_16 = arith.constant 0 : index
    %c1_17 = arith.constant 1 : index
    %35 = memref.load %arg6[%c0_16, %c1_17] : memref<2x2xf32, #tpu.memory_space<smem>>
    %36 = vector.broadcast %35 : f32 to vector<16x16xf32>
    %37 = arith.addf %34, %36 : vector<16x16xf32>
    %cst_18 = arith.constant 0.000000e+00 : f32
    %38 = vector.broadcast %cst_18 : f32 to vector<16x16xf32>
    %39 = arith.maximumf %37, %38 : vector<16x16xf32>
    %c0_19 = arith.constant 0 : index
    %c0_20 = arith.constant 0 : index
    %c0_21 = arith.constant 0 : index
    %c0_22 = arith.constant 0 : index
    %40 = vector.load %arg4[%c0_19, %c0_20, %c0_21, %c0_22] : memref<2x8x16x16xf32, #tpu.memory_space<vmem>>, vector<2x8x16x16xf32>
    %41 = vector.shape_cast %40 : vector<2x8x16x16xf32> to vector<16x16x16xf32>
    %c0_23 = arith.constant 0 : index
    %c0_24 = arith.constant 0 : index
    %c0_25 = arith.constant 0 : index
    %c0_26 = arith.constant 0 : index
    %42 = vector.load %arg3[%c0_23, %c0_24, %c0_25, %c0_26] : memref<2x8x16x2xf32, #tpu.memory_space<vmem>>, vector<2x8x16x2xf32>
    %43 = vector.shape_cast %42 : vector<2x8x16x2xf32> to vector<16x16x2xf32>
    %44 = vector.extract_strided_slice %43 {offsets = [0, 0, 0], sizes = [16, 16, 1], strides = [1, 1, 1]} : vector<16x16x2xf32> to vector<16x16x1xf32>
    %45 = vector.shape_cast %44 : vector<16x16x1xf32> to vector<16x16xf32>
    %46 = vector.shape_cast %45 : vector<16x16xf32> to vector<16x1x16xf32>
    %47 = vector.broadcast %46 : vector<16x1x16xf32> to vector<16x16x16xf32>
    %48 = arith.mulf %41, %47 : vector<16x16x16xf32>
    %cst_27 = arith.constant dense<0.000000e+00> : vector<16x16xf32>
    %49 = vector.multi_reduction <add>, %48, %cst_27 [2] : vector<16x16x16xf32> to vector<16x16xf32>
    %50 = vector.extract_strided_slice %43 {offsets = [0, 0, 1], sizes = [16, 16, 1], strides = [1, 1, 1]} : vector<16x16x2xf32> to vector<16x16x1xf32>
    %51 = vector.shape_cast %50 : vector<16x16x1xf32> to vector<16x16xf32>
    %52 = vector.shape_cast %51 : vector<16x16xf32> to vector<16x1x16xf32>
    %53 = vector.broadcast %52 : vector<16x1x16xf32> to vector<16x16x16xf32>
    %54 = arith.mulf %41, %53 : vector<16x16x16xf32>
    %cst_28 = arith.constant dense<0.000000e+00> : vector<16x16xf32>
    %55 = vector.multi_reduction <add>, %54, %cst_28 [2] : vector<16x16x16xf32> to vector<16x16xf32>
    %c1_29 = arith.constant 1 : index
    %c0_30 = arith.constant 0 : index
    %56 = memref.load %arg5[%c1_29, %c0_30] : memref<2x4xf32, #tpu.memory_space<smem>>
    %57 = vector.broadcast %56 : f32 to vector<16x16xf32>
    %58 = arith.mulf %49, %57 : vector<16x16xf32>
    %c1_31 = arith.constant 1 : index
    %c2_32 = arith.constant 2 : index
    %59 = memref.load %arg5[%c1_31, %c2_32] : memref<2x4xf32, #tpu.memory_space<smem>>
    %60 = vector.broadcast %59 : f32 to vector<16x16xf32>
    %61 = arith.mulf %55, %60 : vector<16x16xf32>
    %62 = arith.addf %58, %61 : vector<16x16xf32>
    %c1_33 = arith.constant 1 : index
    %c0_34 = arith.constant 0 : index
    %63 = memref.load %arg6[%c1_33, %c0_34] : memref<2x2xf32, #tpu.memory_space<smem>>
    %64 = vector.broadcast %63 : f32 to vector<16x16xf32>
    %65 = arith.addf %62, %64 : vector<16x16xf32>
    %cst_35 = arith.constant 0.000000e+00 : f32
    %66 = vector.broadcast %cst_35 : f32 to vector<16x16xf32>
    %67 = arith.maximumf %65, %66 : vector<16x16xf32>
    %c1_36 = arith.constant 1 : index
    %c1_37 = arith.constant 1 : index
    %68 = memref.load %arg5[%c1_36, %c1_37] : memref<2x4xf32, #tpu.memory_space<smem>>
    %69 = vector.broadcast %68 : f32 to vector<16x16xf32>
    %70 = arith.mulf %49, %69 : vector<16x16xf32>
    %c1_38 = arith.constant 1 : index
    %c3_39 = arith.constant 3 : index
    %71 = memref.load %arg5[%c1_38, %c3_39] : memref<2x4xf32, #tpu.memory_space<smem>>
    %72 = vector.broadcast %71 : f32 to vector<16x16xf32>
    %73 = arith.mulf %55, %72 : vector<16x16xf32>
    %74 = arith.addf %70, %73 : vector<16x16xf32>
    %c1_40 = arith.constant 1 : index
    %c1_41 = arith.constant 1 : index
    %75 = memref.load %arg6[%c1_40, %c1_41] : memref<2x2xf32, #tpu.memory_space<smem>>
    %76 = vector.broadcast %75 : f32 to vector<16x16xf32>
    %77 = arith.addf %74, %76 : vector<16x16xf32>
    %cst_42 = arith.constant 0.000000e+00 : f32
    %78 = vector.broadcast %cst_42 : f32 to vector<16x16xf32>
    %79 = arith.maximumf %77, %78 : vector<16x16xf32>
    %c0_43 = arith.constant 0 : index
    %c0_44 = arith.constant 0 : index
    %80 = memref.load %arg8[%c0_43, %c0_44] : memref<1x2xf32, #tpu.memory_space<smem>>
    %c0_45 = arith.constant 0 : index
    %c1_46 = arith.constant 1 : index
    %81 = memref.load %arg8[%c0_45, %c1_46] : memref<1x2xf32, #tpu.memory_space<smem>>
    %c0_47 = arith.constant 0 : index
    %c0_48 = arith.constant 0 : index
    %82 = memref.load %arg7[%c0_47, %c0_48] : memref<4x2xf32, #tpu.memory_space<smem>>
    %83 = vector.broadcast %82 : f32 to vector<16x16xf32>
    %84 = arith.mulf %27, %83 : vector<16x16xf32>
    %85 = vector.broadcast %80 : f32 to vector<16x16xf32>
    %86 = arith.addf %85, %84 : vector<16x16xf32>
    %c0_49 = arith.constant 0 : index
    %c1_50 = arith.constant 1 : index
    %87 = memref.load %arg7[%c0_49, %c1_50] : memref<4x2xf32, #tpu.memory_space<smem>>
    %88 = vector.broadcast %87 : f32 to vector<16x16xf32>
    %89 = arith.mulf %27, %88 : vector<16x16xf32>
    %90 = vector.broadcast %81 : f32 to vector<16x16xf32>
    %91 = arith.addf %90, %89 : vector<16x16xf32>
    %c1_51 = arith.constant 1 : index
    %c0_52 = arith.constant 0 : index
    %92 = memref.load %arg7[%c1_51, %c0_52] : memref<4x2xf32, #tpu.memory_space<smem>>
    %93 = vector.broadcast %92 : f32 to vector<16x16xf32>
    %94 = arith.mulf %39, %93 : vector<16x16xf32>
    %95 = arith.addf %86, %94 : vector<16x16xf32>
    %c1_53 = arith.constant 1 : index
    %c1_54 = arith.constant 1 : index
    %96 = memref.load %arg7[%c1_53, %c1_54] : memref<4x2xf32, #tpu.memory_space<smem>>
    %97 = vector.broadcast %96 : f32 to vector<16x16xf32>
    %98 = arith.mulf %39, %97 : vector<16x16xf32>
    %99 = arith.addf %91, %98 : vector<16x16xf32>
    %c2_55 = arith.constant 2 : index
    %c0_56 = arith.constant 0 : index
    %100 = memref.load %arg7[%c2_55, %c0_56] : memref<4x2xf32, #tpu.memory_space<smem>>
    %101 = vector.broadcast %100 : f32 to vector<16x16xf32>
    %102 = arith.mulf %67, %101 : vector<16x16xf32>
    %103 = arith.addf %95, %102 : vector<16x16xf32>
    %c2_57 = arith.constant 2 : index
    %c1_58 = arith.constant 1 : index
    %104 = memref.load %arg7[%c2_57, %c1_58] : memref<4x2xf32, #tpu.memory_space<smem>>
    %105 = vector.broadcast %104 : f32 to vector<16x16xf32>
    %106 = arith.mulf %67, %105 : vector<16x16xf32>
    %107 = arith.addf %99, %106 : vector<16x16xf32>
    %c3_59 = arith.constant 3 : index
    %c0_60 = arith.constant 0 : index
    %108 = memref.load %arg7[%c3_59, %c0_60] : memref<4x2xf32, #tpu.memory_space<smem>>
    %109 = vector.broadcast %108 : f32 to vector<16x16xf32>
    %110 = arith.mulf %79, %109 : vector<16x16xf32>
    %111 = arith.addf %103, %110 : vector<16x16xf32>
    %c3_61 = arith.constant 3 : index
    %c1_62 = arith.constant 1 : index
    %112 = memref.load %arg7[%c3_61, %c1_62] : memref<4x2xf32, #tpu.memory_space<smem>>
    %113 = vector.broadcast %112 : f32 to vector<16x16xf32>
    %114 = arith.mulf %79, %113 : vector<16x16xf32>
    %115 = arith.addf %107, %114 : vector<16x16xf32>
    %116 = arith.maximumf %111, %115 : vector<16x16xf32>
    %117 = arith.subf %111, %116 : vector<16x16xf32>
    %118 = math.exp %117 : vector<16x16xf32>
    %119 = arith.subf %115, %116 : vector<16x16xf32>
    %120 = math.exp %119 : vector<16x16xf32>
    %121 = arith.addf %118, %120 : vector<16x16xf32>
    %122 = tpu.reciprocal %121 {approx = true} : vector<16x16xf32> -> vector<16x16xf32>
    %123 = arith.mulf %118, %122 : vector<16x16xf32>
    %124 = arith.mulf %120, %122 : vector<16x16xf32>
    %125 = arith.mulf %123, %27 : vector<16x16xf32>
    %126 = arith.mulf %124, %67 : vector<16x16xf32>
    %127 = arith.addf %125, %126 : vector<16x16xf32>
    %128 = arith.mulf %123, %39 : vector<16x16xf32>
    %129 = arith.mulf %124, %79 : vector<16x16xf32>
    %130 = arith.addf %128, %129 : vector<16x16xf32>
    %131 = tpu.concatenate %27, %39, %67, %79, %127, %130 in 1 : vector<16x16xf32>, vector<16x16xf32>, vector<16x16xf32>, vector<16x16xf32>, vector<16x16xf32>, vector<16x16xf32> -> vector<16x96xf32>
    %c0_63 = arith.constant 0 : index
    %c0_64 = arith.constant 0 : index
    %132 = vector.load %arg9[%c0_63, %c0_64] : memref<96x384xf32, #tpu.memory_space<vmem>>, vector<96x384xf32>
    %cst_65 = arith.constant dense<0.000000e+00> : vector<16x384xf32>
    %133 = tpu.matmul %131, %132, %cst_65 {dimension_numbers = #tpu.dot_dimension_numbers<[1], [0], [0], [1], [0, 0, 1, 1], [], []>} : vector<16x96xf32>, vector<96x384xf32>, vector<16x384xf32> -> vector<16x384xf32>
    %c0_66 = arith.constant 0 : index
    %c0_67 = arith.constant 0 : index
    %134 = vector.load %arg11[%c0_66, %c0_67] : memref<1x384xf32, #tpu.memory_space<vmem>>, vector<1x384xf32>
    %135 = vector.broadcast %134 : vector<1x384xf32> to vector<16x384xf32>
    %136 = arith.addf %133, %135 : vector<16x384xf32>
    %c0_68 = arith.constant 0 : index
    %c0_69 = arith.constant 0 : index
    %137 = vector.load %arg13[%c0_68, %c0_69] : memref<1x384xf32, #tpu.memory_space<vmem>>, vector<1x384xf32>
    %cst_70 = arith.constant 0.000000e+00 : f32
    %138 = vector.broadcast %cst_70 : f32 to vector<2x96xf32>
    %cst_71 = arith.constant 0.000000e+00 : f32
    %139 = vector.broadcast %cst_71 : f32 to vector<2x96xf32>
    %cst_72 = arith.constant 0.000000e+00 : f32
    %140 = vector.broadcast %cst_72 : f32 to vector<2x96xf32>
    %cst_73 = arith.constant 0.000000e+00 : f32
    %141 = vector.broadcast %cst_73 : f32 to vector<2x96xf32>
    %142 = vector.extract_strided_slice %136 {offsets = [0, 0], sizes = [1, 384], strides = [1, 1]} : vector<16x384xf32> to vector<1x384xf32>
    %143 = vector.extract_strided_slice %136 {offsets = [8, 0], sizes = [1, 384], strides = [1, 1]} : vector<16x384xf32> to vector<1x384xf32>
    %144 = tpu.concatenate %142, %143 in 0 : vector<1x384xf32>, vector<1x384xf32> -> vector<2x384xf32>
    %c0_74 = arith.constant 0 : index
    %c0_75 = arith.constant 0 : index
    %145 = vector.load %arg10[%c0_74, %c0_75] : memref<96x384xf32, #tpu.memory_space<vmem>>, vector<96x384xf32>
    %cst_76 = arith.constant dense<0.000000e+00> : vector<2x384xf32>
    %146 = tpu.matmul %138, %145, %cst_76 {dimension_numbers = #tpu.dot_dimension_numbers<[1], [0], [0], [1], [0, 0, 1, 1], [], []>} : vector<2x96xf32>, vector<96x384xf32>, vector<2x384xf32> -> vector<2x384xf32>
    %147 = arith.addf %144, %146 : vector<2x384xf32>
    %148 = vector.extract_strided_slice %147 {offsets = [0, 0], sizes = [2, 288], strides = [1, 1]} : vector<2x384xf32> to vector<2x288xf32>
    %149 = arith.negf %148 : vector<2x288xf32>
    %150 = math.exp %149 : vector<2x288xf32>
    %cst_77 = arith.constant 1.000000e+00 : f32
    %151 = vector.broadcast %cst_77 : f32 to vector<2x288xf32>
    %152 = arith.addf %151, %150 : vector<2x288xf32>
    %153 = arith.divf %151, %152 : vector<2x288xf32>
    %154 = vector.extract_strided_slice %147 {offsets = [0, 288], sizes = [2, 96], strides = [1, 1]} : vector<2x384xf32> to vector<2x96xf32>
    %155 = math.tanh %154 : vector<2x96xf32>
    %156 = vector.extract_strided_slice %153 {offsets = [0, 0], sizes = [2, 96], strides = [1, 1]} : vector<2x288xf32> to vector<2x96xf32>
    %157 = vector.extract_strided_slice %153 {offsets = [0, 96], sizes = [2, 96], strides = [1, 1]} : vector<2x288xf32> to vector<2x96xf32>
    %158 = vector.extract_strided_slice %153 {offsets = [0, 192], sizes = [2, 96], strides = [1, 1]} : vector<2x288xf32> to vector<2x96xf32>
    %159 = arith.mulf %157, %139 : vector<2x96xf32>
    %160 = arith.mulf %156, %155 : vector<2x96xf32>
    %161 = arith.addf %159, %160 : vector<2x96xf32>
    %162 = math.tanh %161 : vector<2x96xf32>
    %163 = arith.mulf %158, %162 : vector<2x96xf32>
    %164 = tpu.concatenate %163, %140 in 1 : vector<2x96xf32>, vector<2x96xf32> -> vector<2x192xf32>
    %c0_78 = arith.constant 0 : index
    %c0_79 = arith.constant 0 : index
    %165 = vector.load %arg12[%c0_78, %c0_79] : memref<192x384xf32, #tpu.memory_space<vmem>>, vector<192x384xf32>
    %cst_80 = arith.constant dense<0.000000e+00> : vector<2x384xf32>
    %166 = tpu.matmul %164, %165, %cst_80 {dimension_numbers = #tpu.dot_dimension_numbers<[1], [0], [0], [1], [0, 0, 1, 1], [], []>} : vector<2x192xf32>, vector<192x384xf32>, vector<2x384xf32> -> vector<2x384xf32>
    %167 = vector.broadcast %137 : vector<1x384xf32> to vector<2x384xf32>
    %168 = arith.addf %166, %167 : vector<2x384xf32>
    %169 = vector.extract_strided_slice %168 {offsets = [0, 0], sizes = [2, 288], strides = [1, 1]} : vector<2x384xf32> to vector<2x288xf32>
    %170 = arith.negf %169 : vector<2x288xf32>
    %171 = math.exp %170 : vector<2x288xf32>
    %cst_81 = arith.constant 1.000000e+00 : f32
    %172 = vector.broadcast %cst_81 : f32 to vector<2x288xf32>
    %173 = arith.addf %172, %171 : vector<2x288xf32>
    %174 = arith.divf %172, %173 : vector<2x288xf32>
    %175 = vector.extract_strided_slice %168 {offsets = [0, 288], sizes = [2, 96], strides = [1, 1]} : vector<2x384xf32> to vector<2x96xf32>
    %176 = math.tanh %175 : vector<2x96xf32>
    %177 = vector.extract_strided_slice %174 {offsets = [0, 0], sizes = [2, 96], strides = [1, 1]} : vector<2x288xf32> to vector<2x96xf32>
    %178 = vector.extract_strided_slice %174 {offsets = [0, 96], sizes = [2, 96], strides = [1, 1]} : vector<2x288xf32> to vector<2x96xf32>
    %179 = vector.extract_strided_slice %174 {offsets = [0, 192], sizes = [2, 96], strides = [1, 1]} : vector<2x288xf32> to vector<2x96xf32>
    %180 = arith.mulf %178, %141 : vector<2x96xf32>
    %181 = arith.mulf %177, %176 : vector<2x96xf32>
    %182 = arith.addf %180, %181 : vector<2x96xf32>
    %183 = math.tanh %182 : vector<2x96xf32>
    %184 = arith.mulf %179, %183 : vector<2x96xf32>
    %185 = vector.extract_strided_slice %136 {offsets = [1, 0], sizes = [1, 384], strides = [1, 1]} : vector<16x384xf32> to vector<1x384xf32>
    %186 = vector.extract_strided_slice %136 {offsets = [9, 0], sizes = [1, 384], strides = [1, 1]} : vector<16x384xf32> to vector<1x384xf32>
    %187 = tpu.concatenate %185, %186 in 0 : vector<1x384xf32>, vector<1x384xf32> -> vector<2x384xf32>
    %c0_82 = arith.constant 0 : index
    %c0_83 = arith.constant 0 : index
    %188 = vector.load %arg10[%c0_82, %c0_83] : memref<96x384xf32, #tpu.memory_space<vmem>>, vector<96x384xf32>
    %cst_84 = arith.constant dense<0.000000e+00> : vector<2x384xf32>
    %189 = tpu.matmul %163, %188, %cst_84 {dimension_numbers = #tpu.dot_dimension_numbers<[1], [0], [0], [1], [0, 0, 1, 1], [], []>} : vector<2x96xf32>, vector<96x384xf32>, vector<2x384xf32> -> vector<2x384xf32>
    %190 = arith.addf %187, %189 : vector<2x384xf32>
    %191 = vector.extract_strided_slice %190 {offsets = [0, 0], sizes = [2, 288], strides = [1, 1]} : vector<2x384xf32> to vector<2x288xf32>
    %192 = arith.negf %191 : vector<2x288xf32>
    %193 = math.exp %192 : vector<2x288xf32>
    %cst_85 = arith.constant 1.000000e+00 : f32
    %194 = vector.broadcast %cst_85 : f32 to vector<2x288xf32>
    %195 = arith.addf %194, %193 : vector<2x288xf32>
    %196 = arith.divf %194, %195 : vector<2x288xf32>
    %197 = vector.extract_strided_slice %190 {offsets = [0, 288], sizes = [2, 96], strides = [1, 1]} : vector<2x384xf32> to vector<2x96xf32>
    %198 = math.tanh %197 : vector<2x96xf32>
    %199 = vector.extract_strided_slice %196 {offsets = [0, 0], sizes = [2, 96], strides = [1, 1]} : vector<2x288xf32> to vector<2x96xf32>
    %200 = vector.extract_strided_slice %196 {offsets = [0, 96], sizes = [2, 96], strides = [1, 1]} : vector<2x288xf32> to vector<2x96xf32>
    %201 = vector.extract_strided_slice %196 {offsets = [0, 192], sizes = [2, 96], strides = [1, 1]} : vector<2x288xf32> to vector<2x96xf32>
    %202 = arith.mulf %200, %161 : vector<2x96xf32>
    %203 = arith.mulf %199, %198 : vector<2x96xf32>
    %204 = arith.addf %202, %203 : vector<2x96xf32>
    %205 = math.tanh %204 : vector<2x96xf32>
    %206 = arith.mulf %201, %205 : vector<2x96xf32>
    %207 = tpu.concatenate %206, %184 in 1 : vector<2x96xf32>, vector<2x96xf32> -> vector<2x192xf32>
    %c0_86 = arith.constant 0 : index
    %c0_87 = arith.constant 0 : index
    %208 = vector.load %arg12[%c0_86, %c0_87] : memref<192x384xf32, #tpu.memory_space<vmem>>, vector<192x384xf32>
    %cst_88 = arith.constant dense<0.000000e+00> : vector<2x384xf32>
    %209 = tpu.matmul %207, %208, %cst_88 {dimension_numbers = #tpu.dot_dimension_numbers<[1], [0], [0], [1], [0, 0, 1, 1], [], []>} : vector<2x192xf32>, vector<192x384xf32>, vector<2x384xf32> -> vector<2x384xf32>
    %210 = vector.broadcast %137 : vector<1x384xf32> to vector<2x384xf32>
    %211 = arith.addf %209, %210 : vector<2x384xf32>
    %212 = vector.extract_strided_slice %211 {offsets = [0, 0], sizes = [2, 288], strides = [1, 1]} : vector<2x384xf32> to vector<2x288xf32>
    %213 = arith.negf %212 : vector<2x288xf32>
    %214 = math.exp %213 : vector<2x288xf32>
    %cst_89 = arith.constant 1.000000e+00 : f32
    %215 = vector.broadcast %cst_89 : f32 to vector<2x288xf32>
    %216 = arith.addf %215, %214 : vector<2x288xf32>
    %217 = arith.divf %215, %216 : vector<2x288xf32>
    %218 = vector.extract_strided_slice %211 {offsets = [0, 288], sizes = [2, 96], strides = [1, 1]} : vector<2x384xf32> to vector<2x96xf32>
    %219 = math.tanh %218 : vector<2x96xf32>
    %220 = vector.extract_strided_slice %217 {offsets = [0, 0], sizes = [2, 96], strides = [1, 1]} : vector<2x288xf32> to vector<2x96xf32>
    %221 = vector.extract_strided_slice %217 {offsets = [0, 96], sizes = [2, 96], strides = [1, 1]} : vector<2x288xf32> to vector<2x96xf32>
    %222 = vector.extract_strided_slice %217 {offsets = [0, 192], sizes = [2, 96], strides = [1, 1]} : vector<2x288xf32> to vector<2x96xf32>
    %223 = arith.mulf %221, %182 : vector<2x96xf32>
    %224 = arith.mulf %220, %219 : vector<2x96xf32>
    %225 = arith.addf %223, %224 : vector<2x96xf32>
    %226 = math.tanh %225 : vector<2x96xf32>
    %227 = arith.mulf %222, %226 : vector<2x96xf32>
    %228 = vector.extract_strided_slice %136 {offsets = [2, 0], sizes = [1, 384], strides = [1, 1]} : vector<16x384xf32> to vector<1x384xf32>
    %229 = vector.extract_strided_slice %136 {offsets = [10, 0], sizes = [1, 384], strides = [1, 1]} : vector<16x384xf32> to vector<1x384xf32>
    %230 = tpu.concatenate %228, %229 in 0 : vector<1x384xf32>, vector<1x384xf32> -> vector<2x384xf32>
    %c0_90 = arith.constant 0 : index
    %c0_91 = arith.constant 0 : index
    %231 = vector.load %arg10[%c0_90, %c0_91] : memref<96x384xf32, #tpu.memory_space<vmem>>, vector<96x384xf32>
    %cst_92 = arith.constant dense<0.000000e+00> : vector<2x384xf32>
    %232 = tpu.matmul %206, %231, %cst_92 {dimension_numbers = #tpu.dot_dimension_numbers<[1], [0], [0], [1], [0, 0, 1, 1], [], []>} : vector<2x96xf32>, vector<96x384xf32>, vector<2x384xf32> -> vector<2x384xf32>
    %233 = arith.addf %230, %232 : vector<2x384xf32>
    %234 = vector.extract_strided_slice %233 {offsets = [0, 0], sizes = [2, 288], strides = [1, 1]} : vector<2x384xf32> to vector<2x288xf32>
    %235 = arith.negf %234 : vector<2x288xf32>
    %236 = math.exp %235 : vector<2x288xf32>
    %cst_93 = arith.constant 1.000000e+00 : f32
    %237 = vector.broadcast %cst_93 : f32 to vector<2x288xf32>
    %238 = arith.addf %237, %236 : vector<2x288xf32>
    %239 = arith.divf %237, %238 : vector<2x288xf32>
    %240 = vector.extract_strided_slice %233 {offsets = [0, 288], sizes = [2, 96], strides = [1, 1]} : vector<2x384xf32> to vector<2x96xf32>
    %241 = math.tanh %240 : vector<2x96xf32>
    %242 = vector.extract_strided_slice %239 {offsets = [0, 0], sizes = [2, 96], strides = [1, 1]} : vector<2x288xf32> to vector<2x96xf32>
    %243 = vector.extract_strided_slice %239 {offsets = [0, 96], sizes = [2, 96], strides = [1, 1]} : vector<2x288xf32> to vector<2x96xf32>
    %244 = vector.extract_strided_slice %239 {offsets = [0, 192], sizes = [2, 96], strides = [1, 1]} : vector<2x288xf32> to vector<2x96xf32>
    %245 = arith.mulf %243, %204 : vector<2x96xf32>
    %246 = arith.mulf %242, %241 : vector<2x96xf32>
    %247 = arith.addf %245, %246 : vector<2x96xf32>
    %248 = math.tanh %247 : vector<2x96xf32>
    %249 = arith.mulf %244, %248 : vector<2x96xf32>
    %250 = tpu.concatenate %249, %227 in 1 : vector<2x96xf32>, vector<2x96xf32> -> vector<2x192xf32>
    %c0_94 = arith.constant 0 : index
    %c0_95 = arith.constant 0 : index
    %251 = vector.load %arg12[%c0_94, %c0_95] : memref<192x384xf32, #tpu.memory_space<vmem>>, vector<192x384xf32>
    %cst_96 = arith.constant dense<0.000000e+00> : vector<2x384xf32>
    %252 = tpu.matmul %250, %251, %cst_96 {dimension_numbers = #tpu.dot_dimension_numbers<[1], [0], [0], [1], [0, 0, 1, 1], [], []>} : vector<2x192xf32>, vector<192x384xf32>, vector<2x384xf32> -> vector<2x384xf32>
    %253 = vector.broadcast %137 : vector<1x384xf32> to vector<2x384xf32>
    %254 = arith.addf %252, %253 : vector<2x384xf32>
    %255 = vector.extract_strided_slice %254 {offsets = [0, 0], sizes = [2, 288], strides = [1, 1]} : vector<2x384xf32> to vector<2x288xf32>
    %256 = arith.negf %255 : vector<2x288xf32>
    %257 = math.exp %256 : vector<2x288xf32>
    %cst_97 = arith.constant 1.000000e+00 : f32
    %258 = vector.broadcast %cst_97 : f32 to vector<2x288xf32>
    %259 = arith.addf %258, %257 : vector<2x288xf32>
    %260 = arith.divf %258, %259 : vector<2x288xf32>
    %261 = vector.extract_strided_slice %254 {offsets = [0, 288], sizes = [2, 96], strides = [1, 1]} : vector<2x384xf32> to vector<2x96xf32>
    %262 = math.tanh %261 : vector<2x96xf32>
    %263 = vector.extract_strided_slice %260 {offsets = [0, 0], sizes = [2, 96], strides = [1, 1]} : vector<2x288xf32> to vector<2x96xf32>
    %264 = vector.extract_strided_slice %260 {offsets = [0, 96], sizes = [2, 96], strides = [1, 1]} : vector<2x288xf32> to vector<2x96xf32>
    %265 = vector.extract_strided_slice %260 {offsets = [0, 192], sizes = [2, 96], strides = [1, 1]} : vector<2x288xf32> to vector<2x96xf32>
    %266 = arith.mulf %264, %225 : vector<2x96xf32>
    %267 = arith.mulf %263, %262 : vector<2x96xf32>
    %268 = arith.addf %266, %267 : vector<2x96xf32>
    %269 = math.tanh %268 : vector<2x96xf32>
    %270 = arith.mulf %265, %269 : vector<2x96xf32>
    %271 = vector.extract_strided_slice %136 {offsets = [3, 0], sizes = [1, 384], strides = [1, 1]} : vector<16x384xf32> to vector<1x384xf32>
    %272 = vector.extract_strided_slice %136 {offsets = [11, 0], sizes = [1, 384], strides = [1, 1]} : vector<16x384xf32> to vector<1x384xf32>
    %273 = tpu.concatenate %271, %272 in 0 : vector<1x384xf32>, vector<1x384xf32> -> vector<2x384xf32>
    %c0_98 = arith.constant 0 : index
    %c0_99 = arith.constant 0 : index
    %274 = vector.load %arg10[%c0_98, %c0_99] : memref<96x384xf32, #tpu.memory_space<vmem>>, vector<96x384xf32>
    %cst_100 = arith.constant dense<0.000000e+00> : vector<2x384xf32>
    %275 = tpu.matmul %249, %274, %cst_100 {dimension_numbers = #tpu.dot_dimension_numbers<[1], [0], [0], [1], [0, 0, 1, 1], [], []>} : vector<2x96xf32>, vector<96x384xf32>, vector<2x384xf32> -> vector<2x384xf32>
    %276 = arith.addf %273, %275 : vector<2x384xf32>
    %277 = vector.extract_strided_slice %276 {offsets = [0, 0], sizes = [2, 288], strides = [1, 1]} : vector<2x384xf32> to vector<2x288xf32>
    %278 = arith.negf %277 : vector<2x288xf32>
    %279 = math.exp %278 : vector<2x288xf32>
    %cst_101 = arith.constant 1.000000e+00 : f32
    %280 = vector.broadcast %cst_101 : f32 to vector<2x288xf32>
    %281 = arith.addf %280, %279 : vector<2x288xf32>
    %282 = arith.divf %280, %281 : vector<2x288xf32>
    %283 = vector.extract_strided_slice %276 {offsets = [0, 288], sizes = [2, 96], strides = [1, 1]} : vector<2x384xf32> to vector<2x96xf32>
    %284 = math.tanh %283 : vector<2x96xf32>
    %285 = vector.extract_strided_slice %282 {offsets = [0, 0], sizes = [2, 96], strides = [1, 1]} : vector<2x288xf32> to vector<2x96xf32>
    %286 = vector.extract_strided_slice %282 {offsets = [0, 96], sizes = [2, 96], strides = [1, 1]} : vector<2x288xf32> to vector<2x96xf32>
    %287 = vector.extract_strided_slice %282 {offsets = [0, 192], sizes = [2, 96], strides = [1, 1]} : vector<2x288xf32> to vector<2x96xf32>
    %288 = arith.mulf %286, %247 : vector<2x96xf32>
    %289 = arith.mulf %285, %284 : vector<2x96xf32>
    %290 = arith.addf %288, %289 : vector<2x96xf32>
    %291 = math.tanh %290 : vector<2x96xf32>
    %292 = arith.mulf %287, %291 : vector<2x96xf32>
    %293 = tpu.concatenate %292, %270 in 1 : vector<2x96xf32>, vector<2x96xf32> -> vector<2x192xf32>
    %c0_102 = arith.constant 0 : index
    %c0_103 = arith.constant 0 : index
    %294 = vector.load %arg12[%c0_102, %c0_103] : memref<192x384xf32, #tpu.memory_space<vmem>>, vector<192x384xf32>
    %cst_104 = arith.constant dense<0.000000e+00> : vector<2x384xf32>
    %295 = tpu.matmul %293, %294, %cst_104 {dimension_numbers = #tpu.dot_dimension_numbers<[1], [0], [0], [1], [0, 0, 1, 1], [], []>} : vector<2x192xf32>, vector<192x384xf32>, vector<2x384xf32> -> vector<2x384xf32>
    %296 = vector.broadcast %137 : vector<1x384xf32> to vector<2x384xf32>
    %297 = arith.addf %295, %296 : vector<2x384xf32>
    %298 = vector.extract_strided_slice %297 {offsets = [0, 0], sizes = [2, 288], strides = [1, 1]} : vector<2x384xf32> to vector<2x288xf32>
    %299 = arith.negf %298 : vector<2x288xf32>
    %300 = math.exp %299 : vector<2x288xf32>
    %cst_105 = arith.constant 1.000000e+00 : f32
    %301 = vector.broadcast %cst_105 : f32 to vector<2x288xf32>
    %302 = arith.addf %301, %300 : vector<2x288xf32>
    %303 = arith.divf %301, %302 : vector<2x288xf32>
    %304 = vector.extract_strided_slice %297 {offsets = [0, 288], sizes = [2, 96], strides = [1, 1]} : vector<2x384xf32> to vector<2x96xf32>
    %305 = math.tanh %304 : vector<2x96xf32>
    %306 = vector.extract_strided_slice %303 {offsets = [0, 0], sizes = [2, 96], strides = [1, 1]} : vector<2x288xf32> to vector<2x96xf32>
    %307 = vector.extract_strided_slice %303 {offsets = [0, 96], sizes = [2, 96], strides = [1, 1]} : vector<2x288xf32> to vector<2x96xf32>
    %308 = vector.extract_strided_slice %303 {offsets = [0, 192], sizes = [2, 96], strides = [1, 1]} : vector<2x288xf32> to vector<2x96xf32>
    %309 = arith.mulf %307, %268 : vector<2x96xf32>
    %310 = arith.mulf %306, %305 : vector<2x96xf32>
    %311 = arith.addf %309, %310 : vector<2x96xf32>
    %312 = math.tanh %311 : vector<2x96xf32>
    %313 = arith.mulf %308, %312 : vector<2x96xf32>
    %314 = vector.extract_strided_slice %136 {offsets = [4, 0], sizes = [1, 384], strides = [1, 1]} : vector<16x384xf32> to vector<1x384xf32>
    %315 = vector.extract_strided_slice %136 {offsets = [12, 0], sizes = [1, 384], strides = [1, 1]} : vector<16x384xf32> to vector<1x384xf32>
    %316 = tpu.concatenate %314, %315 in 0 : vector<1x384xf32>, vector<1x384xf32> -> vector<2x384xf32>
    %c0_106 = arith.constant 0 : index
    %c0_107 = arith.constant 0 : index
    %317 = vector.load %arg10[%c0_106, %c0_107] : memref<96x384xf32, #tpu.memory_space<vmem>>, vector<96x384xf32>
    %cst_108 = arith.constant dense<0.000000e+00> : vector<2x384xf32>
    %318 = tpu.matmul %292, %317, %cst_108 {dimension_numbers = #tpu.dot_dimension_numbers<[1], [0], [0], [1], [0, 0, 1, 1], [], []>} : vector<2x96xf32>, vector<96x384xf32>, vector<2x384xf32> -> vector<2x384xf32>
    %319 = arith.addf %316, %318 : vector<2x384xf32>
    %320 = vector.extract_strided_slice %319 {offsets = [0, 0], sizes = [2, 288], strides = [1, 1]} : vector<2x384xf32> to vector<2x288xf32>
    %321 = arith.negf %320 : vector<2x288xf32>
    %322 = math.exp %321 : vector<2x288xf32>
    %cst_109 = arith.constant 1.000000e+00 : f32
    %323 = vector.broadcast %cst_109 : f32 to vector<2x288xf32>
    %324 = arith.addf %323, %322 : vector<2x288xf32>
    %325 = arith.divf %323, %324 : vector<2x288xf32>
    %326 = vector.extract_strided_slice %319 {offsets = [0, 288], sizes = [2, 96], strides = [1, 1]} : vector<2x384xf32> to vector<2x96xf32>
    %327 = math.tanh %326 : vector<2x96xf32>
    %328 = vector.extract_strided_slice %325 {offsets = [0, 0], sizes = [2, 96], strides = [1, 1]} : vector<2x288xf32> to vector<2x96xf32>
    %329 = vector.extract_strided_slice %325 {offsets = [0, 96], sizes = [2, 96], strides = [1, 1]} : vector<2x288xf32> to vector<2x96xf32>
    %330 = vector.extract_strided_slice %325 {offsets = [0, 192], sizes = [2, 96], strides = [1, 1]} : vector<2x288xf32> to vector<2x96xf32>
    %331 = arith.mulf %329, %290 : vector<2x96xf32>
    %332 = arith.mulf %328, %327 : vector<2x96xf32>
    %333 = arith.addf %331, %332 : vector<2x96xf32>
    %334 = math.tanh %333 : vector<2x96xf32>
    %335 = arith.mulf %330, %334 : vector<2x96xf32>
    %336 = tpu.concatenate %335, %313 in 1 : vector<2x96xf32>, vector<2x96xf32> -> vector<2x192xf32>
    %c0_110 = arith.constant 0 : index
    %c0_111 = arith.constant 0 : index
    %337 = vector.load %arg12[%c0_110, %c0_111] : memref<192x384xf32, #tpu.memory_space<vmem>>, vector<192x384xf32>
    %cst_112 = arith.constant dense<0.000000e+00> : vector<2x384xf32>
    %338 = tpu.matmul %336, %337, %cst_112 {dimension_numbers = #tpu.dot_dimension_numbers<[1], [0], [0], [1], [0, 0, 1, 1], [], []>} : vector<2x192xf32>, vector<192x384xf32>, vector<2x384xf32> -> vector<2x384xf32>
    %339 = vector.broadcast %137 : vector<1x384xf32> to vector<2x384xf32>
    %340 = arith.addf %338, %339 : vector<2x384xf32>
    %341 = vector.extract_strided_slice %340 {offsets = [0, 0], sizes = [2, 288], strides = [1, 1]} : vector<2x384xf32> to vector<2x288xf32>
    %342 = arith.negf %341 : vector<2x288xf32>
    %343 = math.exp %342 : vector<2x288xf32>
    %cst_113 = arith.constant 1.000000e+00 : f32
    %344 = vector.broadcast %cst_113 : f32 to vector<2x288xf32>
    %345 = arith.addf %344, %343 : vector<2x288xf32>
    %346 = arith.divf %344, %345 : vector<2x288xf32>
    %347 = vector.extract_strided_slice %340 {offsets = [0, 288], sizes = [2, 96], strides = [1, 1]} : vector<2x384xf32> to vector<2x96xf32>
    %348 = math.tanh %347 : vector<2x96xf32>
    %349 = vector.extract_strided_slice %346 {offsets = [0, 0], sizes = [2, 96], strides = [1, 1]} : vector<2x288xf32> to vector<2x96xf32>
    %350 = vector.extract_strided_slice %346 {offsets = [0, 96], sizes = [2, 96], strides = [1, 1]} : vector<2x288xf32> to vector<2x96xf32>
    %351 = vector.extract_strided_slice %346 {offsets = [0, 192], sizes = [2, 96], strides = [1, 1]} : vector<2x288xf32> to vector<2x96xf32>
    %352 = arith.mulf %350, %311 : vector<2x96xf32>
    %353 = arith.mulf %349, %348 : vector<2x96xf32>
    %354 = arith.addf %352, %353 : vector<2x96xf32>
    %355 = math.tanh %354 : vector<2x96xf32>
    %356 = arith.mulf %351, %355 : vector<2x96xf32>
    %357 = vector.extract_strided_slice %136 {offsets = [5, 0], sizes = [1, 384], strides = [1, 1]} : vector<16x384xf32> to vector<1x384xf32>
    %358 = vector.extract_strided_slice %136 {offsets = [13, 0], sizes = [1, 384], strides = [1, 1]} : vector<16x384xf32> to vector<1x384xf32>
    %359 = tpu.concatenate %357, %358 in 0 : vector<1x384xf32>, vector<1x384xf32> -> vector<2x384xf32>
    %c0_114 = arith.constant 0 : index
    %c0_115 = arith.constant 0 : index
    %360 = vector.load %arg10[%c0_114, %c0_115] : memref<96x384xf32, #tpu.memory_space<vmem>>, vector<96x384xf32>
    %cst_116 = arith.constant dense<0.000000e+00> : vector<2x384xf32>
    %361 = tpu.matmul %335, %360, %cst_116 {dimension_numbers = #tpu.dot_dimension_numbers<[1], [0], [0], [1], [0, 0, 1, 1], [], []>} : vector<2x96xf32>, vector<96x384xf32>, vector<2x384xf32> -> vector<2x384xf32>
    %362 = arith.addf %359, %361 : vector<2x384xf32>
    %363 = vector.extract_strided_slice %362 {offsets = [0, 0], sizes = [2, 288], strides = [1, 1]} : vector<2x384xf32> to vector<2x288xf32>
    %364 = arith.negf %363 : vector<2x288xf32>
    %365 = math.exp %364 : vector<2x288xf32>
    %cst_117 = arith.constant 1.000000e+00 : f32
    %366 = vector.broadcast %cst_117 : f32 to vector<2x288xf32>
    %367 = arith.addf %366, %365 : vector<2x288xf32>
    %368 = arith.divf %366, %367 : vector<2x288xf32>
    %369 = vector.extract_strided_slice %362 {offsets = [0, 288], sizes = [2, 96], strides = [1, 1]} : vector<2x384xf32> to vector<2x96xf32>
    %370 = math.tanh %369 : vector<2x96xf32>
    %371 = vector.extract_strided_slice %368 {offsets = [0, 0], sizes = [2, 96], strides = [1, 1]} : vector<2x288xf32> to vector<2x96xf32>
    %372 = vector.extract_strided_slice %368 {offsets = [0, 96], sizes = [2, 96], strides = [1, 1]} : vector<2x288xf32> to vector<2x96xf32>
    %373 = vector.extract_strided_slice %368 {offsets = [0, 192], sizes = [2, 96], strides = [1, 1]} : vector<2x288xf32> to vector<2x96xf32>
    %374 = arith.mulf %372, %333 : vector<2x96xf32>
    %375 = arith.mulf %371, %370 : vector<2x96xf32>
    %376 = arith.addf %374, %375 : vector<2x96xf32>
    %377 = math.tanh %376 : vector<2x96xf32>
    %378 = arith.mulf %373, %377 : vector<2x96xf32>
    %379 = tpu.concatenate %378, %356 in 1 : vector<2x96xf32>, vector<2x96xf32> -> vector<2x192xf32>
    %c0_118 = arith.constant 0 : index
    %c0_119 = arith.constant 0 : index
    %380 = vector.load %arg12[%c0_118, %c0_119] : memref<192x384xf32, #tpu.memory_space<vmem>>, vector<192x384xf32>
    %cst_120 = arith.constant dense<0.000000e+00> : vector<2x384xf32>
    %381 = tpu.matmul %379, %380, %cst_120 {dimension_numbers = #tpu.dot_dimension_numbers<[1], [0], [0], [1], [0, 0, 1, 1], [], []>} : vector<2x192xf32>, vector<192x384xf32>, vector<2x384xf32> -> vector<2x384xf32>
    %382 = vector.broadcast %137 : vector<1x384xf32> to vector<2x384xf32>
    %383 = arith.addf %381, %382 : vector<2x384xf32>
    %384 = vector.extract_strided_slice %383 {offsets = [0, 0], sizes = [2, 288], strides = [1, 1]} : vector<2x384xf32> to vector<2x288xf32>
    %385 = arith.negf %384 : vector<2x288xf32>
    %386 = math.exp %385 : vector<2x288xf32>
    %cst_121 = arith.constant 1.000000e+00 : f32
    %387 = vector.broadcast %cst_121 : f32 to vector<2x288xf32>
    %388 = arith.addf %387, %386 : vector<2x288xf32>
    %389 = arith.divf %387, %388 : vector<2x288xf32>
    %390 = vector.extract_strided_slice %383 {offsets = [0, 288], sizes = [2, 96], strides = [1, 1]} : vector<2x384xf32> to vector<2x96xf32>
    %391 = math.tanh %390 : vector<2x96xf32>
    %392 = vector.extract_strided_slice %389 {offsets = [0, 0], sizes = [2, 96], strides = [1, 1]} : vector<2x288xf32> to vector<2x96xf32>
    %393 = vector.extract_strided_slice %389 {offsets = [0, 96], sizes = [2, 96], strides = [1, 1]} : vector<2x288xf32> to vector<2x96xf32>
    %394 = vector.extract_strided_slice %389 {offsets = [0, 192], sizes = [2, 96], strides = [1, 1]} : vector<2x288xf32> to vector<2x96xf32>
    %395 = arith.mulf %393, %354 : vector<2x96xf32>
    %396 = arith.mulf %392, %391 : vector<2x96xf32>
    %397 = arith.addf %395, %396 : vector<2x96xf32>
    %398 = math.tanh %397 : vector<2x96xf32>
    %399 = arith.mulf %394, %398 : vector<2x96xf32>
    %400 = vector.extract_strided_slice %136 {offsets = [6, 0], sizes = [1, 384], strides = [1, 1]} : vector<16x384xf32> to vector<1x384xf32>
    %401 = vector.extract_strided_slice %136 {offsets = [14, 0], sizes = [1, 384], strides = [1, 1]} : vector<16x384xf32> to vector<1x384xf32>
    %402 = tpu.concatenate %400, %401 in 0 : vector<1x384xf32>, vector<1x384xf32> -> vector<2x384xf32>
    %c0_122 = arith.constant 0 : index
    %c0_123 = arith.constant 0 : index
    %403 = vector.load %arg10[%c0_122, %c0_123] : memref<96x384xf32, #tpu.memory_space<vmem>>, vector<96x384xf32>
    %cst_124 = arith.constant dense<0.000000e+00> : vector<2x384xf32>
    %404 = tpu.matmul %378, %403, %cst_124 {dimension_numbers = #tpu.dot_dimension_numbers<[1], [0], [0], [1], [0, 0, 1, 1], [], []>} : vector<2x96xf32>, vector<96x384xf32>, vector<2x384xf32> -> vector<2x384xf32>
    %405 = arith.addf %402, %404 : vector<2x384xf32>
    %406 = vector.extract_strided_slice %405 {offsets = [0, 0], sizes = [2, 288], strides = [1, 1]} : vector<2x384xf32> to vector<2x288xf32>
    %407 = arith.negf %406 : vector<2x288xf32>
    %408 = math.exp %407 : vector<2x288xf32>
    %cst_125 = arith.constant 1.000000e+00 : f32
    %409 = vector.broadcast %cst_125 : f32 to vector<2x288xf32>
    %410 = arith.addf %409, %408 : vector<2x288xf32>
    %411 = arith.divf %409, %410 : vector<2x288xf32>
    %412 = vector.extract_strided_slice %405 {offsets = [0, 288], sizes = [2, 96], strides = [1, 1]} : vector<2x384xf32> to vector<2x96xf32>
    %413 = math.tanh %412 : vector<2x96xf32>
    %414 = vector.extract_strided_slice %411 {offsets = [0, 0], sizes = [2, 96], strides = [1, 1]} : vector<2x288xf32> to vector<2x96xf32>
    %415 = vector.extract_strided_slice %411 {offsets = [0, 96], sizes = [2, 96], strides = [1, 1]} : vector<2x288xf32> to vector<2x96xf32>
    %416 = vector.extract_strided_slice %411 {offsets = [0, 192], sizes = [2, 96], strides = [1, 1]} : vector<2x288xf32> to vector<2x96xf32>
    %417 = arith.mulf %415, %376 : vector<2x96xf32>
    %418 = arith.mulf %414, %413 : vector<2x96xf32>
    %419 = arith.addf %417, %418 : vector<2x96xf32>
    %420 = math.tanh %419 : vector<2x96xf32>
    %421 = arith.mulf %416, %420 : vector<2x96xf32>
    %422 = tpu.concatenate %421, %399 in 1 : vector<2x96xf32>, vector<2x96xf32> -> vector<2x192xf32>
    %c0_126 = arith.constant 0 : index
    %c0_127 = arith.constant 0 : index
    %423 = vector.load %arg12[%c0_126, %c0_127] : memref<192x384xf32, #tpu.memory_space<vmem>>, vector<192x384xf32>
    %cst_128 = arith.constant dense<0.000000e+00> : vector<2x384xf32>
    %424 = tpu.matmul %422, %423, %cst_128 {dimension_numbers = #tpu.dot_dimension_numbers<[1], [0], [0], [1], [0, 0, 1, 1], [], []>} : vector<2x192xf32>, vector<192x384xf32>, vector<2x384xf32> -> vector<2x384xf32>
    %425 = vector.broadcast %137 : vector<1x384xf32> to vector<2x384xf32>
    %426 = arith.addf %424, %425 : vector<2x384xf32>
    %427 = vector.extract_strided_slice %426 {offsets = [0, 0], sizes = [2, 288], strides = [1, 1]} : vector<2x384xf32> to vector<2x288xf32>
    %428 = arith.negf %427 : vector<2x288xf32>
    %429 = math.exp %428 : vector<2x288xf32>
    %cst_129 = arith.constant 1.000000e+00 : f32
    %430 = vector.broadcast %cst_129 : f32 to vector<2x288xf32>
    %431 = arith.addf %430, %429 : vector<2x288xf32>
    %432 = arith.divf %430, %431 : vector<2x288xf32>
    %433 = vector.extract_strided_slice %426 {offsets = [0, 288], sizes = [2, 96], strides = [1, 1]} : vector<2x384xf32> to vector<2x96xf32>
    %434 = math.tanh %433 : vector<2x96xf32>
    %435 = vector.extract_strided_slice %432 {offsets = [0, 0], sizes = [2, 96], strides = [1, 1]} : vector<2x288xf32> to vector<2x96xf32>
    %436 = vector.extract_strided_slice %432 {offsets = [0, 96], sizes = [2, 96], strides = [1, 1]} : vector<2x288xf32> to vector<2x96xf32>
    %437 = vector.extract_strided_slice %432 {offsets = [0, 192], sizes = [2, 96], strides = [1, 1]} : vector<2x288xf32> to vector<2x96xf32>
    %438 = arith.mulf %436, %397 : vector<2x96xf32>
    %439 = arith.mulf %435, %434 : vector<2x96xf32>
    %440 = arith.addf %438, %439 : vector<2x96xf32>
    %441 = math.tanh %440 : vector<2x96xf32>
    %442 = arith.mulf %437, %441 : vector<2x96xf32>
    %443 = vector.extract_strided_slice %136 {offsets = [7, 0], sizes = [1, 384], strides = [1, 1]} : vector<16x384xf32> to vector<1x384xf32>
    %444 = vector.extract_strided_slice %136 {offsets = [15, 0], sizes = [1, 384], strides = [1, 1]} : vector<16x384xf32> to vector<1x384xf32>
    %445 = tpu.concatenate %443, %444 in 0 : vector<1x384xf32>, vector<1x384xf32> -> vector<2x384xf32>
    %c0_130 = arith.constant 0 : index
    %c0_131 = arith.constant 0 : index
    %446 = vector.load %arg10[%c0_130, %c0_131] : memref<96x384xf32, #tpu.memory_space<vmem>>, vector<96x384xf32>
    %cst_132 = arith.constant dense<0.000000e+00> : vector<2x384xf32>
    %447 = tpu.matmul %421, %446, %cst_132 {dimension_numbers = #tpu.dot_dimension_numbers<[1], [0], [0], [1], [0, 0, 1, 1], [], []>} : vector<2x96xf32>, vector<96x384xf32>, vector<2x384xf32> -> vector<2x384xf32>
    %448 = arith.addf %445, %447 : vector<2x384xf32>
    %449 = vector.extract_strided_slice %448 {offsets = [0, 0], sizes = [2, 288], strides = [1, 1]} : vector<2x384xf32> to vector<2x288xf32>
    %450 = arith.negf %449 : vector<2x288xf32>
    %451 = math.exp %450 : vector<2x288xf32>
    %cst_133 = arith.constant 1.000000e+00 : f32
    %452 = vector.broadcast %cst_133 : f32 to vector<2x288xf32>
    %453 = arith.addf %452, %451 : vector<2x288xf32>
    %454 = arith.divf %452, %453 : vector<2x288xf32>
    %455 = vector.extract_strided_slice %448 {offsets = [0, 288], sizes = [2, 96], strides = [1, 1]} : vector<2x384xf32> to vector<2x96xf32>
    %456 = math.tanh %455 : vector<2x96xf32>
    %457 = vector.extract_strided_slice %454 {offsets = [0, 0], sizes = [2, 96], strides = [1, 1]} : vector<2x288xf32> to vector<2x96xf32>
    %458 = vector.extract_strided_slice %454 {offsets = [0, 96], sizes = [2, 96], strides = [1, 1]} : vector<2x288xf32> to vector<2x96xf32>
    %459 = vector.extract_strided_slice %454 {offsets = [0, 192], sizes = [2, 96], strides = [1, 1]} : vector<2x288xf32> to vector<2x96xf32>
    %460 = arith.mulf %458, %419 : vector<2x96xf32>
    %461 = arith.mulf %457, %456 : vector<2x96xf32>
    %462 = arith.addf %460, %461 : vector<2x96xf32>
    %463 = math.tanh %462 : vector<2x96xf32>
    %464 = arith.mulf %459, %463 : vector<2x96xf32>
    %465 = tpu.concatenate %464, %442 in 1 : vector<2x96xf32>, vector<2x96xf32> -> vector<2x192xf32>
    %c0_134 = arith.constant 0 : index
    %c0_135 = arith.constant 0 : index
    %466 = vector.load %arg12[%c0_134, %c0_135] : memref<192x384xf32, #tpu.memory_space<vmem>>, vector<192x384xf32>
    %cst_136 = arith.constant dense<0.000000e+00> : vector<2x384xf32>
    %467 = tpu.matmul %465, %466, %cst_136 {dimension_numbers = #tpu.dot_dimension_numbers<[1], [0], [0], [1], [0, 0, 1, 1], [], []>} : vector<2x192xf32>, vector<192x384xf32>, vector<2x384xf32> -> vector<2x384xf32>
    %468 = vector.broadcast %137 : vector<1x384xf32> to vector<2x384xf32>
    %469 = arith.addf %467, %468 : vector<2x384xf32>
    %470 = vector.extract_strided_slice %469 {offsets = [0, 0], sizes = [2, 288], strides = [1, 1]} : vector<2x384xf32> to vector<2x288xf32>
    %471 = arith.negf %470 : vector<2x288xf32>
    %472 = math.exp %471 : vector<2x288xf32>
    %cst_137 = arith.constant 1.000000e+00 : f32
    %473 = vector.broadcast %cst_137 : f32 to vector<2x288xf32>
    %474 = arith.addf %473, %472 : vector<2x288xf32>
    %475 = arith.divf %473, %474 : vector<2x288xf32>
    %476 = vector.extract_strided_slice %469 {offsets = [0, 288], sizes = [2, 96], strides = [1, 1]} : vector<2x384xf32> to vector<2x96xf32>
    %477 = math.tanh %476 : vector<2x96xf32>
    %478 = vector.extract_strided_slice %475 {offsets = [0, 0], sizes = [2, 96], strides = [1, 1]} : vector<2x288xf32> to vector<2x96xf32>
    %479 = vector.extract_strided_slice %475 {offsets = [0, 96], sizes = [2, 96], strides = [1, 1]} : vector<2x288xf32> to vector<2x96xf32>
    %480 = vector.extract_strided_slice %475 {offsets = [0, 192], sizes = [2, 96], strides = [1, 1]} : vector<2x288xf32> to vector<2x96xf32>
    %481 = arith.mulf %479, %440 : vector<2x96xf32>
    %482 = arith.mulf %478, %477 : vector<2x96xf32>
    %483 = arith.addf %481, %482 : vector<2x96xf32>
    %484 = math.tanh %483 : vector<2x96xf32>
    %485 = arith.mulf %480, %484 : vector<2x96xf32>
    %486 = vector.shape_cast %184 : vector<2x96xf32> to vector<2x1x96xf32>
    %487 = vector.shape_cast %227 : vector<2x96xf32> to vector<2x1x96xf32>
    %488 = vector.shape_cast %270 : vector<2x96xf32> to vector<2x1x96xf32>
    %489 = vector.shape_cast %313 : vector<2x96xf32> to vector<2x1x96xf32>
    %490 = vector.shape_cast %356 : vector<2x96xf32> to vector<2x1x96xf32>
    %491 = vector.shape_cast %399 : vector<2x96xf32> to vector<2x1x96xf32>
    %492 = vector.shape_cast %442 : vector<2x96xf32> to vector<2x1x96xf32>
    %493 = vector.shape_cast %485 : vector<2x96xf32> to vector<2x1x96xf32>
    %494 = tpu.concatenate %486, %487, %488, %489, %490, %491, %492, %493 in 1 : vector<2x1x96xf32>, vector<2x1x96xf32>, vector<2x1x96xf32>, vector<2x1x96xf32>, vector<2x1x96xf32>, vector<2x1x96xf32>, vector<2x1x96xf32>, vector<2x1x96xf32> -> vector<2x8x96xf32>
    %c0_138 = arith.constant 0 : index
    %c0_139 = arith.constant 0 : index
    %495 = vector.load %arg14[%c0_138, %c0_139] : memref<1x96xf32, #tpu.memory_space<vmem>>, vector<1x96xf32>
    %496 = vector.shape_cast %495 : vector<1x96xf32> to vector<1x1x96xf32>
    %497 = vector.broadcast %496 : vector<1x1x96xf32> to vector<2x8x96xf32>
    %498 = arith.mulf %494, %497 : vector<2x8x96xf32>
    %499 = vector.extract_strided_slice %498 {offsets = [0, 0, 0], sizes = [2, 8, 32], strides = [1, 1, 1]} : vector<2x8x96xf32> to vector<2x8x32xf32>
    %cst_140 = arith.constant dense<0.000000e+00> : vector<2x8xf32>
    %500 = vector.multi_reduction <add>, %499, %cst_140 [2] : vector<2x8x32xf32> to vector<2x8xf32>
    %501 = vector.shape_cast %500 : vector<2x8xf32> to vector<2x8x1xf32>
    %cst_141 = arith.constant dense<0xFF800000> : vector<2x1xf32>
    %502 = vector.multi_reduction <maximumf>, %501, %cst_141 [1] : vector<2x8x1xf32> to vector<2x1xf32>
    %503 = vector.shape_cast %502 : vector<2x1xf32> to vector<2x1x1xf32>
    %504 = vector.broadcast %503 : vector<2x1x1xf32> to vector<2x8x1xf32>
    %505 = arith.subf %501, %504 : vector<2x8x1xf32>
    %506 = math.exp %505 : vector<2x8x1xf32>
    %cst_142 = arith.constant dense<0.000000e+00> : vector<2x1xf32>
    %507 = vector.multi_reduction <add>, %506, %cst_142 [1] : vector<2x8x1xf32> to vector<2x1xf32>
    %508 = vector.shape_cast %507 : vector<2x1xf32> to vector<2x1x1xf32>
    %509 = tpu.reciprocal %508 {approx = true} : vector<2x1x1xf32> -> vector<2x1x1xf32>
    %510 = vector.broadcast %509 : vector<2x1x1xf32> to vector<2x8x1xf32>
    %511 = arith.mulf %506, %510 : vector<2x8x1xf32>
    %512 = vector.extract_strided_slice %494 {offsets = [0, 0, 0], sizes = [2, 8, 32], strides = [1, 1, 1]} : vector<2x8x96xf32> to vector<2x8x32xf32>
    %513 = vector.broadcast %511 : vector<2x8x1xf32> to vector<2x8x32xf32>
    %514 = arith.mulf %513, %512 : vector<2x8x32xf32>
    %cst_143 = arith.constant dense<0.000000e+00> : vector<2x32xf32>
    %515 = vector.multi_reduction <add>, %514, %cst_143 [1] : vector<2x8x32xf32> to vector<2x32xf32>
    %516 = vector.extract_strided_slice %498 {offsets = [0, 0, 32], sizes = [2, 8, 32], strides = [1, 1, 1]} : vector<2x8x96xf32> to vector<2x8x32xf32>
    %cst_144 = arith.constant dense<0.000000e+00> : vector<2x8xf32>
    %517 = vector.multi_reduction <add>, %516, %cst_144 [2] : vector<2x8x32xf32> to vector<2x8xf32>
    %518 = vector.shape_cast %517 : vector<2x8xf32> to vector<2x8x1xf32>
    %cst_145 = arith.constant dense<0xFF800000> : vector<2x1xf32>
    %519 = vector.multi_reduction <maximumf>, %518, %cst_145 [1] : vector<2x8x1xf32> to vector<2x1xf32>
    %520 = vector.shape_cast %519 : vector<2x1xf32> to vector<2x1x1xf32>
    %521 = vector.broadcast %520 : vector<2x1x1xf32> to vector<2x8x1xf32>
    %522 = arith.subf %518, %521 : vector<2x8x1xf32>
    %523 = math.exp %522 : vector<2x8x1xf32>
    %cst_146 = arith.constant dense<0.000000e+00> : vector<2x1xf32>
    %524 = vector.multi_reduction <add>, %523, %cst_146 [1] : vector<2x8x1xf32> to vector<2x1xf32>
    %525 = vector.shape_cast %524 : vector<2x1xf32> to vector<2x1x1xf32>
    %526 = tpu.reciprocal %525 {approx = true} : vector<2x1x1xf32> -> vector<2x1x1xf32>
    %527 = vector.broadcast %526 : vector<2x1x1xf32> to vector<2x8x1xf32>
    %528 = arith.mulf %523, %527 : vector<2x8x1xf32>
    %529 = vector.extract_strided_slice %494 {offsets = [0, 0, 32], sizes = [2, 8, 32], strides = [1, 1, 1]} : vector<2x8x96xf32> to vector<2x8x32xf32>
    %530 = vector.broadcast %528 : vector<2x8x1xf32> to vector<2x8x32xf32>
    %531 = arith.mulf %530, %529 : vector<2x8x32xf32>
    %cst_147 = arith.constant dense<0.000000e+00> : vector<2x32xf32>
    %532 = vector.multi_reduction <add>, %531, %cst_147 [1] : vector<2x8x32xf32> to vector<2x32xf32>
    %533 = vector.extract_strided_slice %498 {offsets = [0, 0, 64], sizes = [2, 8, 32], strides = [1, 1, 1]} : vector<2x8x96xf32> to vector<2x8x32xf32>
    %cst_148 = arith.constant dense<0.000000e+00> : vector<2x8xf32>
    %534 = vector.multi_reduction <add>, %533, %cst_148 [2] : vector<2x8x32xf32> to vector<2x8xf32>
    %535 = vector.shape_cast %534 : vector<2x8xf32> to vector<2x8x1xf32>
    %cst_149 = arith.constant dense<0xFF800000> : vector<2x1xf32>
    %536 = vector.multi_reduction <maximumf>, %535, %cst_149 [1] : vector<2x8x1xf32> to vector<2x1xf32>
    %537 = vector.shape_cast %536 : vector<2x1xf32> to vector<2x1x1xf32>
    %538 = vector.broadcast %537 : vector<2x1x1xf32> to vector<2x8x1xf32>
    %539 = arith.subf %535, %538 : vector<2x8x1xf32>
    %540 = math.exp %539 : vector<2x8x1xf32>
    %cst_150 = arith.constant dense<0.000000e+00> : vector<2x1xf32>
    %541 = vector.multi_reduction <add>, %540, %cst_150 [1] : vector<2x8x1xf32> to vector<2x1xf32>
    %542 = vector.shape_cast %541 : vector<2x1xf32> to vector<2x1x1xf32>
    %543 = tpu.reciprocal %542 {approx = true} : vector<2x1x1xf32> -> vector<2x1x1xf32>
    %544 = vector.broadcast %543 : vector<2x1x1xf32> to vector<2x8x1xf32>
    %545 = arith.mulf %540, %544 : vector<2x8x1xf32>
    %546 = vector.extract_strided_slice %494 {offsets = [0, 0, 64], sizes = [2, 8, 32], strides = [1, 1, 1]} : vector<2x8x96xf32> to vector<2x8x32xf32>
    %547 = vector.broadcast %545 : vector<2x8x1xf32> to vector<2x8x32xf32>
    %548 = arith.mulf %547, %546 : vector<2x8x32xf32>
    %cst_151 = arith.constant dense<0.000000e+00> : vector<2x32xf32>
    %549 = vector.multi_reduction <add>, %548, %cst_151 [1] : vector<2x8x32xf32> to vector<2x32xf32>
    %550 = tpu.concatenate %515, %532, %549 in 1 : vector<2x32xf32>, vector<2x32xf32>, vector<2x32xf32> -> vector<2x96xf32>
    %c0_152 = arith.constant 0 : index
    %c0_153 = arith.constant 0 : index
    %551 = vector.load %arg15[%c0_152, %c0_153] : memref<96x48xf32, #tpu.memory_space<vmem>>, vector<96x48xf32>
    %cst_154 = arith.constant dense<0.000000e+00> : vector<2x48xf32>
    %552 = tpu.matmul %550, %551, %cst_154 {dimension_numbers = #tpu.dot_dimension_numbers<[1], [0], [0], [1], [0, 0, 1, 1], [], []>} : vector<2x96xf32>, vector<96x48xf32>, vector<2x48xf32> -> vector<2x48xf32>
    %c0_155 = arith.constant 0 : index
    %c0_156 = arith.constant 0 : index
    %553 = vector.load %arg16[%c0_155, %c0_156] : memref<1x48xf32, #tpu.memory_space<vmem>>, vector<1x48xf32>
    %554 = vector.broadcast %553 : vector<1x48xf32> to vector<2x48xf32>
    %555 = arith.addf %552, %554 : vector<2x48xf32>
    %556 = vector.extract_strided_slice %555 {offsets = [0, 0], sizes = [2, 16], strides = [1, 1]} : vector<2x48xf32> to vector<2x16xf32>
    %557 = vector.extract_strided_slice %555 {offsets = [0, 16], sizes = [2, 16], strides = [1, 1]} : vector<2x48xf32> to vector<2x16xf32>
    %558 = vector.extract_strided_slice %555 {offsets = [0, 32], sizes = [2, 16], strides = [1, 1]} : vector<2x48xf32> to vector<2x16xf32>
    %559 = arith.addf %556, %558 : vector<2x16xf32>
    %560 = arith.addf %557, %558 : vector<2x16xf32>
    %561 = tpu.concatenate %559, %559, %560, %560 in 1 : vector<2x16xf32>, vector<2x16xf32>, vector<2x16xf32>, vector<2x16xf32> -> vector<2x64xf32>
    %c0_157 = arith.constant 0 : index
    %c0_158 = arith.constant 0 : index
    %562 = vector.load %arg17[%c0_157, %c0_158] : memref<64x64xf32, #tpu.memory_space<vmem>>, vector<64x64xf32>
    %cst_159 = arith.constant dense<0.000000e+00> : vector<2x64xf32>
    %563 = tpu.matmul %561, %562, %cst_159 {dimension_numbers = #tpu.dot_dimension_numbers<[1], [0], [0], [1], [0, 0, 1, 1], [], []>} : vector<2x64xf32>, vector<64x64xf32>, vector<2x64xf32> -> vector<2x64xf32>
    %c0_160 = arith.constant 0 : index
    %c0_161 = arith.constant 0 : index
    %564 = vector.load %arg18[%c0_160, %c0_161] : memref<1x64xf32, #tpu.memory_space<vmem>>, vector<1x64xf32>
    %565 = vector.broadcast %564 : vector<1x64xf32> to vector<2x64xf32>
    %566 = arith.addf %563, %565 : vector<2x64xf32>
    %cst_162 = arith.constant 0.000000e+00 : f32
    %567 = vector.broadcast %cst_162 : f32 to vector<2x64xf32>
    %568 = arith.maximumf %566, %567 : vector<2x64xf32>
    %569 = tpu.concatenate %556, %556, %557, %557 in 1 : vector<2x16xf32>, vector<2x16xf32>, vector<2x16xf32>, vector<2x16xf32> -> vector<2x64xf32>
    %570 = arith.addf %569, %568 : vector<2x64xf32>
    %c0_163 = arith.constant 0 : index
    %c0_164 = arith.constant 0 : index
    %571 = vector.load %arg19[%c0_163, %c0_164] : memref<64x64xf32, #tpu.memory_space<vmem>>, vector<64x64xf32>
    %cst_165 = arith.constant dense<0.000000e+00> : vector<2x64xf32>
    %572 = tpu.matmul %570, %571, %cst_165 {dimension_numbers = #tpu.dot_dimension_numbers<[1], [0], [0], [1], [0, 0, 1, 1], [], []>} : vector<2x64xf32>, vector<64x64xf32>, vector<2x64xf32> -> vector<2x64xf32>
    %c0_166 = arith.constant 0 : index
    %c0_167 = arith.constant 0 : index
    %573 = vector.load %arg20[%c0_166, %c0_167] : memref<1x64xf32, #tpu.memory_space<vmem>>, vector<1x64xf32>
    %574 = vector.broadcast %573 : vector<1x64xf32> to vector<2x64xf32>
    %575 = arith.addf %572, %574 : vector<2x64xf32>
    %cst_168 = arith.constant 0.000000e+00 : f32
    %576 = vector.broadcast %cst_168 : f32 to vector<2x64xf32>
    %577 = arith.maximumf %575, %576 : vector<2x64xf32>
    %578 = vector.extract_strided_slice %123 {offsets = [0, 0], sizes = [1, 16], strides = [1, 1]} : vector<16x16xf32> to vector<1x16xf32>
    %579 = vector.extract_strided_slice %123 {offsets = [1, 0], sizes = [1, 16], strides = [1, 1]} : vector<16x16xf32> to vector<1x16xf32>
    %580 = vector.extract_strided_slice %123 {offsets = [2, 0], sizes = [1, 16], strides = [1, 1]} : vector<16x16xf32> to vector<1x16xf32>
    %581 = vector.extract_strided_slice %123 {offsets = [3, 0], sizes = [1, 16], strides = [1, 1]} : vector<16x16xf32> to vector<1x16xf32>
    %582 = vector.extract_strided_slice %123 {offsets = [4, 0], sizes = [1, 16], strides = [1, 1]} : vector<16x16xf32> to vector<1x16xf32>
    %583 = vector.extract_strided_slice %123 {offsets = [5, 0], sizes = [1, 16], strides = [1, 1]} : vector<16x16xf32> to vector<1x16xf32>
    %584 = vector.extract_strided_slice %123 {offsets = [6, 0], sizes = [1, 16], strides = [1, 1]} : vector<16x16xf32> to vector<1x16xf32>
    %585 = vector.extract_strided_slice %123 {offsets = [7, 0], sizes = [1, 16], strides = [1, 1]} : vector<16x16xf32> to vector<1x16xf32>
    %586 = tpu.concatenate %578, %579, %580, %581, %582, %583, %584, %585 in 1 : vector<1x16xf32>, vector<1x16xf32>, vector<1x16xf32>, vector<1x16xf32>, vector<1x16xf32>, vector<1x16xf32>, vector<1x16xf32>, vector<1x16xf32> -> vector<1x128xf32>
    %587 = vector.extract_strided_slice %123 {offsets = [8, 0], sizes = [1, 16], strides = [1, 1]} : vector<16x16xf32> to vector<1x16xf32>
    %588 = vector.extract_strided_slice %123 {offsets = [9, 0], sizes = [1, 16], strides = [1, 1]} : vector<16x16xf32> to vector<1x16xf32>
    %589 = vector.extract_strided_slice %123 {offsets = [10, 0], sizes = [1, 16], strides = [1, 1]} : vector<16x16xf32> to vector<1x16xf32>
    %590 = vector.extract_strided_slice %123 {offsets = [11, 0], sizes = [1, 16], strides = [1, 1]} : vector<16x16xf32> to vector<1x16xf32>
    %591 = vector.extract_strided_slice %123 {offsets = [12, 0], sizes = [1, 16], strides = [1, 1]} : vector<16x16xf32> to vector<1x16xf32>
    %592 = vector.extract_strided_slice %123 {offsets = [13, 0], sizes = [1, 16], strides = [1, 1]} : vector<16x16xf32> to vector<1x16xf32>
    %593 = vector.extract_strided_slice %123 {offsets = [14, 0], sizes = [1, 16], strides = [1, 1]} : vector<16x16xf32> to vector<1x16xf32>
    %594 = vector.extract_strided_slice %123 {offsets = [15, 0], sizes = [1, 16], strides = [1, 1]} : vector<16x16xf32> to vector<1x16xf32>
    %595 = tpu.concatenate %587, %588, %589, %590, %591, %592, %593, %594 in 1 : vector<1x16xf32>, vector<1x16xf32>, vector<1x16xf32>, vector<1x16xf32>, vector<1x16xf32>, vector<1x16xf32>, vector<1x16xf32>, vector<1x16xf32> -> vector<1x128xf32>
    %596 = tpu.concatenate %586, %595 in 0 : vector<1x128xf32>, vector<1x128xf32> -> vector<2x128xf32>
    %597 = vector.extract_strided_slice %124 {offsets = [0, 0], sizes = [1, 16], strides = [1, 1]} : vector<16x16xf32> to vector<1x16xf32>
    %598 = vector.extract_strided_slice %124 {offsets = [1, 0], sizes = [1, 16], strides = [1, 1]} : vector<16x16xf32> to vector<1x16xf32>
    %599 = vector.extract_strided_slice %124 {offsets = [2, 0], sizes = [1, 16], strides = [1, 1]} : vector<16x16xf32> to vector<1x16xf32>
    %600 = vector.extract_strided_slice %124 {offsets = [3, 0], sizes = [1, 16], strides = [1, 1]} : vector<16x16xf32> to vector<1x16xf32>
    %601 = vector.extract_strided_slice %124 {offsets = [4, 0], sizes = [1, 16], strides = [1, 1]} : vector<16x16xf32> to vector<1x16xf32>
    %602 = vector.extract_strided_slice %124 {offsets = [5, 0], sizes = [1, 16], strides = [1, 1]} : vector<16x16xf32> to vector<1x16xf32>
    %603 = vector.extract_strided_slice %124 {offsets = [6, 0], sizes = [1, 16], strides = [1, 1]} : vector<16x16xf32> to vector<1x16xf32>
    %604 = vector.extract_strided_slice %124 {offsets = [7, 0], sizes = [1, 16], strides = [1, 1]} : vector<16x16xf32> to vector<1x16xf32>
    %605 = tpu.concatenate %597, %598, %599, %600, %601, %602, %603, %604 in 1 : vector<1x16xf32>, vector<1x16xf32>, vector<1x16xf32>, vector<1x16xf32>, vector<1x16xf32>, vector<1x16xf32>, vector<1x16xf32>, vector<1x16xf32> -> vector<1x128xf32>
    %606 = vector.extract_strided_slice %124 {offsets = [8, 0], sizes = [1, 16], strides = [1, 1]} : vector<16x16xf32> to vector<1x16xf32>
    %607 = vector.extract_strided_slice %124 {offsets = [9, 0], sizes = [1, 16], strides = [1, 1]} : vector<16x16xf32> to vector<1x16xf32>
    %608 = vector.extract_strided_slice %124 {offsets = [10, 0], sizes = [1, 16], strides = [1, 1]} : vector<16x16xf32> to vector<1x16xf32>
    %609 = vector.extract_strided_slice %124 {offsets = [11, 0], sizes = [1, 16], strides = [1, 1]} : vector<16x16xf32> to vector<1x16xf32>
    %610 = vector.extract_strided_slice %124 {offsets = [12, 0], sizes = [1, 16], strides = [1, 1]} : vector<16x16xf32> to vector<1x16xf32>
    %611 = vector.extract_strided_slice %124 {offsets = [13, 0], sizes = [1, 16], strides = [1, 1]} : vector<16x16xf32> to vector<1x16xf32>
    %612 = vector.extract_strided_slice %124 {offsets = [14, 0], sizes = [1, 16], strides = [1, 1]} : vector<16x16xf32> to vector<1x16xf32>
    %613 = vector.extract_strided_slice %124 {offsets = [15, 0], sizes = [1, 16], strides = [1, 1]} : vector<16x16xf32> to vector<1x16xf32>
    %614 = tpu.concatenate %606, %607, %608, %609, %610, %611, %612, %613 in 1 : vector<1x16xf32>, vector<1x16xf32>, vector<1x16xf32>, vector<1x16xf32>, vector<1x16xf32>, vector<1x16xf32>, vector<1x16xf32>, vector<1x16xf32> -> vector<1x128xf32>
    %615 = tpu.concatenate %605, %614 in 0 : vector<1x128xf32>, vector<1x128xf32> -> vector<2x128xf32>
    %cst_169 = arith.constant 0.000000e+00 : f32
    %616 = vector.broadcast %cst_169 : f32 to vector<2x64xf32>
    %617 = tpu.concatenate %577, %616 in 1 : vector<2x64xf32>, vector<2x64xf32> -> vector<2x128xf32>
    %618 = tpu.concatenate %596, %615, %617 in 1 : vector<2x128xf32>, vector<2x128xf32>, vector<2x128xf32> -> vector<2x384xf32>
    %c0_170 = arith.constant 0 : index
    %c0_171 = arith.constant 0 : index
    %619 = vector.load %arg21[%c0_170, %c0_171] : memref<2x384xf32, #tpu.memory_space<vmem>>, vector<2x384xf32>
    tpu.vector_store %arg21[%c0_170, %c0_171], %618 {strides = array<i32>} : memref<2x384xf32, #tpu.memory_space<vmem>>, vector<2x384xf32>,
    return
  }
  func.func @transform_0(%arg0: i32) -> (i32, i32, i32, i32) {
    %c0_i32 = arith.constant 0 : i32
    %c0_i32_0 = arith.constant 0 : i32
    %c0_i32_1 = arith.constant 0 : i32
    %c0_i32_2 = arith.constant 0 : i32
    return %arg0, %c0_i32, %c0_i32_0, %c0_i32_1 : i32, i32, i32, i32
  }
  func.func @transform_1(%arg0: i32) -> (i32, i32, i32, i32) {
    %c0_i32 = arith.constant 0 : i32
    %c0_i32_0 = arith.constant 0 : i32
    %c0_i32_1 = arith.constant 0 : i32
    %c0_i32_2 = arith.constant 0 : i32
    return %arg0, %c0_i32, %c0_i32_0, %c0_i32_1 : i32, i32, i32, i32
  }
  func.func @transform_2(%arg0: i32) -> (i32, i32, i32, i32) {
    %c0_i32 = arith.constant 0 : i32
    %c0_i32_0 = arith.constant 0 : i32
    %c0_i32_1 = arith.constant 0 : i32
    %c0_i32_2 = arith.constant 0 : i32
    return %arg0, %c0_i32, %c0_i32_0, %c0_i32_1 : i32, i32, i32, i32
  }
  func.func @transform_3(%arg0: i32) -> (i32, i32, i32, i32) {
    %c0_i32 = arith.constant 0 : i32
    %c0_i32_0 = arith.constant 0 : i32
    %c0_i32_1 = arith.constant 0 : i32
    %c0_i32_2 = arith.constant 0 : i32
    return %arg0, %c0_i32, %c0_i32_0, %c0_i32_1 : i32, i32, i32, i32
  }
  func.func @transform_4(%arg0: i32) -> (i32, i32) {
    %c0_i32 = arith.constant 0 : i32
    %c0_i32_0 = arith.constant 0 : i32
    %c0_i32_1 = arith.constant 0 : i32
    return %c0_i32, %c0_i32_0 : i32, i32
  }
  func.func @transform_5(%arg0: i32) -> (i32, i32) {
    %c0_i32 = arith.constant 0 : i32
    %c0_i32_0 = arith.constant 0 : i32
    %c0_i32_1 = arith.constant 0 : i32
    return %c0_i32, %c0_i32_0 : i32, i32
  }
  func.func @transform_6(%arg0: i32) -> (i32, i32) {
    %c0_i32 = arith.constant 0 : i32
    %c0_i32_0 = arith.constant 0 : i32
    %c0_i32_1 = arith.constant 0 : i32
    return %c0_i32, %c0_i32_0 : i32, i32
  }
  func.func @transform_7(%arg0: i32) -> (i32, i32) {
    %c0_i32 = arith.constant 0 : i32
    %c0_i32_0 = arith.constant 0 : i32
    %c0_i32_1 = arith.constant 0 : i32
    return %c0_i32, %c0_i32_0 : i32, i32
  }
  func.func @transform_8(%arg0: i32) -> (i32, i32) {
    %c0_i32 = arith.constant 0 : i32
    %c0_i32_0 = arith.constant 0 : i32
    %c0_i32_1 = arith.constant 0 : i32
    return %c0_i32, %c0_i32_0 : i32, i32
  }
  func.func @transform_9(%arg0: i32) -> (i32, i32) {
    %c0_i32 = arith.constant 0 : i32
    %c0_i32_0 = arith.constant 0 : i32
    %c0_i32_1 = arith.constant 0 : i32
    return %c0_i32, %c0_i32_0 : i32, i32
  }
  func.func @transform_10(%arg0: i32) -> (i32, i32) {
    %c0_i32 = arith.constant 0 : i32
    %c0_i32_0 = arith.constant 0 : i32
    %c0_i32_1 = arith.constant 0 : i32
    return %c0_i32, %c0_i32_0 : i32, i32
  }
  func.func @transform_11(%arg0: i32) -> (i32, i32) {
    %c0_i32 = arith.constant 0 : i32
    %c0_i32_0 = arith.constant 0 : i32
    %c0_i32_1 = arith.constant 0 : i32
    return %c0_i32, %c0_i32_0 : i32, i32
  }
  func.func @transform_12(%arg0: i32) -> (i32, i32) {
    %c0_i32 = arith.constant 0 : i32
    %c0_i32_0 = arith.constant 0 : i32
    %c0_i32_1 = arith.constant 0 : i32
    return %c0_i32, %c0_i32_0 : i32, i32
  }
  func.func @transform_13(%arg0: i32) -> (i32, i32) {
    %c0_i32 = arith.constant 0 : i32
    %c0_i32_0 = arith.constant 0 : i32
    %c0_i32_1 = arith.constant 0 : i32
    return %c0_i32, %c0_i32_0 : i32, i32
  }
  func.func @transform_14(%arg0: i32) -> (i32, i32) {
    %c0_i32 = arith.constant 0 : i32
    %c0_i32_0 = arith.constant 0 : i32
    %c0_i32_1 = arith.constant 0 : i32
    return %c0_i32, %c0_i32_0 : i32, i32
  }
  func.func @transform_15(%arg0: i32) -> (i32, i32) {
    %c0_i32 = arith.constant 0 : i32
    %c0_i32_0 = arith.constant 0 : i32
    %c0_i32_1 = arith.constant 0 : i32
    return %c0_i32, %c0_i32_0 : i32, i32
  }
  func.func @transform_16(%arg0: i32) -> (i32, i32) {
    %c0_i32 = arith.constant 0 : i32
    %c0_i32_0 = arith.constant 0 : i32
    %c0_i32_1 = arith.constant 0 : i32
    return %c0_i32, %c0_i32_0 : i32, i32
  }
  func.func @transform_17(%arg0: i32) -> (i32, i32) {
    %c0_i32 = arith.constant 0 : i32
    %c0_i32_0 = arith.constant 0 : i32
    %c0_i32_1 = arith.constant 0 : i32
    return %c0_i32, %c0_i32_0 : i32, i32
  }
  func.func @transform_18(%arg0: i32) -> (i32, i32) {
    %c0_i32 = arith.constant 0 : i32
    %c0_i32_0 = arith.constant 0 : i32
    %c0_i32_1 = arith.constant 0 : i32
    return %c0_i32, %c0_i32_0 : i32, i32
  }
  func.func @transform_19(%arg0: i32) -> (i32, i32) {
    %c0_i32 = arith.constant 0 : i32
    %c0_i32_0 = arith.constant 0 : i32
    %c0_i32_1 = arith.constant 0 : i32
    return %c0_i32, %c0_i32_0 : i32, i32
  }
  func.func @transform_20(%arg0: i32) -> (i32, i32) {
    %c0_i32 = arith.constant 0 : i32
    %c0_i32_0 = arith.constant 0 : i32
    return %arg0, %c0_i32 : i32, i32
  }
}

</mosaic_0001>

<llo_original>
// kernel: netimp_forward.1
$region0: #{netimp_forward.1}
  #allocation0 [shape = 'u32[]', space=smem, size = 0x4, offset = 0x4, fixed_abs, tag = 'smem constant byte address 0x4 - core index']
  #allocation1 [shape = 'u32[144,128]{1,0:T(1,128)}', space=vmem, size = 0x12000, scoped, tag = 'internal scratch']
  %s0 = inlined_call_operand.vmem [shape: f32[2,8,16,2], index: 0, kind: input, shape index: {}]
  %s1 = inlined_call_operand.hbm [shape: f32[2,8,16,16], index: 1, kind: input, shape index: {}]
  %s2 = inlined_call_operand.vmem [shape: f32[2,8,16,2], index: 2, kind: input, shape index: {}]
  %s3 = inlined_call_operand.hbm [shape: f32[2,8,16,16], index: 3, kind: input, shape index: {}]
  %s4 = inlined_call_operand.vmem [shape: f32[2,4], index: 4, kind: input, shape index: {}]
  %s5 = inlined_call_operand.vmem [shape: f32[2,2], index: 5, kind: input, shape index: {}]
  %s6 = inlined_call_operand.vmem [shape: f32[4,2], index: 6, kind: input, shape index: {}]
  %s7 = inlined_call_operand.vmem [shape: f32[1,2], index: 7, kind: input, shape index: {}]
  %s8 = inlined_call_operand.hbm [shape: f32[96,384], index: 8, kind: input, shape index: {}]
  %s9 = inlined_call_operand.hbm [shape: f32[96,384], index: 9, kind: input, shape index: {}]
  %s10 = inlined_call_operand.vmem [shape: f32[1,384], index: 10, kind: input, shape index: {}]
  %s11 = inlined_call_operand.vmem [shape: f32[192,384], index: 11, kind: input, shape index: {}]
  %s12 = inlined_call_operand.vmem [shape: f32[1,384], index: 12, kind: input, shape index: {}]
  %s13 = inlined_call_operand.hbm [shape: f32[1,96], index: 13, kind: input, shape index: {}]
  %s14 = inlined_call_operand.vmem [shape: f32[96,48], index: 14, kind: input, shape index: {}]
  %s15 = inlined_call_operand.hbm [shape: f32[1,48], index: 15, kind: input, shape index: {}]
  %s16 = inlined_call_operand.vmem [shape: f32[64,64], index: 16, kind: input, shape index: {}]
  %s17 = inlined_call_operand.hbm [shape: f32[1,64], index: 17, kind: input, shape index: {}]
  %s18 = inlined_call_operand.vmem [shape: f32[64,64], index: 18, kind: input, shape index: {}]
  %s19 = inlined_call_operand.hbm [shape: f32[1,64], index: 19, kind: input, shape index: {}]
  %s20 = inlined_call_operand.vmem [shape: f32[2,384], index: 20, kind: output, shape index: {}]
  %s21 = sld [smem:[#allocation0]]
  $region138: #{netimp_forward.1} parent=0
    _
  %s23 = ssub.s32 1, %s21
  %s24 = scalar_select 0, %s23, %s21
  $region1: #{netimp_forward.1} parent=0
    #allocation2 [shape = 'u8[131072]{0}', space=vmem, size = 0x20000, scoped, tag = 'input window, operand 1, single buffered']
    #allocation3 [shape = 's32[1]{0}', space=sflag, size = 0x4, scoped, tag = 'scoped memory for netimp_forward.1']
    #allocation4 [shape = 's32[1]{0}', space=sflag, size = 0x4, scoped, tag = 'scoped memory for netimp_forward.1']
    #allocation5 [shape = 'u8[131072]{0}', space=vmem, size = 0x20000, scoped, tag = 'input window, operand 3, single buffered']
    #allocation6 [shape = 's32[1]{0}', space=sflag, size = 0x4, scoped, tag = 'scoped memory for netimp_forward.1']
    #allocation7 [shape = 'u8[1024]{0}', space=smem, size = 0x400, scoped, tag = 'input window, operand 4, single buffered']
    #allocation8 [shape = 'u8[1024]{0}', space=smem, size = 0x400, scoped, tag = 'input window, operand 5, single buffered']
    #allocation9 [shape = 's32[1]{0}', space=sflag, size = 0x4, scoped, tag = 'scoped memory for netimp_forward.1']
    #allocation10 [shape = 'u8[2048]{0}', space=smem, size = 0x800, scoped, tag = 'input window, operand 6, single buffered']
    #allocation11 [shape = 'u8[512]{0}', space=smem, size = 0x200, scoped, tag = 'input window, operand 7, single buffered']
    #allocation12 [shape = 's32[1]{0}', space=sflag, size = 0x4, scoped, tag = 'scoped memory for netimp_forward.1']
    #allocation13 [shape = 'u8[147456]{0}', space=vmem, size = 0x24000, scoped, tag = 'input window, operand 8, single buffered']
    #allocation14 [shape = 'u8[147456]{0}', space=vmem, size = 0x24000, scoped, tag = 'input window, operand 9, single buffered']
    #allocation15 [shape = 's32[1]{0}', space=sflag, size = 0x4, scoped, tag = 'scoped memory for netimp_forward.1']
    #allocation16 [shape = 'u8[512]{0}', space=vmem, size = 0x400, scoped, tag = 'input window, operand 13, single buffered']
    #allocation17 [shape = 'u8[512]{0}', space=vmem, size = 0x400, scoped, tag = 'input window, operand 15, single buffered']
    #allocation18 [shape = 's32[1]{0}', space=sflag, size = 0x4, scoped, tag = 'scoped memory for netimp_forward.1']
    #allocation19 [shape = 'u8[512]{0}', space=vmem, size = 0x400, scoped, tag = 'input window, operand 17, single buffered']
    #allocation20 [shape = 'u8[512]{0}', space=vmem, size = 0x400, scoped, tag = 'input window, operand 19, single buffered']
    #allocation21 [shape = 's32[1]{0}', space=sflag, size = 0x4, scoped, tag = 'scoped memory for netimp_forward.1']
    %25 = vsyncpa [#allocation3], 0
    %26 = vsyncpa [#allocation6], 0
    %27 = vsyncpa [#allocation4], 0
    %28 = vsyncpa [#allocation9], 0
    %29 = vsyncpa [#allocation12], 0
    %30 = vsyncpa [#allocation15], 0
    %31 = vsyncpa [#allocation18], 0
    %32 = vsyncpa [#allocation21], 0
    // Predicated region
    $region2: #{netimp_forward.1} parent=1 // pred_check
      _
    $region3: #{netimp_forward.1} parent=1 // pred_check_branch
      %34 = sbr.rel (0) target = $region5
    $region4: #{netimp_forward.1} parent=1 // pred_region
      _
    $region5: #{netimp_forward.1} parent=1 // pred_fallthru
      _
    // Predicated region
    $region6: #{netimp_forward.1} parent=1 // pred_check
      _
    $region7: #{netimp_forward.1} parent=1 // pred_check_branch
      %36 = sbr.rel (0) target = $region9
    $region8: #{netimp_forward.1} parent=1 // pred_region
      %s38 = ssub.s32 4096, 4096
      %39 = vsyncadd [#allocation3], %s38
      %s40 = sshll.u32 [#allocation2], 4
      %s41 = int_to_ptr.vmem [resolvable:$true] %s40
      %46 = dma.hbm_to_vmem [thread:$0]  %s1, 4096, %s41, [#allocation3], 128, 128, 8
    $region9: #{netimp_forward.1} parent=1 // pred_fallthru
      _
    // Predicated region
    $region10: #{netimp_forward.1} parent=1 // pred_check
      _
    $region11: #{netimp_forward.1} parent=1 // pred_check_branch
      %48 = sbr.rel (0) target = $region13
    $region12: #{netimp_forward.1} parent=1 // pred_region
      _
    $region13: #{netimp_forward.1} parent=1 // pred_fallthru
      _
    // Predicated region
    $region14: #{netimp_forward.1} parent=1 // pred_check
      _
    $region15: #{netimp_forward.1} parent=1 // pred_check_branch
      %50 = sbr.rel (0) target = $region17
    $region16: #{netimp_forward.1} parent=1 // pred_region
      %s52 = ssub.s32 4096, 4096
      %53 = vsyncadd [#allocation6], %s52
      %s54 = sshll.u32 [#allocation5], 4
      %s55 = int_to_ptr.vmem [resolvable:$true] %s54
      %60 = dma.hbm_to_vmem [thread:$0]  %s3, 4096, %s55, [#allocation6], 128, 128, 8
    $region17: #{netimp_forward.1} parent=1 // pred_fallthru
      _
    // Predicated region
    $region18: #{netimp_forward.1} parent=1 // pred_check
      _
    $region19: #{netimp_forward.1} parent=1 // pred_check_branch
      %62 = sbr.rel (0) target = $region21
    $region20: #{netimp_forward.1} parent=1 // pred_region
      %s64 = ssub.s32 32, 32
      %65 = vsyncadd [#allocation4], %s64
      %s67 = sshll.u32 %s4, 4
      %s68 = int_to_ptr.vmem [resolvable:$true] %s67
      %70 = dma.vmem_to_smem %s68, 32, [#allocation7], [#allocation4]
    $region21: #{netimp_forward.1} parent=1 // pred_fallthru
      _
    // Predicated region
    $region22: #{netimp_forward.1} parent=1 // pred_check
      _
    $region23: #{netimp_forward.1} parent=1 // pred_check_branch
      %72 = sbr.rel (0) target = $region25
    $region24: #{netimp_forward.1} parent=1 // pred_region
      %s74 = ssub.s32 32, 32
      %75 = vsyncadd [#allocation9], %s74
      %s77 = sshll.u32 %s5, 4
      %s78 = int_to_ptr.vmem [resolvable:$true] %s77
      %80 = dma.vmem_to_smem %s78, 32, [#allocation8], [#allocation9]
    $region25: #{netimp_forward.1} parent=1 // pred_fallthru
      _
    // Predicated region
    $region26: #{netimp_forward.1} parent=1 // pred_check
      _
    $region27: #{netimp_forward.1} parent=1 // pred_check_branch
      %82 = sbr.rel (0) target = $region29
    $region28: #{netimp_forward.1} parent=1 // pred_region
      %s84 = ssub.s32 64, 64
      %85 = vsyncadd [#allocation9], %s84
      %s87 = sshll.u32 %s6, 4
      %s88 = int_to_ptr.vmem [resolvable:$true] %s87
      %90 = dma.vmem_to_smem %s88, 64, [#allocation10], [#allocation9]
    $region29: #{netimp_forward.1} parent=1 // pred_fallthru
      _
    // Predicated region
    $region30: #{netimp_forward.1} parent=1 // pred_check
      _
    $region31: #{netimp_forward.1} parent=1 // pred_check_branch
      %92 = sbr.rel (0) target = $region33
    $region32: #{netimp_forward.1} parent=1 // pred_region
      %s94 = ssub.s32 16, 16
      %95 = vsyncadd [#allocation12], %s94
      %s97 = sshll.u32 %s7, 4
      %s98 = int_to_ptr.vmem [resolvable:$true] %s97
      %100 = dma.vmem_to_smem %s98, 16, [#allocation11], [#allocation12]
    $region33: #{netimp_forward.1} parent=1 // pred_fallthru
      _
    // Predicated region
    $region34: #{netimp_forward.1} parent=1 // pred_check
      _
    $region35: #{netimp_forward.1} parent=1 // pred_check_branch
      %102 = sbr.rel (0) target = $region37
    $region36: #{netimp_forward.1} parent=1 // pred_region
      %s104 = ssub.s32 4608, 4608
      %105 = vsyncadd [#allocation6], %s104
      %s106 = sshll.u32 [#allocation13], 4
      %s107 = int_to_ptr.vmem [resolvable:$true] %s106
      %112 = dma.hbm_to_vmem [thread:$0]  %s8, 4608, %s107, [#allocation6], 384, 384, 24
    $region37: #{netimp_forward.1} parent=1 // pred_fallthru
      _
    // Predicated region
    $region38: #{netimp_forward.1} parent=1 // pred_check
      _
    $region39: #{netimp_forward.1} parent=1 // pred_check_branch
      %114 = sbr.rel (0) target = $region41
    $region40: #{netimp_forward.1} parent=1 // pred_region
      %s116 = ssub.s32 4608, 4608
      %117 = vsyncadd [#allocation15], %s116
      %s118 = sshll.u32 [#allocation14], 4
      %s119 = int_to_ptr.vmem [resolvable:$true] %s118
      %124 = dma.hbm_to_vmem [thread:$0]  %s9, 4608, %s119, [#allocation15], 384, 384, 24
    $region41: #{netimp_forward.1} parent=1 // pred_fallthru
      _
    // Predicated region
    $region42: #{netimp_forward.1} parent=1 // pred_check
      _
    $region43: #{netimp_forward.1} parent=1 // pred_check_branch
      %126 = sbr.rel (0) target = $region45
    $region44: #{netimp_forward.1} parent=1 // pred_region
      _
    $region45: #{netimp_forward.1} parent=1 // pred_fallthru
      _
    // Predicated region
    $region46: #{netimp_forward.1} parent=1 // pred_check
      _
    $region47: #{netimp_forward.1} parent=1 // pred_check_branch
      %128 = sbr.rel (0) target = $region49
    $region48: #{netimp_forward.1} parent=1 // pred_region
      _
    $region49: #{netimp_forward.1} parent=1 // pred_fallthru
      _
    // Predicated region
    $region50: #{netimp_forward.1} parent=1 // pred_check
      _
    $region51: #{netimp_forward.1} parent=1 // pred_check_branch
      %130 = sbr.rel (0) target = $region53
    $region52: #{netimp_forward.1} parent=1 // pred_region
      _
    $region53: #{netimp_forward.1} parent=1 // pred_fallthru
      _
    // Predicated region
    $region54: #{netimp_forward.1} parent=1 // pred_check
      _
    $region55: #{netimp_forward.1} parent=1 // pred_check_branch
      %132 = sbr.rel (0) target = $region57
    $region56: #{netimp_forward.1} parent=1 // pred_region
      %s134 = ssub.s32 16, 16
      %135 = vsyncadd [#allocation15], %s134
      %s137 = sshll.u32 [#allocation16], 4
      %s138 = int_to_ptr.vmem [resolvable:$true] %s137
      %140 = dma.hbm_to_vmem [thread:$0]  %s13, 16, %s138, [#allocation15]
    $region57: #{netimp_forward.1} parent=1 // pred_fallthru
      _
    // Predicated region
    $region58: #{netimp_forward.1} parent=1 // pred_check
      _
    $region59: #{netimp_forward.1} parent=1 // pred_check_branch
      %142 = sbr.rel (0) target = $region61
    $region60: #{netimp_forward.1} parent=1 // pred_region
      _
    $region61: #{netimp_forward.1} parent=1 // pred_fallthru
      _
    // Predicated region
    $region62: #{netimp_forward.1} parent=1 // pred_check
      _
    $region63: #{netimp_forward.1} parent=1 // pred_check_branch
      %144 = sbr.rel (0) target = $region65
    $region64: #{netimp_forward.1} parent=1 // pred_region
      %s146 = ssub.s32 16, 16
      %147 = vsyncadd [#allocation18], %s146
      %s149 = sshll.u32 [#allocation17], 4
      %s150 = int_to_ptr.vmem [resolvable:$true] %s149
      %152 = dma.hbm_to_vmem [thread:$0]  %s15, 16, %s150, [#allocation18]
    $region65: #{netimp_forward.1} parent=1 // pred_fallthru
      _
    // Predicated region
    $region66: #{netimp_forward.1} parent=1 // pred_check
      _
    $region67: #{netimp_forward.1} parent=1 // pred_check_branch
      %154 = sbr.rel (0) target = $region69
    $region68: #{netimp_forward.1} parent=1 // pred_region
      _
    $region69: #{netimp_forward.1} parent=1 // pred_fallthru
      _
    // Predicated region
    $region70: #{netimp_forward.1} parent=1 // pred_check
      _
    $region71: #{netimp_forward.1} parent=1 // pred_check_branch
      %156 = sbr.rel (0) target = $region73
    $region72: #{netimp_forward.1} parent=1 // pred_region
      %s158 = ssub.s32 16, 16
      %159 = vsyncadd [#allocation18], %s158
      %s161 = sshll.u32 [#allocation19], 4
      %s162 = int_to_ptr.vmem [resolvable:$true] %s161
      %164 = dma.hbm_to_vmem [thread:$0]  %s17, 16, %s162, [#allocation18]
    $region73: #{netimp_forward.1} parent=1 // pred_fallthru
      _
    // Predicated region
    $region74: #{netimp_forward.1} parent=1 // pred_check
      _
    $region75: #{netimp_forward.1} parent=1 // pred_check_branch
      %166 = sbr.rel (0) target = $region77
    $region76: #{netimp_forward.1} parent=1 // pred_region
      _
    $region77: #{netimp_forward.1} parent=1 // pred_fallthru
      _
    // Predicated region
    $region78: #{netimp_forward.1} parent=1 // pred_check
      _
    $region79: #{netimp_forward.1} parent=1 // pred_check_branch
      %168 = sbr.rel (0) target = $region81
    $region80: #{netimp_forward.1} parent=1 // pred_region
      %s170 = ssub.s32 16, 16
      %171 = vsyncadd [#allocation21], %s170
      %s173 = sshll.u32 [#allocation20], 4
      %s174 = int_to_ptr.vmem [resolvable:$true] %s173
      %176 = dma.hbm_to_vmem [thread:$0]  %s19, 16, %s174, [#allocation21]
    $region81: #{netimp_forward.1} parent=1 // pred_fallthru
      _
    // Predicated region
    $region82: #{netimp_forward.1} parent=1 // pred_check
      _
    $region83: #{netimp_forward.1} parent=1 // pred_check_branch
      %178 = sbr.rel (0) target = $region85
    $region84: #{netimp_forward.1} parent=1 // pred_region
      %179 = dma.done [#allocation3], 4096
    $region85: #{netimp_forward.1} parent=1 // pred_fallthru
      _
    // Predicated region
    $region86: #{netimp_forward.1} parent=1 // pred_check
      _
    $region87: #{netimp_forward.1} parent=1 // pred_check_branch
      %181 = sbr.rel (0) target = $region89
    $region88: #{netimp_forward.1} parent=1 // pred_region
      %182 = dma.done [#allocation6], 4096
    $region89: #{netimp_forward.1} parent=1 // pred_fallthru
      _
    // Predicated region
    $region90: #{netimp_forward.1} parent=1 // pred_check
      _
    $region91: #{netimp_forward.1} parent=1 // pred_check_branch
      %184 = sbr.rel (0) target = $region93
    $region92: #{netimp_forward.1} parent=1 // pred_region
      %185 = dma.done [#allocation4], 32
    $region93: #{netimp_forward.1} parent=1 // pred_fallthru
      _
    // Predicated region
    $region94: #{netimp_forward.1} parent=1 // pred_check
      _
    $region95: #{netimp_forward.1} parent=1 // pred_check_branch
      %187 = sbr.rel (0) target = $region97
    $region96: #{netimp_forward.1} parent=1 // pred_region
      %188 = dma.done [#allocation9], 32
    $region97: #{netimp_forward.1} parent=1 // pred_fallthru
      _
    // Predicated region
    $region98: #{netimp_forward.1} parent=1 // pred_check
      _
    $region99: #{netimp_forward.1} parent=1 // pred_check_branch
      %190 = sbr.rel (0) target = $region101
    $region100: #{netimp_forward.1} parent=1 // pred_region
      %191 = dma.done [#allocation9], 64
    $region101: #{netimp_forward.1} parent=1 // pred_fallthru
      _
    // Predicated region
    $region102: #{netimp_forward.1} parent=1 // pred_check
      _
    $region103: #{netimp_forward.1} parent=1 // pred_check_branch
      %193 = sbr.rel (0) target = $region105
    $region104: #{netimp_forward.1} parent=1 // pred_region
      %194 = dma.done [#allocation12], 16
    $region105: #{netimp_forward.1} parent=1 // pred_fallthru
      _
    // Predicated region
    $region106: #{netimp_forward.1} parent=1 // pred_check
      _
    $region107: #{netimp_forward.1} parent=1 // pred_check_branch
      %196 = sbr.rel (0) target = $region109
    $region108: #{netimp_forward.1} parent=1 // pred_region
      %197 = dma.done [#allocation6], 4608
    $region109: #{netimp_forward.1} parent=1 // pred_fallthru
      _
    // Predicated region
    $region110: #{netimp_forward.1} parent=1 // pred_check
      _
    $region111: #{netimp_forward.1} parent=1 // pred_check_branch
      %199 = sbr.rel (0) target = $region113
    $region112: #{netimp_forward.1} parent=1 // pred_region
      %200 = dma.done [#allocation15], 4608
    $region113: #{netimp_forward.1} parent=1 // pred_fallthru
      _
    // Predicated region
    $region114: #{netimp_forward.1} parent=1 // pred_check
      _
    $region115: #{netimp_forward.1} parent=1 // pred_check_branch
      %202 = sbr.rel (0) target = $region117
    $region116: #{netimp_forward.1} parent=1 // pred_region
      %203 = dma.done [#allocation15], 16
    $region117: #{netimp_forward.1} parent=1 // pred_fallthru
      _
    // Predicated region
    $region118: #{netimp_forward.1} parent=1 // pred_check
      _
    $region119: #{netimp_forward.1} parent=1 // pred_check_branch
      %205 = sbr.rel (0) target = $region121
    $region120: #{netimp_forward.1} parent=1 // pred_region
      %206 = dma.done [#allocation18], 16
    $region121: #{netimp_forward.1} parent=1 // pred_fallthru
      _
    // Predicated region
    $region122: #{netimp_forward.1} parent=1 // pred_check
      _
    $region123: #{netimp_forward.1} parent=1 // pred_check_branch
      %208 = sbr.rel (0) target = $region125
    $region124: #{netimp_forward.1} parent=1 // pred_region
      %209 = dma.done [#allocation18], 16
    $region125: #{netimp_forward.1} parent=1 // pred_fallthru
      _
    // Predicated region
    $region126: #{netimp_forward.1} parent=1 // pred_check
      _
    $region127: #{netimp_forward.1} parent=1 // pred_check_branch
      %211 = sbr.rel (0) target = $region129
    $region128: #{netimp_forward.1} parent=1 // pred_region
      %212 = dma.done [#allocation21], 16
    $region129: #{netimp_forward.1} parent=1 // pred_fallthru
      _
    %213 = sfence
    %v214 = vld [vmem:[#allocation2] sm:$0xff]
    %v215 = vld [vmem:[#allocation2 + $0x8] sm:$0xff]
    %v216 = vld [vmem:[#allocation2 + $0x10] sm:$0xff]
    %v217 = vld [vmem:[#allocation2 + $0x18] sm:$0xff]
    %v218 = vld [vmem:[#allocation2 + $0x20] sm:$0xff]
    %v219 = vld [vmem:[#allocation2 + $0x28] sm:$0xff]
    %v220 = vld [vmem:[#allocation2 + $0x30] sm:$0xff]
    %v221 = vld [vmem:[#allocation2 + $0x38] sm:$0xff]
    %v222 = vld [vmem:[#allocation2 + $0x40] sm:$0xff]
    %v223 = vld [vmem:[#allocation2 + $0x48] sm:$0xff]
    %v224 = vld [vmem:[#allocation2 + $0x50] sm:$0xff]
    %v225 = vld [vmem:[#allocation2 + $0x58] sm:$0xff]
    %v226 = vld [vmem:[#allocation2 + $0x60] sm:$0xff]
    %v227 = vld [vmem:[#allocation2 + $0x68] sm:$0xff]
    %v228 = vld [vmem:[#allocation2 + $0x70] sm:$0xff]
    %v229 = vld [vmem:[#allocation2 + $0x78] sm:$0xff]
    %v230 = vld [vmem:[#allocation2 + $0x80] sm:$0xff]
    %v231 = vld [vmem:[#allocation2 + $0x88] sm:$0xff]
    %v232 = vld [vmem:[#allocation2 + $0x90] sm:$0xff]
    %v233 = vld [vmem:[#allocation2 + $0x98] sm:$0xff]
    %v234 = vld [vmem:[#allocation2 + $0xa0] sm:$0xff]
    %v235 = vld [vmem:[#allocation2 + $0xa8] sm:$0xff]
    %v236 = vld [vmem:[#allocation2 + $0xb0] sm:$0xff]
    %v237 = vld [vmem:[#allocation2 + $0xb8] sm:$0xff]
    %v238 = vld [vmem:[#allocation2 + $0xc0] sm:$0xff]
    %v239 = vld [vmem:[#allocation2 + $0xc8] sm:$0xff]
    %v240 = vld [vmem:[#allocation2 + $0xd0] sm:$0xff]
    %v241 = vld [vmem:[#allocation2 + $0xd8] sm:$0xff]
    %v242 = vld [vmem:[#allocation2 + $0xe0] sm:$0xff]
    %v243 = vld [vmem:[#allocation2 + $0xe8] sm:$0xff]
    %v244 = vld [vmem:[#allocation2 + $0xf0] sm:$0xff]
    %v245 = vld [vmem:[#allocation2 + $0xf8] sm:$0xff]
    %v246 = vld [vmem:[%s0] sm:$0xff]
    %v247 = vld [vmem:[%s0 + $0x8] sm:$0xff]
    %v248 = vld [vmem:[%s0 + $0x10] sm:$0xff]
    %v249 = vld [vmem:[%s0 + $0x18] sm:$0xff]
    %v250 = vld [vmem:[%s0 + $0x20] sm:$0xff]
    %v251 = vld [vmem:[%s0 + $0x28] sm:$0xff]
    %v252 = vld [vmem:[%s0 + $0x30] sm:$0xff]
    %v253 = vld [vmem:[%s0 + $0x38] sm:$0xff]
    %v254 = vld [vmem:[%s0 + $0x40] sm:$0xff]
    %v255 = vld [vmem:[%s0 + $0x48] sm:$0xff]
    %v256 = vld [vmem:[%s0 + $0x50] sm:$0xff]
    %v257 = vld [vmem:[%s0 + $0x58] sm:$0xff]
    %v258 = vld [vmem:[%s0 + $0x60] sm:$0xff]
    %v259 = vld [vmem:[%s0 + $0x68] sm:$0xff]
    %v260 = vld [vmem:[%s0 + $0x70] sm:$0xff]
    %v261 = vld [vmem:[%s0 + $0x78] sm:$0xff]
    %v262 = vld [vmem:[%s0 + $0x80] sm:$0xff]
    %v263 = vld [vmem:[%s0 + $0x88] sm:$0xff]
    %v264 = vld [vmem:[%s0 + $0x90] sm:$0xff]
    %v265 = vld [vmem:[%s0 + $0x98] sm:$0xff]
    %v266 = vld [vmem:[%s0 + $0xa0] sm:$0xff]
    %v267 = vld [vmem:[%s0 + $0xa8] sm:$0xff]
    %v268 = vld [vmem:[%s0 + $0xb0] sm:$0xff]
    %v269 = vld [vmem:[%s0 + $0xb8] sm:$0xff]
    %v270 = vld [vmem:[%s0 + $0xc0] sm:$0xff]
    %v271 = vld [vmem:[%s0 + $0xc8] sm:$0xff]
    %v272 = vld [vmem:[%s0 + $0xd0] sm:$0xff]
    %v273 = vld [vmem:[%s0 + $0xd8] sm:$0xff]
    %v274 = vld [vmem:[%s0 + $0xe0] sm:$0xff]
    %v275 = vld [vmem:[%s0 + $0xe8] sm:$0xff]
    %v276 = vld [vmem:[%s0 + $0xf0] sm:$0xff]
    %v277 = vld [vmem:[%s0 + $0xf8] sm:$0xff]
    %310 = vset.pattern.permute.xlu0 0
    %311 = vperm.xlu0 %310, %v246
    %v312 = vpop.permute.xlu0 %311
    %313 = vset.pattern.permute.xlu0 0
    %314 = vperm.xlu0 %313, %v247
    %v315 = vpop.permute.xlu0 %314
    %316 = vset.pattern.permute.xlu0 0
    %317 = vperm.xlu0 %316, %v248
    %v318 = vpop.permute.xlu0 %317
    %319 = vset.pattern.permute.xlu0 0
    %320 = vperm.xlu0 %319, %v249
    %v321 = vpop.permute.xlu0 %320
    %322 = vset.pattern.permute.xlu0 0
    %323 = vperm.xlu0 %322, %v250
    %v324 = vpop.permute.xlu0 %323
    %325 = vset.pattern.permute.xlu0 0
    %326 = vperm.xlu0 %325, %v251
    %v327 = vpop.permute.xlu0 %326
    %328 = vset.pattern.permute.xlu0 0
    %329 = vperm.xlu0 %328, %v252
    %v330 = vpop.permute.xlu0 %329
    %331 = vset.pattern.permute.xlu0 0
    %332 = vperm.xlu0 %331, %v253
    %v333 = vpop.permute.xlu0 %332
    %334 = vset.pattern.permute.xlu0 0
    %335 = vperm.xlu0 %334, %v254
    %v336 = vpop.permute.xlu0 %335
    %337 = vset.pattern.permute.xlu0 0
    %338 = vperm.xlu0 %337, %v255
    %v339 = vpop.permute.xlu0 %338
    %340 = vset.pattern.permute.xlu0 0
    %341 = vperm.xlu0 %340, %v256
    %v342 = vpop.permute.xlu0 %341
    %343 = vset.pattern.permute.xlu0 0
    %344 = vperm.xlu0 %343, %v257
    %v345 = vpop.permute.xlu0 %344
    %346 = vset.pattern.permute.xlu0 0
    %347 = vperm.xlu0 %346, %v258
    %v348 = vpop.permute.xlu0 %347
    %349 = vset.pattern.permute.xlu0 0
    %350 = vperm.xlu0 %349, %v259
    %v351 = vpop.permute.xlu0 %350
    %352 = vset.pattern.permute.xlu0 0
    %353 = vperm.xlu0 %352, %v260
    %v354 = vpop.permute.xlu0 %353
    %355 = vset.pattern.permute.xlu0 0
    %356 = vperm.xlu0 %355, %v261
    %v357 = vpop.permute.xlu0 %356
    %358 = vset.pattern.permute.xlu0 0
    %359 = vperm.xlu0 %358, %v262
    %v360 = vpop.permute.xlu0 %359
    %361 = vset.pattern.permute.xlu0 0
    %362 = vperm.xlu0 %361, %v263
    %v363 = vpop.permute.xlu0 %362
    %364 = vset.pattern.permute.xlu0 0
    %365 = vperm.xlu0 %364, %v264
    %v366 = vpop.permute.xlu0 %365
    %367 = vset.pattern.permute.xlu0 0
    %368 = vperm.xlu0 %367, %v265
    %v369 = vpop.permute.xlu0 %368
    %370 = vset.pattern.permute.xlu0 0
    %371 = vperm.xlu0 %370, %v266
    %v372 = vpop.permute.xlu0 %371
    %373 = vset.pattern.permute.xlu0 0
    %374 = vperm.xlu0 %373, %v267
    %v375 = vpop.permute.xlu0 %374
    %376 = vset.pattern.permute.xlu0 0
    %377 = vperm.xlu0 %376, %v268
    %v378 = vpop.permute.xlu0 %377
    %379 = vset.pattern.permute.xlu0 0
    %380 = vperm.xlu0 %379, %v269
    %v381 = vpop.permute.xlu0 %380
    %382 = vset.pattern.permute.xlu0 0
    %383 = vperm.xlu0 %382, %v270
    %v384 = vpop.permute.xlu0 %383
    %385 = vset.pattern.permute.xlu0 0
    %386 = vperm.xlu0 %385, %v271
    %v387 = vpop.permute.xlu0 %386
    %388 = vset.pattern.permute.xlu0 0
    %389 = vperm.xlu0 %388, %v272
    %v390 = vpop.permute.xlu0 %389
    %391 = vset.pattern.permute.xlu0 0
    %392 = vperm.xlu0 %391, %v273
    %v393 = vpop.permute.xlu0 %392
    %394 = vset.pattern.permute.xlu0 0
    %395 = vperm.xlu0 %394, %v274
    %v396 = vpop.permute.xlu0 %395
    %397 = vset.pattern.permute.xlu0 0
    %398 = vperm.xlu0 %397, %v275
    %v399 = vpop.permute.xlu0 %398
    %400 = vset.pattern.permute.xlu0 0
    %401 = vperm.xlu0 %400, %v276
    %v402 = vpop.permute.xlu0 %401
    %403 = vset.pattern.permute.xlu0 0
    %404 = vperm.xlu0 %403, %v277
    %v405 = vpop.permute.xlu0 %404
    %v406 = vlaneseq
    %v407 = vand.u32 %v406, 127
    %v408 = vlaneseq
    %v409 = vshrl.u32 %v408, 7
    %v410 = vsub.s32 %v407, %v409
    %v411 = vrot.slane %v312, %v410
    %v412 = vadd.s32 %v407, 4294967288
    %v413 = vlaneseq
    %v414 = vshrl.u32 %v413, 7
    %v415 = vsub.s32 %v412, %v414
    %v416 = vrot.slane %v315, %v415
    %vm417 = vcmask 130112
    %v418 = vsel %vm417, %v416, %v411
    %v419 = vlaneseq
    %v420 = vshrl.u32 %v419, 7
    %v421 = vsub.s32 %v407, %v420
    %v422 = vrot.slane %v318, %v421
    %v423 = vlaneseq
    %v424 = vshrl.u32 %v423, 7
    %v425 = vsub.s32 %v412, %v424
    %v426 = vrot.slane %v321, %v425
    %v427 = vsel %vm417, %v426, %v422
    %v428 = vlaneseq
    %v429 = vshrl.u32 %v428, 7
    %v430 = vsub.s32 %v407, %v429
    %v431 = vrot.slane %v324, %v430
    %v432 = vlaneseq
    %v433 = vshrl.u32 %v432, 7
    %v434 = vsub.s32 %v412, %v433
    %v435 = vrot.slane %v327, %v434
    %v436 = vsel %vm417, %v435, %v431
    %v437 = vlaneseq
    %v438 = vshrl.u32 %v437, 7
    %v439 = vsub.s32 %v407, %v438
    %v440 = vrot.slane %v330, %v439
    %v441 = vlaneseq
    %v442 = vshrl.u32 %v441, 7
    %v443 = vsub.s32 %v412, %v442
    %v444 = vrot.slane %v333, %v443
    %v445 = vsel %vm417, %v444, %v440
    %v446 = vlaneseq
    %v447 = vshrl.u32 %v446, 7
    %v448 = vsub.s32 %v407, %v447
    %v449 = vrot.slane %v336, %v448
    %v450 = vlaneseq
    %v451 = vshrl.u32 %v450, 7
    %v452 = vsub.s32 %v412, %v451
    %v453 = vrot.slane %v339, %v452
    %v454 = vsel %vm417, %v453, %v449
    %v455 = vlaneseq
    %v456 = vshrl.u32 %v455, 7
    %v457 = vsub.s32 %v407, %v456
    %v458 = vrot.slane %v342, %v457
    %v459 = vlaneseq
    %v460 = vshrl.u32 %v459, 7
    %v461 = vsub.s32 %v412, %v460
    %v462 = vrot.slane %v345, %v461
    %v463 = vsel %vm417, %v462, %v458
    %v464 = vlaneseq
    %v465 = vshrl.u32 %v464, 7
    %v466 = vsub.s32 %v407, %v465
    %v467 = vrot.slane %v348, %v466
    %v468 = vlaneseq
    %v469 = vshrl.u32 %v468, 7
    %v470 = vsub.s32 %v412, %v469
    %v471 = vrot.slane %v351, %v470
    %v472 = vsel %vm417, %v471, %v467
    %v473 = vlaneseq
    %v474 = vshrl.u32 %v473, 7
    %v475 = vsub.s32 %v407, %v474
    %v476 = vrot.slane %v354, %v475
    %v477 = vlaneseq
    %v478 = vshrl.u32 %v477, 7
    %v479 = vsub.s32 %v412, %v478
    %v480 = vrot.slane %v357, %v479
    %v481 = vsel %vm417, %v480, %v476
    %v482 = vlaneseq
    %v483 = vshrl.u32 %v482, 7
    %v484 = vsub.s32 %v407, %v483
    %v485 = vrot.slane %v360, %v484
    %v486 = vlaneseq
    %v487 = vshrl.u32 %v486, 7
    %v488 = vsub.s32 %v412, %v487
    %v489 = vrot.slane %v363, %v488
    %v490 = vsel %vm417, %v489, %v485
    %v491 = vlaneseq
    %v492 = vshrl.u32 %v491, 7
    %v493 = vsub.s32 %v407, %v492
    %v494 = vrot.slane %v366, %v493
    %v495 = vlaneseq
    %v496 = vshrl.u32 %v495, 7
    %v497 = vsub.s32 %v412, %v496
    %v498 = vrot.slane %v369, %v497
    %v499 = vsel %vm417, %v498, %v494
    %v500 = vlaneseq
    %v501 = vshrl.u32 %v500, 7
    %v502 = vsub.s32 %v407, %v501
    %v503 = vrot.slane %v372, %v502
    %v504 = vlaneseq
    %v505 = vshrl.u32 %v504, 7
    %v506 = vsub.s32 %v412, %v505
    %v507 = vrot.slane %v375, %v506
    %v508 = vsel %vm417, %v507, %v503
    %v509 = vlaneseq
    %v510 = vshrl.u32 %v509, 7
    %v511 = vsub.s32 %v407, %v510
    %v512 = vrot.slane %v378, %v511
    %v513 = vlaneseq
    %v514 = vshrl.u32 %v513, 7
    %v515 = vsub.s32 %v412, %v514
    %v516 = vrot.slane %v381, %v515
    %v517 = vsel %vm417, %v516, %v512
    %v518 = vlaneseq
    %v519 = vshrl.u32 %v518, 7
    %v520 = vsub.s32 %v407, %v519
    %v521 = vrot.slane %v384, %v520
    %v522 = vlaneseq
    %v523 = vshrl.u32 %v522, 7
    %v524 = vsub.s32 %v412, %v523
    %v525 = vrot.slane %v387, %v524
    %v526 = vsel %vm417, %v525, %v521
    %v527 = vlaneseq
    %v528 = vshrl.u32 %v527, 7
    %v529 = vsub.s32 %v407, %v528
    %v530 = vrot.slane %v390, %v529
    %v531 = vlaneseq
    %v532 = vshrl.u32 %v531, 7
    %v533 = vsub.s32 %v412, %v532
    %v534 = vrot.slane %v393, %v533
    %v535 = vsel %vm417, %v534, %v530
    %v536 = vlaneseq
    %v537 = vshrl.u32 %v536, 7
    %v538 = vsub.s32 %v407, %v537
    %v539 = vrot.slane %v396, %v538
    %v540 = vlaneseq
    %v541 = vshrl.u32 %v540, 7
    %v542 = vsub.s32 %v412, %v541
    %v543 = vrot.slane %v399, %v542
    %v544 = vsel %vm417, %v543, %v539
    %v545 = vlaneseq
    %v546 = vshrl.u32 %v545, 7
    %v547 = vsub.s32 %v407, %v546
    %v548 = vrot.slane %v402, %v547
    %v549 = vlaneseq
    %v550 = vshrl.u32 %v549, 7
    %v551 = vsub.s32 %v412, %v550
    %v552 = vrot.slane %v405, %v551
    %v553 = vsel %vm417, %v552, %v548
    %vm554 = vcmask 1041409
    %vm555 = vcmask 1042434
    %v556 = vsel %vm555, %v418, %v418
    %vm557 = vcmask 1043459
    %v558 = vsel %vm557, %v418, %v556
    %vm559 = vcmask 1044484
    %v560 = vsel %vm559, %v418, %v558
    %vm561 = vcmask 1045509
    %v562 = vsel %vm561, %v418, %v560
    %vm563 = vcmask 1046534
    %v564 = vsel %vm563, %v418, %v562
    %vm565 = vcmask 1047559
    %v566 = vsel %vm565, %v418, %v564
    %v567 = vsel %vm555, %v427, %v427
    %v568 = vsel %vm557, %v427, %v567
    %v569 = vsel %vm559, %v427, %v568
    %v570 = vsel %vm561, %v427, %v569
    %v571 = vsel %vm563, %v427, %v570
    %v572 = vsel %vm565, %v427, %v571
    %v573 = vsel %vm555, %v436, %v436
    %v574 = vsel %vm557, %v436, %v573
    %v575 = vsel %vm559, %v436, %v574
    %v576 = vsel %vm561, %v436, %v575
    %v577 = vsel %vm563, %v436, %v576
    %v578 = vsel %vm565, %v436, %v577
    %v579 = vsel %vm555, %v445, %v445
    %v580 = vsel %vm557, %v445, %v579
    %v581 = vsel %vm559, %v445, %v580
    %v582 = vsel %vm561, %v445, %v581
    %v583 = vsel %vm563, %v445, %v582
    %v584 = vsel %vm565, %v445, %v583
    %v585 = vsel %vm555, %v454, %v454
    %v586 = vsel %vm557, %v454, %v585
    %v587 = vsel %vm559, %v454, %v586
    %v588 = vsel %vm561, %v454, %v587
    %v589 = vsel %vm563, %v454, %v588
    %v590 = vsel %vm565, %v454, %v589
    %v591 = vsel %vm555, %v463, %v463
    %v592 = vsel %vm557, %v463, %v591
    %v593 = vsel %vm559, %v463, %v592
    %v594 = vsel %vm561, %v463, %v593
    %v595 = vsel %vm563, %v463, %v594
    %v596 = vsel %vm565, %v463, %v595
    %v597 = vsel %vm555, %v472, %v472
    %v598 = vsel %vm557, %v472, %v597
    %v599 = vsel %vm559, %v472, %v598
    %v600 = vsel %vm561, %v472, %v599
    %v601 = vsel %vm563, %v472, %v600
    %v602 = vsel %vm565, %v472, %v601
    %v603 = vsel %vm555, %v481, %v481
    %v604 = vsel %vm557, %v481, %v603
    %v605 = vsel %vm559, %v481, %v604
    %v606 = vsel %vm561, %v481, %v605
    %v607 = vsel %vm563, %v481, %v606
    %v608 = vsel %vm565, %v481, %v607
    %v609 = vsel %vm555, %v490, %v490
    %v610 = vsel %vm557, %v490, %v609
    %v611 = vsel %vm559, %v490, %v610
    %v612 = vsel %vm561, %v490, %v611
    %v613 = vsel %vm563, %v490, %v612
    %v614 = vsel %vm565, %v490, %v613
    %v615 = vsel %vm555, %v499, %v499
    %v616 = vsel %vm557, %v499, %v615
    %v617 = vsel %vm559, %v499, %v616
    %v618 = vsel %vm561, %v499, %v617
    %v619 = vsel %vm563, %v499, %v618
    %v620 = vsel %vm565, %v499, %v619
    %v621 = vsel %vm555, %v508, %v508
    %v622 = vsel %vm557, %v508, %v621
    %v623 = vsel %vm559, %v508, %v622
    %v624 = vsel %vm561, %v508, %v623
    %v625 = vsel %vm563, %v508, %v624
    %v626 = vsel %vm565, %v508, %v625
    %v627 = vsel %vm555, %v517, %v517
    %v628 = vsel %vm557, %v517, %v627
    %v629 = vsel %vm559, %v517, %v628
    %v630 = vsel %vm561, %v517, %v629
    %v631 = vsel %vm563, %v517, %v630
    %v632 = vsel %vm565, %v517, %v631
    %v633 = vsel %vm555, %v526, %v526
    %v634 = vsel %vm557, %v526, %v633
    %v635 = vsel %vm559, %v526, %v634
    %v636 = vsel %vm561, %v526, %v635
    %v637 = vsel %vm563, %v526, %v636
    %v638 = vsel %vm565, %v526, %v637
    %v639 = vsel %vm555, %v535, %v535
    %v640 = vsel %vm557, %v535, %v639
    %v641 = vsel %vm559, %v535, %v640
    %v642 = vsel %vm561, %v535, %v641
    %v643 = vsel %vm563, %v535, %v642
    %v644 = vsel %vm565, %v535, %v643
    %v645 = vsel %vm555, %v544, %v544
    %v646 = vsel %vm557, %v544, %v645
    %v647 = vsel %vm559, %v544, %v646
    %v648 = vsel %vm561, %v544, %v647
    %v649 = vsel %vm563, %v544, %v648
    %v650 = vsel %vm565, %v544, %v649
    %v651 = vsel %vm555, %v553, %v553
    %v652 = vsel %vm557, %v553, %v651
    %v653 = vsel %vm559, %v553, %v652
    %v654 = vsel %vm561, %v553, %v653
    %v655 = vsel %vm563, %v553, %v654
    %v656 = vsel %vm565, %v553, %v655
    %v673 = vmul.f32 %v214, %v566
    %v674 = vmul.f32 %v215, %v566
    %v675 = vmul.f32 %v216, %v572
    %v676 = vmul.f32 %v217, %v572
    %v677 = vmul.f32 %v218, %v578
    %v678 = vmul.f32 %v219, %v578
    %v679 = vmul.f32 %v220, %v584
    %v680 = vmul.f32 %v221, %v584
    %v681 = vmul.f32 %v222, %v590
    %v682 = vmul.f32 %v223, %v590
    %v683 = vmul.f32 %v224, %v596
    %v684 = vmul.f32 %v225, %v596
    %v685 = vmul.f32 %v226, %v602
    %v686 = vmul.f32 %v227, %v602
    %v687 = vmul.f32 %v228, %v608
    %v688 = vmul.f32 %v229, %v608
    %v689 = vmul.f32 %v230, %v614
    %v690 = vmul.f32 %v231, %v614
    %v691 = vmul.f32 %v232, %v620
    %v692 = vmul.f32 %v233, %v620
    %v693 = vmul.f32 %v234, %v626
    %v694 = vmul.f32 %v235, %v626
    %v695 = vmul.f32 %v236, %v632
    %v696 = vmul.f32 %v237, %v632
    %v697 = vmul.f32 %v238, %v638
    %v698 = vmul.f32 %v239, %v638
    %v699 = vmul.f32 %v240, %v644
    %v700 = vmul.f32 %v241, %v644
    %v701 = vmul.f32 %v242, %v650
    %v702 = vmul.f32 %v243, %v650
    %v703 = vmul.f32 %v244, %v656
    %v704 = vmul.f32 %v245, %v656
    %vm705 = vcmask 130048
    %v706 = vsel %vm705, %v673, 0.0
    %707 = vadd.xlane.f32.xlu0 %v706
    %v708 = vpop.xlane.xlu0 %707
    %v709 = vsel %vm705, %v674, 0.0
    %710 = vadd.xlane.f32.xlu0 %v709
    %v711 = vpop.xlane.xlu0 %710
    %v712 = vsel %vm705, %v675, 0.0
    %713 = vadd.xlane.f32.xlu0 %v712
    %v714 = vpop.xlane.xlu0 %713
    %v715 = vsel %vm705, %v676, 0.0
    %716 = vadd.xlane.f32.xlu0 %v715
    %v717 = vpop.xlane.xlu0 %716
    %v718 = vsel %vm705, %v677, 0.0
    %719 = vadd.xlane.f32.xlu0 %v718
    %v720 = vpop.xlane.xlu0 %719
    %v721 = vsel %vm705, %v678, 0.0
    %722 = vadd.xlane.f32.xlu0 %v721
    %v723 = vpop.xlane.xlu0 %722
    %v724 = vsel %vm705, %v679, 0.0
    %725 = vadd.xlane.f32.xlu0 %v724
    %v726 = vpop.xlane.xlu0 %725
    %v727 = vsel %vm705, %v680, 0.0
    %728 = vadd.xlane.f32.xlu0 %v727
    %v729 = vpop.xlane.xlu0 %728
    %v730 = vsel %vm705, %v681, 0.0
    %731 = vadd.xlane.f32.xlu0 %v730
    %v732 = vpop.xlane.xlu0 %731
    %v733 = vsel %vm705, %v682, 0.0
    %734 = vadd.xlane.f32.xlu0 %v733
    %v735 = vpop.xlane.xlu0 %734
    %v736 = vsel %vm705, %v683, 0.0
    %737 = vadd.xlane.f32.xlu0 %v736
    %v738 = vpop.xlane.xlu0 %737
    %v739 = vsel %vm705, %v684, 0.0
    %740 = vadd.xlane.f32.xlu0 %v739
    %v741 = vpop.xlane.xlu0 %740
    %v742 = vsel %vm705, %v685, 0.0
    %743 = vadd.xlane.f32.xlu0 %v742
    %v744 = vpop.xlane.xlu0 %743
    %v745 = vsel %vm705, %v686, 0.0
    %746 = vadd.xlane.f32.xlu0 %v745
    %v747 = vpop.xlane.xlu0 %746
    %v748 = vsel %vm705, %v687, 0.0
    %749 = vadd.xlane.f32.xlu0 %v748
    %v750 = vpop.xlane.xlu0 %749
    %v751 = vsel %vm705, %v688, 0.0
    %752 = vadd.xlane.f32.xlu0 %v751
    %v753 = vpop.xlane.xlu0 %752
    %v754 = vsel %vm705, %v689, 0.0
    %755 = vadd.xlane.f32.xlu0 %v754
    %v756 = vpop.xlane.xlu0 %755
    %v757 = vsel %vm705, %v690, 0.0
    %758 = vadd.xlane.f32.xlu0 %v757
    %v759 = vpop.xlane.xlu0 %758
    %v760 = vsel %vm705, %v691, 0.0
    %761 = vadd.xlane.f32.xlu0 %v760
    %v762 = vpop.xlane.xlu0 %761
    %v763 = vsel %vm705, %v692, 0.0
    %764 = vadd.xlane.f32.xlu0 %v763
    %v765 = vpop.xlane.xlu0 %764
    %v766 = vsel %vm705, %v693, 0.0
    %767 = vadd.xlane.f32.xlu0 %v766
    %v768 = vpop.xlane.xlu0 %767
    %v769 = vsel %vm705, %v694, 0.0
    %770 = vadd.xlane.f32.xlu0 %v769
    %v771 = vpop.xlane.xlu0 %770
    %v772 = vsel %vm705, %v695, 0.0
    %773 = vadd.xlane.f32.xlu0 %v772
    %v774 = vpop.xlane.xlu0 %773
    %v775 = vsel %vm705, %v696, 0.0
    %776 = vadd.xlane.f32.xlu0 %v775
    %v777 = vpop.xlane.xlu0 %776
    %v778 = vsel %vm705, %v697, 0.0
    %779 = vadd.xlane.f32.xlu0 %v778
    %v780 = vpop.xlane.xlu0 %779
    %v781 = vsel %vm705, %v698, 0.0
    %782 = vadd.xlane.f32.xlu0 %v781
    %v783 = vpop.xlane.xlu0 %782
    %v784 = vsel %vm705, %v699, 0.0
    %785 = vadd.xlane.f32.xlu0 %v784
    %v786 = vpop.xlane.xlu0 %785
    %v787 = vsel %vm705, %v700, 0.0
    %788 = vadd.xlane.f32.xlu0 %v787
    %v789 = vpop.xlane.xlu0 %788
    %v790 = vsel %vm705, %v701, 0.0
    %791 = vadd.xlane.f32.xlu0 %v790
    %v792 = vpop.xlane.xlu0 %791
    %v793 = vsel %vm705, %v702, 0.0
    %794 = vadd.xlane.f32.xlu0 %v793
    %v795 = vpop.xlane.xlu0 %794
    %v796 = vsel %vm705, %v703, 0.0
    %797 = vadd.xlane.f32.xlu0 %v796
    %v798 = vpop.xlane.xlu0 %797
    %v799 = vsel %vm705, %v704, 0.0
    %800 = vadd.xlane.f32.xlu0 %v799
    %v801 = vpop.xlane.xlu0 %800
    %802 = vset.pattern.permute.xlu0 1
    %803 = vperm.xlu0 %802, %v246
    %v804 = vpop.permute.xlu0 %803
    %805 = vset.pattern.permute.xlu0 1
    %806 = vperm.xlu0 %805, %v247
    %v807 = vpop.permute.xlu0 %806
    %808 = vset.pattern.permute.xlu0 1
    %809 = vperm.xlu0 %808, %v248
    %v810 = vpop.permute.xlu0 %809
    %811 = vset.pattern.permute.xlu0 1
    %812 = vperm.xlu0 %811, %v249
    %v813 = vpop.permute.xlu0 %812
    %814 = vset.pattern.permute.xlu0 1
    %815 = vperm.xlu0 %814, %v250
    %v816 = vpop.permute.xlu0 %815
    %817 = vset.pattern.permute.xlu0 1
    %818 = vperm.xlu0 %817, %v251
    %v819 = vpop.permute.xlu0 %818
    %820 = vset.pattern.permute.xlu0 1
    %821 = vperm.xlu0 %820, %v252
    %v822 = vpop.permute.xlu0 %821
    %823 = vset.pattern.permute.xlu0 1
    %824 = vperm.xlu0 %823, %v253
    %v825 = vpop.permute.xlu0 %824
    %826 = vset.pattern.permute.xlu0 1
    %827 = vperm.xlu0 %826, %v254
    %v828 = vpop.permute.xlu0 %827
    %829 = vset.pattern.permute.xlu0 1
    %830 = vperm.xlu0 %829, %v255
    %v831 = vpop.permute.xlu0 %830
    %832 = vset.pattern.permute.xlu0 1
    %833 = vperm.xlu0 %832, %v256
    %v834 = vpop.permute.xlu0 %833
    %835 = vset.pattern.permute.xlu0 1
    %836 = vperm.xlu0 %835, %v257
    %v837 = vpop.permute.xlu0 %836
    %838 = vset.pattern.permute.xlu0 1
    %839 = vperm.xlu0 %838, %v258
    %v840 = vpop.permute.xlu0 %839
    %841 = vset.pattern.permute.xlu0 1
    %842 = vperm.xlu0 %841, %v259
    %v843 = vpop.permute.xlu0 %842
    %844 = vset.pattern.permute.xlu0 1
    %845 = vperm.xlu0 %844, %v260
    %v846 = vpop.permute.xlu0 %845
    %847 = vset.pattern.permute.xlu0 1
    %848 = vperm.xlu0 %847, %v261
    %v849 = vpop.permute.xlu0 %848
    %850 = vset.pattern.permute.xlu0 1
    %851 = vperm.xlu0 %850, %v262
    %v852 = vpop.permute.xlu0 %851
    %853 = vset.pattern.permute.xlu0 1
    %854 = vperm.xlu0 %853, %v263
    %v855 = vpop.permute.xlu0 %854
    %856 = vset.pattern.permute.xlu0 1
    %857 = vperm.xlu0 %856, %v264
    %v858 = vpop.permute.xlu0 %857
    %859 = vset.pattern.permute.xlu0 1
    %860 = vperm.xlu0 %859, %v265
    %v861 = vpop.permute.xlu0 %860
    %862 = vset.pattern.permute.xlu0 1
    %863 = vperm.xlu0 %862, %v266
    %v864 = vpop.permute.xlu0 %863
    %865 = vset.pattern.permute.xlu0 1
    %866 = vperm.xlu0 %865, %v267
    %v867 = vpop.permute.xlu0 %866
    %868 = vset.pattern.permute.xlu0 1
    %869 = vperm.xlu0 %868, %v268
    %v870 = vpop.permute.xlu0 %869
    %871 = vset.pattern.permute.xlu0 1
    %872 = vperm.xlu0 %871, %v269
    %v873 = vpop.permute.xlu0 %872
    %874 = vset.pattern.permute.xlu0 1
    %875 = vperm.xlu0 %874, %v270
    %v876 = vpop.permute.xlu0 %875
    %877 = vset.pattern.permute.xlu0 1
    %878 = vperm.xlu0 %877, %v271
    %v879 = vpop.permute.xlu0 %878
    %880 = vset.pattern.permute.xlu0 1
    %881 = vperm.xlu0 %880, %v272
    %v882 = vpop.permute.xlu0 %881
    %883 = vset.pattern.permute.xlu0 1
    %884 = vperm.xlu0 %883, %v273
    %v885 = vpop.permute.xlu0 %884
    %886 = vset.pattern.permute.xlu0 1
    %887 = vperm.xlu0 %886, %v274
    %v888 = vpop.permute.xlu0 %887
    %889 = vset.pattern.permute.xlu0 1
    %890 = vperm.xlu0 %889, %v275
    %v891 = vpop.permute.xlu0 %890
    %892 = vset.pattern.permute.xlu0 1
    %893 = vperm.xlu0 %892, %v276
    %v894 = vpop.permute.xlu0 %893
    %895 = vset.pattern.permute.xlu0 1
    %896 = vperm.xlu0 %895, %v277
    %v897 = vpop.permute.xlu0 %896
    %v898 = vlaneseq
    %v899 = vshrl.u32 %v898, 7
    %v900 = vsub.s32 %v407, %v899
    %v901 = vrot.slane %v804, %v900
    %v902 = vlaneseq
    %v903 = vshrl.u32 %v902, 7
    %v904 = vsub.s32 %v412, %v903
    %v905 = vrot.slane %v807, %v904
    %v906 = vsel %vm417, %v905, %v901
    %v907 = vlaneseq
    %v908 = vshrl.u32 %v907, 7
    %v909 = vsub.s32 %v407, %v908
    %v910 = vrot.slane %v810, %v909
    %v911 = vlaneseq
    %v912 = vshrl.u32 %v911, 7
    %v913 = vsub.s32 %v412, %v912
    %v914 = vrot.slane %v813, %v913
    %v915 = vsel %vm417, %v914, %v910
    %v916 = vlaneseq
    %v917 = vshrl.u32 %v916, 7
    %v918 = vsub.s32 %v407, %v917
    %v919 = vrot.slane %v816, %v918
    %v920 = vlaneseq
    %v921 = vshrl.u32 %v920, 7
    %v922 = vsub.s32 %v412, %v921
    %v923 = vrot.slane %v819, %v922
    %v924 = vsel %vm417, %v923, %v919
    %v925 = vlaneseq
    %v926 = vshrl.u32 %v925, 7
    %v927 = vsub.s32 %v407, %v926
    %v928 = vrot.slane %v822, %v927
    %v929 = vlaneseq
    %v930 = vshrl.u32 %v929, 7
    %v931 = vsub.s32 %v412, %v930
    %v932 = vrot.slane %v825, %v931
    %v933 = vsel %vm417, %v932, %v928
    %v934 = vlaneseq
    %v935 = vshrl.u32 %v934, 7
    %v936 = vsub.s32 %v407, %v935
    %v937 = vrot.slane %v828, %v936
    %v938 = vlaneseq
    %v939 = vshrl.u32 %v938, 7
    %v940 = vsub.s32 %v412, %v939
    %v941 = vrot.slane %v831, %v940
    %v942 = vsel %vm417, %v941, %v937
    %v943 = vlaneseq
    %v944 = vshrl.u32 %v943, 7
    %v945 = vsub.s32 %v407, %v944
    %v946 = vrot.slane %v834, %v945
    %v947 = vlaneseq
    %v948 = vshrl.u32 %v947, 7
    %v949 = vsub.s32 %v412, %v948
    %v950 = vrot.slane %v837, %v949
    %v951 = vsel %vm417, %v950, %v946
    %v952 = vlaneseq
    %v953 = vshrl.u32 %v952, 7
    %v954 = vsub.s32 %v407, %v953
    %v955 = vrot.slane %v840, %v954
    %v956 = vlaneseq
    %v957 = vshrl.u32 %v956, 7
    %v958 = vsub.s32 %v412, %v957
    %v959 = vrot.slane %v843, %v958
    %v960 = vsel %vm417, %v959, %v955
    %v961 = vlaneseq
    %v962 = vshrl.u32 %v961, 7
    %v963 = vsub.s32 %v407, %v962
    %v964 = vrot.slane %v846, %v963
    %v965 = vlaneseq
    %v966 = vshrl.u32 %v965, 7
    %v967 = vsub.s32 %v412, %v966
    %v968 = vrot.slane %v849, %v967
    %v969 = vsel %vm417, %v968, %v964
    %v970 = vlaneseq
    %v971 = vshrl.u32 %v970, 7
    %v972 = vsub.s32 %v407, %v971
    %v973 = vrot.slane %v852, %v972
    %v974 = vlaneseq
    %v975 = vshrl.u32 %v974, 7
    %v976 = vsub.s32 %v412, %v975
    %v977 = vrot.slane %v855, %v976
    %v978 = vsel %vm417, %v977, %v973
    %v979 = vlaneseq
    %v980 = vshrl.u32 %v979, 7
    %v981 = vsub.s32 %v407, %v980
    %v982 = vrot.slane %v858, %v981
    %v983 = vlaneseq
    %v984 = vshrl.u32 %v983, 7
    %v985 = vsub.s32 %v412, %v984
    %v986 = vrot.slane %v861, %v985
    %v987 = vsel %vm417, %v986, %v982
    %v988 = vlaneseq
    %v989 = vshrl.u32 %v988, 7
    %v990 = vsub.s32 %v407, %v989
    %v991 = vrot.slane %v864, %v990
    %v992 = vlaneseq
    %v993 = vshrl.u32 %v992, 7
    %v994 = vsub.s32 %v412, %v993
    %v995 = vrot.slane %v867, %v994
    %v996 = vsel %vm417, %v995, %v991
    %v997 = vlaneseq
    %v998 = vshrl.u32 %v997, 7
    %v999 = vsub.s32 %v407, %v998
    %v1000 = vrot.slane %v870, %v999
    %v1001 = vlaneseq
    %v1002 = vshrl.u32 %v1001, 7
    %v1003 = vsub.s32 %v412, %v1002
    %v1004 = vrot.slane %v873, %v1003
    %v1005 = vsel %vm417, %v1004, %v1000
    %v1006 = vlaneseq
    %v1007 = vshrl.u32 %v1006, 7
    %v1008 = vsub.s32 %v407, %v1007
    %v1009 = vrot.slane %v876, %v1008
    %v1010 = vlaneseq
    %v1011 = vshrl.u32 %v1010, 7
    %v1012 = vsub.s32 %v412, %v1011
    %v1013 = vrot.slane %v879, %v1012
    %v1014 = vsel %vm417, %v1013, %v1009
    %v1015 = vlaneseq
    %v1016 = vshrl.u32 %v1015, 7
    %v1017 = vsub.s32 %v407, %v1016
    %v1018 = vrot.slane %v882, %v1017
    %v1019 = vlaneseq
    %v1020 = vshrl.u32 %v1019, 7
    %v1021 = vsub.s32 %v412, %v1020
    %v1022 = vrot.slane %v885, %v1021
    %v1023 = vsel %vm417, %v1022, %v1018
    %v1024 = vlaneseq
    %v1025 = vshrl.u32 %v1024, 7
    %v1026 = vsub.s32 %v407, %v1025
    %v1027 = vrot.slane %v888, %v1026
    %v1028 = vlaneseq
    %v1029 = vshrl.u32 %v1028, 7
    %v1030 = vsub.s32 %v412, %v1029
    %v1031 = vrot.slane %v891, %v1030
    %v1032 = vsel %vm417, %v1031, %v1027
    %v1033 = vlaneseq
    %v1034 = vshrl.u32 %v1033, 7
    %v1035 = vsub.s32 %v407, %v1034
    %v1036 = vrot.slane %v894, %v1035
    %v1037 = vlaneseq
    %v1038 = vshrl.u32 %v1037, 7
    %v1039 = vsub.s32 %v412, %v1038
    %v1040 = vrot.slane %v897, %v1039
    %v1041 = vsel %vm417, %v1040, %v1036
    %v1042 = vsel %vm555, %v906, %v906
    %v1043 = vsel %vm557, %v906, %v1042
    %v1044 = vsel %vm559, %v906, %v1043
    %v1045 = vsel %vm561, %v906, %v1044
    %v1046 = vsel %vm563, %v906, %v1045
    %v1047 = vsel %vm565, %v906, %v1046
    %v1048 = vsel %vm555, %v915, %v915
    %v1049 = vsel %vm557, %v915, %v1048
    %v1050 = vsel %vm559, %v915, %v1049
    %v1051 = vsel %vm561, %v915, %v1050
    %v1052 = vsel %vm563, %v915, %v1051
    %v1053 = vsel %vm565, %v915, %v1052
    %v1054 = vsel %vm555, %v924, %v924
    %v1055 = vsel %vm557, %v924, %v1054
    %v1056 = vsel %vm559, %v924, %v1055
    %v1057 = vsel %vm561, %v924, %v1056
    %v1058 = vsel %vm563, %v924, %v1057
    %v1059 = vsel %vm565, %v924, %v1058
    %v1060 = vsel %vm555, %v933, %v933
    %v1061 = vsel %vm557, %v933, %v1060
    %v1062 = vsel %vm559, %v933, %v1061
    %v1063 = vsel %vm561, %v933, %v1062
    %v1064 = vsel %vm563, %v933, %v1063
    %v1065 = vsel %vm565, %v933, %v1064
    %v1066 = vsel %vm555, %v942, %v942
    %v1067 = vsel %vm557, %v942, %v1066
    %v1068 = vsel %vm559, %v942, %v1067
    %v1069 = vsel %vm561, %v942, %v1068
    %v1070 = vsel %vm563, %v942, %v1069
    %v1071 = vsel %vm565, %v942, %v1070
    %v1072 = vsel %vm555, %v951, %v951
    %v1073 = vsel %vm557, %v951, %v1072
    %v1074 = vsel %vm559, %v951, %v1073
    %v1075 = vsel %vm561, %v951, %v1074
    %v1076 = vsel %vm563, %v951, %v1075
    %v1077 = vsel %vm565, %v951, %v1076
    %v1078 = vsel %vm555, %v960, %v960
    %v1079 = vsel %vm557, %v960, %v1078
    %v1080 = vsel %vm559, %v960, %v1079
    %v1081 = vsel %vm561, %v960, %v1080
    %v1082 = vsel %vm563, %v960, %v1081
    %v1083 = vsel %vm565, %v960, %v1082
    %v1084 = vsel %vm555, %v969, %v969
    %v1085 = vsel %vm557, %v969, %v1084
    %v1086 = vsel %vm559, %v969, %v1085
    %v1087 = vsel %vm561, %v969, %v1086
    %v1088 = vsel %vm563, %v969, %v1087
    %v1089 = vsel %vm565, %v969, %v1088
    %v1090 = vsel %vm555, %v978, %v978
    %v1091 = vsel %vm557, %v978, %v1090
    %v1092 = vsel %vm559, %v978, %v1091
    %v1093 = vsel %vm561, %v978, %v1092
    %v1094 = vsel %vm563, %v978, %v1093
    %v1095 = vsel %vm565, %v978, %v1094
    %v1096 = vsel %vm555, %v987, %v987
    %v1097 = vsel %vm557, %v987, %v1096
    %v1098 = vsel %vm559, %v987, %v1097
    %v1099 = vsel %vm561, %v987, %v1098
    %v1100 = vsel %vm563, %v987, %v1099
    %v1101 = vsel %vm565, %v987, %v1100
    %v1102 = vsel %vm555, %v996, %v996
    %v1103 = vsel %vm557, %v996, %v1102
    %v1104 = vsel %vm559, %v996, %v1103
    %v1105 = vsel %vm561, %v996, %v1104
    %v1106 = vsel %vm563, %v996, %v1105
    %v1107 = vsel %vm565, %v996, %v1106
    %v1108 = vsel %vm555, %v1005, %v1005
    %v1109 = vsel %vm557, %v1005, %v1108
    %v1110 = vsel %vm559, %v1005, %v1109
    %v1111 = vsel %vm561, %v1005, %v1110
    %v1112 = vsel %vm563, %v1005, %v1111
    %v1113 = vsel %vm565, %v1005, %v1112
    %v1114 = vsel %vm555, %v1014, %v1014
    %v1115 = vsel %vm557, %v1014, %v1114
    %v1116 = vsel %vm559, %v1014, %v1115
    %v1117 = vsel %vm561, %v1014, %v1116
    %v1118 = vsel %vm563, %v1014, %v1117
    %v1119 = vsel %vm565, %v1014, %v1118
    %v1120 = vsel %vm555, %v1023, %v1023
    %v1121 = vsel %vm557, %v1023, %v1120
    %v1122 = vsel %vm559, %v1023, %v1121
    %v1123 = vsel %vm561, %v1023, %v1122
    %v1124 = vsel %vm563, %v1023, %v1123
    %v1125 = vsel %vm565, %v1023, %v1124
    %v1126 = vsel %vm555, %v1032, %v1032
    %v1127 = vsel %vm557, %v1032, %v1126
    %v1128 = vsel %vm559, %v1032, %v1127
    %v1129 = vsel %vm561, %v1032, %v1128
    %v1130 = vsel %vm563, %v1032, %v1129
    %v1131 = vsel %vm565, %v1032, %v1130
    %v1132 = vsel %vm555, %v1041, %v1041
    %v1133 = vsel %vm557, %v1041, %v1132
    %v1134 = vsel %vm559, %v1041, %v1133
    %v1135 = vsel %vm561, %v1041, %v1134
    %v1136 = vsel %vm563, %v1041, %v1135
    %v1137 = vsel %vm565, %v1041, %v1136
    %v1154 = vmul.f32 %v214, %v1047
    %v1155 = vmul.f32 %v215, %v1047
    %v1156 = vmul.f32 %v216, %v1053
    %v1157 = vmul.f32 %v217, %v1053
    %v1158 = vmul.f32 %v218, %v1059
    %v1159 = vmul.f32 %v219, %v1059
    %v1160 = vmul.f32 %v220, %v1065
    %v1161 = vmul.f32 %v221, %v1065
    %v1162 = vmul.f32 %v222, %v1071
    %v1163 = vmul.f32 %v223, %v1071
    %v1164 = vmul.f32 %v224, %v1077
    %v1165 = vmul.f32 %v225, %v1077
    %v1166 = vmul.f32 %v226, %v1083
    %v1167 = vmul.f32 %v227, %v1083
    %v1168 = vmul.f32 %v228, %v1089
    %v1169 = vmul.f32 %v229, %v1089
    %v1170 = vmul.f32 %v230, %v1095
    %v1171 = vmul.f32 %v231, %v1095
    %v1172 = vmul.f32 %v232, %v1101
    %v1173 = vmul.f32 %v233, %v1101
    %v1174 = vmul.f32 %v234, %v1107
    %v1175 = vmul.f32 %v235, %v1107
    %v1176 = vmul.f32 %v236, %v1113
    %v1177 = vmul.f32 %v237, %v1113
    %v1178 = vmul.f32 %v238, %v1119
    %v1179 = vmul.f32 %v239, %v1119
    %v1180 = vmul.f32 %v240, %v1125
    %v1181 = vmul.f32 %v241, %v1125
    %v1182 = vmul.f32 %v242, %v1131
    %v1183 = vmul.f32 %v243, %v1131
    %v1184 = vmul.f32 %v244, %v1137
    %v1185 = vmul.f32 %v245, %v1137
    %v1186 = vsel %vm705, %v1154, 0.0
    %1187 = vadd.xlane.f32.xlu0 %v1186
    %v1188 = vpop.xlane.xlu0 %1187
    %v1189 = vsel %vm705, %v1155, 0.0
    %1190 = vadd.xlane.f32.xlu0 %v1189
    %v1191 = vpop.xlane.xlu0 %1190
    %v1192 = vsel %vm705, %v1156, 0.0
    %1193 = vadd.xlane.f32.xlu0 %v1192
    %v1194 = vpop.xlane.xlu0 %1193
    %v1195 = vsel %vm705, %v1157, 0.0
    %1196 = vadd.xlane.f32.xlu0 %v1195
    %v1197 = vpop.xlane.xlu0 %1196
    %v1198 = vsel %vm705, %v1158, 0.0
    %1199 = vadd.xlane.f32.xlu0 %v1198
    %v1200 = vpop.xlane.xlu0 %1199
    %v1201 = vsel %vm705, %v1159, 0.0
    %1202 = vadd.xlane.f32.xlu0 %v1201
    %v1203 = vpop.xlane.xlu0 %1202
    %v1204 = vsel %vm705, %v1160, 0.0
    %1205 = vadd.xlane.f32.xlu0 %v1204
    %v1206 = vpop.xlane.xlu0 %1205
    %v1207 = vsel %vm705, %v1161, 0.0
    %1208 = vadd.xlane.f32.xlu0 %v1207
    %v1209 = vpop.xlane.xlu0 %1208
    %v1210 = vsel %vm705, %v1162, 0.0
    %1211 = vadd.xlane.f32.xlu0 %v1210
    %v1212 = vpop.xlane.xlu0 %1211
    %v1213 = vsel %vm705, %v1163, 0.0
    %1214 = vadd.xlane.f32.xlu0 %v1213
    %v1215 = vpop.xlane.xlu0 %1214
    %v1216 = vsel %vm705, %v1164, 0.0
    %1217 = vadd.xlane.f32.xlu0 %v1216
    %v1218 = vpop.xlane.xlu0 %1217
    %v1219 = vsel %vm705, %v1165, 0.0
    %1220 = vadd.xlane.f32.xlu0 %v1219
    %v1221 = vpop.xlane.xlu0 %1220
    %v1222 = vsel %vm705, %v1166, 0.0
    %1223 = vadd.xlane.f32.xlu0 %v1222
    %v1224 = vpop.xlane.xlu0 %1223
    %v1225 = vsel %vm705, %v1167, 0.0
    %1226 = vadd.xlane.f32.xlu0 %v1225
    %v1227 = vpop.xlane.xlu0 %1226
    %v1228 = vsel %vm705, %v1168, 0.0
    %1229 = vadd.xlane.f32.xlu0 %v1228
    %v1230 = vpop.xlane.xlu0 %1229
    %v1231 = vsel %vm705, %v1169, 0.0
    %1232 = vadd.xlane.f32.xlu0 %v1231
    %v1233 = vpop.xlane.xlu0 %1232
    %v1234 = vsel %vm705, %v1170, 0.0
    %1235 = vadd.xlane.f32.xlu0 %v1234
    %v1236 = vpop.xlane.xlu0 %1235
    %v1237 = vsel %vm705, %v1171, 0.0
    %1238 = vadd.xlane.f32.xlu0 %v1237
    %v1239 = vpop.xlane.xlu0 %1238
    %v1240 = vsel %vm705, %v1172, 0.0
    %1241 = vadd.xlane.f32.xlu0 %v1240
    %v1242 = vpop.xlane.xlu0 %1241
    %v1243 = vsel %vm705, %v1173, 0.0
    %1244 = vadd.xlane.f32.xlu0 %v1243
    %v1245 = vpop.xlane.xlu0 %1244
    %v1246 = vsel %vm705, %v1174, 0.0
    %1247 = vadd.xlane.f32.xlu0 %v1246
    %v1248 = vpop.xlane.xlu0 %1247
    %v1249 = vsel %vm705, %v1175, 0.0
    %1250 = vadd.xlane.f32.xlu0 %v1249
    %v1251 = vpop.xlane.xlu0 %1250
    %v1252 = vsel %vm705, %v1176, 0.0
    %1253 = vadd.xlane.f32.xlu0 %v1252
    %v1254 = vpop.xlane.xlu0 %1253
    %v1255 = vsel %vm705, %v1177, 0.0
    %1256 = vadd.xlane.f32.xlu0 %v1255
    %v1257 = vpop.xlane.xlu0 %1256
    %v1258 = vsel %vm705, %v1178, 0.0
    %1259 = vadd.xlane.f32.xlu0 %v1258
    %v1260 = vpop.xlane.xlu0 %1259
    %v1261 = vsel %vm705, %v1179, 0.0
    %1262 = vadd.xlane.f32.xlu0 %v1261
    %v1263 = vpop.xlane.xlu0 %1262
    %v1264 = vsel %vm705, %v1180, 0.0
    %1265 = vadd.xlane.f32.xlu0 %v1264
    %v1266 = vpop.xlane.xlu0 %1265
    %v1267 = vsel %vm705, %v1181, 0.0
    %1268 = vadd.xlane.f32.xlu0 %v1267
    %v1269 = vpop.xlane.xlu0 %1268
    %v1270 = vsel %vm705, %v1182, 0.0
    %1271 = vadd.xlane.f32.xlu0 %v1270
    %v1272 = vpop.xlane.xlu0 %1271
    %v1273 = vsel %vm705, %v1183, 0.0
    %1274 = vadd.xlane.f32.xlu0 %v1273
    %v1275 = vpop.xlane.xlu0 %1274
    %v1276 = vsel %vm705, %v1184, 0.0
    %1277 = vadd.xlane.f32.xlu0 %v1276
    %v1278 = vpop.xlane.xlu0 %1277
    %v1279 = vsel %vm705, %v1185, 0.0
    %1280 = vadd.xlane.f32.xlu0 %v1279
    %v1281 = vpop.xlane.xlu0 %1280
    %s1282 = sld [smem:[#allocation7]]
    %v1283 = vstv %s1282
    %v1284 = vmul.f32 %v708, %v1283
    %v1285 = vmul.f32 %v711, %v1283
    %v1286 = vmul.f32 %v714, %v1283
    %v1287 = vmul.f32 %v717, %v1283
    %v1288 = vmul.f32 %v720, %v1283
    %v1289 = vmul.f32 %v723, %v1283
    %v1290 = vmul.f32 %v726, %v1283
    %v1291 = vmul.f32 %v729, %v1283
    %v1292 = vmul.f32 %v732, %v1283
    %v1293 = vmul.f32 %v735, %v1283
    %v1294 = vmul.f32 %v738, %v1283
    %v1295 = vmul.f32 %v741, %v1283
    %v1296 = vmul.f32 %v744, %v1283
    %v1297 = vmul.f32 %v747, %v1283
    %v1298 = vmul.f32 %v750, %v1283
    %v1299 = vmul.f32 %v753, %v1283
    %v1300 = vmul.f32 %v756, %v1283
    %v1301 = vmul.f32 %v759, %v1283
    %v1302 = vmul.f32 %v762, %v1283
    %v1303 = vmul.f32 %v765, %v1283
    %v1304 = vmul.f32 %v768, %v1283
    %v1305 = vmul.f32 %v771, %v1283
    %v1306 = vmul.f32 %v774, %v1283
    %v1307 = vmul.f32 %v777, %v1283
    %v1308 = vmul.f32 %v780, %v1283
    %v1309 = vmul.f32 %v783, %v1283
    %v1310 = vmul.f32 %v786, %v1283
    %v1311 = vmul.f32 %v789, %v1283
    %v1312 = vmul.f32 %v792, %v1283
    %v1313 = vmul.f32 %v795, %v1283
    %v1314 = vmul.f32 %v798, %v1283
    %v1315 = vmul.f32 %v801, %v1283
    %s1316 = sld [smem:[#allocation7 + $0x2]]
    %v1317 = vstv %s1316
    %v1318 = vmul.f32 %v1188, %v1317
    %v1319 = vmul.f32 %v1191, %v1317
    %v1320 = vmul.f32 %v1194, %v1317
    %v1321 = vmul.f32 %v1197, %v1317
    %v1322 = vmul.f32 %v1200, %v1317
    %v1323 = vmul.f32 %v1203, %v1317
    %v1324 = vmul.f32 %v1206, %v1317
    %v1325 = vmul.f32 %v1209, %v1317
    %v1326 = vmul.f32 %v1212, %v1317
    %v1327 = vmul.f32 %v1215, %v1317
    %v1328 = vmul.f32 %v1218, %v1317
    %v1329 = vmul.f32 %v1221, %v1317
    %v1330 = vmul.f32 %v1224, %v1317
    %v1331 = vmul.f32 %v1227, %v1317
    %v1332 = vmul.f32 %v1230, %v1317
    %v1333 = vmul.f32 %v1233, %v1317
    %v1334 = vmul.f32 %v1236, %v1317
    %v1335 = vmul.f32 %v1239, %v1317
    %v1336 = vmul.f32 %v1242, %v1317
    %v1337 = vmul.f32 %v1245, %v1317
    %v1338 = vmul.f32 %v1248, %v1317
    %v1339 = vmul.f32 %v1251, %v1317
    %v1340 = vmul.f32 %v1254, %v1317
    %v1341 = vmul.f32 %v1257, %v1317
    %v1342 = vmul.f32 %v1260, %v1317
    %v1343 = vmul.f32 %v1263, %v1317
    %v1344 = vmul.f32 %v1266, %v1317
    %v1345 = vmul.f32 %v1269, %v1317
    %v1346 = vmul.f32 %v1272, %v1317
    %v1347 = vmul.f32 %v1275, %v1317
    %v1348 = vmul.f32 %v1278, %v1317
    %v1349 = vmul.f32 %v1281, %v1317
    %v1350 = vadd.f32 %v1284, %v1318
    %v1351 = vadd.f32 %v1285, %v1319
    %v1352 = vadd.f32 %v1286, %v1320
    %v1353 = vadd.f32 %v1287, %v1321
    %v1354 = vadd.f32 %v1288, %v1322
    %v1355 = vadd.f32 %v1289, %v1323
    %v1356 = vadd.f32 %v1290, %v1324
    %v1357 = vadd.f32 %v1291, %v1325
    %v1358 = vadd.f32 %v1292, %v1326
    %v1359 = vadd.f32 %v1293, %v1327
    %v1360 = vadd.f32 %v1294, %v1328
    %v1361 = vadd.f32 %v1295, %v1329
    %v1362 = vadd.f32 %v1296, %v1330
    %v1363 = vadd.f32 %v1297, %v1331
    %v1364 = vadd.f32 %v1298, %v1332
    %v1365 = vadd.f32 %v1299, %v1333
    %v1366 = vadd.f32 %v1300, %v1334
    %v1367 = vadd.f32 %v1301, %v1335
    %v1368 = vadd.f32 %v1302, %v1336
    %v1369 = vadd.f32 %v1303, %v1337
    %v1370 = vadd.f32 %v1304, %v1338
    %v1371 = vadd.f32 %v1305, %v1339
    %v1372 = vadd.f32 %v1306, %v1340
    %v1373 = vadd.f32 %v1307, %v1341
    %v1374 = vadd.f32 %v1308, %v1342
    %v1375 = vadd.f32 %v1309, %v1343
    %v1376 = vadd.f32 %v1310, %v1344
    %v1377 = vadd.f32 %v1311, %v1345
    %v1378 = vadd.f32 %v1312, %v1346
    %v1379 = vadd.f32 %v1313, %v1347
    %v1380 = vadd.f32 %v1314, %v1348
    %v1381 = vadd.f32 %v1315, %v1349
    %s1382 = sld [smem:[#allocation8]]
    %v1383 = vstv %s1382
    %v1384 = vadd.f32 %v1350, %v1383
    %v1385 = vadd.f32 %v1351, %v1383
    %v1386 = vadd.f32 %v1352, %v1383
    %v1387 = vadd.f32 %v1353, %v1383
    %v1388 = vadd.f32 %v1354, %v1383
    %v1389 = vadd.f32 %v1355, %v1383
    %v1390 = vadd.f32 %v1356, %v1383
    %v1391 = vadd.f32 %v1357, %v1383
    %v1392 = vadd.f32 %v1358, %v1383
    %v1393 = vadd.f32 %v1359, %v1383
    %v1394 = vadd.f32 %v1360, %v1383
    %v1395 = vadd.f32 %v1361, %v1383
    %v1396 = vadd.f32 %v1362, %v1383
    %v1397 = vadd.f32 %v1363, %v1383
    %v1398 = vadd.f32 %v1364, %v1383
    %v1399 = vadd.f32 %v1365, %v1383
    %v1400 = vadd.f32 %v1366, %v1383
    %v1401 = vadd.f32 %v1367, %v1383
    %v1402 = vadd.f32 %v1368, %v1383
    %v1403 = vadd.f32 %v1369, %v1383
    %v1404 = vadd.f32 %v1370, %v1383
    %v1405 = vadd.f32 %v1371, %v1383
    %v1406 = vadd.f32 %v1372, %v1383
    %v1407 = vadd.f32 %v1373, %v1383
    %v1408 = vadd.f32 %v1374, %v1383
    %v1409 = vadd.f32 %v1375, %v1383
    %v1410 = vadd.f32 %v1376, %v1383
    %v1411 = vadd.f32 %v1377, %v1383
    %v1412 = vadd.f32 %v1378, %v1383
    %v1413 = vadd.f32 %v1379, %v1383
    %v1414 = vadd.f32 %v1380, %v1383
    %v1415 = vadd.f32 %v1381, %v1383
    %v1416 = vmax.f32 %v1384, 0.0
    %v1417 = vmax.f32 %v1385, 0.0
    %v1418 = vmax.f32 %v1386, 0.0
    %v1419 = vmax.f32 %v1387, 0.0
    %v1420 = vmax.f32 %v1388, 0.0
    %v1421 = vmax.f32 %v1389, 0.0
    %v1422 = vmax.f32 %v1390, 0.0
    %v1423 = vmax.f32 %v1391, 0.0
    %v1424 = vmax.f32 %v1392, 0.0
    %v1425 = vmax.f32 %v1393, 0.0
    %v1426 = vmax.f32 %v1394, 0.0
    %v1427 = vmax.f32 %v1395, 0.0
    %v1428 = vmax.f32 %v1396, 0.0
    %v1429 = vmax.f32 %v1397, 0.0
    %v1430 = vmax.f32 %v1398, 0.0
    %v1431 = vmax.f32 %v1399, 0.0
    %v1432 = vmax.f32 %v1400, 0.0
    %v1433 = vmax.f32 %v1401, 0.0
    %v1434 = vmax.f32 %v1402, 0.0
    %v1435 = vmax.f32 %v1403, 0.0
    %v1436 = vmax.f32 %v1404, 0.0
    %v1437 = vmax.f32 %v1405, 0.0
    %v1438 = vmax.f32 %v1406, 0.0
    %v1439 = vmax.f32 %v1407, 0.0
    %v1440 = vmax.f32 %v1408, 0.0
    %v1441 = vmax.f32 %v1409, 0.0
    %v1442 = vmax.f32 %v1410, 0.0
    %v1443 = vmax.f32 %v1411, 0.0
    %v1444 = vmax.f32 %v1412, 0.0
    %v1445 = vmax.f32 %v1413, 0.0
    %v1446 = vmax.f32 %v1414, 0.0
    %v1447 = vmax.f32 %v1415, 0.0
    %s1448 = sld [smem:[#allocation7 + $0x1]]
    %v1449 = vstv %s1448
    %v1450 = vmul.f32 %v708, %v1449
    %v1451 = vmul.f32 %v711, %v1449
    %v1452 = vmul.f32 %v714, %v1449
    %v1453 = vmul.f32 %v717, %v1449
    %v1454 = vmul.f32 %v720, %v1449
    %v1455 = vmul.f32 %v723, %v1449
    %v1456 = vmul.f32 %v726, %v1449
    %v1457 = vmul.f32 %v729, %v1449
    %v1458 = vmul.f32 %v732, %v1449
    %v1459 = vmul.f32 %v735, %v1449
    %v1460 = vmul.f32 %v738, %v1449
    %v1461 = vmul.f32 %v741, %v1449
    %v1462 = vmul.f32 %v744, %v1449
    %v1463 = vmul.f32 %v747, %v1449
    %v1464 = vmul.f32 %v750, %v1449
    %v1465 = vmul.f32 %v753, %v1449
    %v1466 = vmul.f32 %v756, %v1449
    %v1467 = vmul.f32 %v759, %v1449
    %v1468 = vmul.f32 %v762, %v1449
    %v1469 = vmul.f32 %v765, %v1449
    %v1470 = vmul.f32 %v768, %v1449
    %v1471 = vmul.f32 %v771, %v1449
    %v1472 = vmul.f32 %v774, %v1449
    %v1473 = vmul.f32 %v777, %v1449
    %v1474 = vmul.f32 %v780, %v1449
    %v1475 = vmul.f32 %v783, %v1449
    %v1476 = vmul.f32 %v786, %v1449
    %v1477 = vmul.f32 %v789, %v1449
    %v1478 = vmul.f32 %v792, %v1449
    %v1479 = vmul.f32 %v795, %v1449
    %v1480 = vmul.f32 %v798, %v1449
    %v1481 = vmul.f32 %v801, %v1449
    %s1482 = sld [smem:[#allocation7 + $0x3]]
    %v1483 = vstv %s1482
    %v1484 = vmul.f32 %v1188, %v1483
    %v1485 = vmul.f32 %v1191, %v1483
    %v1486 = vmul.f32 %v1194, %v1483
    %v1487 = vmul.f32 %v1197, %v1483
    %v1488 = vmul.f32 %v1200, %v1483
    %v1489 = vmul.f32 %v1203, %v1483
    %v1490 = vmul.f32 %v1206, %v1483
    %v1491 = vmul.f32 %v1209, %v1483
    %v1492 = vmul.f32 %v1212, %v1483
    %v1493 = vmul.f32 %v1215, %v1483
    %v1494 = vmul.f32 %v1218, %v1483
    %v1495 = vmul.f32 %v1221, %v1483
    %v1496 = vmul.f32 %v1224, %v1483
    %v1497 = vmul.f32 %v1227, %v1483
    %v1498 = vmul.f32 %v1230, %v1483
    %v1499 = vmul.f32 %v1233, %v1483
    %v1500 = vmul.f32 %v1236, %v1483
    %v1501 = vmul.f32 %v1239, %v1483
    %v1502 = vmul.f32 %v1242, %v1483
    %v1503 = vmul.f32 %v1245, %v1483
    %v1504 = vmul.f32 %v1248, %v1483
    %v1505 = vmul.f32 %v1251, %v1483
    %v1506 = vmul.f32 %v1254, %v1483
    %v1507 = vmul.f32 %v1257, %v1483
    %v1508 = vmul.f32 %v1260, %v1483
    %v1509 = vmul.f32 %v1263, %v1483
    %v1510 = vmul.f32 %v1266, %v1483
    %v1511 = vmul.f32 %v1269, %v1483
    %v1512 = vmul.f32 %v1272, %v1483
    %v1513 = vmul.f32 %v1275, %v1483
    %v1514 = vmul.f32 %v1278, %v1483
    %v1515 = vmul.f32 %v1281, %v1483
    %v1516 = vadd.f32 %v1450, %v1484
    %v1517 = vadd.f32 %v1451, %v1485
    %v1518 = vadd.f32 %v1452, %v1486
    %v1519 = vadd.f32 %v1453, %v1487
    %v1520 = vadd.f32 %v1454, %v1488
    %v1521 = vadd.f32 %v1455, %v1489
    %v1522 = vadd.f32 %v1456, %v1490
    %v1523 = vadd.f32 %v1457, %v1491
    %v1524 = vadd.f32 %v1458, %v1492
    %v1525 = vadd.f32 %v1459, %v1493
    %v1526 = vadd.f32 %v1460, %v1494
    %v1527 = vadd.f32 %v1461, %v1495
    %v1528 = vadd.f32 %v1462, %v1496
    %v1529 = vadd.f32 %v1463, %v1497
    %v1530 = vadd.f32 %v1464, %v1498
    %v1531 = vadd.f32 %v1465, %v1499
    %v1532 = vadd.f32 %v1466, %v1500
    %v1533 = vadd.f32 %v1467, %v1501
    %v1534 = vadd.f32 %v1468, %v1502
    %v1535 = vadd.f32 %v1469, %v1503
    %v1536 = vadd.f32 %v1470, %v1504
    %v1537 = vadd.f32 %v1471, %v1505
    %v1538 = vadd.f32 %v1472, %v1506
    %v1539 = vadd.f32 %v1473, %v1507
    %v1540 = vadd.f32 %v1474, %v1508
    %v1541 = vadd.f32 %v1475, %v1509
    %v1542 = vadd.f32 %v1476, %v1510
    %v1543 = vadd.f32 %v1477, %v1511
    %v1544 = vadd.f32 %v1478, %v1512
    %v1545 = vadd.f32 %v1479, %v1513
    %v1546 = vadd.f32 %v1480, %v1514
    %v1547 = vadd.f32 %v1481, %v1515
    %s1548 = sld [smem:[#allocation8 + $0x1]]
    %v1549 = vstv %s1548
    %v1550 = vadd.f32 %v1516, %v1549
    %v1551 = vadd.f32 %v1517, %v1549
    %v1552 = vadd.f32 %v1518, %v1549
    %v1553 = vadd.f32 %v1519, %v1549
    %v1554 = vadd.f32 %v1520, %v1549
    %v1555 = vadd.f32 %v1521, %v1549
    %v1556 = vadd.f32 %v1522, %v1549
    %v1557 = vadd.f32 %v1523, %v1549
    %v1558 = vadd.f32 %v1524, %v1549
    %v1559 = vadd.f32 %v1525, %v1549
    %v1560 = vadd.f32 %v1526, %v1549
    %v1561 = vadd.f32 %v1527, %v1549
    %v1562 = vadd.f32 %v1528, %v1549
    %v1563 = vadd.f32 %v1529, %v1549
    %v1564 = vadd.f32 %v1530, %v1549
    %v1565 = vadd.f32 %v1531, %v1549
    %v1566 = vadd.f32 %v1532, %v1549
    %v1567 = vadd.f32 %v1533, %v1549
    %v1568 = vadd.f32 %v1534, %v1549
    %v1569 = vadd.f32 %v1535, %v1549
    %v1570 = vadd.f32 %v1536, %v1549
    %v1571 = vadd.f32 %v1537, %v1549
    %v1572 = vadd.f32 %v1538, %v1549
    %v1573 = vadd.f32 %v1539, %v1549
    %v1574 = vadd.f32 %v1540, %v1549
    %v1575 = vadd.f32 %v1541, %v1549
    %v1576 = vadd.f32 %v1542, %v1549
    %v1577 = vadd.f32 %v1543, %v1549
    %v1578 = vadd.f32 %v1544, %v1549
    %v1579 = vadd.f32 %v1545, %v1549
    %v1580 = vadd.f32 %v1546, %v1549
    %v1581 = vadd.f32 %v1547, %v1549
    %v1582 = vmax.f32 %v1550, 0.0
    %v1583 = vmax.f32 %v1551, 0.0
    %v1584 = vmax.f32 %v1552, 0.0
    %v1585 = vmax.f32 %v1553, 0.0
    %v1586 = vmax.f32 %v1554, 0.0
    %v1587 = vmax.f32 %v1555, 0.0
    %v1588 = vmax.f32 %v1556, 0.0
    %v1589 = vmax.f32 %v1557, 0.0
    %v1590 = vmax.f32 %v1558, 0.0
    %v1591 = vmax.f32 %v1559, 0.0
    %v1592 = vmax.f32 %v1560, 0.0
    %v1593 = vmax.f32 %v1561, 0.0
    %v1594 = vmax.f32 %v1562, 0.0
    %v1595 = vmax.f32 %v1563, 0.0
    %v1596 = vmax.f32 %v1564, 0.0
    %v1597 = vmax.f32 %v1565, 0.0
    %v1598 = vmax.f32 %v1566, 0.0
    %v1599 = vmax.f32 %v1567, 0.0
    %v1600 = vmax.f32 %v1568, 0.0
    %v1601 = vmax.f32 %v1569, 0.0
    %v1602 = vmax.f32 %v1570, 0.0
    %v1603 = vmax.f32 %v1571, 0.0
    %v1604 = vmax.f32 %v1572, 0.0
    %v1605 = vmax.f32 %v1573, 0.0
    %v1606 = vmax.f32 %v1574, 0.0
    %v1607 = vmax.f32 %v1575, 0.0
    %v1608 = vmax.f32 %v1576, 0.0
    %v1609 = vmax.f32 %v1577, 0.0
    %v1610 = vmax.f32 %v1578, 0.0
    %v1611 = vmax.f32 %v1579, 0.0
    %v1612 = vmax.f32 %v1580, 0.0
    %v1613 = vmax.f32 %v1581, 0.0
    %v1614 = vld [vmem:[#allocation5] sm:$0xff]
    %v1615 = vld [vmem:[#allocation5 + $0x8] sm:$0xff]
    %v1616 = vld [vmem:[#allocation5 + $0x10] sm:$0xff]
    %v1617 = vld [vmem:[#allocation5 + $0x18] sm:$0xff]
    %v1618 = vld [vmem:[#allocation5 + $0x20] sm:$0xff]
    %v1619 = vld [vmem:[#allocation5 + $0x28] sm:$0xff]
    %v1620 = vld [vmem:[#allocation5 + $0x30] sm:$0xff]
    %v1621 = vld [vmem:[#allocation5 + $0x38] sm:$0xff]
    %v1622 = vld [vmem:[#allocation5 + $0x40] sm:$0xff]
    %v1623 = vld [vmem:[#allocation5 + $0x48] sm:$0xff]
    %v1624 = vld [vmem:[#allocation5 + $0x50] sm:$0xff]
    %v1625 = vld [vmem:[#allocation5 + $0x58] sm:$0xff]
    %v1626 = vld [vmem:[#allocation5 + $0x60] sm:$0xff]
    %v1627 = vld [vmem:[#allocation5 + $0x68] sm:$0xff]
    %v1628 = vld [vmem:[#allocation5 + $0x70] sm:$0xff]
    %v1629 = vld [vmem:[#allocation5 + $0x78] sm:$0xff]
    %v1630 = vld [vmem:[#allocation5 + $0x80] sm:$0xff]
    %v1631 = vld [vmem:[#allocation5 + $0x88] sm:$0xff]
    %v1632 = vld [vmem:[#allocation5 + $0x90] sm:$0xff]
    %v1633 = vld [vmem:[#allocation5 + $0x98] sm:$0xff]
    %v1634 = vld [vmem:[#allocation5 + $0xa0] sm:$0xff]
    %v1635 = vld [vmem:[#allocation5 + $0xa8] sm:$0xff]
    %v1636 = vld [vmem:[#allocation5 + $0xb0] sm:$0xff]
    %v1637 = vld [vmem:[#allocation5 + $0xb8] sm:$0xff]
    %v1638 = vld [vmem:[#allocation5 + $0xc0] sm:$0xff]
    %v1639 = vld [vmem:[#allocation5 + $0xc8] sm:$0xff]
    %v1640 = vld [vmem:[#allocation5 + $0xd0] sm:$0xff]
    %v1641 = vld [vmem:[#allocation5 + $0xd8] sm:$0xff]
    %v1642 = vld [vmem:[#allocation5 + $0xe0] sm:$0xff]
    %v1643 = vld [vmem:[#allocation5 + $0xe8] sm:$0xff]
    %v1644 = vld [vmem:[#allocation5 + $0xf0] sm:$0xff]
    %v1645 = vld [vmem:[#allocation5 + $0xf8] sm:$0xff]
    %v1646 = vld [vmem:[%s2] sm:$0xff]
    %v1647 = vld [vmem:[%s2 + $0x8] sm:$0xff]
    %v1648 = vld [vmem:[%s2 + $0x10] sm:$0xff]
    %v1649 = vld [vmem:[%s2 + $0x18] sm:$0xff]
    %v1650 = vld [vmem:[%s2 + $0x20] sm:$0xff]
    %v1651 = vld [vmem:[%s2 + $0x28] sm:$0xff]
    %v1652 = vld [vmem:[%s2 + $0x30] sm:$0xff]
    %v1653 = vld [vmem:[%s2 + $0x38] sm:$0xff]
    %v1654 = vld [vmem:[%s2 + $0x40] sm:$0xff]
    %v1655 = vld [vmem:[%s2 + $0x48] sm:$0xff]
    %v1656 = vld [vmem:[%s2 + $0x50] sm:$0xff]
    %v1657 = vld [vmem:[%s2 + $0x58] sm:$0xff]
    %v1658 = vld [vmem:[%s2 + $0x60] sm:$0xff]
    %v1659 = vld [vmem:[%s2 + $0x68] sm:$0xff]
    %v1660 = vld [vmem:[%s2 + $0x70] sm:$0xff]
    %v1661 = vld [vmem:[%s2 + $0x78] sm:$0xff]
    %v1662 = vld [vmem:[%s2 + $0x80] sm:$0xff]
    %v1663 = vld [vmem:[%s2 + $0x88] sm:$0xff]
    %v1664 = vld [vmem:[%s2 + $0x90] sm:$0xff]
    %v1665 = vld [vmem:[%s2 + $0x98] sm:$0xff]
    %v1666 = vld [vmem:[%s2 + $0xa0] sm:$0xff]
    %v1667 = vld [vmem:[%s2 + $0xa8] sm:$0xff]
    %v1668 = vld [vmem:[%s2 + $0xb0] sm:$0xff]
    %v1669 = vld [vmem:[%s2 + $0xb8] sm:$0xff]
    %v1670 = vld [vmem:[%s2 + $0xc0] sm:$0xff]
    %v1671 = vld [vmem:[%s2 + $0xc8] sm:$0xff]
    %v1672 = vld [vmem:[%s2 + $0xd0] sm:$0xff]
    %v1673 = vld [vmem:[%s2 + $0xd8] sm:$0xff]
    %v1674 = vld [vmem:[%s2 + $0xe0] sm:$0xff]
    %v1675 = vld [vmem:[%s2 + $0xe8] sm:$0xff]
    %v1676 = vld [vmem:[%s2 + $0xf0] sm:$0xff]
    %v1677 = vld [vmem:[%s2 + $0xf8] sm:$0xff]
    %1710 = vset.pattern.permute.xlu0 0
    %1711 = vperm.xlu0 %1710, %v1646
    %v1712 = vpop.permute.xlu0 %1711
    %1713 = vset.pattern.permute.xlu0 0
    %1714 = vperm.xlu0 %1713, %v1647
    %v1715 = vpop.permute.xlu0 %1714
    %1716 = vset.pattern.permute.xlu0 0
    %1717 = vperm.xlu0 %1716, %v1648
    %v1718 = vpop.permute.xlu0 %1717
    %1719 = vset.pattern.permute.xlu0 0
    %1720 = vperm.xlu0 %1719, %v1649
    %v1721 = vpop.permute.xlu0 %1720
    %1722 = vset.pattern.permute.xlu0 0
    %1723 = vperm.xlu0 %1722, %v1650
    %v1724 = vpop.permute.xlu0 %1723
    %1725 = vset.pattern.permute.xlu0 0
    %1726 = vperm.xlu0 %1725, %v1651
    %v1727 = vpop.permute.xlu0 %1726
    %1728 = vset.pattern.permute.xlu0 0
    %1729 = vperm.xlu0 %1728, %v1652
    %v1730 = vpop.permute.xlu0 %1729
    %1731 = vset.pattern.permute.xlu0 0
    %1732 = vperm.xlu0 %1731, %v1653
    %v1733 = vpop.permute.xlu0 %1732
    %1734 = vset.pattern.permute.xlu0 0
    %1735 = vperm.xlu0 %1734, %v1654
    %v1736 = vpop.permute.xlu0 %1735
    %1737 = vset.pattern.permute.xlu0 0
    %1738 = vperm.xlu0 %1737, %v1655
    %v1739 = vpop.permute.xlu0 %1738
    %1740 = vset.pattern.permute.xlu0 0
    %1741 = vperm.xlu0 %1740, %v1656
    %v1742 = vpop.permute.xlu0 %1741
    %1743 = vset.pattern.permute.xlu0 0
    %1744 = vperm.xlu0 %1743, %v1657
    %v1745 = vpop.permute.xlu0 %1744
    %1746 = vset.pattern.permute.xlu0 0
    %1747 = vperm.xlu0 %1746, %v1658
    %v1748 = vpop.permute.xlu0 %1747
    %1749 = vset.pattern.permute.xlu0 0
    %1750 = vperm.xlu0 %1749, %v1659
    %v1751 = vpop.permute.xlu0 %1750
    %1752 = vset.pattern.permute.xlu0 0
    %1753 = vperm.xlu0 %1752, %v1660
    %v1754 = vpop.permute.xlu0 %1753
    %1755 = vset.pattern.permute.xlu0 0
    %1756 = vperm.xlu0 %1755, %v1661
    %v1757 = vpop.permute.xlu0 %1756
    %1758 = vset.pattern.permute.xlu0 0
    %1759 = vperm.xlu0 %1758, %v1662
    %v1760 = vpop.permute.xlu0 %1759
    %1761 = vset.pattern.permute.xlu0 0
    %1762 = vperm.xlu0 %1761, %v1663
    %v1763 = vpop.permute.xlu0 %1762
    %1764 = vset.pattern.permute.xlu0 0
    %1765 = vperm.xlu0 %1764, %v1664
    %v1766 = vpop.permute.xlu0 %1765
    %1767 = vset.pattern.permute.xlu0 0
    %1768 = vperm.xlu0 %1767, %v1665
    %v1769 = vpop.permute.xlu0 %1768
    %1770 = vset.pattern.permute.xlu0 0
    %1771 = vperm.xlu0 %1770, %v1666
    %v1772 = vpop.permute.xlu0 %1771
    %1773 = vset.pattern.permute.xlu0 0
    %1774 = vperm.xlu0 %1773, %v1667
    %v1775 = vpop.permute.xlu0 %1774
    %1776 = vset.pattern.permute.xlu0 0
    %1777 = vperm.xlu0 %1776, %v1668
    %v1778 = vpop.permute.xlu0 %1777
    %1779 = vset.pattern.permute.xlu0 0
    %1780 = vperm.xlu0 %1779, %v1669
    %v1781 = vpop.permute.xlu0 %1780
    %1782 = vset.pattern.permute.xlu0 0
    %1783 = vperm.xlu0 %1782, %v1670
    %v1784 = vpop.permute.xlu0 %1783
    %1785 = vset.pattern.permute.xlu0 0
    %1786 = vperm.xlu0 %1785, %v1671
    %v1787 = vpop.permute.xlu0 %1786
    %1788 = vset.pattern.permute.xlu0 0
    %1789 = vperm.xlu0 %1788, %v1672
    %v1790 = vpop.permute.xlu0 %1789
    %1791 = vset.pattern.permute.xlu0 0
    %1792 = vperm.xlu0 %1791, %v1673
    %v1793 = vpop.permute.xlu0 %1792
    %1794 = vset.pattern.permute.xlu0 0
    %1795 = vperm.xlu0 %1794, %v1674
    %v1796 = vpop.permute.xlu0 %1795
    %1797 = vset.pattern.permute.xlu0 0
    %1798 = vperm.xlu0 %1797, %v1675
    %v1799 = vpop.permute.xlu0 %1798
    %1800 = vset.pattern.permute.xlu0 0
    %1801 = vperm.xlu0 %1800, %v1676
    %v1802 = vpop.permute.xlu0 %1801
    %1803 = vset.pattern.permute.xlu0 0
    %1804 = vperm.xlu0 %1803, %v1677
    %v1805 = vpop.permute.xlu0 %1804
    %v1806 = vlaneseq
    %v1807 = vshrl.u32 %v1806, 7
    %v1808 = vsub.s32 %v407, %v1807
    %v1809 = vrot.slane %v1712, %v1808
    %v1810 = vlaneseq
    %v1811 = vshrl.u32 %v1810, 7
    %v1812 = vsub.s32 %v412, %v1811
    %v1813 = vrot.slane %v1715, %v1812
    %v1814 = vsel %vm417, %v1813, %v1809
    %v1815 = vlaneseq
    %v1816 = vshrl.u32 %v1815, 7
    %v1817 = vsub.s32 %v407, %v1816
    %v1818 = vrot.slane %v1718, %v1817
    %v1819 = vlaneseq
    %v1820 = vshrl.u32 %v1819, 7
    %v1821 = vsub.s32 %v412, %v1820
    %v1822 = vrot.slane %v1721, %v1821
    %v1823 = vsel %vm417, %v1822, %v1818
    %v1824 = vlaneseq
    %v1825 = vshrl.u32 %v1824, 7
    %v1826 = vsub.s32 %v407, %v1825
    %v1827 = vrot.slane %v1724, %v1826
    %v1828 = vlaneseq
    %v1829 = vshrl.u32 %v1828, 7
    %v1830 = vsub.s32 %v412, %v1829
    %v1831 = vrot.slane %v1727, %v1830
    %v1832 = vsel %vm417, %v1831, %v1827
    %v1833 = vlaneseq
    %v1834 = vshrl.u32 %v1833, 7
    %v1835 = vsub.s32 %v407, %v1834
    %v1836 = vrot.slane %v1730, %v1835
    %v1837 = vlaneseq
    %v1838 = vshrl.u32 %v1837, 7
    %v1839 = vsub.s32 %v412, %v1838
    %v1840 = vrot.slane %v1733, %v1839
    %v1841 = vsel %vm417, %v1840, %v1836
    %v1842 = vlaneseq
    %v1843 = vshrl.u32 %v1842, 7
    %v1844 = vsub.s32 %v407, %v1843
    %v1845 = vrot.slane %v1736, %v1844
    %v1846 = vlaneseq
    %v1847 = vshrl.u32 %v1846, 7
    %v1848 = vsub.s32 %v412, %v1847
    %v1849 = vrot.slane %v1739, %v1848
    %v1850 = vsel %vm417, %v1849, %v1845
    %v1851 = vlaneseq
    %v1852 = vshrl.u32 %v1851, 7
    %v1853 = vsub.s32 %v407, %v1852
    %v1854 = vrot.slane %v1742, %v1853
    %v1855 = vlaneseq
    %v1856 = vshrl.u32 %v1855, 7
    %v1857 = vsub.s32 %v412, %v1856
    %v1858 = vrot.slane %v1745, %v1857
    %v1859 = vsel %vm417, %v1858, %v1854
    %v1860 = vlaneseq
    %v1861 = vshrl.u32 %v1860, 7
    %v1862 = vsub.s32 %v407, %v1861
    %v1863 = vrot.slane %v1748, %v1862
    %v1864 = vlaneseq
    %v1865 = vshrl.u32 %v1864, 7
    %v1866 = vsub.s32 %v412, %v1865
    %v1867 = vrot.slane %v1751, %v1866
    %v1868 = vsel %vm417, %v1867, %v1863
    %v1869 = vlaneseq
    %v1870 = vshrl.u32 %v1869, 7
    %v1871 = vsub.s32 %v407, %v1870
    %v1872 = vrot.slane %v1754, %v1871
    %v1873 = vlaneseq
    %v1874 = vshrl.u32 %v1873, 7
    %v1875 = vsub.s32 %v412, %v1874
    %v1876 = vrot.slane %v1757, %v1875
    %v1877 = vsel %vm417, %v1876, %v1872
    %v1878 = vlaneseq
    %v1879 = vshrl.u32 %v1878, 7
    %v1880 = vsub.s32 %v407, %v1879
    %v1881 = vrot.slane %v1760, %v1880
    %v1882 = vlaneseq
    %v1883 = vshrl.u32 %v1882, 7
    %v1884 = vsub.s32 %v412, %v1883
    %v1885 = vrot.slane %v1763, %v1884
    %v1886 = vsel %vm417, %v1885, %v1881
    %v1887 = vlaneseq
    %v1888 = vshrl.u32 %v1887, 7
    %v1889 = vsub.s32 %v407, %v1888
    %v1890 = vrot.slane %v1766, %v1889
    %v1891 = vlaneseq
    %v1892 = vshrl.u32 %v1891, 7
    %v1893 = vsub.s32 %v412, %v1892
    %v1894 = vrot.slane %v1769, %v1893
    %v1895 = vsel %vm417, %v1894, %v1890
    %v1896 = vlaneseq
    %v1897 = vshrl.u32 %v1896, 7
    %v1898 = vsub.s32 %v407, %v1897
    %v1899 = vrot.slane %v1772, %v1898
    %v1900 = vlaneseq
    %v1901 = vshrl.u32 %v1900, 7
    %v1902 = vsub.s32 %v412, %v1901
    %v1903 = vrot.slane %v1775, %v1902
    %v1904 = vsel %vm417, %v1903, %v1899
    %v1905 = vlaneseq
    %v1906 = vshrl.u32 %v1905, 7
    %v1907 = vsub.s32 %v407, %v1906
    %v1908 = vrot.slane %v1778, %v1907
    %v1909 = vlaneseq
    %v1910 = vshrl.u32 %v1909, 7
    %v1911 = vsub.s32 %v412, %v1910
    %v1912 = vrot.slane %v1781, %v1911
    %v1913 = vsel %vm417, %v1912, %v1908
    %v1914 = vlaneseq
    %v1915 = vshrl.u32 %v1914, 7
    %v1916 = vsub.s32 %v407, %v1915
    %v1917 = vrot.slane %v1784, %v1916
    %v1918 = vlaneseq
    %v1919 = vshrl.u32 %v1918, 7
    %v1920 = vsub.s32 %v412, %v1919
    %v1921 = vrot.slane %v1787, %v1920
    %v1922 = vsel %vm417, %v1921, %v1917
    %v1923 = vlaneseq
    %v1924 = vshrl.u32 %v1923, 7
    %v1925 = vsub.s32 %v407, %v1924
    %v1926 = vrot.slane %v1790, %v1925
    %v1927 = vlaneseq
    %v1928 = vshrl.u32 %v1927, 7
    %v1929 = vsub.s32 %v412, %v1928
    %v1930 = vrot.slane %v1793, %v1929
    %v1931 = vsel %vm417, %v1930, %v1926
    %v1932 = vlaneseq
    %v1933 = vshrl.u32 %v1932, 7
    %v1934 = vsub.s32 %v407, %v1933
    %v1935 = vrot.slane %v1796, %v1934
    %v1936 = vlaneseq
    %v1937 = vshrl.u32 %v1936, 7
    %v1938 = vsub.s32 %v412, %v1937
    %v1939 = vrot.slane %v1799, %v1938
    %v1940 = vsel %vm417, %v1939, %v1935
    %v1941 = vlaneseq
    %v1942 = vshrl.u32 %v1941, 7
    %v1943 = vsub.s32 %v407, %v1942
    %v1944 = vrot.slane %v1802, %v1943
    %v1945 = vlaneseq
    %v1946 = vshrl.u32 %v1945, 7
    %v1947 = vsub.s32 %v412, %v1946
    %v1948 = vrot.slane %v1805, %v1947
    %v1949 = vsel %vm417, %v1948, %v1944
    %v1950 = vsel %vm555, %v1814, %v1814
    %v1951 = vsel %vm557, %v1814, %v1950
    %v1952 = vsel %vm559, %v1814, %v1951
    %v1953 = vsel %vm561, %v1814, %v1952
    %v1954 = vsel %vm563, %v1814, %v1953
    %v1955 = vsel %vm565, %v1814, %v1954
    %v1956 = vsel %vm555, %v1823, %v1823
    %v1957 = vsel %vm557, %v1823, %v1956
    %v1958 = vsel %vm559, %v1823, %v1957
    %v1959 = vsel %vm561, %v1823, %v1958
    %v1960 = vsel %vm563, %v1823, %v1959
    %v1961 = vsel %vm565, %v1823, %v1960
    %v1962 = vsel %vm555, %v1832, %v1832
    %v1963 = vsel %vm557, %v1832, %v1962
    %v1964 = vsel %vm559, %v1832, %v1963
    %v1965 = vsel %vm561, %v1832, %v1964
    %v1966 = vsel %vm563, %v1832, %v1965
    %v1967 = vsel %vm565, %v1832, %v1966
    %v1968 = vsel %vm555, %v1841, %v1841
    %v1969 = vsel %vm557, %v1841, %v1968
    %v1970 = vsel %vm559, %v1841, %v1969
    %v1971 = vsel %vm561, %v1841, %v1970
    %v1972 = vsel %vm563, %v1841, %v1971
    %v1973 = vsel %vm565, %v1841, %v1972
    %v1974 = vsel %vm555, %v1850, %v1850
    %v1975 = vsel %vm557, %v1850, %v1974
    %v1976 = vsel %vm559, %v1850, %v1975
    %v1977 = vsel %vm561, %v1850, %v1976
    %v1978 = vsel %vm563, %v1850, %v1977
    %v1979 = vsel %vm565, %v1850, %v1978
    %v1980 = vsel %vm555, %v1859, %v1859
    %v1981 = vsel %vm557, %v1859, %v1980
    %v1982 = vsel %vm559, %v1859, %v1981
    %v1983 = vsel %vm561, %v1859, %v1982
    %v1984 = vsel %vm563, %v1859, %v1983
    %v1985 = vsel %vm565, %v1859, %v1984
    %v1986 = vsel %vm555, %v1868, %v1868
    %v1987 = vsel %vm557, %v1868, %v1986
    %v1988 = vsel %vm559, %v1868, %v1987
    %v1989 = vsel %vm561, %v1868, %v1988
    %v1990 = vsel %vm563, %v1868, %v1989
    %v1991 = vsel %vm565, %v1868, %v1990
    %v1992 = vsel %vm555, %v1877, %v1877
    %v1993 = vsel %vm557, %v1877, %v1992
    %v1994 = vsel %vm559, %v1877, %v1993
    %v1995 = vsel %vm561, %v1877, %v1994
    %v1996 = vsel %vm563, %v1877, %v1995
    %v1997 = vsel %vm565, %v1877, %v1996
    %v1998 = vsel %vm555, %v1886, %v1886
    %v1999 = vsel %vm557, %v1886, %v1998
    %v2000 = vsel %vm559, %v1886, %v1999
    %v2001 = vsel %vm561, %v1886, %v2000
    %v2002 = vsel %vm563, %v1886, %v2001
    %v2003 = vsel %vm565, %v1886, %v2002
    %v2004 = vsel %vm555, %v1895, %v1895
    %v2005 = vsel %vm557, %v1895, %v2004
    %v2006 = vsel %vm559, %v1895, %v2005
    %v2007 = vsel %vm561, %v1895, %v2006
    %v2008 = vsel %vm563, %v1895, %v2007
    %v2009 = vsel %vm565, %v1895, %v2008
    %v2010 = vsel %vm555, %v1904, %v1904
    %v2011 = vsel %vm557, %v1904, %v2010
    %v2012 = vsel %vm559, %v1904, %v2011
    %v2013 = vsel %vm561, %v1904, %v2012
    %v2014 = vsel %vm563, %v1904, %v2013
    %v2015 = vsel %vm565, %v1904, %v2014
    %v2016 = vsel %vm555, %v1913, %v1913
    %v2017 = vsel %vm557, %v1913, %v2016
    %v2018 = vsel %vm559, %v1913, %v2017
    %v2019 = vsel %vm561, %v1913, %v2018
    %v2020 = vsel %vm563, %v1913, %v2019
    %v2021 = vsel %vm565, %v1913, %v2020
    %v2022 = vsel %vm555, %v1922, %v1922
    %v2023 = vsel %vm557, %v1922, %v2022
    %v2024 = vsel %vm559, %v1922, %v2023
    %v2025 = vsel %vm561, %v1922, %v2024
    %v2026 = vsel %vm563, %v1922, %v2025
    %v2027 = vsel %vm565, %v1922, %v2026
    %v2028 = vsel %vm555, %v1931, %v1931
    %v2029 = vsel %vm557, %v1931, %v2028
    %v2030 = vsel %vm559, %v1931, %v2029
    %v2031 = vsel %vm561, %v1931, %v2030
    %v2032 = vsel %vm563, %v1931, %v2031
    %v2033 = vsel %vm565, %v1931, %v2032
    %v2034 = vsel %vm555, %v1940, %v1940
    %v2035 = vsel %vm557, %v1940, %v2034
    %v2036 = vsel %vm559, %v1940, %v2035
    %v2037 = vsel %vm561, %v1940, %v2036
    %v2038 = vsel %vm563, %v1940, %v2037
    %v2039 = vsel %vm565, %v1940, %v2038
    %v2040 = vsel %vm555, %v1949, %v1949
    %v2041 = vsel %vm557, %v1949, %v2040
    %v2042 = vsel %vm559, %v1949, %v2041
    %v2043 = vsel %vm561, %v1949, %v2042
    %v2044 = vsel %vm563, %v1949, %v2043
    %v2045 = vsel %vm565, %v1949, %v2044
    %v2062 = vmul.f32 %v1614, %v1955
    %v2063 = vmul.f32 %v1615, %v1955
    %v2064 = vmul.f32 %v1616, %v1961
    %v2065 = vmul.f32 %v1617, %v1961
    %v2066 = vmul.f32 %v1618, %v1967
    %v2067 = vmul.f32 %v1619, %v1967
    %v2068 = vmul.f32 %v1620, %v1973
    %v2069 = vmul.f32 %v1621, %v1973
    %v2070 = vmul.f32 %v1622, %v1979
    %v2071 = vmul.f32 %v1623, %v1979
    %v2072 = vmul.f32 %v1624, %v1985
    %v2073 = vmul.f32 %v1625, %v1985
    %v2074 = vmul.f32 %v1626, %v1991
    %v2075 = vmul.f32 %v1627, %v1991
    %v2076 = vmul.f32 %v1628, %v1997
    %v2077 = vmul.f32 %v1629, %v1997
    %v2078 = vmul.f32 %v1630, %v2003
    %v2079 = vmul.f32 %v1631, %v2003
    %v2080 = vmul.f32 %v1632, %v2009
    %v2081 = vmul.f32 %v1633, %v2009
    %v2082 = vmul.f32 %v1634, %v2015
    %v2083 = vmul.f32 %v1635, %v2015
    %v2084 = vmul.f32 %v1636, %v2021
    %v2085 = vmul.f32 %v1637, %v2021
    %v2086 = vmul.f32 %v1638, %v2027
    %v2087 = vmul.f32 %v1639, %v2027
    %v2088 = vmul.f32 %v1640, %v2033
    %v2089 = vmul.f32 %v1641, %v2033
    %v2090 = vmul.f32 %v1642, %v2039
    %v2091 = vmul.f32 %v1643, %v2039
    %v2092 = vmul.f32 %v1644, %v2045
    %v2093 = vmul.f32 %v1645, %v2045
    %v2094 = vsel %vm705, %v2062, 0.0
    %2095 = vadd.xlane.f32.xlu0 %v2094
    %v2096 = vpop.xlane.xlu0 %2095
    %v2097 = vsel %vm705, %v2063, 0.0
    %2098 = vadd.xlane.f32.xlu0 %v2097
    %v2099 = vpop.xlane.xlu0 %2098
    %v2100 = vsel %vm705, %v2064, 0.0
    %2101 = vadd.xlane.f32.xlu0 %v2100
    %v2102 = vpop.xlane.xlu0 %2101
    %v2103 = vsel %vm705, %v2065, 0.0
    %2104 = vadd.xlane.f32.xlu0 %v2103
    %v2105 = vpop.xlane.xlu0 %2104
    %v2106 = vsel %vm705, %v2066, 0.0
    %2107 = vadd.xlane.f32.xlu0 %v2106
    %v2108 = vpop.xlane.xlu0 %2107
    %v2109 = vsel %vm705, %v2067, 0.0
    %2110 = vadd.xlane.f32.xlu0 %v2109
    %v2111 = vpop.xlane.xlu0 %2110
    %v2112 = vsel %vm705, %v2068, 0.0
    %2113 = vadd.xlane.f32.xlu0 %v2112
    %v2114 = vpop.xlane.xlu0 %2113
    %v2115 = vsel %vm705, %v2069, 0.0
    %2116 = vadd.xlane.f32.xlu0 %v2115
    %v2117 = vpop.xlane.xlu0 %2116
    %v2118 = vsel %vm705, %v2070, 0.0
    %2119 = vadd.xlane.f32.xlu0 %v2118
    %v2120 = vpop.xlane.xlu0 %2119
    %v2121 = vsel %vm705, %v2071, 0.0
    %2122 = vadd.xlane.f32.xlu0 %v2121
    %v2123 = vpop.xlane.xlu0 %2122
    %v2124 = vsel %vm705, %v2072, 0.0
    %2125 = vadd.xlane.f32.xlu0 %v2124
    %v2126 = vpop.xlane.xlu0 %2125
    %v2127 = vsel %vm705, %v2073, 0.0
    %2128 = vadd.xlane.f32.xlu0 %v2127
    %v2129 = vpop.xlane.xlu0 %2128
    %v2130 = vsel %vm705, %v2074, 0.0
    %2131 = vadd.xlane.f32.xlu0 %v2130
    %v2132 = vpop.xlane.xlu0 %2131
    %v2133 = vsel %vm705, %v2075, 0.0
    %2134 = vadd.xlane.f32.xlu0 %v2133
    %v2135 = vpop.xlane.xlu0 %2134
    %v2136 = vsel %vm705, %v2076, 0.0
    %2137 = vadd.xlane.f32.xlu0 %v2136
    %v2138 = vpop.xlane.xlu0 %2137
    %v2139 = vsel %vm705, %v2077, 0.0
    %2140 = vadd.xlane.f32.xlu0 %v2139
    %v2141 = vpop.xlane.xlu0 %2140
    %v2142 = vsel %vm705, %v2078, 0.0
    %2143 = vadd.xlane.f32.xlu0 %v2142
    %v2144 = vpop.xlane.xlu0 %2143
    %v2145 = vsel %vm705, %v2079, 0.0
    %2146 = vadd.xlane.f32.xlu0 %v2145
    %v2147 = vpop.xlane.xlu0 %2146
    %v2148 = vsel %vm705, %v2080, 0.0
    %2149 = vadd.xlane.f32.xlu0 %v2148
    %v2150 = vpop.xlane.xlu0 %2149
    %v2151 = vsel %vm705, %v2081, 0.0
    %2152 = vadd.xlane.f32.xlu0 %v2151
    %v2153 = vpop.xlane.xlu0 %2152
    %v2154 = vsel %vm705, %v2082, 0.0
    %2155 = vadd.xlane.f32.xlu0 %v2154
    %v2156 = vpop.xlane.xlu0 %2155
    %v2157 = vsel %vm705, %v2083, 0.0
    %2158 = vadd.xlane.f32.xlu0 %v2157
    %v2159 = vpop.xlane.xlu0 %2158
    %v2160 = vsel %vm705, %v2084, 0.0
    %2161 = vadd.xlane.f32.xlu0 %v2160
    %v2162 = vpop.xlane.xlu0 %2161
    %v2163 = vsel %vm705, %v2085, 0.0
    %2164 = vadd.xlane.f32.xlu0 %v2163
    %v2165 = vpop.xlane.xlu0 %2164
    %v2166 = vsel %vm705, %v2086, 0.0
    %2167 = vadd.xlane.f32.xlu0 %v2166
    %v2168 = vpop.xlane.xlu0 %2167
    %v2169 = vsel %vm705, %v2087, 0.0
    %2170 = vadd.xlane.f32.xlu0 %v2169
    %v2171 = vpop.xlane.xlu0 %2170
    %v2172 = vsel %vm705, %v2088, 0.0
    %2173 = vadd.xlane.f32.xlu0 %v2172
    %v2174 = vpop.xlane.xlu0 %2173
    %v2175 = vsel %vm705, %v2089, 0.0
    %2176 = vadd.xlane.f32.xlu0 %v2175
    %v2177 = vpop.xlane.xlu0 %2176
    %v2178 = vsel %vm705, %v2090, 0.0
    %2179 = vadd.xlane.f32.xlu0 %v2178
    %v2180 = vpop.xlane.xlu0 %2179
    %v2181 = vsel %vm705, %v2091, 0.0
    %2182 = vadd.xlane.f32.xlu0 %v2181
    %v2183 = vpop.xlane.xlu0 %2182
    %v2184 = vsel %vm705, %v2092, 0.0
    %2185 = vadd.xlane.f32.xlu0 %v2184
    %v2186 = vpop.xlane.xlu0 %2185
    %v2187 = vsel %vm705, %v2093, 0.0
    %2188 = vadd.xlane.f32.xlu0 %v2187
    %v2189 = vpop.xlane.xlu0 %2188
    %2190 = vset.pattern.permute.xlu0 1
    %2191 = vperm.xlu0 %2190, %v1646
    %v2192 = vpop.permute.xlu0 %2191
    %2193 = vset.pattern.permute.xlu0 1
    %2194 = vperm.xlu0 %2193, %v1647
    %v2195 = vpop.permute.xlu0 %2194
    %2196 = vset.pattern.permute.xlu0 1
    %2197 = vperm.xlu0 %2196, %v1648
    %v2198 = vpop.permute.xlu0 %2197
    %2199 = vset.pattern.permute.xlu0 1
    %2200 = vperm.xlu0 %2199, %v1649
    %v2201 = vpop.permute.xlu0 %2200
    %2202 = vset.pattern.permute.xlu0 1
    %2203 = vperm.xlu0 %2202, %v1650
    %v2204 = vpop.permute.xlu0 %2203
    %2205 = vset.pattern.permute.xlu0 1
    %2206 = vperm.xlu0 %2205, %v1651
    %v2207 = vpop.permute.xlu0 %2206
    %2208 = vset.pattern.permute.xlu0 1
    %2209 = vperm.xlu0 %2208, %v1652
    %v2210 = vpop.permute.xlu0 %2209
    %2211 = vset.pattern.permute.xlu0 1
    %2212 = vperm.xlu0 %2211, %v1653
    %v2213 = vpop.permute.xlu0 %2212
    %2214 = vset.pattern.permute.xlu0 1
    %2215 = vperm.xlu0 %2214, %v1654
    %v2216 = vpop.permute.xlu0 %2215
    %2217 = vset.pattern.permute.xlu0 1
    %2218 = vperm.xlu0 %2217, %v1655
    %v2219 = vpop.permute.xlu0 %2218
    %2220 = vset.pattern.permute.xlu0 1
    %2221 = vperm.xlu0 %2220, %v1656
    %v2222 = vpop.permute.xlu0 %2221
    %2223 = vset.pattern.permute.xlu0 1
    %2224 = vperm.xlu0 %2223, %v1657
    %v2225 = vpop.permute.xlu0 %2224
    %2226 = vset.pattern.permute.xlu0 1
    %2227 = vperm.xlu0 %2226, %v1658
    %v2228 = vpop.permute.xlu0 %2227
    %2229 = vset.pattern.permute.xlu0 1
    %2230 = vperm.xlu0 %2229, %v1659
    %v2231 = vpop.permute.xlu0 %2230
    %2232 = vset.pattern.permute.xlu0 1
    %2233 = vperm.xlu0 %2232, %v1660
    %v2234 = vpop.permute.xlu0 %2233
    %2235 = vset.pattern.permute.xlu0 1
    %2236 = vperm.xlu0 %2235, %v1661
    %v2237 = vpop.permute.xlu0 %2236
    %2238 = vset.pattern.permute.xlu0 1
    %2239 = vperm.xlu0 %2238, %v1662
    %v2240 = vpop.permute.xlu0 %2239
    %2241 = vset.pattern.permute.xlu0 1
    %2242 = vperm.xlu0 %2241, %v1663
    %v2243 = vpop.permute.xlu0 %2242
    %2244 = vset.pattern.permute.xlu0 1
    %2245 = vperm.xlu0 %2244, %v1664
    %v2246 = vpop.permute.xlu0 %2245
    %2247 = vset.pattern.permute.xlu0 1
    %2248 = vperm.xlu0 %2247, %v1665
    %v2249 = vpop.permute.xlu0 %2248
    %2250 = vset.pattern.permute.xlu0 1
    %2251 = vperm.xlu0 %2250, %v1666
    %v2252 = vpop.permute.xlu0 %2251
    %2253 = vset.pattern.permute.xlu0 1
    %2254 = vperm.xlu0 %2253, %v1667
    %v2255 = vpop.permute.xlu0 %2254
    %2256 = vset.pattern.permute.xlu0 1
    %2257 = vperm.xlu0 %2256, %v1668
    %v2258 = vpop.permute.xlu0 %2257
    %2259 = vset.pattern.permute.xlu0 1
    %2260 = vperm.xlu0 %2259, %v1669
    %v2261 = vpop.permute.xlu0 %2260
    %2262 = vset.pattern.permute.xlu0 1
    %2263 = vperm.xlu0 %2262, %v1670
    %v2264 = vpop.permute.xlu0 %2263
    %2265 = vset.pattern.permute.xlu0 1
    %2266 = vperm.xlu0 %2265, %v1671
    %v2267 = vpop.permute.xlu0 %2266
    %2268 = vset.pattern.permute.xlu0 1
    %2269 = vperm.xlu0 %2268, %v1672
    %v2270 = vpop.permute.xlu0 %2269
    %2271 = vset.pattern.permute.xlu0 1
    %2272 = vperm.xlu0 %2271, %v1673
    %v2273 = vpop.permute.xlu0 %2272
    %2274 = vset.pattern.permute.xlu0 1
    %2275 = vperm.xlu0 %2274, %v1674
    %v2276 = vpop.permute.xlu0 %2275
    %2277 = vset.pattern.permute.xlu0 1
    %2278 = vperm.xlu0 %2277, %v1675
    %v2279 = vpop.permute.xlu0 %2278
    %2280 = vset.pattern.permute.xlu0 1
    %2281 = vperm.xlu0 %2280, %v1676
    %v2282 = vpop.permute.xlu0 %2281
    %2283 = vset.pattern.permute.xlu0 1
    %2284 = vperm.xlu0 %2283, %v1677
    %v2285 = vpop.permute.xlu0 %2284
    %v2286 = vlaneseq
    %v2287 = vshrl.u32 %v2286, 7
    %v2288 = vsub.s32 %v407, %v2287
    %v2289 = vrot.slane %v2192, %v2288
    %v2290 = vlaneseq
    %v2291 = vshrl.u32 %v2290, 7
    %v2292 = vsub.s32 %v412, %v2291
    %v2293 = vrot.slane %v2195, %v2292
    %v2294 = vsel %vm417, %v2293, %v2289
    %v2295 = vlaneseq
    %v2296 = vshrl.u32 %v2295, 7
    %v2297 = vsub.s32 %v407, %v2296
    %v2298 = vrot.slane %v2198, %v2297
    %v2299 = vlaneseq
    %v2300 = vshrl.u32 %v2299, 7
    %v2301 = vsub.s32 %v412, %v2300
    %v2302 = vrot.slane %v2201, %v2301
    %v2303 = vsel %vm417, %v2302, %v2298
    %v2304 = vlaneseq
    %v2305 = vshrl.u32 %v2304, 7
    %v2306 = vsub.s32 %v407, %v2305
    %v2307 = vrot.slane %v2204, %v2306
    %v2308 = vlaneseq
    %v2309 = vshrl.u32 %v2308, 7
    %v2310 = vsub.s32 %v412, %v2309
    %v2311 = vrot.slane %v2207, %v2310
    %v2312 = vsel %vm417, %v2311, %v2307
    %v2313 = vlaneseq
    %v2314 = vshrl.u32 %v2313, 7
    %v2315 = vsub.s32 %v407, %v2314
    %v2316 = vrot.slane %v2210, %v2315
    %v2317 = vlaneseq
    %v2318 = vshrl.u32 %v2317, 7
    %v2319 = vsub.s32 %v412, %v2318
    %v2320 = vrot.slane %v2213, %v2319
    %v2321 = vsel %vm417, %v2320, %v2316
    %v2322 = vlaneseq
    %v2323 = vshrl.u32 %v2322, 7
    %v2324 = vsub.s32 %v407, %v2323
    %v2325 = vrot.slane %v2216, %v2324
    %v2326 = vlaneseq
    %v2327 = vshrl.u32 %v2326, 7
    %v2328 = vsub.s32 %v412, %v2327
    %v2329 = vrot.slane %v2219, %v2328
    %v2330 = vsel %vm417, %v2329, %v2325
    %v2331 = vlaneseq
    %v2332 = vshrl.u32 %v2331, 7
    %v2333 = vsub.s32 %v407, %v2332
    %v2334 = vrot.slane %v2222, %v2333
    %v2335 = vlaneseq
    %v2336 = vshrl.u32 %v2335, 7
    %v2337 = vsub.s32 %v412, %v2336
    %v2338 = vrot.slane %v2225, %v2337
    %v2339 = vsel %vm417, %v2338, %v2334
    %v2340 = vlaneseq
    %v2341 = vshrl.u32 %v2340, 7
    %v2342 = vsub.s32 %v407, %v2341
    %v2343 = vrot.slane %v2228, %v2342
    %v2344 = vlaneseq
    %v2345 = vshrl.u32 %v2344, 7
    %v2346 = vsub.s32 %v412, %v2345
    %v2347 = vrot.slane %v2231, %v2346
    %v2348 = vsel %vm417, %v2347, %v2343
    %v2349 = vlaneseq
    %v2350 = vshrl.u32 %v2349, 7
    %v2351 = vsub.s32 %v407, %v2350
    %v2352 = vrot.slane %v2234, %v2351
    %v2353 = vlaneseq
    %v2354 = vshrl.u32 %v2353, 7
    %v2355 = vsub.s32 %v412, %v2354
    %v2356 = vrot.slane %v2237, %v2355
    %v2357 = vsel %vm417, %v2356, %v2352
    %v2358 = vlaneseq
    %v2359 = vshrl.u32 %v2358, 7
    %v2360 = vsub.s32 %v407, %v2359
    %v2361 = vrot.slane %v2240, %v2360
    %v2362 = vlaneseq
    %v2363 = vshrl.u32 %v2362, 7
    %v2364 = vsub.s32 %v412, %v2363
    %v2365 = vrot.slane %v2243, %v2364
    %v2366 = vsel %vm417, %v2365, %v2361
    %v2367 = vlaneseq
    %v2368 = vshrl.u32 %v2367, 7
    %v2369 = vsub.s32 %v407, %v2368
    %v2370 = vrot.slane %v2246, %v2369
    %v2371 = vlaneseq
    %v2372 = vshrl.u32 %v2371, 7
    %v2373 = vsub.s32 %v412, %v2372
    %v2374 = vrot.slane %v2249, %v2373
    %v2375 = vsel %vm417, %v2374, %v2370
    %v2376 = vlaneseq
    %v2377 = vshrl.u32 %v2376, 7
    %v2378 = vsub.s32 %v407, %v2377
    %v2379 = vrot.slane %v2252, %v2378
    %v2380 = vlaneseq
    %v2381 = vshrl.u32 %v2380, 7
    %v2382 = vsub.s32 %v412, %v2381
    %v2383 = vrot.slane %v2255, %v2382
    %v2384 = vsel %vm417, %v2383, %v2379
    %v2385 = vlaneseq
    %v2386 = vshrl.u32 %v2385, 7
    %v2387 = vsub.s32 %v407, %v2386
    %v2388 = vrot.slane %v2258, %v2387
    %v2389 = vlaneseq
    %v2390 = vshrl.u32 %v2389, 7
    %v2391 = vsub.s32 %v412, %v2390
    %v2392 = vrot.slane %v2261, %v2391
    %v2393 = vsel %vm417, %v2392, %v2388
    %v2394 = vlaneseq
    %v2395 = vshrl.u32 %v2394, 7
    %v2396 = vsub.s32 %v407, %v2395
    %v2397 = vrot.slane %v2264, %v2396
    %v2398 = vlaneseq
    %v2399 = vshrl.u32 %v2398, 7
    %v2400 = vsub.s32 %v412, %v2399
    %v2401 = vrot.slane %v2267, %v2400
    %v2402 = vsel %vm417, %v2401, %v2397
    %v2403 = vlaneseq
    %v2404 = vshrl.u32 %v2403, 7
    %v2405 = vsub.s32 %v407, %v2404
    %v2406 = vrot.slane %v2270, %v2405
    %v2407 = vlaneseq
    %v2408 = vshrl.u32 %v2407, 7
    %v2409 = vsub.s32 %v412, %v2408
    %v2410 = vrot.slane %v2273, %v2409
    %v2411 = vsel %vm417, %v2410, %v2406
    %v2412 = vlaneseq
    %v2413 = vshrl.u32 %v2412, 7
    %v2414 = vsub.s32 %v407, %v2413
    %v2415 = vrot.slane %v2276, %v2414
    %v2416 = vlaneseq
    %v2417 = vshrl.u32 %v2416, 7
    %v2418 = vsub.s32 %v412, %v2417
    %v2419 = vrot.slane %v2279, %v2418
    %v2420 = vsel %vm417, %v2419, %v2415
    %v2421 = vlaneseq
    %v2422 = vshrl.u32 %v2421, 7
    %v2423 = vsub.s32 %v407, %v2422
    %v2424 = vrot.slane %v2282, %v2423
    %v2425 = vlaneseq
    %v2426 = vshrl.u32 %v2425, 7
    %v2427 = vsub.s32 %v412, %v2426
    %v2428 = vrot.slane %v2285, %v2427
    %v2429 = vsel %vm417, %v2428, %v2424
    %v2430 = vsel %vm555, %v2294, %v2294
    %v2431 = vsel %vm557, %v2294, %v2430
    %v2432 = vsel %vm559, %v2294, %v2431
    %v2433 = vsel %vm561, %v2294, %v2432
    %v2434 = vsel %vm563, %v2294, %v2433
    %v2435 = vsel %vm565, %v2294, %v2434
    %v2436 = vsel %vm555, %v2303, %v2303
    %v2437 = vsel %vm557, %v2303, %v2436
    %v2438 = vsel %vm559, %v2303, %v2437
    %v2439 = vsel %vm561, %v2303, %v2438
    %v2440 = vsel %vm563, %v2303, %v2439
    %v2441 = vsel %vm565, %v2303, %v2440
    %v2442 = vsel %vm555, %v2312, %v2312
    %v2443 = vsel %vm557, %v2312, %v2442
    %v2444 = vsel %vm559, %v2312, %v2443
    %v2445 = vsel %vm561, %v2312, %v2444
    %v2446 = vsel %vm563, %v2312, %v2445
    %v2447 = vsel %vm565, %v2312, %v2446
    %v2448 = vsel %vm555, %v2321, %v2321
    %v2449 = vsel %vm557, %v2321, %v2448
    %v2450 = vsel %vm559, %v2321, %v2449
    %v2451 = vsel %vm561, %v2321, %v2450
    %v2452 = vsel %vm563, %v2321, %v2451
    %v2453 = vsel %vm565, %v2321, %v2452
    %v2454 = vsel %vm555, %v2330, %v2330
    %v2455 = vsel %vm557, %v2330, %v2454
    %v2456 = vsel %vm559, %v2330, %v2455
    %v2457 = vsel %vm561, %v2330, %v2456
    %v2458 = vsel %vm563, %v2330, %v2457
    %v2459 = vsel %vm565, %v2330, %v2458
    %v2460 = vsel %vm555, %v2339, %v2339
    %v2461 = vsel %vm557, %v2339, %v2460
    %v2462 = vsel %vm559, %v2339, %v2461
    %v2463 = vsel %vm561, %v2339, %v2462
    %v2464 = vsel %vm563, %v2339, %v2463
    %v2465 = vsel %vm565, %v2339, %v2464
    %v2466 = vsel %vm555, %v2348, %v2348
    %v2467 = vsel %vm557, %v2348, %v2466
    %v2468 = vsel %vm559, %v2348, %v2467
    %v2469 = vsel %vm561, %v2348, %v2468
    %v2470 = vsel %vm563, %v2348, %v2469
    %v2471 = vsel %vm565, %v2348, %v2470
    %v2472 = vsel %vm555, %v2357, %v2357
    %v2473 = vsel %vm557, %v2357, %v2472
    %v2474 = vsel %vm559, %v2357, %v2473
    %v2475 = vsel %vm561, %v2357, %v2474
    %v2476 = vsel %vm563, %v2357, %v2475
    %v2477 = vsel %vm565, %v2357, %v2476
    %v2478 = vsel %vm555, %v2366, %v2366
    %v2479 = vsel %vm557, %v2366, %v2478
    %v2480 = vsel %vm559, %v2366, %v2479
    %v2481 = vsel %vm561, %v2366, %v2480
    %v2482 = vsel %vm563, %v2366, %v2481
    %v2483 = vsel %vm565, %v2366, %v2482
    %v2484 = vsel %vm555, %v2375, %v2375
    %v2485 = vsel %vm557, %v2375, %v2484
    %v2486 = vsel %vm559, %v2375, %v2485
    %v2487 = vsel %vm561, %v2375, %v2486
    %v2488 = vsel %vm563, %v2375, %v2487
    %v2489 = vsel %vm565, %v2375, %v2488
    %v2490 = vsel %vm555, %v2384, %v2384
    %v2491 = vsel %vm557, %v2384, %v2490
    %v2492 = vsel %vm559, %v2384, %v2491
    %v2493 = vsel %vm561, %v2384, %v2492
    %v2494 = vsel %vm563, %v2384, %v2493
    %v2495 = vsel %vm565, %v2384, %v2494
    %v2496 = vsel %vm555, %v2393, %v2393
    %v2497 = vsel %vm557, %v2393, %v2496
    %v2498 = vsel %vm559, %v2393, %v2497
    %v2499 = vsel %vm561, %v2393, %v2498
    %v2500 = vsel %vm563, %v2393, %v2499
    %v2501 = vsel %vm565, %v2393, %v2500
    %v2502 = vsel %vm555, %v2402, %v2402
    %v2503 = vsel %vm557, %v2402, %v2502
    %v2504 = vsel %vm559, %v2402, %v2503
    %v2505 = vsel %vm561, %v2402, %v2504
    %v2506 = vsel %vm563, %v2402, %v2505
    %v2507 = vsel %vm565, %v2402, %v2506
    %v2508 = vsel %vm555, %v2411, %v2411
    %v2509 = vsel %vm557, %v2411, %v2508
    %v2510 = vsel %vm559, %v2411, %v2509
    %v2511 = vsel %vm561, %v2411, %v2510
    %v2512 = vsel %vm563, %v2411, %v2511
    %v2513 = vsel %vm565, %v2411, %v2512
    %v2514 = vsel %vm555, %v2420, %v2420
    %v2515 = vsel %vm557, %v2420, %v2514
    %v2516 = vsel %vm559, %v2420, %v2515
    %v2517 = vsel %vm561, %v2420, %v2516
    %v2518 = vsel %vm563, %v2420, %v2517
    %v2519 = vsel %vm565, %v2420, %v2518
    %v2520 = vsel %vm555, %v2429, %v2429
    %v2521 = vsel %vm557, %v2429, %v2520
    %v2522 = vsel %vm559, %v2429, %v2521
    %v2523 = vsel %vm561, %v2429, %v2522
    %v2524 = vsel %vm563, %v2429, %v2523
    %v2525 = vsel %vm565, %v2429, %v2524
    %v2542 = vmul.f32 %v1614, %v2435
    %v2543 = vmul.f32 %v1615, %v2435
    %v2544 = vmul.f32 %v1616, %v2441
    %v2545 = vmul.f32 %v1617, %v2441
    %v2546 = vmul.f32 %v1618, %v2447
    %v2547 = vmul.f32 %v1619, %v2447
    %v2548 = vmul.f32 %v1620, %v2453
    %v2549 = vmul.f32 %v1621, %v2453
    %v2550 = vmul.f32 %v1622, %v2459
    %v2551 = vmul.f32 %v1623, %v2459
    %v2552 = vmul.f32 %v1624, %v2465
    %v2553 = vmul.f32 %v1625, %v2465
    %v2554 = vmul.f32 %v1626, %v2471
    %v2555 = vmul.f32 %v1627, %v2471
    %v2556 = vmul.f32 %v1628, %v2477
    %v2557 = vmul.f32 %v1629, %v2477
    %v2558 = vmul.f32 %v1630, %v2483
    %v2559 = vmul.f32 %v1631, %v2483
    %v2560 = vmul.f32 %v1632, %v2489
    %v2561 = vmul.f32 %v1633, %v2489
    %v2562 = vmul.f32 %v1634, %v2495
    %v2563 = vmul.f32 %v1635, %v2495
    %v2564 = vmul.f32 %v1636, %v2501
    %v2565 = vmul.f32 %v1637, %v2501
    %v2566 = vmul.f32 %v1638, %v2507
    %v2567 = vmul.f32 %v1639, %v2507
    %v2568 = vmul.f32 %v1640, %v2513
    %v2569 = vmul.f32 %v1641, %v2513
    %v2570 = vmul.f32 %v1642, %v2519
    %v2571 = vmul.f32 %v1643, %v2519
    %v2572 = vmul.f32 %v1644, %v2525
    %v2573 = vmul.f32 %v1645, %v2525
    %v2574 = vsel %vm705, %v2542, 0.0
    %2575 = vadd.xlane.f32.xlu0 %v2574
    %v2576 = vpop.xlane.xlu0 %2575
    %v2577 = vsel %vm705, %v2543, 0.0
    %2578 = vadd.xlane.f32.xlu0 %v2577
    %v2579 = vpop.xlane.xlu0 %2578
    %v2580 = vsel %vm705, %v2544, 0.0
    %2581 = vadd.xlane.f32.xlu0 %v2580
    %v2582 = vpop.xlane.xlu0 %2581
    %v2583 = vsel %vm705, %v2545, 0.0
    %2584 = vadd.xlane.f32.xlu0 %v2583
    %v2585 = vpop.xlane.xlu0 %2584
    %v2586 = vsel %vm705, %v2546, 0.0
    %2587 = vadd.xlane.f32.xlu0 %v2586
    %v2588 = vpop.xlane.xlu0 %2587
    %v2589 = vsel %vm705, %v2547, 0.0
    %2590 = vadd.xlane.f32.xlu0 %v2589
    %v2591 = vpop.xlane.xlu0 %2590
    %v2592 = vsel %vm705, %v2548, 0.0
    %2593 = vadd.xlane.f32.xlu0 %v2592
    %v2594 = vpop.xlane.xlu0 %2593
    %v2595 = vsel %vm705, %v2549, 0.0
    %2596 = vadd.xlane.f32.xlu0 %v2595
    %v2597 = vpop.xlane.xlu0 %2596
    %v2598 = vsel %vm705, %v2550, 0.0
    %2599 = vadd.xlane.f32.xlu0 %v2598
    %v2600 = vpop.xlane.xlu0 %2599
    %v2601 = vsel %vm705, %v2551, 0.0
    %2602 = vadd.xlane.f32.xlu0 %v2601
    %v2603 = vpop.xlane.xlu0 %2602
    %v2604 = vsel %vm705, %v2552, 0.0
    %2605 = vadd.xlane.f32.xlu0 %v2604
    %v2606 = vpop.xlane.xlu0 %2605
    %v2607 = vsel %vm705, %v2553, 0.0
    %2608 = vadd.xlane.f32.xlu0 %v2607
    %v2609 = vpop.xlane.xlu0 %2608
    %v2610 = vsel %vm705, %v2554, 0.0
    %2611 = vadd.xlane.f32.xlu0 %v2610
    %v2612 = vpop.xlane.xlu0 %2611
    %v2613 = vsel %vm705, %v2555, 0.0
    %2614 = vadd.xlane.f32.xlu0 %v2613
    %v2615 = vpop.xlane.xlu0 %2614
    %v2616 = vsel %vm705, %v2556, 0.0
    %2617 = vadd.xlane.f32.xlu0 %v2616
    %v2618 = vpop.xlane.xlu0 %2617
    %v2619 = vsel %vm705, %v2557, 0.0
    %2620 = vadd.xlane.f32.xlu0 %v2619
    %v2621 = vpop.xlane.xlu0 %2620
    %v2622 = vsel %vm705, %v2558, 0.0
    %2623 = vadd.xlane.f32.xlu0 %v2622
    %v2624 = vpop.xlane.xlu0 %2623
    %v2625 = vsel %vm705, %v2559, 0.0
    %2626 = vadd.xlane.f32.xlu0 %v2625
    %v2627 = vpop.xlane.xlu0 %2626
    %v2628 = vsel %vm705, %v2560, 0.0
    %2629 = vadd.xlane.f32.xlu0 %v2628
    %v2630 = vpop.xlane.xlu0 %2629
    %v2631 = vsel %vm705, %v2561, 0.0
    %2632 = vadd.xlane.f32.xlu0 %v2631
    %v2633 = vpop.xlane.xlu0 %2632
    %v2634 = vsel %vm705, %v2562, 0.0
    %2635 = vadd.xlane.f32.xlu0 %v2634
    %v2636 = vpop.xlane.xlu0 %2635
    %v2637 = vsel %vm705, %v2563, 0.0
    %2638 = vadd.xlane.f32.xlu0 %v2637
    %v2639 = vpop.xlane.xlu0 %2638
    %v2640 = vsel %vm705, %v2564, 0.0
    %2641 = vadd.xlane.f32.xlu0 %v2640
    %v2642 = vpop.xlane.xlu0 %2641
    %v2643 = vsel %vm705, %v2565, 0.0
    %2644 = vadd.xlane.f32.xlu0 %v2643
    %v2645 = vpop.xlane.xlu0 %2644
    %v2646 = vsel %vm705, %v2566, 0.0
    %2647 = vadd.xlane.f32.xlu0 %v2646
    %v2648 = vpop.xlane.xlu0 %2647
    %v2649 = vsel %vm705, %v2567, 0.0
    %2650 = vadd.xlane.f32.xlu0 %v2649
    %v2651 = vpop.xlane.xlu0 %2650
    %v2652 = vsel %vm705, %v2568, 0.0
    %2653 = vadd.xlane.f32.xlu0 %v2652
    %v2654 = vpop.xlane.xlu0 %2653
    %v2655 = vsel %vm705, %v2569, 0.0
    %2656 = vadd.xlane.f32.xlu0 %v2655
    %v2657 = vpop.xlane.xlu0 %2656
    %v2658 = vsel %vm705, %v2570, 0.0
    %2659 = vadd.xlane.f32.xlu0 %v2658
    %v2660 = vpop.xlane.xlu0 %2659
    %v2661 = vsel %vm705, %v2571, 0.0
    %2662 = vadd.xlane.f32.xlu0 %v2661
    %v2663 = vpop.xlane.xlu0 %2662
    %v2664 = vsel %vm705, %v2572, 0.0
    %2665 = vadd.xlane.f32.xlu0 %v2664
    %v2666 = vpop.xlane.xlu0 %2665
    %v2667 = vsel %vm705, %v2573, 0.0
    %2668 = vadd.xlane.f32.xlu0 %v2667
    %v2669 = vpop.xlane.xlu0 %2668
    %s2670 = sld [smem:[#allocation7 + $0x80]]
    %v2671 = vstv %s2670
    %v2672 = vmul.f32 %v2096, %v2671
    %v2673 = vmul.f32 %v2099, %v2671
    %v2674 = vmul.f32 %v2102, %v2671
    %v2675 = vmul.f32 %v2105, %v2671
    %v2676 = vmul.f32 %v2108, %v2671
    %v2677 = vmul.f32 %v2111, %v2671
    %v2678 = vmul.f32 %v2114, %v2671
    %v2679 = vmul.f32 %v2117, %v2671
    %v2680 = vmul.f32 %v2120, %v2671
    %v2681 = vmul.f32 %v2123, %v2671
    %v2682 = vmul.f32 %v2126, %v2671
    %v2683 = vmul.f32 %v2129, %v2671
    %v2684 = vmul.f32 %v2132, %v2671
    %v2685 = vmul.f32 %v2135, %v2671
    %v2686 = vmul.f32 %v2138, %v2671
    %v2687 = vmul.f32 %v2141, %v2671
    %v2688 = vmul.f32 %v2144, %v2671
    %v2689 = vmul.f32 %v2147, %v2671
    %v2690 = vmul.f32 %v2150, %v2671
    %v2691 = vmul.f32 %v2153, %v2671
    %v2692 = vmul.f32 %v2156, %v2671
    %v2693 = vmul.f32 %v2159, %v2671
    %v2694 = vmul.f32 %v2162, %v2671
    %v2695 = vmul.f32 %v2165, %v2671
    %v2696 = vmul.f32 %v2168, %v2671
    %v2697 = vmul.f32 %v2171, %v2671
    %v2698 = vmul.f32 %v2174, %v2671
    %v2699 = vmul.f32 %v2177, %v2671
    %v2700 = vmul.f32 %v2180, %v2671
    %v2701 = vmul.f32 %v2183, %v2671
    %v2702 = vmul.f32 %v2186, %v2671
    %v2703 = vmul.f32 %v2189, %v2671
    %s2704 = sld [smem:[#allocation7 + $0x82]]
    %v2705 = vstv %s2704
    %v2706 = vmul.f32 %v2576, %v2705
    %v2707 = vmul.f32 %v2579, %v2705
    %v2708 = vmul.f32 %v2582, %v2705
    %v2709 = vmul.f32 %v2585, %v2705
    %v2710 = vmul.f32 %v2588, %v2705
    %v2711 = vmul.f32 %v2591, %v2705
    %v2712 = vmul.f32 %v2594, %v2705
    %v2713 = vmul.f32 %v2597, %v2705
    %v2714 = vmul.f32 %v2600, %v2705
    %v2715 = vmul.f32 %v2603, %v2705
    %v2716 = vmul.f32 %v2606, %v2705
    %v2717 = vmul.f32 %v2609, %v2705
    %v2718 = vmul.f32 %v2612, %v2705
    %v2719 = vmul.f32 %v2615, %v2705
    %v2720 = vmul.f32 %v2618, %v2705
    %v2721 = vmul.f32 %v2621, %v2705
    %v2722 = vmul.f32 %v2624, %v2705
    %v2723 = vmul.f32 %v2627, %v2705
    %v2724 = vmul.f32 %v2630, %v2705
    %v2725 = vmul.f32 %v2633, %v2705
    %v2726 = vmul.f32 %v2636, %v2705
    %v2727 = vmul.f32 %v2639, %v2705
    %v2728 = vmul.f32 %v2642, %v2705
    %v2729 = vmul.f32 %v2645, %v2705
    %v2730 = vmul.f32 %v2648, %v2705
    %v2731 = vmul.f32 %v2651, %v2705
    %v2732 = vmul.f32 %v2654, %v2705
    %v2733 = vmul.f32 %v2657, %v2705
    %v2734 = vmul.f32 %v2660, %v2705
    %v2735 = vmul.f32 %v2663, %v2705
    %v2736 = vmul.f32 %v2666, %v2705
    %v2737 = vmul.f32 %v2669, %v2705
    %v2738 = vadd.f32 %v2672, %v2706
    %v2739 = vadd.f32 %v2673, %v2707
    %v2740 = vadd.f32 %v2674, %v2708
    %v2741 = vadd.f32 %v2675, %v2709
    %v2742 = vadd.f32 %v2676, %v2710
    %v2743 = vadd.f32 %v2677, %v2711
    %v2744 = vadd.f32 %v2678, %v2712
    %v2745 = vadd.f32 %v2679, %v2713
    %v2746 = vadd.f32 %v2680, %v2714
    %v2747 = vadd.f32 %v2681, %v2715
    %v2748 = vadd.f32 %v2682, %v2716
    %v2749 = vadd.f32 %v2683, %v2717
    %v2750 = vadd.f32 %v2684, %v2718
    %v2751 = vadd.f32 %v2685, %v2719
    %v2752 = vadd.f32 %v2686, %v2720
    %v2753 = vadd.f32 %v2687, %v2721
    %v2754 = vadd.f32 %v2688, %v2722
    %v2755 = vadd.f32 %v2689, %v2723
    %v2756 = vadd.f32 %v2690, %v2724
    %v2757 = vadd.f32 %v2691, %v2725
    %v2758 = vadd.f32 %v2692, %v2726
    %v2759 = vadd.f32 %v2693, %v2727
    %v2760 = vadd.f32 %v2694, %v2728
    %v2761 = vadd.f32 %v2695, %v2729
    %v2762 = vadd.f32 %v2696, %v2730
    %v2763 = vadd.f32 %v2697, %v2731
    %v2764 = vadd.f32 %v2698, %v2732
    %v2765 = vadd.f32 %v2699, %v2733
    %v2766 = vadd.f32 %v2700, %v2734
    %v2767 = vadd.f32 %v2701, %v2735
    %v2768 = vadd.f32 %v2702, %v2736
    %v2769 = vadd.f32 %v2703, %v2737
    %s2770 = sld [smem:[#allocation8 + $0x80]]
    %v2771 = vstv %s2770
    %v2772 = vadd.f32 %v2738, %v2771
    %v2773 = vadd.f32 %v2739, %v2771
    %v2774 = vadd.f32 %v2740, %v2771
    %v2775 = vadd.f32 %v2741, %v2771
    %v2776 = vadd.f32 %v2742, %v2771
    %v2777 = vadd.f32 %v2743, %v2771
    %v2778 = vadd.f32 %v2744, %v2771
    %v2779 = vadd.f32 %v2745, %v2771
    %v2780 = vadd.f32 %v2746, %v2771
    %v2781 = vadd.f32 %v2747, %v2771
    %v2782 = vadd.f32 %v2748, %v2771
    %v2783 = vadd.f32 %v2749, %v2771
    %v2784 = vadd.f32 %v2750, %v2771
    %v2785 = vadd.f32 %v2751, %v2771
    %v2786 = vadd.f32 %v2752, %v2771
    %v2787 = vadd.f32 %v2753, %v2771
    %v2788 = vadd.f32 %v2754, %v2771
    %v2789 = vadd.f32 %v2755, %v2771
    %v2790 = vadd.f32 %v2756, %v2771
    %v2791 = vadd.f32 %v2757, %v2771
    %v2792 = vadd.f32 %v2758, %v2771
    %v2793 = vadd.f32 %v2759, %v2771
    %v2794 = vadd.f32 %v2760, %v2771
    %v2795 = vadd.f32 %v2761, %v2771
    %v2796 = vadd.f32 %v2762, %v2771
    %v2797 = vadd.f32 %v2763, %v2771
    %v2798 = vadd.f32 %v2764, %v2771
    %v2799 = vadd.f32 %v2765, %v2771
    %v2800 = vadd.f32 %v2766, %v2771
    %v2801 = vadd.f32 %v2767, %v2771
    %v2802 = vadd.f32 %v2768, %v2771
    %v2803 = vadd.f32 %v2769, %v2771
    %v2804 = vmax.f32 %v2772, 0.0
    %v2805 = vmax.f32 %v2773, 0.0
    %v2806 = vmax.f32 %v2774, 0.0
    %v2807 = vmax.f32 %v2775, 0.0
    %v2808 = vmax.f32 %v2776, 0.0
    %v2809 = vmax.f32 %v2777, 0.0
    %v2810 = vmax.f32 %v2778, 0.0
    %v2811 = vmax.f32 %v2779, 0.0
    %v2812 = vmax.f32 %v2780, 0.0
    %v2813 = vmax.f32 %v2781, 0.0
    %v2814 = vmax.f32 %v2782, 0.0
    %v2815 = vmax.f32 %v2783, 0.0
    %v2816 = vmax.f32 %v2784, 0.0
    %v2817 = vmax.f32 %v2785, 0.0
    %v2818 = vmax.f32 %v2786, 0.0
    %v2819 = vmax.f32 %v2787, 0.0
    %v2820 = vmax.f32 %v2788, 0.0
    %v2821 = vmax.f32 %v2789, 0.0
    %v2822 = vmax.f32 %v2790, 0.0
    %v2823 = vmax.f32 %v2791, 0.0
    %v2824 = vmax.f32 %v2792, 0.0
    %v2825 = vmax.f32 %v2793, 0.0
    %v2826 = vmax.f32 %v2794, 0.0
    %v2827 = vmax.f32 %v2795, 0.0
    %v2828 = vmax.f32 %v2796, 0.0
    %v2829 = vmax.f32 %v2797, 0.0
    %v2830 = vmax.f32 %v2798, 0.0
    %v2831 = vmax.f32 %v2799, 0.0
    %v2832 = vmax.f32 %v2800, 0.0
    %v2833 = vmax.f32 %v2801, 0.0
    %v2834 = vmax.f32 %v2802, 0.0
    %v2835 = vmax.f32 %v2803, 0.0
    %s2836 = sld [smem:[#allocation7 + $0x81]]
    %v2837 = vstv %s2836
    %v2838 = vmul.f32 %v2096, %v2837
    %v2839 = vmul.f32 %v2099, %v2837
    %v2840 = vmul.f32 %v2102, %v2837
    %v2841 = vmul.f32 %v2105, %v2837
    %v2842 = vmul.f32 %v2108, %v2837
    %v2843 = vmul.f32 %v2111, %v2837
    %v2844 = vmul.f32 %v2114, %v2837
    %v2845 = vmul.f32 %v2117, %v2837
    %v2846 = vmul.f32 %v2120, %v2837
    %v2847 = vmul.f32 %v2123, %v2837
    %v2848 = vmul.f32 %v2126, %v2837
    %v2849 = vmul.f32 %v2129, %v2837
    %v2850 = vmul.f32 %v2132, %v2837
    %v2851 = vmul.f32 %v2135, %v2837
    %v2852 = vmul.f32 %v2138, %v2837
    %v2853 = vmul.f32 %v2141, %v2837
    %v2854 = vmul.f32 %v2144, %v2837
    %v2855 = vmul.f32 %v2147, %v2837
    %v2856 = vmul.f32 %v2150, %v2837
    %v2857 = vmul.f32 %v2153, %v2837
    %v2858 = vmul.f32 %v2156, %v2837
    %v2859 = vmul.f32 %v2159, %v2837
    %v2860 = vmul.f32 %v2162, %v2837
    %v2861 = vmul.f32 %v2165, %v2837
    %v2862 = vmul.f32 %v2168, %v2837
    %v2863 = vmul.f32 %v2171, %v2837
    %v2864 = vmul.f32 %v2174, %v2837
    %v2865 = vmul.f32 %v2177, %v2837
    %v2866 = vmul.f32 %v2180, %v2837
    %v2867 = vmul.f32 %v2183, %v2837
    %v2868 = vmul.f32 %v2186, %v2837
    %v2869 = vmul.f32 %v2189, %v2837
    %s2870 = sld [smem:[#allocation7 + $0x83]]
    %v2871 = vstv %s2870
    %v2872 = vmul.f32 %v2576, %v2871
    %v2873 = vmul.f32 %v2579, %v2871
    %v2874 = vmul.f32 %v2582, %v2871
    %v2875 = vmul.f32 %v2585, %v2871
    %v2876 = vmul.f32 %v2588, %v2871
    %v2877 = vmul.f32 %v2591, %v2871
    %v2878 = vmul.f32 %v2594, %v2871
    %v2879 = vmul.f32 %v2597, %v2871
    %v2880 = vmul.f32 %v2600, %v2871
    %v2881 = vmul.f32 %v2603, %v2871
    %v2882 = vmul.f32 %v2606, %v2871
    %v2883 = vmul.f32 %v2609, %v2871
    %v2884 = vmul.f32 %v2612, %v2871
    %v2885 = vmul.f32 %v2615, %v2871
    %v2886 = vmul.f32 %v2618, %v2871
    %v2887 = vmul.f32 %v2621, %v2871
    %v2888 = vmul.f32 %v2624, %v2871
    %v2889 = vmul.f32 %v2627, %v2871
    %v2890 = vmul.f32 %v2630, %v2871
    %v2891 = vmul.f32 %v2633, %v2871
    %v2892 = vmul.f32 %v2636, %v2871
    %v2893 = vmul.f32 %v2639, %v2871
    %v2894 = vmul.f32 %v2642, %v2871
    %v2895 = vmul.f32 %v2645, %v2871
    %v2896 = vmul.f32 %v2648, %v2871
    %v2897 = vmul.f32 %v2651, %v2871
    %v2898 = vmul.f32 %v2654, %v2871
    %v2899 = vmul.f32 %v2657, %v2871
    %v2900 = vmul.f32 %v2660, %v2871
    %v2901 = vmul.f32 %v2663, %v2871
    %v2902 = vmul.f32 %v2666, %v2871
    %v2903 = vmul.f32 %v2669, %v2871
    %v2904 = vadd.f32 %v2838, %v2872
    %v2905 = vadd.f32 %v2839, %v2873
    %v2906 = vadd.f32 %v2840, %v2874
    %v2907 = vadd.f32 %v2841, %v2875
    %v2908 = vadd.f32 %v2842, %v2876
    %v2909 = vadd.f32 %v2843, %v2877
    %v2910 = vadd.f32 %v2844, %v2878
    %v2911 = vadd.f32 %v2845, %v2879
    %v2912 = vadd.f32 %v2846, %v2880
    %v2913 = vadd.f32 %v2847, %v2881
    %v2914 = vadd.f32 %v2848, %v2882
    %v2915 = vadd.f32 %v2849, %v2883
    %v2916 = vadd.f32 %v2850, %v2884
    %v2917 = vadd.f32 %v2851, %v2885
    %v2918 = vadd.f32 %v2852, %v2886
    %v2919 = vadd.f32 %v2853, %v2887
    %v2920 = vadd.f32 %v2854, %v2888
    %v2921 = vadd.f32 %v2855, %v2889
    %v2922 = vadd.f32 %v2856, %v2890
    %v2923 = vadd.f32 %v2857, %v2891
    %v2924 = vadd.f32 %v2858, %v2892
    %v2925 = vadd.f32 %v2859, %v2893
    %v2926 = vadd.f32 %v2860, %v2894
    %v2927 = vadd.f32 %v2861, %v2895
    %v2928 = vadd.f32 %v2862, %v2896
    %v2929 = vadd.f32 %v2863, %v2897
    %v2930 = vadd.f32 %v2864, %v2898
    %v2931 = vadd.f32 %v2865, %v2899
    %v2932 = vadd.f32 %v2866, %v2900
    %v2933 = vadd.f32 %v2867, %v2901
    %v2934 = vadd.f32 %v2868, %v2902
    %v2935 = vadd.f32 %v2869, %v2903
    %s2936 = sld [smem:[#allocation8 + $0x81]]
    %v2937 = vstv %s2936
    %v2938 = vadd.f32 %v2904, %v2937
    %v2939 = vadd.f32 %v2905, %v2937
    %v2940 = vadd.f32 %v2906, %v2937
    %v2941 = vadd.f32 %v2907, %v2937
    %v2942 = vadd.f32 %v2908, %v2937
    %v2943 = vadd.f32 %v2909, %v2937
    %v2944 = vadd.f32 %v2910, %v2937
    %v2945 = vadd.f32 %v2911, %v2937
    %v2946 = vadd.f32 %v2912, %v2937
    %v2947 = vadd.f32 %v2913, %v2937
    %v2948 = vadd.f32 %v2914, %v2937
    %v2949 = vadd.f32 %v2915, %v2937
    %v2950 = vadd.f32 %v2916, %v2937
    %v2951 = vadd.f32 %v2917, %v2937
    %v2952 = vadd.f32 %v2918, %v2937
    %v2953 = vadd.f32 %v2919, %v2937
    %v2954 = vadd.f32 %v2920, %v2937
    %v2955 = vadd.f32 %v2921, %v2937
    %v2956 = vadd.f32 %v2922, %v2937
    %v2957 = vadd.f32 %v2923, %v2937
    %v2958 = vadd.f32 %v2924, %v2937
    %v2959 = vadd.f32 %v2925, %v2937
    %v2960 = vadd.f32 %v2926, %v2937
    %v2961 = vadd.f32 %v2927, %v2937
    %v2962 = vadd.f32 %v2928, %v2937
    %v2963 = vadd.f32 %v2929, %v2937
    %v2964 = vadd.f32 %v2930, %v2937
    %v2965 = vadd.f32 %v2931, %v2937
    %v2966 = vadd.f32 %v2932, %v2937
    %v2967 = vadd.f32 %v2933, %v2937
    %v2968 = vadd.f32 %v2934, %v2937
    %v2969 = vadd.f32 %v2935, %v2937
    %v2970 = vmax.f32 %v2938, 0.0
    %v2971 = vmax.f32 %v2939, 0.0
    %v2972 = vmax.f32 %v2940, 0.0
    %v2973 = vmax.f32 %v2941, 0.0
    %v2974 = vmax.f32 %v2942, 0.0
    %v2975 = vmax.f32 %v2943, 0.0
    %v2976 = vmax.f32 %v2944, 0.0
    %v2977 = vmax.f32 %v2945, 0.0
    %v2978 = vmax.f32 %v2946, 0.0
    %v2979 = vmax.f32 %v2947, 0.0
    %v2980 = vmax.f32 %v2948, 0.0
    %v2981 = vmax.f32 %v2949, 0.0
    %v2982 = vmax.f32 %v2950, 0.0
    %v2983 = vmax.f32 %v2951, 0.0
    %v2984 = vmax.f32 %v2952, 0.0
    %v2985 = vmax.f32 %v2953, 0.0
    %v2986 = vmax.f32 %v2954, 0.0
    %v2987 = vmax.f32 %v2955, 0.0
    %v2988 = vmax.f32 %v2956, 0.0
    %v2989 = vmax.f32 %v2957, 0.0
    %v2990 = vmax.f32 %v2958, 0.0
    %v2991 = vmax.f32 %v2959, 0.0
    %v2992 = vmax.f32 %v2960, 0.0
    %v2993 = vmax.f32 %v2961, 0.0
    %v2994 = vmax.f32 %v2962, 0.0
    %v2995 = vmax.f32 %v2963, 0.0
    %v2996 = vmax.f32 %v2964, 0.0
    %v2997 = vmax.f32 %v2965, 0.0
    %v2998 = vmax.f32 %v2966, 0.0
    %v2999 = vmax.f32 %v2967, 0.0
    %v3000 = vmax.f32 %v2968, 0.0
    %v3001 = vmax.f32 %v2969, 0.0
    %s3002 = sld [smem:[#allocation11]]
    %s3003 = sld [smem:[#allocation11 + $0x1]]
    %s3004 = sld [smem:[#allocation10]]
    %v3005 = vstv %s3004
    %v3006 = vmul.f32 %v1416, %v3005
    %v3007 = vmul.f32 %v1417, %v3005
    %v3008 = vmul.f32 %v1418, %v3005
    %v3009 = vmul.f32 %v1419, %v3005
    %v3010 = vmul.f32 %v1420, %v3005
    %v3011 = vmul.f32 %v1421, %v3005
    %v3012 = vmul.f32 %v1422, %v3005
    %v3013 = vmul.f32 %v1423, %v3005
    %v3014 = vmul.f32 %v1424, %v3005
    %v3015 = vmul.f32 %v1425, %v3005
    %v3016 = vmul.f32 %v1426, %v3005
    %v3017 = vmul.f32 %v1427, %v3005
    %v3018 = vmul.f32 %v1428, %v3005
    %v3019 = vmul.f32 %v1429, %v3005
    %v3020 = vmul.f32 %v1430, %v3005
    %v3021 = vmul.f32 %v1431, %v3005
    %v3022 = vmul.f32 %v1432, %v3005
    %v3023 = vmul.f32 %v1433, %v3005
    %v3024 = vmul.f32 %v1434, %v3005
    %v3025 = vmul.f32 %v1435, %v3005
    %v3026 = vmul.f32 %v1436, %v3005
    %v3027 = vmul.f32 %v1437, %v3005
    %v3028 = vmul.f32 %v1438, %v3005
    %v3029 = vmul.f32 %v1439, %v3005
    %v3030 = vmul.f32 %v1440, %v3005
    %v3031 = vmul.f32 %v1441, %v3005
    %v3032 = vmul.f32 %v1442, %v3005
    %v3033 = vmul.f32 %v1443, %v3005
    %v3034 = vmul.f32 %v1444, %v3005
    %v3035 = vmul.f32 %v1445, %v3005
    %v3036 = vmul.f32 %v1446, %v3005
    %v3037 = vmul.f32 %v1447, %v3005
    %v3038 = vstv %s3002
    %v3039 = vadd.f32 %v3038, %v3006
    %v3040 = vadd.f32 %v3038, %v3007
    %v3041 = vadd.f32 %v3038, %v3008
    %v3042 = vadd.f32 %v3038, %v3009
    %v3043 = vadd.f32 %v3038, %v3010
    %v3044 = vadd.f32 %v3038, %v3011
    %v3045 = vadd.f32 %v3038, %v3012
    %v3046 = vadd.f32 %v3038, %v3013
    %v3047 = vadd.f32 %v3038, %v3014
    %v3048 = vadd.f32 %v3038, %v3015
    %v3049 = vadd.f32 %v3038, %v3016
    %v3050 = vadd.f32 %v3038, %v3017
    %v3051 = vadd.f32 %v3038, %v3018
    %v3052 = vadd.f32 %v3038, %v3019
    %v3053 = vadd.f32 %v3038, %v3020
    %v3054 = vadd.f32 %v3038, %v3021
    %v3055 = vadd.f32 %v3038, %v3022
    %v3056 = vadd.f32 %v3038, %v3023
    %v3057 = vadd.f32 %v3038, %v3024
    %v3058 = vadd.f32 %v3038, %v3025
    %v3059 = vadd.f32 %v3038, %v3026
    %v3060 = vadd.f32 %v3038, %v3027
    %v3061 = vadd.f32 %v3038, %v3028
    %v3062 = vadd.f32 %v3038, %v3029
    %v3063 = vadd.f32 %v3038, %v3030
    %v3064 = vadd.f32 %v3038, %v3031
    %v3065 = vadd.f32 %v3038, %v3032
    %v3066 = vadd.f32 %v3038, %v3033
    %v3067 = vadd.f32 %v3038, %v3034
    %v3068 = vadd.f32 %v3038, %v3035
    %v3069 = vadd.f32 %v3038, %v3036
    %v3070 = vadd.f32 %v3038, %v3037
    %s3071 = sld [smem:[#allocation10 + $0x1]]
    %v3072 = vstv %s3071
    %v3073 = vmul.f32 %v1416, %v3072
    %v3074 = vmul.f32 %v1417, %v3072
    %v3075 = vmul.f32 %v1418, %v3072
    %v3076 = vmul.f32 %v1419, %v3072
    %v3077 = vmul.f32 %v1420, %v3072
    %v3078 = vmul.f32 %v1421, %v3072
    %v3079 = vmul.f32 %v1422, %v3072
    %v3080 = vmul.f32 %v1423, %v3072
    %v3081 = vmul.f32 %v1424, %v3072
    %v3082 = vmul.f32 %v1425, %v3072
    %v3083 = vmul.f32 %v1426, %v3072
    %v3084 = vmul.f32 %v1427, %v3072
    %v3085 = vmul.f32 %v1428, %v3072
    %v3086 = vmul.f32 %v1429, %v3072
    %v3087 = vmul.f32 %v1430, %v3072
    %v3088 = vmul.f32 %v1431, %v3072
    %v3089 = vmul.f32 %v1432, %v3072
    %v3090 = vmul.f32 %v1433, %v3072
    %v3091 = vmul.f32 %v1434, %v3072
    %v3092 = vmul.f32 %v1435, %v3072
    %v3093 = vmul.f32 %v1436, %v3072
    %v3094 = vmul.f32 %v1437, %v3072
    %v3095 = vmul.f32 %v1438, %v3072
    %v3096 = vmul.f32 %v1439, %v3072
    %v3097 = vmul.f32 %v1440, %v3072
    %v3098 = vmul.f32 %v1441, %v3072
    %v3099 = vmul.f32 %v1442, %v3072
    %v3100 = vmul.f32 %v1443, %v3072
    %v3101 = vmul.f32 %v1444, %v3072
    %v3102 = vmul.f32 %v1445, %v3072
    %v3103 = vmul.f32 %v1446, %v3072
    %v3104 = vmul.f32 %v1447, %v3072
    %v3105 = vstv %s3003
    %v3106 = vadd.f32 %v3105, %v3073
    %v3107 = vadd.f32 %v3105, %v3074
    %v3108 = vadd.f32 %v3105, %v3075
    %v3109 = vadd.f32 %v3105, %v3076
    %v3110 = vadd.f32 %v3105, %v3077
    %v3111 = vadd.f32 %v3105, %v3078
    %v3112 = vadd.f32 %v3105, %v3079
    %v3113 = vadd.f32 %v3105, %v3080
    %v3114 = vadd.f32 %v3105, %v3081
    %v3115 = vadd.f32 %v3105, %v3082
    %v3116 = vadd.f32 %v3105, %v3083
    %v3117 = vadd.f32 %v3105, %v3084
    %v3118 = vadd.f32 %v3105, %v3085
    %v3119 = vadd.f32 %v3105, %v3086
    %v3120 = vadd.f32 %v3105, %v3087
    %v3121 = vadd.f32 %v3105, %v3088
    %v3122 = vadd.f32 %v3105, %v3089
    %v3123 = vadd.f32 %v3105, %v3090
    %v3124 = vadd.f32 %v3105, %v3091
    %v3125 = vadd.f32 %v3105, %v3092
    %v3126 = vadd.f32 %v3105, %v3093
    %v3127 = vadd.f32 %v3105, %v3094
    %v3128 = vadd.f32 %v3105, %v3095
    %v3129 = vadd.f32 %v3105, %v3096
    %v3130 = vadd.f32 %v3105, %v3097
    %v3131 = vadd.f32 %v3105, %v3098
    %v3132 = vadd.f32 %v3105, %v3099
    %v3133 = vadd.f32 %v3105, %v3100
    %v3134 = vadd.f32 %v3105, %v3101
    %v3135 = vadd.f32 %v3105, %v3102
    %v3136 = vadd.f32 %v3105, %v3103
    %v3137 = vadd.f32 %v3105, %v3104
    %s3138 = sld [smem:[#allocation10 + $0x80]]
    %v3139 = vstv %s3138
    %v3140 = vmul.f32 %v1582, %v3139
    %v3141 = vmul.f32 %v1583, %v3139
    %v3142 = vmul.f32 %v1584, %v3139
    %v3143 = vmul.f32 %v1585, %v3139
    %v3144 = vmul.f32 %v1586, %v3139
    %v3145 = vmul.f32 %v1587, %v3139
    %v3146 = vmul.f32 %v1588, %v3139
    %v3147 = vmul.f32 %v1589, %v3139
    %v3148 = vmul.f32 %v1590, %v3139
    %v3149 = vmul.f32 %v1591, %v3139
    %v3150 = vmul.f32 %v1592, %v3139
    %v3151 = vmul.f32 %v1593, %v3139
    %v3152 = vmul.f32 %v1594, %v3139
    %v3153 = vmul.f32 %v1595, %v3139
    %v3154 = vmul.f32 %v1596, %v3139
    %v3155 = vmul.f32 %v1597, %v3139
    %v3156 = vmul.f32 %v1598, %v3139
    %v3157 = vmul.f32 %v1599, %v3139
    %v3158 = vmul.f32 %v1600, %v3139
    %v3159 = vmul.f32 %v1601, %v3139
    %v3160 = vmul.f32 %v1602, %v3139
    %v3161 = vmul.f32 %v1603, %v3139
    %v3162 = vmul.f32 %v1604, %v3139
    %v3163 = vmul.f32 %v1605, %v3139
    %v3164 = vmul.f32 %v1606, %v3139
    %v3165 = vmul.f32 %v1607, %v3139
    %v3166 = vmul.f32 %v1608, %v3139
    %v3167 = vmul.f32 %v1609, %v3139
    %v3168 = vmul.f32 %v1610, %v3139
    %v3169 = vmul.f32 %v1611, %v3139
    %v3170 = vmul.f32 %v1612, %v3139
    %v3171 = vmul.f32 %v1613, %v3139
    %v3172 = vadd.f32 %v3039, %v3140
    %v3173 = vadd.f32 %v3040, %v3141
    %v3174 = vadd.f32 %v3041, %v3142
    %v3175 = vadd.f32 %v3042, %v3143
    %v3176 = vadd.f32 %v3043, %v3144
    %v3177 = vadd.f32 %v3044, %v3145
    %v3178 = vadd.f32 %v3045, %v3146
    %v3179 = vadd.f32 %v3046, %v3147
    %v3180 = vadd.f32 %v3047, %v3148
    %v3181 = vadd.f32 %v3048, %v3149
    %v3182 = vadd.f32 %v3049, %v3150
    %v3183 = vadd.f32 %v3050, %v3151
    %v3184 = vadd.f32 %v3051, %v3152
    %v3185 = vadd.f32 %v3052, %v3153
    %v3186 = vadd.f32 %v3053, %v3154
    %v3187 = vadd.f32 %v3054, %v3155
    %v3188 = vadd.f32 %v3055, %v3156
    %v3189 = vadd.f32 %v3056, %v3157
    %v3190 = vadd.f32 %v3057, %v3158
    %v3191 = vadd.f32 %v3058, %v3159
    %v3192 = vadd.f32 %v3059, %v3160
    %v3193 = vadd.f32 %v3060, %v3161
    %v3194 = vadd.f32 %v3061, %v3162
    %v3195 = vadd.f32 %v3062, %v3163
    %v3196 = vadd.f32 %v3063, %v3164
    %v3197 = vadd.f32 %v3064, %v3165
    %v3198 = vadd.f32 %v3065, %v3166
    %v3199 = vadd.f32 %v3066, %v3167
    %v3200 = vadd.f32 %v3067, %v3168
    %v3201 = vadd.f32 %v3068, %v3169
    %v3202 = vadd.f32 %v3069, %v3170
    %v3203 = vadd.f32 %v3070, %v3171
    %s3204 = sld [smem:[#allocation10 + $0x81]]
    %v3205 = vstv %s3204
    %v3206 = vmul.f32 %v1582, %v3205
    %v3207 = vmul.f32 %v1583, %v3205
    %v3208 = vmul.f32 %v1584, %v3205
    %v3209 = vmul.f32 %v1585, %v3205
    %v3210 = vmul.f32 %v1586, %v3205
    %v3211 = vmul.f32 %v1587, %v3205
    %v3212 = vmul.f32 %v1588, %v3205
    %v3213 = vmul.f32 %v1589, %v3205
    %v3214 = vmul.f32 %v1590, %v3205
    %v3215 = vmul.f32 %v1591, %v3205
    %v3216 = vmul.f32 %v1592, %v3205
    %v3217 = vmul.f32 %v1593, %v3205
    %v3218 = vmul.f32 %v1594, %v3205
    %v3219 = vmul.f32 %v1595, %v3205
    %v3220 = vmul.f32 %v1596, %v3205
    %v3221 = vmul.f32 %v1597, %v3205
    %v3222 = vmul.f32 %v1598, %v3205
    %v3223 = vmul.f32 %v1599, %v3205
    %v3224 = vmul.f32 %v1600, %v3205
    %v3225 = vmul.f32 %v1601, %v3205
    %v3226 = vmul.f32 %v1602, %v3205
    %v3227 = vmul.f32 %v1603, %v3205
    %v3228 = vmul.f32 %v1604, %v3205
    %v3229 = vmul.f32 %v1605, %v3205
    %v3230 = vmul.f32 %v1606, %v3205
    %v3231 = vmul.f32 %v1607, %v3205
    %v3232 = vmul.f32 %v1608, %v3205
    %v3233 = vmul.f32 %v1609, %v3205
    %v3234 = vmul.f32 %v1610, %v3205
    %v3235 = vmul.f32 %v1611, %v3205
    %v3236 = vmul.f32 %v1612, %v3205
    %v3237 = vmul.f32 %v1613, %v3205
    %v3238 = vadd.f32 %v3106, %v3206
    %v3239 = vadd.f32 %v3107, %v3207
    %v3240 = vadd.f32 %v3108, %v3208
    %v3241 = vadd.f32 %v3109, %v3209
    %v3242 = vadd.f32 %v3110, %v3210
    %v3243 = vadd.f32 %v3111, %v3211
    %v3244 = vadd.f32 %v3112, %v3212
    %v3245 = vadd.f32 %v3113, %v3213
    %v3246 = vadd.f32 %v3114, %v3214
    %v3247 = vadd.f32 %v3115, %v3215
    %v3248 = vadd.f32 %v3116, %v3216
    %v3249 = vadd.f32 %v3117, %v3217
    %v3250 = vadd.f32 %v3118, %v3218
    %v3251 = vadd.f32 %v3119, %v3219
    %v3252 = vadd.f32 %v3120, %v3220
    %v3253 = vadd.f32 %v3121, %v3221
    %v3254 = vadd.f32 %v3122, %v3222
    %v3255 = vadd.f32 %v3123, %v3223
    %v3256 = vadd.f32 %v3124, %v3224
    %v3257 = vadd.f32 %v3125, %v3225
    %v3258 = vadd.f32 %v3126, %v3226
    %v3259 = vadd.f32 %v3127, %v3227
    %v3260 = vadd.f32 %v3128, %v3228
    %v3261 = vadd.f32 %v3129, %v3229
    %v3262 = vadd.f32 %v3130, %v3230
    %v3263 = vadd.f32 %v3131, %v3231
    %v3264 = vadd.f32 %v3132, %v3232
    %v3265 = vadd.f32 %v3133, %v3233
    %v3266 = vadd.f32 %v3134, %v3234
    %v3267 = vadd.f32 %v3135, %v3235
    %v3268 = vadd.f32 %v3136, %v3236
    %v3269 = vadd.f32 %v3137, %v3237
    %s3270 = sld [smem:[#allocation10 + $0x100]]
    %v3271 = vstv %s3270
    %v3272 = vmul.f32 %v2804, %v3271
    %v3273 = vmul.f32 %v2805, %v3271
    %v3274 = vmul.f32 %v2806, %v3271
    %v3275 = vmul.f32 %v2807, %v3271
    %v3276 = vmul.f32 %v2808, %v3271
    %v3277 = vmul.f32 %v2809, %v3271
    %v3278 = vmul.f32 %v2810, %v3271
    %v3279 = vmul.f32 %v2811, %v3271
    %v3280 = vmul.f32 %v2812, %v3271
    %v3281 = vmul.f32 %v2813, %v3271
    %v3282 = vmul.f32 %v2814, %v3271
    %v3283 = vmul.f32 %v2815, %v3271
    %v3284 = vmul.f32 %v2816, %v3271
    %v3285 = vmul.f32 %v2817, %v3271
    %v3286 = vmul.f32 %v2818, %v3271
    %v3287 = vmul.f32 %v2819, %v3271
    %v3288 = vmul.f32 %v2820, %v3271
    %v3289 = vmul.f32 %v2821, %v3271
    %v3290 = vmul.f32 %v2822, %v3271
    %v3291 = vmul.f32 %v2823, %v3271
    %v3292 = vmul.f32 %v2824, %v3271
    %v3293 = vmul.f32 %v2825, %v3271
    %v3294 = vmul.f32 %v2826, %v3271
    %v3295 = vmul.f32 %v2827, %v3271
    %v3296 = vmul.f32 %v2828, %v3271
    %v3297 = vmul.f32 %v2829, %v3271
    %v3298 = vmul.f32 %v2830, %v3271
    %v3299 = vmul.f32 %v2831, %v3271
    %v3300 = vmul.f32 %v2832, %v3271
    %v3301 = vmul.f32 %v2833, %v3271
    %v3302 = vmul.f32 %v2834, %v3271
    %v3303 = vmul.f32 %v2835, %v3271
    %v3304 = vadd.f32 %v3172, %v3272
    %v3305 = vadd.f32 %v3173, %v3273
    %v3306 = vadd.f32 %v3174, %v3274
    %v3307 = vadd.f32 %v3175, %v3275
    %v3308 = vadd.f32 %v3176, %v3276
    %v3309 = vadd.f32 %v3177, %v3277
    %v3310 = vadd.f32 %v3178, %v3278
    %v3311 = vadd.f32 %v3179, %v3279
    %v3312 = vadd.f32 %v3180, %v3280
    %v3313 = vadd.f32 %v3181, %v3281
    %v3314 = vadd.f32 %v3182, %v3282
    %v3315 = vadd.f32 %v3183, %v3283
    %v3316 = vadd.f32 %v3184, %v3284
    %v3317 = vadd.f32 %v3185, %v3285
    %v3318 = vadd.f32 %v3186, %v3286
    %v3319 = vadd.f32 %v3187, %v3287
    %v3320 = vadd.f32 %v3188, %v3288
    %v3321 = vadd.f32 %v3189, %v3289
    %v3322 = vadd.f32 %v3190, %v3290
    %v3323 = vadd.f32 %v3191, %v3291
    %v3324 = vadd.f32 %v3192, %v3292
    %v3325 = vadd.f32 %v3193, %v3293
    %v3326 = vadd.f32 %v3194, %v3294
    %v3327 = vadd.f32 %v3195, %v3295
    %v3328 = vadd.f32 %v3196, %v3296
    %v3329 = vadd.f32 %v3197, %v3297
    %v3330 = vadd.f32 %v3198, %v3298
    %v3331 = vadd.f32 %v3199, %v3299
    %v3332 = vadd.f32 %v3200, %v3300
    %v3333 = vadd.f32 %v3201, %v3301
    %v3334 = vadd.f32 %v3202, %v3302
    %v3335 = vadd.f32 %v3203, %v3303
    %s3336 = sld [smem:[#allocation10 + $0x101]]
    %v3337 = vstv %s3336
    %v3338 = vmul.f32 %v2804, %v3337
    %v3339 = vmul.f32 %v2805, %v3337
    %v3340 = vmul.f32 %v2806, %v3337
    %v3341 = vmul.f32 %v2807, %v3337
    %v3342 = vmul.f32 %v2808, %v3337
    %v3343 = vmul.f32 %v2809, %v3337
    %v3344 = vmul.f32 %v2810, %v3337
    %v3345 = vmul.f32 %v2811, %v3337
    %v3346 = vmul.f32 %v2812, %v3337
    %v3347 = vmul.f32 %v2813, %v3337
    %v3348 = vmul.f32 %v2814, %v3337
    %v3349 = vmul.f32 %v2815, %v3337
    %v3350 = vmul.f32 %v2816, %v3337
    %v3351 = vmul.f32 %v2817, %v3337
    %v3352 = vmul.f32 %v2818, %v3337
    %v3353 = vmul.f32 %v2819, %v3337
    %v3354 = vmul.f32 %v2820, %v3337
    %v3355 = vmul.f32 %v2821, %v3337
    %v3356 = vmul.f32 %v2822, %v3337
    %v3357 = vmul.f32 %v2823, %v3337
    %v3358 = vmul.f32 %v2824, %v3337
    %v3359 = vmul.f32 %v2825, %v3337
    %v3360 = vmul.f32 %v2826, %v3337
    %v3361 = vmul.f32 %v2827, %v3337
    %v3362 = vmul.f32 %v2828, %v3337
    %v3363 = vmul.f32 %v2829, %v3337
    %v3364 = vmul.f32 %v2830, %v3337
    %v3365 = vmul.f32 %v2831, %v3337
    %v3366 = vmul.f32 %v2832, %v3337
    %v3367 = vmul.f32 %v2833, %v3337
    %v3368 = vmul.f32 %v2834, %v3337
    %v3369 = vmul.f32 %v2835, %v3337
    %v3370 = vadd.f32 %v3238, %v3338
    %v3371 = vadd.f32 %v3239, %v3339
    %v3372 = vadd.f32 %v3240, %v3340
    %v3373 = vadd.f32 %v3241, %v3341
    %v3374 = vadd.f32 %v3242, %v3342
    %v3375 = vadd.f32 %v3243, %v3343
    %v3376 = vadd.f32 %v3244, %v3344
    %v3377 = vadd.f32 %v3245, %v3345
    %v3378 = vadd.f32 %v3246, %v3346
    %v3379 = vadd.f32 %v3247, %v3347
    %v3380 = vadd.f32 %v3248, %v3348
    %v3381 = vadd.f32 %v3249, %v3349
    %v3382 = vadd.f32 %v3250, %v3350
    %v3383 = vadd.f32 %v3251, %v3351
    %v3384 = vadd.f32 %v3252, %v3352
    %v3385 = vadd.f32 %v3253, %v3353
    %v3386 = vadd.f32 %v3254, %v3354
    %v3387 = vadd.f32 %v3255, %v3355
    %v3388 = vadd.f32 %v3256, %v3356
    %v3389 = vadd.f32 %v3257, %v3357
    %v3390 = vadd.f32 %v3258, %v3358
    %v3391 = vadd.f32 %v3259, %v3359
    %v3392 = vadd.f32 %v3260, %v3360
    %v3393 = vadd.f32 %v3261, %v3361
    %v3394 = vadd.f32 %v3262, %v3362
    %v3395 = vadd.f32 %v3263, %v3363
    %v3396 = vadd.f32 %v3264, %v3364
    %v3397 = vadd.f32 %v3265, %v3365
    %v3398 = vadd.f32 %v3266, %v3366
    %v3399 = vadd.f32 %v3267, %v3367
    %v3400 = vadd.f32 %v3268, %v3368
    %v3401 = vadd.f32 %v3269, %v3369
    %s3402 = sld [smem:[#allocation10 + $0x180]]
    %v3403 = vstv %s3402
    %v3404 = vmul.f32 %v2970, %v3403
    %v3405 = vmul.f32 %v2971, %v3403
    %v3406 = vmul.f32 %v2972, %v3403
    %v3407 = vmul.f32 %v2973, %v3403
    %v3408 = vmul.f32 %v2974, %v3403
    %v3409 = vmul.f32 %v2975, %v3403
    %v3410 = vmul.f32 %v2976, %v3403
    %v3411 = vmul.f32 %v2977, %v3403
    %v3412 = vmul.f32 %v2978, %v3403
    %v3413 = vmul.f32 %v2979, %v3403
    %v3414 = vmul.f32 %v2980, %v3403
    %v3415 = vmul.f32 %v2981, %v3403
    %v3416 = vmul.f32 %v2982, %v3403
    %v3417 = vmul.f32 %v2983, %v3403
    %v3418 = vmul.f32 %v2984, %v3403
    %v3419 = vmul.f32 %v2985, %v3403
    %v3420 = vmul.f32 %v2986, %v3403
    %v3421 = vmul.f32 %v2987, %v3403
    %v3422 = vmul.f32 %v2988, %v3403
    %v3423 = vmul.f32 %v2989, %v3403
    %v3424 = vmul.f32 %v2990, %v3403
    %v3425 = vmul.f32 %v2991, %v3403
    %v3426 = vmul.f32 %v2992, %v3403
    %v3427 = vmul.f32 %v2993, %v3403
    %v3428 = vmul.f32 %v2994, %v3403
    %v3429 = vmul.f32 %v2995, %v3403
    %v3430 = vmul.f32 %v2996, %v3403
    %v3431 = vmul.f32 %v2997, %v3403
    %v3432 = vmul.f32 %v2998, %v3403
    %v3433 = vmul.f32 %v2999, %v3403
    %v3434 = vmul.f32 %v3000, %v3403
    %v3435 = vmul.f32 %v3001, %v3403
    %v3436 = vadd.f32 %v3304, %v3404
    %v3437 = vadd.f32 %v3305, %v3405
    %v3438 = vadd.f32 %v3306, %v3406
    %v3439 = vadd.f32 %v3307, %v3407
    %v3440 = vadd.f32 %v3308, %v3408
    %v3441 = vadd.f32 %v3309, %v3409
    %v3442 = vadd.f32 %v3310, %v3410
    %v3443 = vadd.f32 %v3311, %v3411
    %v3444 = vadd.f32 %v3312, %v3412
    %v3445 = vadd.f32 %v3313, %v3413
    %v3446 = vadd.f32 %v3314, %v3414
    %v3447 = vadd.f32 %v3315, %v3415
    %v3448 = vadd.f32 %v3316, %v3416
    %v3449 = vadd.f32 %v3317, %v3417
    %v3450 = vadd.f32 %v3318, %v3418
    %v3451 = vadd.f32 %v3319, %v3419
    %v3452 = vadd.f32 %v3320, %v3420
    %v3453 = vadd.f32 %v3321, %v3421
    %v3454 = vadd.f32 %v3322, %v3422
    %v3455 = vadd.f32 %v3323, %v3423
    %v3456 = vadd.f32 %v3324, %v3424
    %v3457 = vadd.f32 %v3325, %v3425
    %v3458 = vadd.f32 %v3326, %v3426
    %v3459 = vadd.f32 %v3327, %v3427
    %v3460 = vadd.f32 %v3328, %v3428
    %v3461 = vadd.f32 %v3329, %v3429
    %v3462 = vadd.f32 %v3330, %v3430
    %v3463 = vadd.f32 %v3331, %v3431
    %v3464 = vadd.f32 %v3332, %v3432
    %v3465 = vadd.f32 %v3333, %v3433
    %v3466 = vadd.f32 %v3334, %v3434
    %v3467 = vadd.f32 %v3335, %v3435
    %s3468 = sld [smem:[#allocation10 + $0x181]]
    %v3469 = vstv %s3468
    %v3470 = vmul.f32 %v2970, %v3469
    %v3471 = vmul.f32 %v2971, %v3469
    %v3472 = vmul.f32 %v2972, %v3469
    %v3473 = vmul.f32 %v2973, %v3469
    %v3474 = vmul.f32 %v2974, %v3469
    %v3475 = vmul.f32 %v2975, %v3469
    %v3476 = vmul.f32 %v2976, %v3469
    %v3477 = vmul.f32 %v2977, %v3469
    %v3478 = vmul.f32 %v2978, %v3469
    %v3479 = vmul.f32 %v2979, %v3469
    %v3480 = vmul.f32 %v2980, %v3469
    %v3481 = vmul.f32 %v2981, %v3469
    %v3482 = vmul.f32 %v2982, %v3469
    %v3483 = vmul.f32 %v2983, %v3469
    %v3484 = vmul.f32 %v2984, %v3469
    %v3485 = vmul.f32 %v2985, %v3469
    %v3486 = vmul.f32 %v2986, %v3469
    %v3487 = vmul.f32 %v2987, %v3469
    %v3488 = vmul.f32 %v2988, %v3469
    %v3489 = vmul.f32 %v2989, %v3469
    %v3490 = vmul.f32 %v2990, %v3469
    %v3491 = vmul.f32 %v2991, %v3469
    %v3492 = vmul.f32 %v2992, %v3469
    %v3493 = vmul.f32 %v2993, %v3469
    %v3494 = vmul.f32 %v2994, %v3469
    %v3495 = vmul.f32 %v2995, %v3469
    %v3496 = vmul.f32 %v2996, %v3469
    %v3497 = vmul.f32 %v2997, %v3469
    %v3498 = vmul.f32 %v2998, %v3469
    %v3499 = vmul.f32 %v2999, %v3469
    %v3500 = vmul.f32 %v3000, %v3469
    %v3501 = vmul.f32 %v3001, %v3469
    %v3502 = vadd.f32 %v3370, %v3470
    %v3503 = vadd.f32 %v3371, %v3471
    %v3504 = vadd.f32 %v3372, %v3472
    %v3505 = vadd.f32 %v3373, %v3473
    %v3506 = vadd.f32 %v3374, %v3474
    %v3507 = vadd.f32 %v3375, %v3475
    %v3508 = vadd.f32 %v3376, %v3476
    %v3509 = vadd.f32 %v3377, %v3477
    %v3510 = vadd.f32 %v3378, %v3478
    %v3511 = vadd.f32 %v3379, %v3479
    %v3512 = vadd.f32 %v3380, %v3480
    %v3513 = vadd.f32 %v3381, %v3481
    %v3514 = vadd.f32 %v3382, %v3482
    %v3515 = vadd.f32 %v3383, %v3483
    %v3516 = vadd.f32 %v3384, %v3484
    %v3517 = vadd.f32 %v3385, %v3485
    %v3518 = vadd.f32 %v3386, %v3486
    %v3519 = vadd.f32 %v3387, %v3487
    %v3520 = vadd.f32 %v3388, %v3488
    %v3521 = vadd.f32 %v3389, %v3489
    %v3522 = vadd.f32 %v3390, %v3490
    %v3523 = vadd.f32 %v3391, %v3491
    %v3524 = vadd.f32 %v3392, %v3492
    %v3525 = vadd.f32 %v3393, %v3493
    %v3526 = vadd.f32 %v3394, %v3494
    %v3527 = vadd.f32 %v3395, %v3495
    %v3528 = vadd.f32 %v3396, %v3496
    %v3529 = vadd.f32 %v3397, %v3497
    %v3530 = vadd.f32 %v3398, %v3498
    %v3531 = vadd.f32 %v3399, %v3499
    %v3532 = vadd.f32 %v3400, %v3500
    %v3533 = vadd.f32 %v3401, %v3501
    %v3534 = vmax.f32 %v3436, %v3502
    %v3535 = vmax.f32 %v3437, %v3503
    %v3536 = vmax.f32 %v3438, %v3504
    %v3537 = vmax.f32 %v3439, %v3505
    %v3538 = vmax.f32 %v3440, %v3506
    %v3539 = vmax.f32 %v3441, %v3507
    %v3540 = vmax.f32 %v3442, %v3508
    %v3541 = vmax.f32 %v3443, %v3509
    %v3542 = vmax.f32 %v3444, %v3510
    %v3543 = vmax.f32 %v3445, %v3511
    %v3544 = vmax.f32 %v3446, %v3512
    %v3545 = vmax.f32 %v3447, %v3513
    %v3546 = vmax.f32 %v3448, %v3514
    %v3547 = vmax.f32 %v3449, %v3515
    %v3548 = vmax.f32 %v3450, %v3516
    %v3549 = vmax.f32 %v3451, %v3517
    %v3550 = vmax.f32 %v3452, %v3518
    %v3551 = vmax.f32 %v3453, %v3519
    %v3552 = vmax.f32 %v3454, %v3520
    %v3553 = vmax.f32 %v3455, %v3521
    %v3554 = vmax.f32 %v3456, %v3522
    %v3555 = vmax.f32 %v3457, %v3523
    %v3556 = vmax.f32 %v3458, %v3524
    %v3557 = vmax.f32 %v3459, %v3525
    %v3558 = vmax.f32 %v3460, %v3526
    %v3559 = vmax.f32 %v3461, %v3527
    %v3560 = vmax.f32 %v3462, %v3528
    %v3561 = vmax.f32 %v3463, %v3529
    %v3562 = vmax.f32 %v3464, %v3530
    %v3563 = vmax.f32 %v3465, %v3531
    %v3564 = vmax.f32 %v3466, %v3532
    %v3565 = vmax.f32 %v3467, %v3533
    %v3566 = vsub.f32 %v3436, %v3534
    %v3567 = vsub.f32 %v3437, %v3535
    %v3568 = vsub.f32 %v3438, %v3536
    %v3569 = vsub.f32 %v3439, %v3537
    %v3570 = vsub.f32 %v3440, %v3538
    %v3571 = vsub.f32 %v3441, %v3539
    %v3572 = vsub.f32 %v3442, %v3540
    %v3573 = vsub.f32 %v3443, %v3541
    %v3574 = vsub.f32 %v3444, %v3542
    %v3575 = vsub.f32 %v3445, %v3543
    %v3576 = vsub.f32 %v3446, %v3544
    %v3577 = vsub.f32 %v3447, %v3545
    %v3578 = vsub.f32 %v3448, %v3546
    %v3579 = vsub.f32 %v3449, %v3547
    %v3580 = vsub.f32 %v3450, %v3548
    %v3581 = vsub.f32 %v3451, %v3549
    %v3582 = vsub.f32 %v3452, %v3550
    %v3583 = vsub.f32 %v3453, %v3551
    %v3584 = vsub.f32 %v3454, %v3552
    %v3585 = vsub.f32 %v3455, %v3553
    %v3586 = vsub.f32 %v3456, %v3554
    %v3587 = vsub.f32 %v3457, %v3555
    %v3588 = vsub.f32 %v3458, %v3556
    %v3589 = vsub.f32 %v3459, %v3557
    %v3590 = vsub.f32 %v3460, %v3558
    %v3591 = vsub.f32 %v3461, %v3559
    %v3592 = vsub.f32 %v3462, %v3560
    %v3593 = vsub.f32 %v3463, %v3561
    %v3594 = vsub.f32 %v3464, %v3562
    %v3595 = vsub.f32 %v3465, %v3563
    %v3596 = vsub.f32 %v3466, %v3564
    %v3597 = vsub.f32 %v3467, %v3565
    %v3598 = vmul.f32 %v3566, 1.442695
    %v3599 = vpow.pop %v3598
    %v3600 = vmul.f32 %v3567, 1.442695
    %v3601 = vpow.pop %v3600
    %v3602 = vmul.f32 %v3568, 1.442695
    %v3603 = vpow.pop %v3602
    %v3604 = vmul.f32 %v3569, 1.442695
    %v3605 = vpow.pop %v3604
    %v3606 = vmul.f32 %v3570, 1.442695
    %v3607 = vpow.pop %v3606
    %v3608 = vmul.f32 %v3571, 1.442695
    %v3609 = vpow.pop %v3608
    %v3610 = vmul.f32 %v3572, 1.442695
    %v3611 = vpow.pop %v3610
    %v3612 = vmul.f32 %v3573, 1.442695
    %v3613 = vpow.pop %v3612
    %v3614 = vmul.f32 %v3574, 1.442695
    %v3615 = vpow.pop %v3614
    %v3616 = vmul.f32 %v3575, 1.442695
    %v3617 = vpow.pop %v3616
    %v3618 = vmul.f32 %v3576, 1.442695
    %v3619 = vpow.pop %v3618
    %v3620 = vmul.f32 %v3577, 1.442695
    %v3621 = vpow.pop %v3620
    %v3622 = vmul.f32 %v3578, 1.442695
    %v3623 = vpow.pop %v3622
    %v3624 = vmul.f32 %v3579, 1.442695
    %v3625 = vpow.pop %v3624
    %v3626 = vmul.f32 %v3580, 1.442695
    %v3627 = vpow.pop %v3626
    %v3628 = vmul.f32 %v3581, 1.442695
    %v3629 = vpow.pop %v3628
    %v3630 = vmul.f32 %v3582, 1.442695
    %v3631 = vpow.pop %v3630
    %v3632 = vmul.f32 %v3583, 1.442695
    %v3633 = vpow.pop %v3632
    %v3634 = vmul.f32 %v3584, 1.442695
    %v3635 = vpow.pop %v3634
    %v3636 = vmul.f32 %v3585, 1.442695
    %v3637 = vpow.pop %v3636
    %v3638 = vmul.f32 %v3586, 1.442695
    %v3639 = vpow.pop %v3638
    %v3640 = vmul.f32 %v3587, 1.442695
    %v3641 = vpow.pop %v3640
    %v3642 = vmul.f32 %v3588, 1.442695
    %v3643 = vpow.pop %v3642
    %v3644 = vmul.f32 %v3589, 1.442695
    %v3645 = vpow.pop %v3644
    %v3646 = vmul.f32 %v3590, 1.442695
    %v3647 = vpow.pop %v3646
    %v3648 = vmul.f32 %v3591, 1.442695
    %v3649 = vpow.pop %v3648
    %v3650 = vmul.f32 %v3592, 1.442695
    %v3651 = vpow.pop %v3650
    %v3652 = vmul.f32 %v3593, 1.442695
    %v3653 = vpow.pop %v3652
    %v3654 = vmul.f32 %v3594, 1.442695
    %v3655 = vpow.pop %v3654
    %v3656 = vmul.f32 %v3595, 1.442695
    %v3657 = vpow.pop %v3656
    %v3658 = vmul.f32 %v3596, 1.442695
    %v3659 = vpow.pop %v3658
    %v3660 = vmul.f32 %v3597, 1.442695
    %v3661 = vpow.pop %v3660
    %v3662 = vsub.f32 %v3502, %v3534
    %v3663 = vsub.f32 %v3503, %v3535
    %v3664 = vsub.f32 %v3504, %v3536
    %v3665 = vsub.f32 %v3505, %v3537
    %v3666 = vsub.f32 %v3506, %v3538
    %v3667 = vsub.f32 %v3507, %v3539
    %v3668 = vsub.f32 %v3508, %v3540
    %v3669 = vsub.f32 %v3509, %v3541
    %v3670 = vsub.f32 %v3510, %v3542
    %v3671 = vsub.f32 %v3511, %v3543
    %v3672 = vsub.f32 %v3512, %v3544
    %v3673 = vsub.f32 %v3513, %v3545
    %v3674 = vsub.f32 %v3514, %v3546
    %v3675 = vsub.f32 %v3515, %v3547
    %v3676 = vsub.f32 %v3516, %v3548
    %v3677 = vsub.f32 %v3517, %v3549
    %v3678 = vsub.f32 %v3518, %v3550
    %v3679 = vsub.f32 %v3519, %v3551
    %v3680 = vsub.f32 %v3520, %v3552
    %v3681 = vsub.f32 %v3521, %v3553
    %v3682 = vsub.f32 %v3522, %v3554
    %v3683 = vsub.f32 %v3523, %v3555
    %v3684 = vsub.f32 %v3524, %v3556
    %v3685 = vsub.f32 %v3525, %v3557
    %v3686 = vsub.f32 %v3526, %v3558
    %v3687 = vsub.f32 %v3527, %v3559
    %v3688 = vsub.f32 %v3528, %v3560
    %v3689 = vsub.f32 %v3529, %v3561
    %v3690 = vsub.f32 %v3530, %v3562
    %v3691 = vsub.f32 %v3531, %v3563
    %v3692 = vsub.f32 %v3532, %v3564
    %v3693 = vsub.f32 %v3533, %v3565
    %v3694 = vmul.f32 %v3662, 1.442695
    %v3695 = vpow.pop %v3694
    %v3696 = vmul.f32 %v3663, 1.442695
    %v3697 = vpow.pop %v3696
    %v3698 = vmul.f32 %v3664, 1.442695
    %v3699 = vpow.pop %v3698
    %v3700 = vmul.f32 %v3665, 1.442695
    %v3701 = vpow.pop %v3700
    %v3702 = vmul.f32 %v3666, 1.442695
    %v3703 = vpow.pop %v3702
    %v3704 = vmul.f32 %v3667, 1.442695
    %v3705 = vpow.pop %v3704
    %v3706 = vmul.f32 %v3668, 1.442695
    %v3707 = vpow.pop %v3706
    %v3708 = vmul.f32 %v3669, 1.442695
    %v3709 = vpow.pop %v3708
    %v3710 = vmul.f32 %v3670, 1.442695
    %v3711 = vpow.pop %v3710
    %v3712 = vmul.f32 %v3671, 1.442695
    %v3713 = vpow.pop %v3712
    %v3714 = vmul.f32 %v3672, 1.442695
    %v3715 = vpow.pop %v3714
    %v3716 = vmul.f32 %v3673, 1.442695
    %v3717 = vpow.pop %v3716
    %v3718 = vmul.f32 %v3674, 1.442695
    %v3719 = vpow.pop %v3718
    %v3720 = vmul.f32 %v3675, 1.442695
    %v3721 = vpow.pop %v3720
    %v3722 = vmul.f32 %v3676, 1.442695
    %v3723 = vpow.pop %v3722
    %v3724 = vmul.f32 %v3677, 1.442695
    %v3725 = vpow.pop %v3724
    %v3726 = vmul.f32 %v3678, 1.442695
    %v3727 = vpow.pop %v3726
    %v3728 = vmul.f32 %v3679, 1.442695
    %v3729 = vpow.pop %v3728
    %v3730 = vmul.f32 %v3680, 1.442695
    %v3731 = vpow.pop %v3730
    %v3732 = vmul.f32 %v3681, 1.442695
    %v3733 = vpow.pop %v3732
    %v3734 = vmul.f32 %v3682, 1.442695
    %v3735 = vpow.pop %v3734
    %v3736 = vmul.f32 %v3683, 1.442695
    %v3737 = vpow.pop %v3736
    %v3738 = vmul.f32 %v3684, 1.442695
    %v3739 = vpow.pop %v3738
    %v3740 = vmul.f32 %v3685, 1.442695
    %v3741 = vpow.pop %v3740
    %v3742 = vmul.f32 %v3686, 1.442695
    %v3743 = vpow.pop %v3742
    %v3744 = vmul.f32 %v3687, 1.442695
    %v3745 = vpow.pop %v3744
    %v3746 = vmul.f32 %v3688, 1.442695
    %v3747 = vpow.pop %v3746
    %v3748 = vmul.f32 %v3689, 1.442695
    %v3749 = vpow.pop %v3748
    %v3750 = vmul.f32 %v3690, 1.442695
    %v3751 = vpow.pop %v3750
    %v3752 = vmul.f32 %v3691, 1.442695
    %v3753 = vpow.pop %v3752
    %v3754 = vmul.f32 %v3692, 1.442695
    %v3755 = vpow.pop %v3754
    %v3756 = vmul.f32 %v3693, 1.442695
    %v3757 = vpow.pop %v3756
    %v3758 = vadd.f32 %v3599, %v3695
    %v3759 = vadd.f32 %v3601, %v3697
    %v3760 = vadd.f32 %v3603, %v3699
    %v3761 = vadd.f32 %v3605, %v3701
    %v3762 = vadd.f32 %v3607, %v3703
    %v3763 = vadd.f32 %v3609, %v3705
    %v3764 = vadd.f32 %v3611, %v3707
    %v3765 = vadd.f32 %v3613, %v3709
    %v3766 = vadd.f32 %v3615, %v3711
    %v3767 = vadd.f32 %v3617, %v3713
    %v3768 = vadd.f32 %v3619, %v3715
    %v3769 = vadd.f32 %v3621, %v3717
    %v3770 = vadd.f32 %v3623, %v3719
    %v3771 = vadd.f32 %v3625, %v3721
    %v3772 = vadd.f32 %v3627, %v3723
    %v3773 = vadd.f32 %v3629, %v3725
    %v3774 = vadd.f32 %v3631, %v3727
    %v3775 = vadd.f32 %v3633, %v3729
    %v3776 = vadd.f32 %v3635, %v3731
    %v3777 = vadd.f32 %v3637, %v3733
    %v3778 = vadd.f32 %v3639, %v3735
    %v3779 = vadd.f32 %v3641, %v3737
    %v3780 = vadd.f32 %v3643, %v3739
    %v3781 = vadd.f32 %v3645, %v3741
    %v3782 = vadd.f32 %v3647, %v3743
    %v3783 = vadd.f32 %v3649, %v3745
    %v3784 = vadd.f32 %v3651, %v3747
    %v3785 = vadd.f32 %v3653, %v3749
    %v3786 = vadd.f32 %v3655, %v3751
    %v3787 = vadd.f32 %v3657, %v3753
    %v3788 = vadd.f32 %v3659, %v3755
    %v3789 = vadd.f32 %v3661, %v3757
    %v3790 = vrcp.pop %v3758
    %v3791 = vrcp.pop %v3759
    %v3792 = vrcp.pop %v3760
    %v3793 = vrcp.pop %v3761
    %v3794 = vrcp.pop %v3762
    %v3795 = vrcp.pop %v3763
    %v3796 = vrcp.pop %v3764
    %v3797 = vrcp.pop %v3765
    %v3798 = vrcp.pop %v3766
    %v3799 = vrcp.pop %v3767
    %v3800 = vrcp.pop %v3768
    %v3801 = vrcp.pop %v3769
    %v3802 = vrcp.pop %v3770
    %v3803 = vrcp.pop %v3771
    %v3804 = vrcp.pop %v3772
    %v3805 = vrcp.pop %v3773
    %v3806 = vrcp.pop %v3774
    %v3807 = vrcp.pop %v3775
    %v3808 = vrcp.pop %v3776
    %v3809 = vrcp.pop %v3777
    %v3810 = vrcp.pop %v3778
    %v3811 = vrcp.pop %v3779
    %v3812 = vrcp.pop %v3780
    %v3813 = vrcp.pop %v3781
    %v3814 = vrcp.pop %v3782
    %v3815 = vrcp.pop %v3783
    %v3816 = vrcp.pop %v3784
    %v3817 = vrcp.pop %v3785
    %v3818 = vrcp.pop %v3786
    %v3819 = vrcp.pop %v3787
    %v3820 = vrcp.pop %v3788
    %v3821 = vrcp.pop %v3789
    %v3822 = vmul.f32 %v3599, %v3790
    %v3823 = vmul.f32 %v3601, %v3791
    %v3824 = vmul.f32 %v3603, %v3792
    %v3825 = vmul.f32 %v3605, %v3793
    %v3826 = vmul.f32 %v3607, %v3794
    %v3827 = vmul.f32 %v3609, %v3795
    %v3828 = vmul.f32 %v3611, %v3796
    %v3829 = vmul.f32 %v3613, %v3797
    %v3830 = vmul.f32 %v3615, %v3798
    %v3831 = vmul.f32 %v3617, %v3799
    %v3832 = vmul.f32 %v3619, %v3800
    %v3833 = vmul.f32 %v3621, %v3801
    %v3834 = vmul.f32 %v3623, %v3802
    %v3835 = vmul.f32 %v3625, %v3803
    %v3836 = vmul.f32 %v3627, %v3804
    %v3837 = vmul.f32 %v3629, %v3805
    %v3838 = vmul.f32 %v3631, %v3806
    %v3839 = vmul.f32 %v3633, %v3807
    %v3840 = vmul.f32 %v3635, %v3808
    %v3841 = vmul.f32 %v3637, %v3809
    %v3842 = vmul.f32 %v3639, %v3810
    %v3843 = vmul.f32 %v3641, %v3811
    %v3844 = vmul.f32 %v3643, %v3812
    %v3845 = vmul.f32 %v3645, %v3813
    %v3846 = vmul.f32 %v3647, %v3814
    %v3847 = vmul.f32 %v3649, %v3815
    %v3848 = vmul.f32 %v3651, %v3816
    %v3849 = vmul.f32 %v3653, %v3817
    %v3850 = vmul.f32 %v3655, %v3818
    %v3851 = vmul.f32 %v3657, %v3819
    %v3852 = vmul.f32 %v3659, %v3820
    %v3853 = vmul.f32 %v3661, %v3821
    %v3854 = vmul.f32 %v3695, %v3790
    %v3855 = vmul.f32 %v3697, %v3791
    %v3856 = vmul.f32 %v3699, %v3792
    %v3857 = vmul.f32 %v3701, %v3793
    %v3858 = vmul.f32 %v3703, %v3794
    %v3859 = vmul.f32 %v3705, %v3795
    %v3860 = vmul.f32 %v3707, %v3796
    %v3861 = vmul.f32 %v3709, %v3797
    %v3862 = vmul.f32 %v3711, %v3798
    %v3863 = vmul.f32 %v3713, %v3799
    %v3864 = vmul.f32 %v3715, %v3800
    %v3865 = vmul.f32 %v3717, %v3801
    %v3866 = vmul.f32 %v3719, %v3802
    %v3867 = vmul.f32 %v3721, %v3803
    %v3868 = vmul.f32 %v3723, %v3804
    %v3869 = vmul.f32 %v3725, %v3805
    %v3870 = vmul.f32 %v3727, %v3806
    %v3871 = vmul.f32 %v3729, %v3807
    %v3872 = vmul.f32 %v3731, %v3808
    %v3873 = vmul.f32 %v3733, %v3809
    %v3874 = vmul.f32 %v3735, %v3810
    %v3875 = vmul.f32 %v3737, %v3811
    %v3876 = vmul.f32 %v3739, %v3812
    %v3877 = vmul.f32 %v3741, %v3813
    %v3878 = vmul.f32 %v3743, %v3814
    %v3879 = vmul.f32 %v3745, %v3815
    %v3880 = vmul.f32 %v3747, %v3816
    %v3881 = vmul.f32 %v3749, %v3817
    %v3882 = vmul.f32 %v3751, %v3818
    %v3883 = vmul.f32 %v3753, %v3819
    %v3884 = vmul.f32 %v3755, %v3820
    %v3885 = vmul.f32 %v3757, %v3821
    %v3886 = vmul.f32 %v3822, %v1416
    %v3887 = vmul.f32 %v3823, %v1417
    %v3888 = vmul.f32 %v3824, %v1418
    %v3889 = vmul.f32 %v3825, %v1419
    %v3890 = vmul.f32 %v3826, %v1420
    %v3891 = vmul.f32 %v3827, %v1421
    %v3892 = vmul.f32 %v3828, %v1422
    %v3893 = vmul.f32 %v3829, %v1423
    %v3894 = vmul.f32 %v3830, %v1424
    %v3895 = vmul.f32 %v3831, %v1425
    %v3896 = vmul.f32 %v3832, %v1426
    %v3897 = vmul.f32 %v3833, %v1427
    %v3898 = vmul.f32 %v3834, %v1428
    %v3899 = vmul.f32 %v3835, %v1429
    %v3900 = vmul.f32 %v3836, %v1430
    %v3901 = vmul.f32 %v3837, %v1431
    %v3902 = vmul.f32 %v3838, %v1432
    %v3903 = vmul.f32 %v3839, %v1433
    %v3904 = vmul.f32 %v3840, %v1434
    %v3905 = vmul.f32 %v3841, %v1435
    %v3906 = vmul.f32 %v3842, %v1436
    %v3907 = vmul.f32 %v3843, %v1437
    %v3908 = vmul.f32 %v3844, %v1438
    %v3909 = vmul.f32 %v3845, %v1439
    %v3910 = vmul.f32 %v3846, %v1440
    %v3911 = vmul.f32 %v3847, %v1441
    %v3912 = vmul.f32 %v3848, %v1442
    %v3913 = vmul.f32 %v3849, %v1443
    %v3914 = vmul.f32 %v3850, %v1444
    %v3915 = vmul.f32 %v3851, %v1445
    %v3916 = vmul.f32 %v3852, %v1446
    %v3917 = vmul.f32 %v3853, %v1447
    %v3918 = vmul.f32 %v3854, %v2804
    %v3919 = vmul.f32 %v3855, %v2805
    %v3920 = vmul.f32 %v3856, %v2806
    %v3921 = vmul.f32 %v3857, %v2807
    %v3922 = vmul.f32 %v3858, %v2808
    %v3923 = vmul.f32 %v3859, %v2809
    %v3924 = vmul.f32 %v3860, %v2810
    %v3925 = vmul.f32 %v3861, %v2811
    %v3926 = vmul.f32 %v3862, %v2812
    %v3927 = vmul.f32 %v3863, %v2813
    %v3928 = vmul.f32 %v3864, %v2814
    %v3929 = vmul.f32 %v3865, %v2815
    %v3930 = vmul.f32 %v3866, %v2816
    %v3931 = vmul.f32 %v3867, %v2817
    %v3932 = vmul.f32 %v3868, %v2818
    %v3933 = vmul.f32 %v3869, %v2819
    %v3934 = vmul.f32 %v3870, %v2820
    %v3935 = vmul.f32 %v3871, %v2821
    %v3936 = vmul.f32 %v3872, %v2822
    %v3937 = vmul.f32 %v3873, %v2823
    %v3938 = vmul.f32 %v3874, %v2824
    %v3939 = vmul.f32 %v3875, %v2825
    %v3940 = vmul.f32 %v3876, %v2826
    %v3941 = vmul.f32 %v3877, %v2827
    %v3942 = vmul.f32 %v3878, %v2828
    %v3943 = vmul.f32 %v3879, %v2829
    %v3944 = vmul.f32 %v3880, %v2830
    %v3945 = vmul.f32 %v3881, %v2831
    %v3946 = vmul.f32 %v3882, %v2832
    %v3947 = vmul.f32 %v3883, %v2833
    %v3948 = vmul.f32 %v3884, %v2834
    %v3949 = vmul.f32 %v3885, %v2835
    %v3950 = vadd.f32 %v3886, %v3918
    %v3951 = vadd.f32 %v3887, %v3919
    %v3952 = vadd.f32 %v3888, %v3920
    %v3953 = vadd.f32 %v3889, %v3921
    %v3954 = vadd.f32 %v3890, %v3922
    %v3955 = vadd.f32 %v3891, %v3923
    %v3956 = vadd.f32 %v3892, %v3924
    %v3957 = vadd.f32 %v3893, %v3925
    %v3958 = vadd.f32 %v3894, %v3926
    %v3959 = vadd.f32 %v3895, %v3927
    %v3960 = vadd.f32 %v3896, %v3928
    %v3961 = vadd.f32 %v3897, %v3929
    %v3962 = vadd.f32 %v3898, %v3930
    %v3963 = vadd.f32 %v3899, %v3931
    %v3964 = vadd.f32 %v3900, %v3932
    %v3965 = vadd.f32 %v3901, %v3933
    %v3966 = vadd.f32 %v3902, %v3934
    %v3967 = vadd.f32 %v3903, %v3935
    %v3968 = vadd.f32 %v3904, %v3936
    %v3969 = vadd.f32 %v3905, %v3937
    %v3970 = vadd.f32 %v3906, %v3938
    %v3971 = vadd.f32 %v3907, %v3939
    %v3972 = vadd.f32 %v3908, %v3940
    %v3973 = vadd.f32 %v3909, %v3941
    %v3974 = vadd.f32 %v3910, %v3942
    %v3975 = vadd.f32 %v3911, %v3943
    %v3976 = vadd.f32 %v3912, %v3944
    %v3977 = vadd.f32 %v3913, %v3945
    %v3978 = vadd.f32 %v3914, %v3946
    %v3979 = vadd.f32 %v3915, %v3947
    %v3980 = vadd.f32 %v3916, %v3948
    %v3981 = vadd.f32 %v3917, %v3949
    %v3982 = vmul.f32 %v3822, %v1582
    %v3983 = vmul.f32 %v3823, %v1583
    %v3984 = vmul.f32 %v3824, %v1584
    %v3985 = vmul.f32 %v3825, %v1585
    %v3986 = vmul.f32 %v3826, %v1586
    %v3987 = vmul.f32 %v3827, %v1587
    %v3988 = vmul.f32 %v3828, %v1588
    %v3989 = vmul.f32 %v3829, %v1589
    %v3990 = vmul.f32 %v3830, %v1590
    %v3991 = vmul.f32 %v3831, %v1591
    %v3992 = vmul.f32 %v3832, %v1592
    %v3993 = vmul.f32 %v3833, %v1593
    %v3994 = vmul.f32 %v3834, %v1594
    %v3995 = vmul.f32 %v3835, %v1595
    %v3996 = vmul.f32 %v3836, %v1596
    %v3997 = vmul.f32 %v3837, %v1597
    %v3998 = vmul.f32 %v3838, %v1598
    %v3999 = vmul.f32 %v3839, %v1599
    %v4000 = vmul.f32 %v3840, %v1600
    %v4001 = vmul.f32 %v3841, %v1601
    %v4002 = vmul.f32 %v3842, %v1602
    %v4003 = vmul.f32 %v3843, %v1603
    %v4004 = vmul.f32 %v3844, %v1604
    %v4005 = vmul.f32 %v3845, %v1605
    %v4006 = vmul.f32 %v3846, %v1606
    %v4007 = vmul.f32 %v3847, %v1607
    %v4008 = vmul.f32 %v3848, %v1608
    %v4009 = vmul.f32 %v3849, %v1609
    %v4010 = vmul.f32 %v3850, %v1610
    %v4011 = vmul.f32 %v3851, %v1611
    %v4012 = vmul.f32 %v3852, %v1612
    %v4013 = vmul.f32 %v3853, %v1613
    %v4014 = vmul.f32 %v3854, %v2970
    %v4015 = vmul.f32 %v3855, %v2971
    %v4016 = vmul.f32 %v3856, %v2972
    %v4017 = vmul.f32 %v3857, %v2973
    %v4018 = vmul.f32 %v3858, %v2974
    %v4019 = vmul.f32 %v3859, %v2975
    %v4020 = vmul.f32 %v3860, %v2976
    %v4021 = vmul.f32 %v3861, %v2977
    %v4022 = vmul.f32 %v3862, %v2978
    %v4023 = vmul.f32 %v3863, %v2979
    %v4024 = vmul.f32 %v3864, %v2980
    %v4025 = vmul.f32 %v3865, %v2981
    %v4026 = vmul.f32 %v3866, %v2982
    %v4027 = vmul.f32 %v3867, %v2983
    %v4028 = vmul.f32 %v3868, %v2984
    %v4029 = vmul.f32 %v3869, %v2985
    %v4030 = vmul.f32 %v3870, %v2986
    %v4031 = vmul.f32 %v3871, %v2987
    %v4032 = vmul.f32 %v3872, %v2988
    %v4033 = vmul.f32 %v3873, %v2989
    %v4034 = vmul.f32 %v3874, %v2990
    %v4035 = vmul.f32 %v3875, %v2991
    %v4036 = vmul.f32 %v3876, %v2992
    %v4037 = vmul.f32 %v3877, %v2993
    %v4038 = vmul.f32 %v3878, %v2994
    %v4039 = vmul.f32 %v3879, %v2995
    %v4040 = vmul.f32 %v3880, %v2996
    %v4041 = vmul.f32 %v3881, %v2997
    %v4042 = vmul.f32 %v3882, %v2998
    %v4043 = vmul.f32 %v3883, %v2999
    %v4044 = vmul.f32 %v3884, %v3000
    %v4045 = vmul.f32 %v3885, %v3001
    %v4046 = vadd.f32 %v3982, %v4014
    %v4047 = vadd.f32 %v3983, %v4015
    %v4048 = vadd.f32 %v3984, %v4016
    %v4049 = vadd.f32 %v3985, %v4017
    %v4050 = vadd.f32 %v3986, %v4018
    %v4051 = vadd.f32 %v3987, %v4019
    %v4052 = vadd.f32 %v3988, %v4020
    %v4053 = vadd.f32 %v3989, %v4021
    %v4054 = vadd.f32 %v3990, %v4022
    %v4055 = vadd.f32 %v3991, %v4023
    %v4056 = vadd.f32 %v3992, %v4024
    %v4057 = vadd.f32 %v3993, %v4025
    %v4058 = vadd.f32 %v3994, %v4026
    %v4059 = vadd.f32 %v3995, %v4027
    %v4060 = vadd.f32 %v3996, %v4028
    %v4061 = vadd.f32 %v3997, %v4029
    %v4062 = vadd.f32 %v3998, %v4030
    %v4063 = vadd.f32 %v3999, %v4031
    %v4064 = vadd.f32 %v4000, %v4032
    %v4065 = vadd.f32 %v4001, %v4033
    %v4066 = vadd.f32 %v4002, %v4034
    %v4067 = vadd.f32 %v4003, %v4035
    %v4068 = vadd.f32 %v4004, %v4036
    %v4069 = vadd.f32 %v4005, %v4037
    %v4070 = vadd.f32 %v4006, %v4038
    %v4071 = vadd.f32 %v4007, %v4039
    %v4072 = vadd.f32 %v4008, %v4040
    %v4073 = vadd.f32 %v4009, %v4041
    %v4074 = vadd.f32 %v4010, %v4042
    %v4075 = vadd.f32 %v4011, %v4043
    %v4076 = vadd.f32 %v4012, %v4044
    %v4077 = vadd.f32 %v4013, %v4045
    %v4110 = vlaneseq
    %v4111 = vshrl.u32 %v4110, 7
    %v4112 = vsub.s32 %v407, %v4111
    %v4113 = vrot.slane %v1416, %v4112
    %v4114 = vlaneseq
    %v4115 = vshrl.u32 %v4114, 7
    %v4116 = vsub.s32 %v412, %v4115
    %v4117 = vrot.slane %v1417, %v4116
    %v4118 = vsel %vm417, %v4117, %v4113
    %v4119 = vlaneseq
    %v4120 = vshrl.u32 %v4119, 7
    %v4121 = vsub.s32 %v407, %v4120
    %v4122 = vrot.slane %v1418, %v4121
    %v4123 = vlaneseq
    %v4124 = vshrl.u32 %v4123, 7
    %v4125 = vsub.s32 %v412, %v4124
    %v4126 = vrot.slane %v1419, %v4125
    %v4127 = vsel %vm417, %v4126, %v4122
    %v4128 = vlaneseq
    %v4129 = vshrl.u32 %v4128, 7
    %v4130 = vsub.s32 %v407, %v4129
    %v4131 = vrot.slane %v1420, %v4130
    %v4132 = vlaneseq
    %v4133 = vshrl.u32 %v4132, 7
    %v4134 = vsub.s32 %v412, %v4133
    %v4135 = vrot.slane %v1421, %v4134
    %v4136 = vsel %vm417, %v4135, %v4131
    %v4137 = vlaneseq
    %v4138 = vshrl.u32 %v4137, 7
    %v4139 = vsub.s32 %v407, %v4138
    %v4140 = vrot.slane %v1422, %v4139
    %v4141 = vlaneseq
    %v4142 = vshrl.u32 %v4141, 7
    %v4143 = vsub.s32 %v412, %v4142
    %v4144 = vrot.slane %v1423, %v4143
    %v4145 = vsel %vm417, %v4144, %v4140
    %v4146 = vlaneseq
    %v4147 = vshrl.u32 %v4146, 7
    %v4148 = vsub.s32 %v407, %v4147
    %v4149 = vrot.slane %v1424, %v4148
    %v4150 = vlaneseq
    %v4151 = vshrl.u32 %v4150, 7
    %v4152 = vsub.s32 %v412, %v4151
    %v4153 = vrot.slane %v1425, %v4152
    %v4154 = vsel %vm417, %v4153, %v4149
    %v4155 = vlaneseq
    %v4156 = vshrl.u32 %v4155, 7
    %v4157 = vsub.s32 %v407, %v4156
    %v4158 = vrot.slane %v1426, %v4157
    %v4159 = vlaneseq
    %v4160 = vshrl.u32 %v4159, 7
    %v4161 = vsub.s32 %v412, %v4160
    %v4162 = vrot.slane %v1427, %v4161
    %v4163 = vsel %vm417, %v4162, %v4158
    %v4164 = vlaneseq
    %v4165 = vshrl.u32 %v4164, 7
    %v4166 = vsub.s32 %v407, %v4165
    %v4167 = vrot.slane %v1428, %v4166
    %v4168 = vlaneseq
    %v4169 = vshrl.u32 %v4168, 7
    %v4170 = vsub.s32 %v412, %v4169
    %v4171 = vrot.slane %v1429, %v4170
    %v4172 = vsel %vm417, %v4171, %v4167
    %v4173 = vlaneseq
    %v4174 = vshrl.u32 %v4173, 7
    %v4175 = vsub.s32 %v407, %v4174
    %v4176 = vrot.slane %v1430, %v4175
    %v4177 = vlaneseq
    %v4178 = vshrl.u32 %v4177, 7
    %v4179 = vsub.s32 %v412, %v4178
    %v4180 = vrot.slane %v1431, %v4179
    %v4181 = vsel %vm417, %v4180, %v4176
    %v4182 = vlaneseq
    %v4183 = vshrl.u32 %v4182, 7
    %v4184 = vsub.s32 %v407, %v4183
    %v4185 = vrot.slane %v1432, %v4184
    %v4186 = vlaneseq
    %v4187 = vshrl.u32 %v4186, 7
    %v4188 = vsub.s32 %v412, %v4187
    %v4189 = vrot.slane %v1433, %v4188
    %v4190 = vsel %vm417, %v4189, %v4185
    %v4191 = vlaneseq
    %v4192 = vshrl.u32 %v4191, 7
    %v4193 = vsub.s32 %v407, %v4192
    %v4194 = vrot.slane %v1434, %v4193
    %v4195 = vlaneseq
    %v4196 = vshrl.u32 %v4195, 7
    %v4197 = vsub.s32 %v412, %v4196
    %v4198 = vrot.slane %v1435, %v4197
    %v4199 = vsel %vm417, %v4198, %v4194
    %v4200 = vlaneseq
    %v4201 = vshrl.u32 %v4200, 7
    %v4202 = vsub.s32 %v407, %v4201
    %v4203 = vrot.slane %v1436, %v4202
    %v4204 = vlaneseq
    %v4205 = vshrl.u32 %v4204, 7
    %v4206 = vsub.s32 %v412, %v4205
    %v4207 = vrot.slane %v1437, %v4206
    %v4208 = vsel %vm417, %v4207, %v4203
    %v4209 = vlaneseq
    %v4210 = vshrl.u32 %v4209, 7
    %v4211 = vsub.s32 %v407, %v4210
    %v4212 = vrot.slane %v1438, %v4211
    %v4213 = vlaneseq
    %v4214 = vshrl.u32 %v4213, 7
    %v4215 = vsub.s32 %v412, %v4214
    %v4216 = vrot.slane %v1439, %v4215
    %v4217 = vsel %vm417, %v4216, %v4212
    %v4218 = vlaneseq
    %v4219 = vshrl.u32 %v4218, 7
    %v4220 = vsub.s32 %v407, %v4219
    %v4221 = vrot.slane %v1440, %v4220
    %v4222 = vlaneseq
    %v4223 = vshrl.u32 %v4222, 7
    %v4224 = vsub.s32 %v412, %v4223
    %v4225 = vrot.slane %v1441, %v4224
    %v4226 = vsel %vm417, %v4225, %v4221
    %v4227 = vlaneseq
    %v4228 = vshrl.u32 %v4227, 7
    %v4229 = vsub.s32 %v407, %v4228
    %v4230 = vrot.slane %v1442, %v4229
    %v4231 = vlaneseq
    %v4232 = vshrl.u32 %v4231, 7
    %v4233 = vsub.s32 %v412, %v4232
    %v4234 = vrot.slane %v1443, %v4233
    %v4235 = vsel %vm417, %v4234, %v4230
    %v4236 = vlaneseq
    %v4237 = vshrl.u32 %v4236, 7
    %v4238 = vsub.s32 %v407, %v4237
    %v4239 = vrot.slane %v1444, %v4238
    %v4240 = vlaneseq
    %v4241 = vshrl.u32 %v4240, 7
    %v4242 = vsub.s32 %v412, %v4241
    %v4243 = vrot.slane %v1445, %v4242
    %v4244 = vsel %vm417, %v4243, %v4239
    %v4245 = vlaneseq
    %v4246 = vshrl.u32 %v4245, 7
    %v4247 = vsub.s32 %v407, %v4246
    %v4248 = vrot.slane %v1446, %v4247
    %v4249 = vlaneseq
    %v4250 = vshrl.u32 %v4249, 7
    %v4251 = vsub.s32 %v412, %v4250
    %v4252 = vrot.slane %v1447, %v4251
    %v4253 = vsel %vm417, %v4252, %v4248
    %v4254 = vsel %vm554, %v4127, %v4118
    %v4255 = vsel %vm555, %v4136, %v4254
    %v4256 = vsel %vm557, %v4145, %v4255
    %v4257 = vsel %vm559, %v4154, %v4256
    %v4258 = vsel %vm561, %v4163, %v4257
    %v4259 = vsel %vm563, %v4172, %v4258
    %v4260 = vsel %vm565, %v4181, %v4259
    %v4261 = vsel %vm554, %v4199, %v4190
    %v4262 = vsel %vm555, %v4208, %v4261
    %v4263 = vsel %vm557, %v4217, %v4262
    %v4264 = vsel %vm559, %v4226, %v4263
    %v4265 = vsel %vm561, %v4235, %v4264
    %v4266 = vsel %vm563, %v4244, %v4265
    %v4267 = vsel %vm565, %v4253, %v4266
    %v4302 = vadd.s32 %v407, 4294967280
    %v4303 = vlaneseq
    %v4304 = vshrl.u32 %v4303, 7
    %v4305 = vsub.s32 %v4302, %v4304
    %v4306 = vrot.slane %v1582, %v4305
    %v4307 = vadd.s32 %v407, 4294967272
    %v4308 = vlaneseq
    %v4309 = vshrl.u32 %v4308, 7
    %v4310 = vsub.s32 %v4307, %v4309
    %v4311 = vrot.slane %v1583, %v4310
    %vm4312 = vcmask 261312
    %v4313 = vsel %vm4312, %v4311, %v4306
    %v4314 = vlaneseq
    %v4315 = vshrl.u32 %v4314, 7
    %v4316 = vsub.s32 %v4302, %v4315
    %v4317 = vrot.slane %v1584, %v4316
    %v4318 = vlaneseq
    %v4319 = vshrl.u32 %v4318, 7
    %v4320 = vsub.s32 %v4307, %v4319
    %v4321 = vrot.slane %v1585, %v4320
    %v4322 = vsel %vm4312, %v4321, %v4317
    %v4323 = vlaneseq
    %v4324 = vshrl.u32 %v4323, 7
    %v4325 = vsub.s32 %v4302, %v4324
    %v4326 = vrot.slane %v1586, %v4325
    %v4327 = vlaneseq
    %v4328 = vshrl.u32 %v4327, 7
    %v4329 = vsub.s32 %v4307, %v4328
    %v4330 = vrot.slane %v1587, %v4329
    %v4331 = vsel %vm4312, %v4330, %v4326
    %v4332 = vlaneseq
    %v4333 = vshrl.u32 %v4332, 7
    %v4334 = vsub.s32 %v4302, %v4333
    %v4335 = vrot.slane %v1588, %v4334
    %v4336 = vlaneseq
    %v4337 = vshrl.u32 %v4336, 7
    %v4338 = vsub.s32 %v4307, %v4337
    %v4339 = vrot.slane %v1589, %v4338
    %v4340 = vsel %vm4312, %v4339, %v4335
    %v4341 = vlaneseq
    %v4342 = vshrl.u32 %v4341, 7
    %v4343 = vsub.s32 %v4302, %v4342
    %v4344 = vrot.slane %v1590, %v4343
    %v4345 = vlaneseq
    %v4346 = vshrl.u32 %v4345, 7
    %v4347 = vsub.s32 %v4307, %v4346
    %v4348 = vrot.slane %v1591, %v4347
    %v4349 = vsel %vm4312, %v4348, %v4344
    %v4350 = vlaneseq
    %v4351 = vshrl.u32 %v4350, 7
    %v4352 = vsub.s32 %v4302, %v4351
    %v4353 = vrot.slane %v1592, %v4352
    %v4354 = vlaneseq
    %v4355 = vshrl.u32 %v4354, 7
    %v4356 = vsub.s32 %v4307, %v4355
    %v4357 = vrot.slane %v1593, %v4356
    %v4358 = vsel %vm4312, %v4357, %v4353
    %v4359 = vlaneseq
    %v4360 = vshrl.u32 %v4359, 7
    %v4361 = vsub.s32 %v4302, %v4360
    %v4362 = vrot.slane %v1594, %v4361
    %v4363 = vlaneseq
    %v4364 = vshrl.u32 %v4363, 7
    %v4365 = vsub.s32 %v4307, %v4364
    %v4366 = vrot.slane %v1595, %v4365
    %v4367 = vsel %vm4312, %v4366, %v4362
    %v4368 = vlaneseq
    %v4369 = vshrl.u32 %v4368, 7
    %v4370 = vsub.s32 %v4302, %v4369
    %v4371 = vrot.slane %v1596, %v4370
    %v4372 = vlaneseq
    %v4373 = vshrl.u32 %v4372, 7
    %v4374 = vsub.s32 %v4307, %v4373
    %v4375 = vrot.slane %v1597, %v4374
    %v4376 = vsel %vm4312, %v4375, %v4371
    %v4377 = vlaneseq
    %v4378 = vshrl.u32 %v4377, 7
    %v4379 = vsub.s32 %v4302, %v4378
    %v4380 = vrot.slane %v1598, %v4379
    %v4381 = vlaneseq
    %v4382 = vshrl.u32 %v4381, 7
    %v4383 = vsub.s32 %v4307, %v4382
    %v4384 = vrot.slane %v1599, %v4383
    %v4385 = vsel %vm4312, %v4384, %v4380
    %v4386 = vlaneseq
    %v4387 = vshrl.u32 %v4386, 7
    %v4388 = vsub.s32 %v4302, %v4387
    %v4389 = vrot.slane %v1600, %v4388
    %v4390 = vlaneseq
    %v4391 = vshrl.u32 %v4390, 7
    %v4392 = vsub.s32 %v4307, %v4391
    %v4393 = vrot.slane %v1601, %v4392
    %v4394 = vsel %vm4312, %v4393, %v4389
    %v4395 = vlaneseq
    %v4396 = vshrl.u32 %v4395, 7
    %v4397 = vsub.s32 %v4302, %v4396
    %v4398 = vrot.slane %v1602, %v4397
    %v4399 = vlaneseq
    %v4400 = vshrl.u32 %v4399, 7
    %v4401 = vsub.s32 %v4307, %v4400
    %v4402 = vrot.slane %v1603, %v4401
    %v4403 = vsel %vm4312, %v4402, %v4398
    %v4404 = vlaneseq
    %v4405 = vshrl.u32 %v4404, 7
    %v4406 = vsub.s32 %v4302, %v4405
    %v4407 = vrot.slane %v1604, %v4406
    %v4408 = vlaneseq
    %v4409 = vshrl.u32 %v4408, 7
    %v4410 = vsub.s32 %v4307, %v4409
    %v4411 = vrot.slane %v1605, %v4410
    %v4412 = vsel %vm4312, %v4411, %v4407
    %v4413 = vlaneseq
    %v4414 = vshrl.u32 %v4413, 7
    %v4415 = vsub.s32 %v4302, %v4414
    %v4416 = vrot.slane %v1606, %v4415
    %v4417 = vlaneseq
    %v4418 = vshrl.u32 %v4417, 7
    %v4419 = vsub.s32 %v4307, %v4418
    %v4420 = vrot.slane %v1607, %v4419
    %v4421 = vsel %vm4312, %v4420, %v4416
    %v4422 = vlaneseq
    %v4423 = vshrl.u32 %v4422, 7
    %v4424 = vsub.s32 %v4302, %v4423
    %v4425 = vrot.slane %v1608, %v4424
    %v4426 = vlaneseq
    %v4427 = vshrl.u32 %v4426, 7
    %v4428 = vsub.s32 %v4307, %v4427
    %v4429 = vrot.slane %v1609, %v4428
    %v4430 = vsel %vm4312, %v4429, %v4425
    %v4431 = vlaneseq
    %v4432 = vshrl.u32 %v4431, 7
    %v4433 = vsub.s32 %v4302, %v4432
    %v4434 = vrot.slane %v1610, %v4433
    %v4435 = vlaneseq
    %v4436 = vshrl.u32 %v4435, 7
    %v4437 = vsub.s32 %v4307, %v4436
    %v4438 = vrot.slane %v1611, %v4437
    %v4439 = vsel %vm4312, %v4438, %v4434
    %v4440 = vlaneseq
    %v4441 = vshrl.u32 %v4440, 7
    %v4442 = vsub.s32 %v4302, %v4441
    %v4443 = vrot.slane %v1612, %v4442
    %v4444 = vlaneseq
    %v4445 = vshrl.u32 %v4444, 7
    %v4446 = vsub.s32 %v4307, %v4445
    %v4447 = vrot.slane %v1613, %v4446
    %v4448 = vsel %vm4312, %v4447, %v4443
    %v4449 = vsel %vm554, %v4322, %v4313
    %v4450 = vsel %vm555, %v4331, %v4449
    %v4451 = vsel %vm557, %v4340, %v4450
    %v4452 = vsel %vm559, %v4349, %v4451
    %v4453 = vsel %vm561, %v4358, %v4452
    %v4454 = vsel %vm563, %v4367, %v4453
    %v4455 = vsel %vm565, %v4376, %v4454
    %v4456 = vsel %vm554, %v4394, %v4385
    %v4457 = vsel %vm555, %v4403, %v4456
    %v4458 = vsel %vm557, %v4412, %v4457
    %v4459 = vsel %vm559, %v4421, %v4458
    %v4460 = vsel %vm561, %v4430, %v4459
    %v4461 = vsel %vm563, %v4439, %v4460
    %v4462 = vsel %vm565, %v4448, %v4461
    %v4497 = vadd.s32 %v407, 4294967264
    %v4498 = vlaneseq
    %v4499 = vshrl.u32 %v4498, 7
    %v4500 = vsub.s32 %v4497, %v4499
    %v4501 = vrot.slane %v2804, %v4500
    %v4502 = vadd.s32 %v407, 4294967256
    %v4503 = vlaneseq
    %v4504 = vshrl.u32 %v4503, 7
    %v4505 = vsub.s32 %v4502, %v4504
    %v4506 = vrot.slane %v2805, %v4505
    %vm4507 = vcmask 392512
    %v4508 = vsel %vm4507, %v4506, %v4501
    %v4509 = vlaneseq
    %v4510 = vshrl.u32 %v4509, 7
    %v4511 = vsub.s32 %v4497, %v4510
    %v4512 = vrot.slane %v2806, %v4511
    %v4513 = vlaneseq
    %v4514 = vshrl.u32 %v4513, 7
    %v4515 = vsub.s32 %v4502, %v4514
    %v4516 = vrot.slane %v2807, %v4515
    %v4517 = vsel %vm4507, %v4516, %v4512
    %v4518 = vlaneseq
    %v4519 = vshrl.u32 %v4518, 7
    %v4520 = vsub.s32 %v4497, %v4519
    %v4521 = vrot.slane %v2808, %v4520
    %v4522 = vlaneseq
    %v4523 = vshrl.u32 %v4522, 7
    %v4524 = vsub.s32 %v4502, %v4523
    %v4525 = vrot.slane %v2809, %v4524
    %v4526 = vsel %vm4507, %v4525, %v4521
    %v4527 = vlaneseq
    %v4528 = vshrl.u32 %v4527, 7
    %v4529 = vsub.s32 %v4497, %v4528
    %v4530 = vrot.slane %v2810, %v4529
    %v4531 = vlaneseq
    %v4532 = vshrl.u32 %v4531, 7
    %v4533 = vsub.s32 %v4502, %v4532
    %v4534 = vrot.slane %v2811, %v4533
    %v4535 = vsel %vm4507, %v4534, %v4530
    %v4536 = vlaneseq
    %v4537 = vshrl.u32 %v4536, 7
    %v4538 = vsub.s32 %v4497, %v4537
    %v4539 = vrot.slane %v2812, %v4538
    %v4540 = vlaneseq
    %v4541 = vshrl.u32 %v4540, 7
    %v4542 = vsub.s32 %v4502, %v4541
    %v4543 = vrot.slane %v2813, %v4542
    %v4544 = vsel %vm4507, %v4543, %v4539
    %v4545 = vlaneseq
    %v4546 = vshrl.u32 %v4545, 7
    %v4547 = vsub.s32 %v4497, %v4546
    %v4548 = vrot.slane %v2814, %v4547
    %v4549 = vlaneseq
    %v4550 = vshrl.u32 %v4549, 7
    %v4551 = vsub.s32 %v4502, %v4550
    %v4552 = vrot.slane %v2815, %v4551
    %v4553 = vsel %vm4507, %v4552, %v4548
    %v4554 = vlaneseq
    %v4555 = vshrl.u32 %v4554, 7
    %v4556 = vsub.s32 %v4497, %v4555
    %v4557 = vrot.slane %v2816, %v4556
    %v4558 = vlaneseq
    %v4559 = vshrl.u32 %v4558, 7
    %v4560 = vsub.s32 %v4502, %v4559
    %v4561 = vrot.slane %v2817, %v4560
    %v4562 = vsel %vm4507, %v4561, %v4557
    %v4563 = vlaneseq
    %v4564 = vshrl.u32 %v4563, 7
    %v4565 = vsub.s32 %v4497, %v4564
    %v4566 = vrot.slane %v2818, %v4565
    %v4567 = vlaneseq
    %v4568 = vshrl.u32 %v4567, 7
    %v4569 = vsub.s32 %v4502, %v4568
    %v4570 = vrot.slane %v2819, %v4569
    %v4571 = vsel %vm4507, %v4570, %v4566
    %v4572 = vlaneseq
    %v4573 = vshrl.u32 %v4572, 7
    %v4574 = vsub.s32 %v4497, %v4573
    %v4575 = vrot.slane %v2820, %v4574
    %v4576 = vlaneseq
    %v4577 = vshrl.u32 %v4576, 7
    %v4578 = vsub.s32 %v4502, %v4577
    %v4579 = vrot.slane %v2821, %v4578
    %v4580 = vsel %vm4507, %v4579, %v4575
    %v4581 = vlaneseq
    %v4582 = vshrl.u32 %v4581, 7
    %v4583 = vsub.s32 %v4497, %v4582
    %v4584 = vrot.slane %v2822, %v4583
    %v4585 = vlaneseq
    %v4586 = vshrl.u32 %v4585, 7
    %v4587 = vsub.s32 %v4502, %v4586
    %v4588 = vrot.slane %v2823, %v4587
    %v4589 = vsel %vm4507, %v4588, %v4584
    %v4590 = vlaneseq
    %v4591 = vshrl.u32 %v4590, 7
    %v4592 = vsub.s32 %v4497, %v4591
    %v4593 = vrot.slane %v2824, %v4592
    %v4594 = vlaneseq
    %v4595 = vshrl.u32 %v4594, 7
    %v4596 = vsub.s32 %v4502, %v4595
    %v4597 = vrot.slane %v2825, %v4596
    %v4598 = vsel %vm4507, %v4597, %v4593
    %v4599 = vlaneseq
    %v4600 = vshrl.u32 %v4599, 7
    %v4601 = vsub.s32 %v4497, %v4600
    %v4602 = vrot.slane %v2826, %v4601
    %v4603 = vlaneseq
    %v4604 = vshrl.u32 %v4603, 7
    %v4605 = vsub.s32 %v4502, %v4604
    %v4606 = vrot.slane %v2827, %v4605
    %v4607 = vsel %vm4507, %v4606, %v4602
    %v4608 = vlaneseq
    %v4609 = vshrl.u32 %v4608, 7
    %v4610 = vsub.s32 %v4497, %v4609
    %v4611 = vrot.slane %v2828, %v4610
    %v4612 = vlaneseq
    %v4613 = vshrl.u32 %v4612, 7
    %v4614 = vsub.s32 %v4502, %v4613
    %v4615 = vrot.slane %v2829, %v4614
    %v4616 = vsel %vm4507, %v4615, %v4611
    %v4617 = vlaneseq
    %v4618 = vshrl.u32 %v4617, 7
    %v4619 = vsub.s32 %v4497, %v4618
    %v4620 = vrot.slane %v2830, %v4619
    %v4621 = vlaneseq
    %v4622 = vshrl.u32 %v4621, 7
    %v4623 = vsub.s32 %v4502, %v4622
    %v4624 = vrot.slane %v2831, %v4623
    %v4625 = vsel %vm4507, %v4624, %v4620
    %v4626 = vlaneseq
    %v4627 = vshrl.u32 %v4626, 7
    %v4628 = vsub.s32 %v4497, %v4627
    %v4629 = vrot.slane %v2832, %v4628
    %v4630 = vlaneseq
    %v4631 = vshrl.u32 %v4630, 7
    %v4632 = vsub.s32 %v4502, %v4631
    %v4633 = vrot.slane %v2833, %v4632
    %v4634 = vsel %vm4507, %v4633, %v4629
    %v4635 = vlaneseq
    %v4636 = vshrl.u32 %v4635, 7
    %v4637 = vsub.s32 %v4497, %v4636
    %v4638 = vrot.slane %v2834, %v4637
    %v4639 = vlaneseq
    %v4640 = vshrl.u32 %v4639, 7
    %v4641 = vsub.s32 %v4502, %v4640
    %v4642 = vrot.slane %v2835, %v4641
    %v4643 = vsel %vm4507, %v4642, %v4638
    %v4644 = vsel %vm554, %v4517, %v4508
    %v4645 = vsel %vm555, %v4526, %v4644
    %v4646 = vsel %vm557, %v4535, %v4645
    %v4647 = vsel %vm559, %v4544, %v4646
    %v4648 = vsel %vm561, %v4553, %v4647
    %v4649 = vsel %vm563, %v4562, %v4648
    %v4650 = vsel %vm565, %v4571, %v4649
    %v4651 = vsel %vm554, %v4589, %v4580
    %v4652 = vsel %vm555, %v4598, %v4651
    %v4653 = vsel %vm557, %v4607, %v4652
    %v4654 = vsel %vm559, %v4616, %v4653
    %v4655 = vsel %vm561, %v4625, %v4654
    %v4656 = vsel %vm563, %v4634, %v4655
    %v4657 = vsel %vm565, %v4643, %v4656
    %v4692 = vadd.s32 %v407, 4294967248
    %v4693 = vlaneseq
    %v4694 = vshrl.u32 %v4693, 7
    %v4695 = vsub.s32 %v4692, %v4694
    %v4696 = vrot.slane %v2970, %v4695
    %v4697 = vadd.s32 %v407, 4294967240
    %v4698 = vlaneseq
    %v4699 = vshrl.u32 %v4698, 7
    %v4700 = vsub.s32 %v4697, %v4699
    %v4701 = vrot.slane %v2971, %v4700
    %vm4702 = vcmask 523712
    %v4703 = vsel %vm4702, %v4701, %v4696
    %v4704 = vlaneseq
    %v4705 = vshrl.u32 %v4704, 7
    %v4706 = vsub.s32 %v4692, %v4705
    %v4707 = vrot.slane %v2972, %v4706
    %v4708 = vlaneseq
    %v4709 = vshrl.u32 %v4708, 7
    %v4710 = vsub.s32 %v4697, %v4709
    %v4711 = vrot.slane %v2973, %v4710
    %v4712 = vsel %vm4702, %v4711, %v4707
    %v4713 = vlaneseq
    %v4714 = vshrl.u32 %v4713, 7
    %v4715 = vsub.s32 %v4692, %v4714
    %v4716 = vrot.slane %v2974, %v4715
    %v4717 = vlaneseq
    %v4718 = vshrl.u32 %v4717, 7
    %v4719 = vsub.s32 %v4697, %v4718
    %v4720 = vrot.slane %v2975, %v4719
    %v4721 = vsel %vm4702, %v4720, %v4716
    %v4722 = vlaneseq
    %v4723 = vshrl.u32 %v4722, 7
    %v4724 = vsub.s32 %v4692, %v4723
    %v4725 = vrot.slane %v2976, %v4724
    %v4726 = vlaneseq
    %v4727 = vshrl.u32 %v4726, 7
    %v4728 = vsub.s32 %v4697, %v4727
    %v4729 = vrot.slane %v2977, %v4728
    %v4730 = vsel %vm4702, %v4729, %v4725
    %v4731 = vlaneseq
    %v4732 = vshrl.u32 %v4731, 7
    %v4733 = vsub.s32 %v4692, %v4732
    %v4734 = vrot.slane %v2978, %v4733
    %v4735 = vlaneseq
    %v4736 = vshrl.u32 %v4735, 7
    %v4737 = vsub.s32 %v4697, %v4736
    %v4738 = vrot.slane %v2979, %v4737
    %v4739 = vsel %vm4702, %v4738, %v4734
    %v4740 = vlaneseq
    %v4741 = vshrl.u32 %v4740, 7
    %v4742 = vsub.s32 %v4692, %v4741
    %v4743 = vrot.slane %v2980, %v4742
    %v4744 = vlaneseq
    %v4745 = vshrl.u32 %v4744, 7
    %v4746 = vsub.s32 %v4697, %v4745
    %v4747 = vrot.slane %v2981, %v4746
    %v4748 = vsel %vm4702, %v4747, %v4743
    %v4749 = vlaneseq
    %v4750 = vshrl.u32 %v4749, 7
    %v4751 = vsub.s32 %v4692, %v4750
    %v4752 = vrot.slane %v2982, %v4751
    %v4753 = vlaneseq
    %v4754 = vshrl.u32 %v4753, 7
    %v4755 = vsub.s32 %v4697, %v4754
    %v4756 = vrot.slane %v2983, %v4755
    %v4757 = vsel %vm4702, %v4756, %v4752
    %v4758 = vlaneseq
    %v4759 = vshrl.u32 %v4758, 7
    %v4760 = vsub.s32 %v4692, %v4759
    %v4761 = vrot.slane %v2984, %v4760
    %v4762 = vlaneseq
    %v4763 = vshrl.u32 %v4762, 7
    %v4764 = vsub.s32 %v4697, %v4763
    %v4765 = vrot.slane %v2985, %v4764
    %v4766 = vsel %vm4702, %v4765, %v4761
    %v4767 = vlaneseq
    %v4768 = vshrl.u32 %v4767, 7
    %v4769 = vsub.s32 %v4692, %v4768
    %v4770 = vrot.slane %v2986, %v4769
    %v4771 = vlaneseq
    %v4772 = vshrl.u32 %v4771, 7
    %v4773 = vsub.s32 %v4697, %v4772
    %v4774 = vrot.slane %v2987, %v4773
    %v4775 = vsel %vm4702, %v4774, %v4770
    %v4776 = vlaneseq
    %v4777 = vshrl.u32 %v4776, 7
    %v4778 = vsub.s32 %v4692, %v4777
    %v4779 = vrot.slane %v2988, %v4778
    %v4780 = vlaneseq
    %v4781 = vshrl.u32 %v4780, 7
    %v4782 = vsub.s32 %v4697, %v4781
    %v4783 = vrot.slane %v2989, %v4782
    %v4784 = vsel %vm4702, %v4783, %v4779
    %v4785 = vlaneseq
    %v4786 = vshrl.u32 %v4785, 7
    %v4787 = vsub.s32 %v4692, %v4786
    %v4788 = vrot.slane %v2990, %v4787
    %v4789 = vlaneseq
    %v4790 = vshrl.u32 %v4789, 7
    %v4791 = vsub.s32 %v4697, %v4790
    %v4792 = vrot.slane %v2991, %v4791
    %v4793 = vsel %vm4702, %v4792, %v4788
    %v4794 = vlaneseq
    %v4795 = vshrl.u32 %v4794, 7
    %v4796 = vsub.s32 %v4692, %v4795
    %v4797 = vrot.slane %v2992, %v4796
    %v4798 = vlaneseq
    %v4799 = vshrl.u32 %v4798, 7
    %v4800 = vsub.s32 %v4697, %v4799
    %v4801 = vrot.slane %v2993, %v4800
    %v4802 = vsel %vm4702, %v4801, %v4797
    %v4803 = vlaneseq
    %v4804 = vshrl.u32 %v4803, 7
    %v4805 = vsub.s32 %v4692, %v4804
    %v4806 = vrot.slane %v2994, %v4805
    %v4807 = vlaneseq
    %v4808 = vshrl.u32 %v4807, 7
    %v4809 = vsub.s32 %v4697, %v4808
    %v4810 = vrot.slane %v2995, %v4809
    %v4811 = vsel %vm4702, %v4810, %v4806
    %v4812 = vlaneseq
    %v4813 = vshrl.u32 %v4812, 7
    %v4814 = vsub.s32 %v4692, %v4813
    %v4815 = vrot.slane %v2996, %v4814
    %v4816 = vlaneseq
    %v4817 = vshrl.u32 %v4816, 7
    %v4818 = vsub.s32 %v4697, %v4817
    %v4819 = vrot.slane %v2997, %v4818
    %v4820 = vsel %vm4702, %v4819, %v4815
    %v4821 = vlaneseq
    %v4822 = vshrl.u32 %v4821, 7
    %v4823 = vsub.s32 %v4692, %v4822
    %v4824 = vrot.slane %v2998, %v4823
    %v4825 = vlaneseq
    %v4826 = vshrl.u32 %v4825, 7
    %v4827 = vsub.s32 %v4697, %v4826
    %v4828 = vrot.slane %v2999, %v4827
    %v4829 = vsel %vm4702, %v4828, %v4824
    %v4830 = vlaneseq
    %v4831 = vshrl.u32 %v4830, 7
    %v4832 = vsub.s32 %v4692, %v4831
    %v4833 = vrot.slane %v3000, %v4832
    %v4834 = vlaneseq
    %v4835 = vshrl.u32 %v4834, 7
    %v4836 = vsub.s32 %v4697, %v4835
    %v4837 = vrot.slane %v3001, %v4836
    %v4838 = vsel %vm4702, %v4837, %v4833
    %v4839 = vsel %vm554, %v4712, %v4703
    %v4840 = vsel %vm555, %v4721, %v4839
    %v4841 = vsel %vm557, %v4730, %v4840
    %v4842 = vsel %vm559, %v4739, %v4841
    %v4843 = vsel %vm561, %v4748, %v4842
    %v4844 = vsel %vm563, %v4757, %v4843
    %v4845 = vsel %vm565, %v4766, %v4844
    %v4846 = vsel %vm554, %v4784, %v4775
    %v4847 = vsel %vm555, %v4793, %v4846
    %v4848 = vsel %vm557, %v4802, %v4847
    %v4849 = vsel %vm559, %v4811, %v4848
    %v4850 = vsel %vm561, %v4820, %v4849
    %v4851 = vsel %vm563, %v4829, %v4850
    %v4852 = vsel %vm565, %v4838, %v4851
    %v4887 = vadd.s32 %v407, 4294967232
    %v4888 = vlaneseq
    %v4889 = vshrl.u32 %v4888, 7
    %v4890 = vsub.s32 %v4887, %v4889
    %v4891 = vrot.slane %v3950, %v4890
    %v4892 = vadd.s32 %v407, 4294967224
    %v4893 = vlaneseq
    %v4894 = vshrl.u32 %v4893, 7
    %v4895 = vsub.s32 %v4892, %v4894
    %v4896 = vrot.slane %v3951, %v4895
    %vm4897 = vcmask 654912
    %v4898 = vsel %vm4897, %v4896, %v4891
    %v4899 = vlaneseq
    %v4900 = vshrl.u32 %v4899, 7
    %v4901 = vsub.s32 %v4887, %v4900
    %v4902 = vrot.slane %v3952, %v4901
    %v4903 = vlaneseq
    %v4904 = vshrl.u32 %v4903, 7
    %v4905 = vsub.s32 %v4892, %v4904
    %v4906 = vrot.slane %v3953, %v4905
    %v4907 = vsel %vm4897, %v4906, %v4902
    %v4908 = vlaneseq
    %v4909 = vshrl.u32 %v4908, 7
    %v4910 = vsub.s32 %v4887, %v4909
    %v4911 = vrot.slane %v3954, %v4910
    %v4912 = vlaneseq
    %v4913 = vshrl.u32 %v4912, 7
    %v4914 = vsub.s32 %v4892, %v4913
    %v4915 = vrot.slane %v3955, %v4914
    %v4916 = vsel %vm4897, %v4915, %v4911
    %v4917 = vlaneseq
    %v4918 = vshrl.u32 %v4917, 7
    %v4919 = vsub.s32 %v4887, %v4918
    %v4920 = vrot.slane %v3956, %v4919
    %v4921 = vlaneseq
    %v4922 = vshrl.u32 %v4921, 7
    %v4923 = vsub.s32 %v4892, %v4922
    %v4924 = vrot.slane %v3957, %v4923
    %v4925 = vsel %vm4897, %v4924, %v4920
    %v4926 = vlaneseq
    %v4927 = vshrl.u32 %v4926, 7
    %v4928 = vsub.s32 %v4887, %v4927
    %v4929 = vrot.slane %v3958, %v4928
    %v4930 = vlaneseq
    %v4931 = vshrl.u32 %v4930, 7
    %v4932 = vsub.s32 %v4892, %v4931
    %v4933 = vrot.slane %v3959, %v4932
    %v4934 = vsel %vm4897, %v4933, %v4929
    %v4935 = vlaneseq
    %v4936 = vshrl.u32 %v4935, 7
    %v4937 = vsub.s32 %v4887, %v4936
    %v4938 = vrot.slane %v3960, %v4937
    %v4939 = vlaneseq
    %v4940 = vshrl.u32 %v4939, 7
    %v4941 = vsub.s32 %v4892, %v4940
    %v4942 = vrot.slane %v3961, %v4941
    %v4943 = vsel %vm4897, %v4942, %v4938
    %v4944 = vlaneseq
    %v4945 = vshrl.u32 %v4944, 7
    %v4946 = vsub.s32 %v4887, %v4945
    %v4947 = vrot.slane %v3962, %v4946
    %v4948 = vlaneseq
    %v4949 = vshrl.u32 %v4948, 7
    %v4950 = vsub.s32 %v4892, %v4949
    %v4951 = vrot.slane %v3963, %v4950
    %v4952 = vsel %vm4897, %v4951, %v4947
    %v4953 = vlaneseq
    %v4954 = vshrl.u32 %v4953, 7
    %v4955 = vsub.s32 %v4887, %v4954
    %v4956 = vrot.slane %v3964, %v4955
    %v4957 = vlaneseq
    %v4958 = vshrl.u32 %v4957, 7
    %v4959 = vsub.s32 %v4892, %v4958
    %v4960 = vrot.slane %v3965, %v4959
    %v4961 = vsel %vm4897, %v4960, %v4956
    %v4962 = vlaneseq
    %v4963 = vshrl.u32 %v4962, 7
    %v4964 = vsub.s32 %v4887, %v4963
    %v4965 = vrot.slane %v3966, %v4964
    %v4966 = vlaneseq
    %v4967 = vshrl.u32 %v4966, 7
    %v4968 = vsub.s32 %v4892, %v4967
    %v4969 = vrot.slane %v3967, %v4968
    %v4970 = vsel %vm4897, %v4969, %v4965
    %v4971 = vlaneseq
    %v4972 = vshrl.u32 %v4971, 7
    %v4973 = vsub.s32 %v4887, %v4972
    %v4974 = vrot.slane %v3968, %v4973
    %v4975 = vlaneseq
    %v4976 = vshrl.u32 %v4975, 7
    %v4977 = vsub.s32 %v4892, %v4976
    %v4978 = vrot.slane %v3969, %v4977
    %v4979 = vsel %vm4897, %v4978, %v4974
    %v4980 = vlaneseq
    %v4981 = vshrl.u32 %v4980, 7
    %v4982 = vsub.s32 %v4887, %v4981
    %v4983 = vrot.slane %v3970, %v4982
    %v4984 = vlaneseq
    %v4985 = vshrl.u32 %v4984, 7
    %v4986 = vsub.s32 %v4892, %v4985
    %v4987 = vrot.slane %v3971, %v4986
    %v4988 = vsel %vm4897, %v4987, %v4983
    %v4989 = vlaneseq
    %v4990 = vshrl.u32 %v4989, 7
    %v4991 = vsub.s32 %v4887, %v4990
    %v4992 = vrot.slane %v3972, %v4991
    %v4993 = vlaneseq
    %v4994 = vshrl.u32 %v4993, 7
    %v4995 = vsub.s32 %v4892, %v4994
    %v4996 = vrot.slane %v3973, %v4995
    %v4997 = vsel %vm4897, %v4996, %v4992
    %v4998 = vlaneseq
    %v4999 = vshrl.u32 %v4998, 7
    %v5000 = vsub.s32 %v4887, %v4999
    %v5001 = vrot.slane %v3974, %v5000
    %v5002 = vlaneseq
    %v5003 = vshrl.u32 %v5002, 7
    %v5004 = vsub.s32 %v4892, %v5003
    %v5005 = vrot.slane %v3975, %v5004
    %v5006 = vsel %vm4897, %v5005, %v5001
    %v5007 = vlaneseq
    %v5008 = vshrl.u32 %v5007, 7
    %v5009 = vsub.s32 %v4887, %v5008
    %v5010 = vrot.slane %v3976, %v5009
    %v5011 = vlaneseq
    %v5012 = vshrl.u32 %v5011, 7
    %v5013 = vsub.s32 %v4892, %v5012
    %v5014 = vrot.slane %v3977, %v5013
    %v5015 = vsel %vm4897, %v5014, %v5010
    %v5016 = vlaneseq
    %v5017 = vshrl.u32 %v5016, 7
    %v5018 = vsub.s32 %v4887, %v5017
    %v5019 = vrot.slane %v3978, %v5018
    %v5020 = vlaneseq
    %v5021 = vshrl.u32 %v5020, 7
    %v5022 = vsub.s32 %v4892, %v5021
    %v5023 = vrot.slane %v3979, %v5022
    %v5024 = vsel %vm4897, %v5023, %v5019
    %v5025 = vlaneseq
    %v5026 = vshrl.u32 %v5025, 7
    %v5027 = vsub.s32 %v4887, %v5026
    %v5028 = vrot.slane %v3980, %v5027
    %v5029 = vlaneseq
    %v5030 = vshrl.u32 %v5029, 7
    %v5031 = vsub.s32 %v4892, %v5030
    %v5032 = vrot.slane %v3981, %v5031
    %v5033 = vsel %vm4897, %v5032, %v5028
    %v5034 = vsel %vm554, %v4907, %v4898
    %v5035 = vsel %vm555, %v4916, %v5034
    %v5036 = vsel %vm557, %v4925, %v5035
    %v5037 = vsel %vm559, %v4934, %v5036
    %v5038 = vsel %vm561, %v4943, %v5037
    %v5039 = vsel %vm563, %v4952, %v5038
    %v5040 = vsel %vm565, %v4961, %v5039
    %v5041 = vsel %vm554, %v4979, %v4970
    %v5042 = vsel %vm555, %v4988, %v5041
    %v5043 = vsel %vm557, %v4997, %v5042
    %v5044 = vsel %vm559, %v5006, %v5043
    %v5045 = vsel %vm561, %v5015, %v5044
    %v5046 = vsel %vm563, %v5024, %v5045
    %v5047 = vsel %vm565, %v5033, %v5046
    %v5082 = vadd.s32 %v407, 4294967216
    %v5083 = vlaneseq
    %v5084 = vshrl.u32 %v5083, 7
    %v5085 = vsub.s32 %v5082, %v5084
    %v5086 = vrot.slane %v4046, %v5085
    %v5087 = vadd.s32 %v407, 4294967208
    %v5088 = vlaneseq
    %v5089 = vshrl.u32 %v5088, 7
    %v5090 = vsub.s32 %v5087, %v5089
    %v5091 = vrot.slane %v4047, %v5090
    %vm5092 = vcmask 786112
    %v5093 = vsel %vm5092, %v5091, %v5086
    %v5094 = vlaneseq
    %v5095 = vshrl.u32 %v5094, 7
    %v5096 = vsub.s32 %v5082, %v5095
    %v5097 = vrot.slane %v4048, %v5096
    %v5098 = vlaneseq
    %v5099 = vshrl.u32 %v5098, 7
    %v5100 = vsub.s32 %v5087, %v5099
    %v5101 = vrot.slane %v4049, %v5100
    %v5102 = vsel %vm5092, %v5101, %v5097
    %v5103 = vlaneseq
    %v5104 = vshrl.u32 %v5103, 7
    %v5105 = vsub.s32 %v5082, %v5104
    %v5106 = vrot.slane %v4050, %v5105
    %v5107 = vlaneseq
    %v5108 = vshrl.u32 %v5107, 7
    %v5109 = vsub.s32 %v5087, %v5108
    %v5110 = vrot.slane %v4051, %v5109
    %v5111 = vsel %vm5092, %v5110, %v5106
    %v5112 = vlaneseq
    %v5113 = vshrl.u32 %v5112, 7
    %v5114 = vsub.s32 %v5082, %v5113
    %v5115 = vrot.slane %v4052, %v5114
    %v5116 = vlaneseq
    %v5117 = vshrl.u32 %v5116, 7
    %v5118 = vsub.s32 %v5087, %v5117
    %v5119 = vrot.slane %v4053, %v5118
    %v5120 = vsel %vm5092, %v5119, %v5115
    %v5121 = vlaneseq
    %v5122 = vshrl.u32 %v5121, 7
    %v5123 = vsub.s32 %v5082, %v5122
    %v5124 = vrot.slane %v4054, %v5123
    %v5125 = vlaneseq
    %v5126 = vshrl.u32 %v5125, 7
    %v5127 = vsub.s32 %v5087, %v5126
    %v5128 = vrot.slane %v4055, %v5127
    %v5129 = vsel %vm5092, %v5128, %v5124
    %v5130 = vlaneseq
    %v5131 = vshrl.u32 %v5130, 7
    %v5132 = vsub.s32 %v5082, %v5131
    %v5133 = vrot.slane %v4056, %v5132
    %v5134 = vlaneseq
    %v5135 = vshrl.u32 %v5134, 7
    %v5136 = vsub.s32 %v5087, %v5135
    %v5137 = vrot.slane %v4057, %v5136
    %v5138 = vsel %vm5092, %v5137, %v5133
    %v5139 = vlaneseq
    %v5140 = vshrl.u32 %v5139, 7
    %v5141 = vsub.s32 %v5082, %v5140
    %v5142 = vrot.slane %v4058, %v5141
    %v5143 = vlaneseq
    %v5144 = vshrl.u32 %v5143, 7
    %v5145 = vsub.s32 %v5087, %v5144
    %v5146 = vrot.slane %v4059, %v5145
    %v5147 = vsel %vm5092, %v5146, %v5142
    %v5148 = vlaneseq
    %v5149 = vshrl.u32 %v5148, 7
    %v5150 = vsub.s32 %v5082, %v5149
    %v5151 = vrot.slane %v4060, %v5150
    %v5152 = vlaneseq
    %v5153 = vshrl.u32 %v5152, 7
    %v5154 = vsub.s32 %v5087, %v5153
    %v5155 = vrot.slane %v4061, %v5154
    %v5156 = vsel %vm5092, %v5155, %v5151
    %v5157 = vlaneseq
    %v5158 = vshrl.u32 %v5157, 7
    %v5159 = vsub.s32 %v5082, %v5158
    %v5160 = vrot.slane %v4062, %v5159
    %v5161 = vlaneseq
    %v5162 = vshrl.u32 %v5161, 7
    %v5163 = vsub.s32 %v5087, %v5162
    %v5164 = vrot.slane %v4063, %v5163
    %v5165 = vsel %vm5092, %v5164, %v5160
    %v5166 = vlaneseq
    %v5167 = vshrl.u32 %v5166, 7
    %v5168 = vsub.s32 %v5082, %v5167
    %v5169 = vrot.slane %v4064, %v5168
    %v5170 = vlaneseq
    %v5171 = vshrl.u32 %v5170, 7
    %v5172 = vsub.s32 %v5087, %v5171
    %v5173 = vrot.slane %v4065, %v5172
    %v5174 = vsel %vm5092, %v5173, %v5169
    %v5175 = vlaneseq
    %v5176 = vshrl.u32 %v5175, 7
    %v5177 = vsub.s32 %v5082, %v5176
    %v5178 = vrot.slane %v4066, %v5177
    %v5179 = vlaneseq
    %v5180 = vshrl.u32 %v5179, 7
    %v5181 = vsub.s32 %v5087, %v5180
    %v5182 = vrot.slane %v4067, %v5181
    %v5183 = vsel %vm5092, %v5182, %v5178
    %v5184 = vlaneseq
    %v5185 = vshrl.u32 %v5184, 7
    %v5186 = vsub.s32 %v5082, %v5185
    %v5187 = vrot.slane %v4068, %v5186
    %v5188 = vlaneseq
    %v5189 = vshrl.u32 %v5188, 7
    %v5190 = vsub.s32 %v5087, %v5189
    %v5191 = vrot.slane %v4069, %v5190
    %v5192 = vsel %vm5092, %v5191, %v5187
    %v5193 = vlaneseq
    %v5194 = vshrl.u32 %v5193, 7
    %v5195 = vsub.s32 %v5082, %v5194
    %v5196 = vrot.slane %v4070, %v5195
    %v5197 = vlaneseq
    %v5198 = vshrl.u32 %v5197, 7
    %v5199 = vsub.s32 %v5087, %v5198
    %v5200 = vrot.slane %v4071, %v5199
    %v5201 = vsel %vm5092, %v5200, %v5196
    %v5202 = vlaneseq
    %v5203 = vshrl.u32 %v5202, 7
    %v5204 = vsub.s32 %v5082, %v5203
    %v5205 = vrot.slane %v4072, %v5204
    %v5206 = vlaneseq
    %v5207 = vshrl.u32 %v5206, 7
    %v5208 = vsub.s32 %v5087, %v5207
    %v5209 = vrot.slane %v4073, %v5208
    %v5210 = vsel %vm5092, %v5209, %v5205
    %v5211 = vlaneseq
    %v5212 = vshrl.u32 %v5211, 7
    %v5213 = vsub.s32 %v5082, %v5212
    %v5214 = vrot.slane %v4074, %v5213
    %v5215 = vlaneseq
    %v5216 = vshrl.u32 %v5215, 7
    %v5217 = vsub.s32 %v5087, %v5216
    %v5218 = vrot.slane %v4075, %v5217
    %v5219 = vsel %vm5092, %v5218, %v5214
    %v5220 = vlaneseq
    %v5221 = vshrl.u32 %v5220, 7
    %v5222 = vsub.s32 %v5082, %v5221
    %v5223 = vrot.slane %v4076, %v5222
    %v5224 = vlaneseq
    %v5225 = vshrl.u32 %v5224, 7
    %v5226 = vsub.s32 %v5087, %v5225
    %v5227 = vrot.slane %v4077, %v5226
    %v5228 = vsel %vm5092, %v5227, %v5223
    %v5229 = vsel %vm554, %v5102, %v5093
    %v5230 = vsel %vm555, %v5111, %v5229
    %v5231 = vsel %vm557, %v5120, %v5230
    %v5232 = vsel %vm559, %v5129, %v5231
    %v5233 = vsel %vm561, %v5138, %v5232
    %v5234 = vsel %vm563, %v5147, %v5233
    %v5235 = vsel %vm565, %v5156, %v5234
    %v5236 = vsel %vm554, %v5174, %v5165
    %v5237 = vsel %vm555, %v5183, %v5236
    %v5238 = vsel %vm557, %v5192, %v5237
    %v5239 = vsel %vm559, %v5201, %v5238
    %v5240 = vsel %vm561, %v5210, %v5239
    %v5241 = vsel %vm563, %v5219, %v5240
    %v5242 = vsel %vm565, %v5228, %v5241
    %v5245 = vsel %vm705, %v4260, %v4455
    %v5246 = vsel %vm705, %v4267, %v4462
    %vm5247 = vcmask 261120
    %v5248 = vsel %vm5247, %v5245, %v4650
    %v5249 = vsel %vm5247, %v5246, %v4657
    %vm5250 = vcmask 392192
    %v5251 = vsel %vm5250, %v5248, %v4845
    %v5252 = vsel %vm5250, %v5249, %v4852
    %vm5253 = vcmask 523264
    %v5254 = vsel %vm5253, %v5251, %v5040
    %v5255 = vsel %vm5253, %v5252, %v5047
    %vm5256 = vcmask 654336
    %v5257 = vsel %vm5256, %v5254, %v5235
    %v5258 = vsel %vm5256, %v5255, %v5242
    %v5259 = vld [vmem:[#allocation13] sm:$0xff]
    %v5260 = vld [vmem:[#allocation13 + $0x8] sm:$0xff]
    %v5261 = vld [vmem:[#allocation13 + $0x10] sm:$0xff]
    %v5262 = vld [vmem:[#allocation13 + $0x18] sm:$0xff]
    %v5263 = vld [vmem:[#allocation13 + $0x20] sm:$0xff]
    %v5264 = vld [vmem:[#allocation13 + $0x28] sm:$0xff]
    %v5265 = vld [vmem:[#allocation13 + $0x30] sm:$0xff]
    %v5266 = vld [vmem:[#allocation13 + $0x38] sm:$0xff]
    %v5267 = vld [vmem:[#allocation13 + $0x40] sm:$0xff]
    %v5268 = vld [vmem:[#allocation13 + $0x48] sm:$0xff]
    %v5269 = vld [vmem:[#allocation13 + $0x50] sm:$0xff]
    %v5270 = vld [vmem:[#allocation13 + $0x58] sm:$0xff]
    %v5271 = vld [vmem:[#allocation13 + $0x60] sm:$0xff]
    %v5272 = vld [vmem:[#allocation13 + $0x68] sm:$0xff]
    %v5273 = vld [vmem:[#allocation13 + $0x70] sm:$0xff]
    %v5274 = vld [vmem:[#allocation13 + $0x78] sm:$0xff]
    %v5275 = vld [vmem:[#allocation13 + $0x80] sm:$0xff]
    %v5276 = vld [vmem:[#allocation13 + $0x88] sm:$0xff]
    %v5277 = vld [vmem:[#allocation13 + $0x90] sm:$0xff]
    %v5278 = vld [vmem:[#allocation13 + $0x98] sm:$0xff]
    %v5279 = vld [vmem:[#allocation13 + $0xa0] sm:$0xff]
    %v5280 = vld [vmem:[#allocation13 + $0xa8] sm:$0xff]
    %v5281 = vld [vmem:[#allocation13 + $0xb0] sm:$0xff]
    %v5282 = vld [vmem:[#allocation13 + $0xb8] sm:$0xff]
    %v5283 = vld [vmem:[#allocation13 + $0xc0] sm:$0xff]
    %v5284 = vld [vmem:[#allocation13 + $0xc8] sm:$0xff]
    %v5285 = vld [vmem:[#allocation13 + $0xd0] sm:$0xff]
    %v5286 = vld [vmem:[#allocation13 + $0xd8] sm:$0xff]
    %v5287 = vld [vmem:[#allocation13 + $0xe0] sm:$0xff]
    %v5288 = vld [vmem:[#allocation13 + $0xe8] sm:$0xff]
    %v5289 = vld [vmem:[#allocation13 + $0xf0] sm:$0xff]
    %v5290 = vld [vmem:[#allocation13 + $0xf8] sm:$0xff]
    %v5291 = vld [vmem:[#allocation13 + $0x100] sm:$0xff]
    %v5292 = vld [vmem:[#allocation13 + $0x108] sm:$0xff]
    %v5293 = vld [vmem:[#allocation13 + $0x110] sm:$0xff]
    %v5294 = vld [vmem:[#allocation13 + $0x118] sm:$0xff]
    %v5295 = vld [vmem:[%s10] sm:$0x7]
    %v5297 = vlaneseq
    %v5298 = vshrl.u32 %v5297, 7
    %v5299 = vsub.s32 0, %v5298
    %v5300 = vrot.slane %v5295, %v5299
    %v5301 = vlaneseq
    %v5302 = vshrl.u32 %v5301, 7
    %v5303 = vsub.s32 1, %v5302
    %v5304 = vrot.slane %v5295, %v5303
    %v5305 = vlaneseq
    %v5306 = vshrl.u32 %v5305, 7
    %v5307 = vsub.s32 2, %v5306
    %v5308 = vrot.slane %v5295, %v5307
    %vm5312 = vcmask 785408
    %v5314 = vsel %vm5312, %v5257, 0
    %v5317 = vsel %vm5312, %v5258, 0
    %5319 = vmatprep.subr.mxu0 %v5260
    %5320 = vmatpush1.msra.mxu0 %v5259
    %5321 = vmatprep.subr.mxu0 %v5263
    %5322 = vmatpush1.msra.mxu0 %v5262
    %5323 = vmatprep.subr.mxu0 %v5266
    %5324 = vmatpush1.msra.mxu0 %v5265
    %5325 = vmatprep.subr.mxu0 %v5269
    %5326 = vmatpush1.msra.mxu0 %v5268
    %5327 = vmatprep.subr.mxu0 %v5272
    %5328 = vmatpush1.msra.mxu0 %v5271
    %5329 = vmatprep.subr.mxu0 %v5275
    %5330 = vmatpush1.msra.mxu0 %v5274
    %5331 = vmatprep.subr.mxu0 %v5278
    %5332 = vmatpush1.msra.mxu0 %v5277
    %5333 = vmatprep.subr.mxu0 %v5281
    %5334 = vmatpush1.msra.mxu0 %v5280
    %5335 = vmatprep.subr.mxu0 %v5284
    %5336 = vmatpush1.msra.mxu0 %v5283
    %5337 = vmatprep.subr.mxu0 %v5287
    %5338 = vmatpush1.msra.mxu0 %v5286
    %5339 = vmatprep.subr.mxu0 %v5290
    %5340 = vmatpush1.msra.mxu0 %v5289
    %5341 = vmatprep.subr.mxu0 %v5293
    %5342 = vmatpush1.msra.mxu0 %v5292
    %5343 = vmatprep.subr.mxu0 0.0
    %5344 = vmatpush1.msra.mxu0 0.0
    %5345 = vmatprep.subr.mxu0 0.0
    %5346 = vmatpush1.msra.mxu0 0.0
    %5347 = vmatprep.subr.mxu0 0.0
    %5348 = vmatpush1.msra.mxu0 0.0
    %5349 = vmatprep.subr.mxu0 0.0
    %5350 = vmatpush1.msra.mxu0 0.0
    %5351 = vmatprep.subr.mxu0 0.0
    %5352 = vmatpush1.msra.mxu0 0.0
    %5353 = vmatprep.subr.mxu0 0.0
    %5354 = vmatpush1.msra.mxu0 0.0
    %5355 = vmatprep.subr.mxu0 0.0
    %5356 = vmatpush1.msra.mxu0 0.0
    %5357 = vmatprep.subr.mxu0 0.0
    %5358 = vmatpush1.msra.mxu0 0.0
    %5359 = vmatprep.subr.mxu0 0.0
    %5360 = vmatpush1.msra.mxu0 0.0
    %5361 = vmatprep.subr.mxu0 0.0
    %5362 = vmatpush1.msra.mxu0 0.0
    %5363 = vmatprep.subr.mxu0 0.0
    %5364 = vmatpush1.msra.mxu0 0.0
    %5365 = vmatprep.subr.mxu0 0.0
    %5366 = vmatpush1.msra.mxu0 0.0
    %5367 = vmatprep.subr.mxu0 0.0
    %5368 = vmatpush1.msra.mxu0 0.0
    %5369 = vmatprep.subr.mxu0 0.0
    %5370 = vmatpush1.msra.mxu0 0.0
    %5371 = vmatprep.subr.mxu0 0.0
    %5372 = vmatpush1.msra.mxu0 0.0
    %5373 = vmatprep.subr.mxu0 0.0
    %5374 = vmatpush1.msra.mxu0 0.0
    %5375 = vmatprep.subr.mxu0 0.0
    %5376 = vmatpush1.msra.mxu0 0.0
    %5377 = vmatprep.subr.mxu0 0.0
    %5378 = vmatpush1.msra.mxu0 0.0
    %5379 = vmatprep.subr.mxu0 0.0
    %5380 = vmatpush1.msra.mxu0 0.0
    %5381 = vmatprep.subr.mxu0 0.0
    %5382 = vmatpush1.msra.mxu0 0.0
    %5383 = vmatprep.mubr.f32.mxu0 0.0
    %5384 = vmatmul.mubr.f32.gmra.mrb[0].mxu0 %v5314
    %v5385 = vpop.f32.mrb[0].mxu0
    %v5386 = vadd.f32 %v5300, %v5385
    %v5387 = vpop.f32.mrb[0].mxu0
    %v5388 = vadd.f32 %v5304, %v5387
    %5389 = vmatprep.mubr.f32.mxu0 0.0
    %5390 = vmatmul.mubr.f32.gmra.mrb[0].mxu0 %v5317
    %v5391 = vpop.f32.mrb[0].mxu0
    %v5392 = vadd.f32 %v5300, %v5391
    %v5393 = vpop.f32.mrb[0].mxu0
    %v5394 = vadd.f32 %v5304, %v5393
    %5395 = vdwg.mxu0
    %5396 = vmatprep.subr.mxu0 0.0
    %5397 = vmatpush1.msra.mxu0 %v5261
    %5398 = vmatprep.subr.mxu0 0.0
    %5399 = vmatpush1.msra.mxu0 %v5264
    %5400 = vmatprep.subr.mxu0 0.0
    %5401 = vmatpush1.msra.mxu0 %v5267
    %5402 = vmatprep.subr.mxu0 0.0
    %5403 = vmatpush1.msra.mxu0 %v5270
    %5404 = vmatprep.subr.mxu0 0.0
    %5405 = vmatpush1.msra.mxu0 %v5273
    %5406 = vmatprep.subr.mxu0 0.0
    %5407 = vmatpush1.msra.mxu0 %v5276
    %5408 = vmatprep.subr.mxu0 0.0
    %5409 = vmatpush1.msra.mxu0 %v5279
    %5410 = vmatprep.subr.mxu0 0.0
    %5411 = vmatpush1.msra.mxu0 %v5282
    %5412 = vmatprep.subr.mxu0 0.0
    %5413 = vmatpush1.msra.mxu0 %v5285
    %5414 = vmatprep.subr.mxu0 0.0
    %5415 = vmatpush1.msra.mxu0 %v5288
    %5416 = vmatprep.subr.mxu0 0.0
    %5417 = vmatpush1.msra.mxu0 %v5291
    %5418 = vmatprep.subr.mxu0 0.0
    %5419 = vmatpush1.msra.mxu0 %v5294
    %5420 = vmatprep.subr.mxu0 0.0
    %5421 = vmatpush1.msra.mxu0 0.0
    %5422 = vmatprep.subr.mxu0 0.0
    %5423 = vmatpush1.msra.mxu0 0.0
    %5424 = vmatprep.subr.mxu0 0.0
    %5425 = vmatpush1.msra.mxu0 0.0
    %5426 = vmatprep.subr.mxu0 0.0
    %5427 = vmatpush1.msra.mxu0 0.0
    %5428 = vmatprep.subr.mxu0 0.0
    %5429 = vmatpush1.msra.mxu0 0.0
    %5430 = vmatprep.subr.mxu0 0.0
    %5431 = vmatpush1.msra.mxu0 0.0
    %5432 = vmatprep.subr.mxu0 0.0
    %5433 = vmatpush1.msra.mxu0 0.0
    %5434 = vmatprep.subr.mxu0 0.0
    %5435 = vmatpush1.msra.mxu0 0.0
    %5436 = vmatprep.subr.mxu0 0.0
    %5437 = vmatpush1.msra.mxu0 0.0
    %5438 = vmatprep.subr.mxu0 0.0
    %5439 = vmatpush1.msra.mxu0 0.0
    %5440 = vmatprep.subr.mxu0 0.0
    %5441 = vmatpush1.msra.mxu0 0.0
    %5442 = vmatprep.subr.mxu0 0.0
    %5443 = vmatpush1.msra.mxu0 0.0
    %5444 = vmatprep.subr.mxu0 0.0
    %5445 = vmatpush1.msra.mxu0 0.0
    %5446 = vmatprep.subr.mxu0 0.0
    %5447 = vmatpush1.msra.mxu0 0.0
    %5448 = vmatprep.subr.mxu0 0.0
    %5449 = vmatpush1.msra.mxu0 0.0
    %5450 = vmatprep.subr.mxu0 0.0
    %5451 = vmatpush1.msra.mxu0 0.0
    %5452 = vmatprep.subr.mxu0 0.0
    %5453 = vmatpush1.msra.mxu0 0.0
    %5454 = vmatprep.subr.mxu0 0.0
    %5455 = vmatpush1.msra.mxu0 0.0
    %5456 = vmatprep.subr.mxu0 0.0
    %5457 = vmatpush1.msra.mxu0 0.0
    %5458 = vmatprep.subr.mxu0 0.0
    %5459 = vmatpush1.msra.mxu0 0.0
    %5460 = vmatprep.mubr.f32.mxu0 0.0
    %5461 = vmatmul.mubr.f32.gmra.mrb[0].mxu0 %v5314
    %v5462 = vpop.f32.mrb[0].mxu0
    %v5463 = vadd.f32 %v5308, %v5462
    %v5464 = vpop.f32.mrb[0].mxu0
    %5465 = vmatprep.mubr.f32.mxu0 0.0
    %5466 = vmatmul.mubr.f32.gmra.mrb[0].mxu0 %v5317
    %v5467 = vpop.f32.mrb[0].mxu0
    %v5468 = vadd.f32 %v5308, %v5467
    %v5469 = vpop.f32.mrb[0].mxu0
    %5470 = vdwg.mxu0
    %v5471 = vld [vmem:[%s12] sm:$0x7]
    %v5475 = vrot.slane %v5392, 7
    %v5476 = vrot.slane %v5394, 7
    %v5477 = vrot.slane %v5468, 7
    %vm5481 = vcmask 1040384
    %v5482 = vsel %vm5481, %v5386, %v5475
    %v5483 = vsel %vm5481, %v5388, %v5476
    %v5484 = vsel %vm5481, %v5463, %v5477
    %v5485 = vld [vmem:[#allocation14] sm:$0xff]
    %v5486 = vld [vmem:[#allocation14 + $0x8] sm:$0xff]
    %v5487 = vld [vmem:[#allocation14 + $0x10] sm:$0xff]
    %v5488 = vld [vmem:[#allocation14 + $0x18] sm:$0xff]
    %v5489 = vld [vmem:[#allocation14 + $0x20] sm:$0xff]
    %v5490 = vld [vmem:[#allocation14 + $0x28] sm:$0xff]
    %v5491 = vld [vmem:[#allocation14 + $0x30] sm:$0xff]
    %v5492 = vld [vmem:[#allocation14 + $0x38] sm:$0xff]
    %v5493 = vld [vmem:[#allocation14 + $0x40] sm:$0xff]
    %v5494 = vld [vmem:[#allocation14 + $0x48] sm:$0xff]
    %v5495 = vld [vmem:[#allocation14 + $0x50] sm:$0xff]
    %v5496 = vld [vmem:[#allocation14 + $0x58] sm:$0xff]
    %v5497 = vld [vmem:[#allocation14 + $0x60] sm:$0xff]
    %v5498 = vld [vmem:[#allocation14 + $0x68] sm:$0xff]
    %v5499 = vld [vmem:[#allocation14 + $0x70] sm:$0xff]
    %v5500 = vld [vmem:[#allocation14 + $0x78] sm:$0xff]
    %v5501 = vld [vmem:[#allocation14 + $0x80] sm:$0xff]
    %v5502 = vld [vmem:[#allocation14 + $0x88] sm:$0xff]
    %v5503 = vld [vmem:[#allocation14 + $0x90] sm:$0xff]
    %v5504 = vld [vmem:[#allocation14 + $0x98] sm:$0xff]
    %v5505 = vld [vmem:[#allocation14 + $0xa0] sm:$0xff]
    %v5506 = vld [vmem:[#allocation14 + $0xa8] sm:$0xff]
    %v5507 = vld [vmem:[#allocation14 + $0xb0] sm:$0xff]
    %v5508 = vld [vmem:[#allocation14 + $0xb8] sm:$0xff]
    %v5509 = vld [vmem:[#allocation14 + $0xc0] sm:$0xff]
    %v5510 = vld [vmem:[#allocation14 + $0xc8] sm:$0xff]
    %v5511 = vld [vmem:[#allocation14 + $0xd0] sm:$0xff]
    %v5512 = vld [vmem:[#allocation14 + $0xd8] sm:$0xff]
    %v5513 = vld [vmem:[#allocation14 + $0xe0] sm:$0xff]
    %v5514 = vld [vmem:[#allocation14 + $0xe8] sm:$0xff]
    %v5515 = vld [vmem:[#allocation14 + $0xf0] sm:$0xff]
    %v5516 = vld [vmem:[#allocation14 + $0xf8] sm:$0xff]
    %v5517 = vld [vmem:[#allocation14 + $0x100] sm:$0xff]
    %v5518 = vld [vmem:[#allocation14 + $0x108] sm:$0xff]
    %v5519 = vld [vmem:[#allocation14 + $0x110] sm:$0xff]
    %v5520 = vld [vmem:[#allocation14 + $0x118] sm:$0xff]
    %v5522 = vsel %vm5312, 0.0, 0
    %5524 = vmatprep.subr.mxu0 %v5486
    %5525 = vmatpush1.msra.mxu0 %v5485
    %5526 = vmatprep.subr.mxu0 %v5489
    %5527 = vmatpush1.msra.mxu0 %v5488
    %5528 = vmatprep.subr.mxu0 %v5492
    %5529 = vmatpush1.msra.mxu0 %v5491
    %5530 = vmatprep.subr.mxu0 %v5495
    %5531 = vmatpush1.msra.mxu0 %v5494
    %5532 = vmatprep.subr.mxu0 %v5498
    %5533 = vmatpush1.msra.mxu0 %v5497
    %5534 = vmatprep.subr.mxu0 %v5501
    %5535 = vmatpush1.msra.mxu0 %v5500
    %5536 = vmatprep.subr.mxu0 %v5504
    %5537 = vmatpush1.msra.mxu0 %v5503
    %5538 = vmatprep.subr.mxu0 %v5507
    %5539 = vmatpush1.msra.mxu0 %v5506
    %5540 = vmatprep.subr.mxu0 %v5510
    %5541 = vmatpush1.msra.mxu0 %v5509
    %5542 = vmatprep.subr.mxu0 %v5513
    %5543 = vmatpush1.msra.mxu0 %v5512
    %5544 = vmatprep.subr.mxu0 %v5516
    %5545 = vmatpush1.msra.mxu0 %v5515
    %5546 = vmatprep.subr.mxu0 %v5519
    %5547 = vmatpush1.msra.mxu0 %v5518
    %5548 = vmatprep.subr.mxu0 0.0
    %5549 = vmatpush1.msra.mxu0 0.0
    %5550 = vmatprep.subr.mxu0 0.0
    %5551 = vmatpush1.msra.mxu0 0.0
    %5552 = vmatprep.subr.mxu0 0.0
    %5553 = vmatpush1.msra.mxu0 0.0
    %5554 = vmatprep.subr.mxu0 0.0
    %5555 = vmatpush1.msra.mxu0 0.0
    %5556 = vmatprep.subr.mxu0 0.0
    %5557 = vmatpush1.msra.mxu0 0.0
    %5558 = vmatprep.subr.mxu0 0.0
    %5559 = vmatpush1.msra.mxu0 0.0
    %5560 = vmatprep.subr.mxu0 0.0
    %5561 = vmatpush1.msra.mxu0 0.0
    %5562 = vmatprep.subr.mxu0 0.0
    %5563 = vmatpush1.msra.mxu0 0.0
    %5564 = vmatprep.subr.mxu0 0.0
    %5565 = vmatpush1.msra.mxu0 0.0
    %5566 = vmatprep.subr.mxu0 0.0
    %5567 = vmatpush1.msra.mxu0 0.0
    %5568 = vmatprep.subr.mxu0 0.0
    %5569 = vmatpush1.msra.mxu0 0.0
    %5570 = vmatprep.subr.mxu0 0.0
    %5571 = vmatpush1.msra.mxu0 0.0
    %5572 = vmatprep.subr.mxu0 0.0
    %5573 = vmatpush1.msra.mxu0 0.0
    %5574 = vmatprep.subr.mxu0 0.0
    %5575 = vmatpush1.msra.mxu0 0.0
    %5576 = vmatprep.subr.mxu0 0.0
    %5577 = vmatpush1.msra.mxu0 0.0
    %5578 = vmatprep.subr.mxu0 0.0
    %5579 = vmatpush1.msra.mxu0 0.0
    %5580 = vmatprep.subr.mxu0 0.0
    %5581 = vmatpush1.msra.mxu0 0.0
    %5582 = vmatprep.subr.mxu0 0.0
    %5583 = vmatpush1.msra.mxu0 0.0
    %5584 = vmatprep.subr.mxu0 0.0
    %5585 = vmatpush1.msra.mxu0 0.0
    %5586 = vmatprep.subr.mxu0 0.0
    %5587 = vmatpush1.msra.mxu0 0.0
    %5588 = vmatprep.mubr.f32.mxu0 0.0
    %5589 = vmatmul.mubr.f32.gmra.mrb[0].mxu0 %v5522
    %v5590 = vpop.f32.mrb[0].mxu0
    %v5591 = vadd.f32 0.0, %v5590
    %v5592 = vpop.f32.mrb[0].mxu0
    %v5593 = vadd.f32 0.0, %v5592
    %5594 = vdwg.mxu0
    %5595 = vmatprep.subr.mxu0 0.0
    %5596 = vmatpush1.msra.mxu0 %v5487
    %5597 = vmatprep.subr.mxu0 0.0
    %5598 = vmatpush1.msra.mxu0 %v5490
    %5599 = vmatprep.subr.mxu0 0.0
    %5600 = vmatpush1.msra.mxu0 %v5493
    %5601 = vmatprep.subr.mxu0 0.0
    %5602 = vmatpush1.msra.mxu0 %v5496
    %5603 = vmatprep.subr.mxu0 0.0
    %5604 = vmatpush1.msra.mxu0 %v5499
    %5605 = vmatprep.subr.mxu0 0.0
    %5606 = vmatpush1.msra.mxu0 %v5502
    %5607 = vmatprep.subr.mxu0 0.0
    %5608 = vmatpush1.msra.mxu0 %v5505
    %5609 = vmatprep.subr.mxu0 0.0
    %5610 = vmatpush1.msra.mxu0 %v5508
    %5611 = vmatprep.subr.mxu0 0.0
    %5612 = vmatpush1.msra.mxu0 %v5511
    %5613 = vmatprep.subr.mxu0 0.0
    %5614 = vmatpush1.msra.mxu0 %v5514
    %5615 = vmatprep.subr.mxu0 0.0
    %5616 = vmatpush1.msra.mxu0 %v5517
    %5617 = vmatprep.subr.mxu0 0.0
    %5618 = vmatpush1.msra.mxu0 %v5520
    %5619 = vmatprep.subr.mxu0 0.0
    %5620 = vmatpush1.msra.mxu0 0.0
    %5621 = vmatprep.subr.mxu0 0.0
    %5622 = vmatpush1.msra.mxu0 0.0
    %5623 = vmatprep.subr.mxu0 0.0
    %5624 = vmatpush1.msra.mxu0 0.0
    %5625 = vmatprep.subr.mxu0 0.0
    %5626 = vmatpush1.msra.mxu0 0.0
    %5627 = vmatprep.subr.mxu0 0.0
    %5628 = vmatpush1.msra.mxu0 0.0
    %5629 = vmatprep.subr.mxu0 0.0
    %5630 = vmatpush1.msra.mxu0 0.0
    %5631 = vmatprep.subr.mxu0 0.0
    %5632 = vmatpush1.msra.mxu0 0.0
    %5633 = vmatprep.subr.mxu0 0.0
    %5634 = vmatpush1.msra.mxu0 0.0
    %5635 = vmatprep.subr.mxu0 0.0
    %5636 = vmatpush1.msra.mxu0 0.0
    %5637 = vmatprep.subr.mxu0 0.0
    %5638 = vmatpush1.msra.mxu0 0.0
    %5639 = vmatprep.subr.mxu0 0.0
    %5640 = vmatpush1.msra.mxu0 0.0
    %5641 = vmatprep.subr.mxu0 0.0
    %5642 = vmatpush1.msra.mxu0 0.0
    %5643 = vmatprep.subr.mxu0 0.0
    %5644 = vmatpush1.msra.mxu0 0.0
    %5645 = vmatprep.subr.mxu0 0.0
    %5646 = vmatpush1.msra.mxu0 0.0
    %5647 = vmatprep.subr.mxu0 0.0
    %5648 = vmatpush1.msra.mxu0 0.0
    %5649 = vmatprep.subr.mxu0 0.0
    %5650 = vmatpush1.msra.mxu0 0.0
    %5651 = vmatprep.subr.mxu0 0.0
    %5652 = vmatpush1.msra.mxu0 0.0
    %5653 = vmatprep.subr.mxu0 0.0
    %5654 = vmatpush1.msra.mxu0 0.0
    %5655 = vmatprep.subr.mxu0 0.0
    %5656 = vmatpush1.msra.mxu0 0.0
    %5657 = vmatprep.subr.mxu0 0.0
    %5658 = vmatpush1.msra.mxu0 0.0
    %5659 = vmatprep.mubr.f32.mxu0 0.0
    %5660 = vmatmul.mubr.f32.gmra.mrb[0].mxu0 %v5522
    %v5661 = vpop.f32.mrb[0].mxu0
    %v5662 = vadd.f32 0.0, %v5661
    %v5663 = vpop.f32.mrb[0].mxu0
    %5664 = vdwg.mxu0
    %v5665 = vadd.f32 %v5482, %v5591
    %v5666 = vadd.f32 %v5483, %v5593
    %v5667 = vadd.f32 %v5484, %v5662
    %v5668 = vxor.u32 %v5665, 2147483648
    %v5669 = vxor.u32 %v5666, 2147483648
    %v5670 = vxor.u32 %v5667, 2147483648
    %v5671 = vmul.f32 %v5668, 1.442695
    %v5672 = vpow.pop %v5671
    %v5673 = vmul.f32 %v5669, 1.442695
    %v5674 = vpow.pop %v5673
    %v5675 = vmul.f32 %v5670, 1.442695
    %v5676 = vpow.pop %v5675
    %v5677 = vadd.f32 %v5672, 1.0
    %v5678 = vadd.f32 %v5674, 1.0
    %v5679 = vadd.f32 %v5676, 1.0
    %v5680 = vrcp.pop %v5677
    %v5681 = vmul.f32 1.0, %v5680
    %v5682 = vrcp.pop %v5678
    %v5683 = vmul.f32 1.0, %v5682
    %v5684 = vrcp.pop %v5679
    %v5685 = vmul.f32 1.0, %v5684
    %v5686 = vtanh.pop %v5667
    %v5687 = vmul.f32 %v5681, 0.0
    %v5688 = vmul.f32 %v5683, 0.0
    %5690 = vrot.lane.b32.xlu0 %v5686, 96
    %v5691 = vpop.permute.xlu0 %5690
    %v5693 = vmul.f32 %v5681, %v5691
    %5695 = vrot.lane.b32.xlu0 %v5693, 96
    %v5696 = vpop.permute.xlu0 %5695
    %v5698 = vadd.f32 %v5687, %v5696
    %v5699 = vadd.f32 %v5688, %v5696
    %v5700 = vtanh.pop %v5698
    %v5701 = vtanh.pop %v5699
    %5704 = vrot.lane.b32.xlu0 %v5700, 96
    %v5705 = vpop.permute.xlu0 %5704
    %5706 = vrot.lane.b32.xlu0 %v5701, 96
    %v5707 = vpop.permute.xlu0 %5706
    %v5708 = vsel %vm5312, %v5705, %v5707
    %v5711 = vmul.f32 %v5683, %v5708
    %v5712 = vmul.f32 %v5685, %v5707
    %5715 = vrot.lane.b32.xlu0 %v5711, 64
    %v5716 = vpop.permute.xlu0 %5715
    %5717 = vrot.lane.b32.xlu0 %v5712, 64
    %v5718 = vpop.permute.xlu0 %5717
    %v5719 = vsel %vm5253, %v5716, %v5718
    %v5721 = vsel %vm5312, %v5719, 0.0
    %v5722 = vld [vmem:[%s11] sm:$0xff]
    %v5723 = vld [vmem:[%s11 + $0x8] sm:$0xff]
    %v5724 = vld [vmem:[%s11 + $0x10] sm:$0xff]
    %v5725 = vld [vmem:[%s11 + $0x18] sm:$0xff]
    %v5726 = vld [vmem:[%s11 + $0x20] sm:$0xff]
    %v5727 = vld [vmem:[%s11 + $0x28] sm:$0xff]
    %v5728 = vld [vmem:[%s11 + $0x30] sm:$0xff]
    %v5729 = vld [vmem:[%s11 + $0x38] sm:$0xff]
    %v5730 = vld [vmem:[%s11 + $0x40] sm:$0xff]
    %v5731 = vld [vmem:[%s11 + $0x48] sm:$0xff]
    %v5732 = vld [vmem:[%s11 + $0x50] sm:$0xff]
    %v5733 = vld [vmem:[%s11 + $0x58] sm:$0xff]
    %v5734 = vld [vmem:[%s11 + $0x60] sm:$0xff]
    %v5735 = vld [vmem:[%s11 + $0x68] sm:$0xff]
    %v5736 = vld [vmem:[%s11 + $0x70] sm:$0xff]
    %v5737 = vld [vmem:[%s11 + $0x78] sm:$0xff]
    %v5738 = vld [vmem:[%s11 + $0x80] sm:$0xff]
    %v5739 = vld [vmem:[%s11 + $0x88] sm:$0xff]
    %v5740 = vld [vmem:[%s11 + $0x90] sm:$0xff]
    %v5741 = vld [vmem:[%s11 + $0x98] sm:$0xff]
    %v5742 = vld [vmem:[%s11 + $0xa0] sm:$0xff]
    %v5743 = vld [vmem:[%s11 + $0xa8] sm:$0xff]
    %v5744 = vld [vmem:[%s11 + $0xb0] sm:$0xff]
    %v5745 = vld [vmem:[%s11 + $0xb8] sm:$0xff]
    %v5746 = vld [vmem:[%s11 + $0xc0] sm:$0xff]
    %v5747 = vld [vmem:[%s11 + $0xc8] sm:$0xff]
    %v5748 = vld [vmem:[%s11 + $0xd0] sm:$0xff]
    %v5749 = vld [vmem:[%s11 + $0xd8] sm:$0xff]
    %v5750 = vld [vmem:[%s11 + $0xe0] sm:$0xff]
    %v5751 = vld [vmem:[%s11 + $0xe8] sm:$0xff]
    %v5752 = vld [vmem:[%s11 + $0xf0] sm:$0xff]
    %v5753 = vld [vmem:[%s11 + $0xf8] sm:$0xff]
    %v5754 = vld [vmem:[%s11 + $0x100] sm:$0xff]
    %v5755 = vld [vmem:[%s11 + $0x108] sm:$0xff]
    %v5756 = vld [vmem:[%s11 + $0x110] sm:$0xff]
    %v5757 = vld [vmem:[%s11 + $0x118] sm:$0xff]
    %v5758 = vld [vmem:[%s11 + $0x120] sm:$0xff]
    %v5759 = vld [vmem:[%s11 + $0x128] sm:$0xff]
    %v5760 = vld [vmem:[%s11 + $0x130] sm:$0xff]
    %v5761 = vld [vmem:[%s11 + $0x138] sm:$0xff]
    %v5762 = vld [vmem:[%s11 + $0x140] sm:$0xff]
    %v5763 = vld [vmem:[%s11 + $0x148] sm:$0xff]
    %v5764 = vld [vmem:[%s11 + $0x150] sm:$0xff]
    %v5765 = vld [vmem:[%s11 + $0x158] sm:$0xff]
    %v5766 = vld [vmem:[%s11 + $0x160] sm:$0xff]
    %v5767 = vld [vmem:[%s11 + $0x168] sm:$0xff]
    %v5768 = vld [vmem:[%s11 + $0x170] sm:$0xff]
    %v5769 = vld [vmem:[%s11 + $0x178] sm:$0xff]
    %v5770 = vld [vmem:[%s11 + $0x180] sm:$0xff]
    %v5771 = vld [vmem:[%s11 + $0x188] sm:$0xff]
    %v5772 = vld [vmem:[%s11 + $0x190] sm:$0xff]
    %v5773 = vld [vmem:[%s11 + $0x198] sm:$0xff]
    %v5774 = vld [vmem:[%s11 + $0x1a0] sm:$0xff]
    %v5775 = vld [vmem:[%s11 + $0x1a8] sm:$0xff]
    %v5776 = vld [vmem:[%s11 + $0x1b0] sm:$0xff]
    %v5777 = vld [vmem:[%s11 + $0x1b8] sm:$0xff]
    %v5778 = vld [vmem:[%s11 + $0x1c0] sm:$0xff]
    %v5779 = vld [vmem:[%s11 + $0x1c8] sm:$0xff]
    %v5780 = vld [vmem:[%s11 + $0x1d0] sm:$0xff]
    %v5781 = vld [vmem:[%s11 + $0x1d8] sm:$0xff]
    %v5782 = vld [vmem:[%s11 + $0x1e0] sm:$0xff]
    %v5783 = vld [vmem:[%s11 + $0x1e8] sm:$0xff]
    %v5784 = vld [vmem:[%s11 + $0x1f0] sm:$0xff]
    %v5785 = vld [vmem:[%s11 + $0x1f8] sm:$0xff]
    %v5786 = vld [vmem:[%s11 + $0x200] sm:$0xff]
    %v5787 = vld [vmem:[%s11 + $0x208] sm:$0xff]
    %v5788 = vld [vmem:[%s11 + $0x210] sm:$0xff]
    %v5789 = vld [vmem:[%s11 + $0x218] sm:$0xff]
    %v5790 = vld [vmem:[%s11 + $0x220] sm:$0xff]
    %v5791 = vld [vmem:[%s11 + $0x228] sm:$0xff]
    %v5792 = vld [vmem:[%s11 + $0x230] sm:$0xff]
    %v5793 = vld [vmem:[%s11 + $0x238] sm:$0xff]
    %v5795 = vlaneseq
    %v5796 = vshrl.u32 %v5795, 7
    %v5797 = vsub.s32 0, %v5796
    %v5798 = vrot.slane %v5471, %v5797
    %v5799 = vlaneseq
    %v5800 = vshrl.u32 %v5799, 7
    %v5801 = vsub.s32 1, %v5800
    %v5802 = vrot.slane %v5471, %v5801
    %v5803 = vlaneseq
    %v5804 = vshrl.u32 %v5803, 7
    %v5805 = vsub.s32 2, %v5804
    %v5806 = vrot.slane %v5471, %v5805
    %v5810 = vsel %vm5253, 0.0, 0
    %5812 = vmatprep.subr.mxu0 %v5723
    %5813 = vmatpush1.msra.mxu0 %v5722
    %5814 = vmatprep.subr.mxu0 %v5726
    %5815 = vmatpush1.msra.mxu0 %v5725
    %5816 = vmatprep.subr.mxu0 %v5729
    %5817 = vmatpush1.msra.mxu0 %v5728
    %5818 = vmatprep.subr.mxu0 %v5732
    %5819 = vmatpush1.msra.mxu0 %v5731
    %5820 = vmatprep.subr.mxu0 %v5735
    %5821 = vmatpush1.msra.mxu0 %v5734
    %5822 = vmatprep.subr.mxu0 %v5738
    %5823 = vmatpush1.msra.mxu0 %v5737
    %5824 = vmatprep.subr.mxu0 %v5741
    %5825 = vmatpush1.msra.mxu0 %v5740
    %5826 = vmatprep.subr.mxu0 %v5744
    %5827 = vmatpush1.msra.mxu0 %v5743
    %5828 = vmatprep.subr.mxu0 %v5747
    %5829 = vmatpush1.msra.mxu0 %v5746
    %5830 = vmatprep.subr.mxu0 %v5750
    %5831 = vmatpush1.msra.mxu0 %v5749
    %5832 = vmatprep.subr.mxu0 %v5753
    %5833 = vmatpush1.msra.mxu0 %v5752
    %5834 = vmatprep.subr.mxu0 %v5756
    %5835 = vmatpush1.msra.mxu0 %v5755
    %5836 = vmatprep.subr.mxu0 %v5759
    %5837 = vmatpush1.msra.mxu0 %v5758
    %5838 = vmatprep.subr.mxu0 %v5762
    %5839 = vmatpush1.msra.mxu0 %v5761
    %5840 = vmatprep.subr.mxu0 %v5765
    %5841 = vmatpush1.msra.mxu0 %v5764
    %5842 = vmatprep.subr.mxu0 %v5768
    %5843 = vmatpush1.msra.mxu0 %v5767
    %5844 = vmatprep.subr.mxu0 %v5771
    %5845 = vmatpush1.msra.mxu0 %v5770
    %5846 = vmatprep.subr.mxu0 %v5774
    %5847 = vmatpush1.msra.mxu0 %v5773
    %5848 = vmatprep.subr.mxu0 %v5777
    %5849 = vmatpush1.msra.mxu0 %v5776
    %5850 = vmatprep.subr.mxu0 %v5780
    %5851 = vmatpush1.msra.mxu0 %v5779
    %5852 = vmatprep.subr.mxu0 %v5783
    %5853 = vmatpush1.msra.mxu0 %v5782
    %5854 = vmatprep.subr.mxu0 %v5786
    %5855 = vmatpush1.msra.mxu0 %v5785
    %5856 = vmatprep.subr.mxu0 %v5789
    %5857 = vmatpush1.msra.mxu0 %v5788
    %5858 = vmatprep.subr.mxu0 %v5792
    %5859 = vmatpush1.msra.mxu0 %v5791
    %5860 = vmatprep.subr.mxu0 0.0
    %5861 = vmatpush1.msra.mxu0 0.0
    %5862 = vmatprep.subr.mxu0 0.0
    %5863 = vmatpush1.msra.mxu0 0.0
    %5864 = vmatprep.subr.mxu0 0.0
    %5865 = vmatpush1.msra.mxu0 0.0
    %5866 = vmatprep.subr.mxu0 0.0
    %5867 = vmatpush1.msra.mxu0 0.0
    %5868 = vmatprep.subr.mxu0 0.0
    %5869 = vmatpush1.msra.mxu0 0.0
    %5870 = vmatprep.subr.mxu0 0.0
    %5871 = vmatpush1.msra.mxu0 0.0
    %5872 = vmatprep.subr.mxu0 0.0
    %5873 = vmatpush1.msra.mxu0 0.0
    %5874 = vmatprep.subr.mxu0 0.0
    %5875 = vmatpush1.msra.mxu0 0.0
    %5876 = vmatprep.mubr.f32.mxu0 %v5810
    %5877 = vmatmul.mubr.f32.gmra.mrb[0].mxu0 %v5721
    %v5878 = vpop.f32.mrb[0].mxu0
    %v5879 = vadd.f32 %v5798, %v5878
    %v5880 = vpop.f32.mrb[0].mxu0
    %v5881 = vadd.f32 %v5802, %v5880
    %5882 = vdwg.mxu0
    %5883 = vmatprep.subr.mxu0 0.0
    %5884 = vmatpush1.msra.mxu0 %v5724
    %5885 = vmatprep.subr.mxu0 0.0
    %5886 = vmatpush1.msra.mxu0 %v5727
    %5887 = vmatprep.subr.mxu0 0.0
    %5888 = vmatpush1.msra.mxu0 %v5730
    %5889 = vmatprep.subr.mxu0 0.0
    %5890 = vmatpush1.msra.mxu0 %v5733
    %5891 = vmatprep.subr.mxu0 0.0
    %5892 = vmatpush1.msra.mxu0 %v5736
    %5893 = vmatprep.subr.mxu0 0.0
    %5894 = vmatpush1.msra.mxu0 %v5739
    %5895 = vmatprep.subr.mxu0 0.0
    %5896 = vmatpush1.msra.mxu0 %v5742
    %5897 = vmatprep.subr.mxu0 0.0
    %5898 = vmatpush1.msra.mxu0 %v5745
    %5899 = vmatprep.subr.mxu0 0.0
    %5900 = vmatpush1.msra.mxu0 %v5748
    %5901 = vmatprep.subr.mxu0 0.0
    %5902 = vmatpush1.msra.mxu0 %v5751
    %5903 = vmatprep.subr.mxu0 0.0
    %5904 = vmatpush1.msra.mxu0 %v5754
    %5905 = vmatprep.subr.mxu0 0.0
    %5906 = vmatpush1.msra.mxu0 %v5757
    %5907 = vmatprep.subr.mxu0 0.0
    %5908 = vmatpush1.msra.mxu0 %v5760
    %5909 = vmatprep.subr.mxu0 0.0
    %5910 = vmatpush1.msra.mxu0 %v5763
    %5911 = vmatprep.subr.mxu0 0.0
    %5912 = vmatpush1.msra.mxu0 %v5766
    %5913 = vmatprep.subr.mxu0 0.0
    %5914 = vmatpush1.msra.mxu0 %v5769
    %5915 = vmatprep.subr.mxu0 0.0
    %5916 = vmatpush1.msra.mxu0 %v5772
    %5917 = vmatprep.subr.mxu0 0.0
    %5918 = vmatpush1.msra.mxu0 %v5775
    %5919 = vmatprep.subr.mxu0 0.0
    %5920 = vmatpush1.msra.mxu0 %v5778
    %5921 = vmatprep.subr.mxu0 0.0
    %5922 = vmatpush1.msra.mxu0 %v5781
    %5923 = vmatprep.subr.mxu0 0.0
    %5924 = vmatpush1.msra.mxu0 %v5784
    %5925 = vmatprep.subr.mxu0 0.0
    %5926 = vmatpush1.msra.mxu0 %v5787
    %5927 = vmatprep.subr.mxu0 0.0
    %5928 = vmatpush1.msra.mxu0 %v5790
    %5929 = vmatprep.subr.mxu0 0.0
    %5930 = vmatpush1.msra.mxu0 %v5793
    %5931 = vmatprep.subr.mxu0 0.0
    %5932 = vmatpush1.msra.mxu0 0.0
    %5933 = vmatprep.subr.mxu0 0.0
    %5934 = vmatpush1.msra.mxu0 0.0
    %5935 = vmatprep.subr.mxu0 0.0
    %5936 = vmatpush1.msra.mxu0 0.0
    %5937 = vmatprep.subr.mxu0 0.0
    %5938 = vmatpush1.msra.mxu0 0.0
    %5939 = vmatprep.subr.mxu0 0.0
    %5940 = vmatpush1.msra.mxu0 0.0
    %5941 = vmatprep.subr.mxu0 0.0
    %5942 = vmatpush1.msra.mxu0 0.0
    %5943 = vmatprep.subr.mxu0 0.0
    %5944 = vmatpush1.msra.mxu0 0.0
    %5945 = vmatprep.subr.mxu0 0.0
    %5946 = vmatpush1.msra.mxu0 0.0
    %5947 = vmatprep.mubr.f32.mxu0 %v5810
    %5948 = vmatmul.mubr.f32.gmra.mrb[0].mxu0 %v5721
    %v5949 = vpop.f32.mrb[0].mxu0
    %v5950 = vadd.f32 %v5806, %v5949
    %v5951 = vpop.f32.mrb[0].mxu0
    %5952 = vdwg.mxu0
    %v5953 = vxor.u32 %v5879, 2147483648
    %v5954 = vxor.u32 %v5881, 2147483648
    %v5955 = vxor.u32 %v5950, 2147483648
    %v5956 = vmul.f32 %v5953, 1.442695
    %v5957 = vpow.pop %v5956
    %v5958 = vmul.f32 %v5954, 1.442695
    %v5959 = vpow.pop %v5958
    %v5960 = vmul.f32 %v5955, 1.442695
    %v5961 = vpow.pop %v5960
    %v5962 = vadd.f32 %v5957, 1.0
    %v5963 = vadd.f32 %v5959, 1.0
    %v5964 = vadd.f32 %v5961, 1.0
    %v5965 = vrcp.pop %v5962
    %v5966 = vmul.f32 1.0, %v5965
    %v5967 = vrcp.pop %v5963
    %v5968 = vmul.f32 1.0, %v5967
    %v5969 = vrcp.pop %v5964
    %v5970 = vmul.f32 1.0, %v5969
    %v5971 = vtanh.pop %v5950
    %v5972 = vmul.f32 %v5966, 0.0
    %v5973 = vmul.f32 %v5968, 0.0
    %5975 = vrot.lane.b32.xlu0 %v5971, 96
    %v5976 = vpop.permute.xlu0 %5975
    %v5978 = vmul.f32 %v5966, %v5976
    %5980 = vrot.lane.b32.xlu0 %v5978, 96
    %v5981 = vpop.permute.xlu0 %5980
    %v5983 = vadd.f32 %v5972, %v5981
    %v5984 = vadd.f32 %v5973, %v5981
    %v5985 = vtanh.pop %v5983
    %v5986 = vtanh.pop %v5984
    %5989 = vrot.lane.b32.xlu0 %v5985, 96
    %v5990 = vpop.permute.xlu0 %5989
    %5991 = vrot.lane.b32.xlu0 %v5986, 96
    %v5992 = vpop.permute.xlu0 %5991
    %v5993 = vsel %vm5312, %v5990, %v5992
    %v5996 = vmul.f32 %v5968, %v5993
    %v5997 = vmul.f32 %v5970, %v5992
    %v6001 = vrot.slane %v5386, 1
    %v6002 = vrot.slane %v5388, 1
    %v6003 = vrot.slane %v5463, 1
    %v6007 = vsel %vm5481, %v6001, %v5392
    %v6008 = vsel %vm5481, %v6002, %v5394
    %v6009 = vsel %vm5481, %v6003, %v5468
    %v6010 = vsel %vm5312, %v5719, 0
    %6012 = vmatprep.subr.mxu0 %v5486
    %6013 = vmatpush1.msra.mxu0 %v5485
    %6014 = vmatprep.subr.mxu0 %v5489
    %6015 = vmatpush1.msra.mxu0 %v5488
    %6016 = vmatprep.subr.mxu0 %v5492
    %6017 = vmatpush1.msra.mxu0 %v5491
    %6018 = vmatprep.subr.mxu0 %v5495
    %6019 = vmatpush1.msra.mxu0 %v5494
    %6020 = vmatprep.subr.mxu0 %v5498
    %6021 = vmatpush1.msra.mxu0 %v5497
    %6022 = vmatprep.subr.mxu0 %v5501
    %6023 = vmatpush1.msra.mxu0 %v5500
    %6024 = vmatprep.subr.mxu0 %v5504
    %6025 = vmatpush1.msra.mxu0 %v5503
    %6026 = vmatprep.subr.mxu0 %v5507
    %6027 = vmatpush1.msra.mxu0 %v5506
    %6028 = vmatprep.subr.mxu0 %v5510
    %6029 = vmatpush1.msra.mxu0 %v5509
    %6030 = vmatprep.subr.mxu0 %v5513
    %6031 = vmatpush1.msra.mxu0 %v5512
    %6032 = vmatprep.subr.mxu0 %v5516
    %6033 = vmatpush1.msra.mxu0 %v5515
    %6034 = vmatprep.subr.mxu0 %v5519
    %6035 = vmatpush1.msra.mxu0 %v5518
    %6036 = vmatprep.subr.mxu0 0.0
    %6037 = vmatpush1.msra.mxu0 0.0
    %6038 = vmatprep.subr.mxu0 0.0
    %6039 = vmatpush1.msra.mxu0 0.0
    %6040 = vmatprep.subr.mxu0 0.0
    %6041 = vmatpush1.msra.mxu0 0.0
    %6042 = vmatprep.subr.mxu0 0.0
    %6043 = vmatpush1.msra.mxu0 0.0
    %6044 = vmatprep.subr.mxu0 0.0
    %6045 = vmatpush1.msra.mxu0 0.0
    %6046 = vmatprep.subr.mxu0 0.0
    %6047 = vmatpush1.msra.mxu0 0.0
    %6048 = vmatprep.subr.mxu0 0.0
    %6049 = vmatpush1.msra.mxu0 0.0
    %6050 = vmatprep.subr.mxu0 0.0
    %6051 = vmatpush1.msra.mxu0 0.0
    %6052 = vmatprep.subr.mxu0 0.0
    %6053 = vmatpush1.msra.mxu0 0.0
    %6054 = vmatprep.subr.mxu0 0.0
    %6055 = vmatpush1.msra.mxu0 0.0
    %6056 = vmatprep.subr.mxu0 0.0
    %6057 = vmatpush1.msra.mxu0 0.0
    %6058 = vmatprep.subr.mxu0 0.0
    %6059 = vmatpush1.msra.mxu0 0.0
    %6060 = vmatprep.subr.mxu0 0.0
    %6061 = vmatpush1.msra.mxu0 0.0
    %6062 = vmatprep.subr.mxu0 0.0
    %6063 = vmatpush1.msra.mxu0 0.0
    %6064 = vmatprep.subr.mxu0 0.0
    %6065 = vmatpush1.msra.mxu0 0.0
    %6066 = vmatprep.subr.mxu0 0.0
    %6067 = vmatpush1.msra.mxu0 0.0
    %6068 = vmatprep.subr.mxu0 0.0
    %6069 = vmatpush1.msra.mxu0 0.0
    %6070 = vmatprep.subr.mxu0 0.0
    %6071 = vmatpush1.msra.mxu0 0.0
    %6072 = vmatprep.subr.mxu0 0.0
    %6073 = vmatpush1.msra.mxu0 0.0
    %6074 = vmatprep.subr.mxu0 0.0
    %6075 = vmatpush1.msra.mxu0 0.0
    %6076 = vmatprep.mubr.f32.mxu0 0.0
    %6077 = vmatmul.mubr.f32.gmra.mrb[0].mxu0 %v6010
    %v6078 = vpop.f32.mrb[0].mxu0
    %v6079 = vadd.f32 0.0, %v6078
    %v6080 = vpop.f32.mrb[0].mxu0
    %v6081 = vadd.f32 0.0, %v6080
    %6082 = vdwg.mxu0
    %6083 = vmatprep.subr.mxu0 0.0
    %6084 = vmatpush1.msra.mxu0 %v5487
    %6085 = vmatprep.subr.mxu0 0.0
    %6086 = vmatpush1.msra.mxu0 %v5490
    %6087 = vmatprep.subr.mxu0 0.0
    %6088 = vmatpush1.msra.mxu0 %v5493
    %6089 = vmatprep.subr.mxu0 0.0
    %6090 = vmatpush1.msra.mxu0 %v5496
    %6091 = vmatprep.subr.mxu0 0.0
    %6092 = vmatpush1.msra.mxu0 %v5499
    %6093 = vmatprep.subr.mxu0 0.0
    %6094 = vmatpush1.msra.mxu0 %v5502
    %6095 = vmatprep.subr.mxu0 0.0
    %6096 = vmatpush1.msra.mxu0 %v5505
    %6097 = vmatprep.subr.mxu0 0.0
    %6098 = vmatpush1.msra.mxu0 %v5508
    %6099 = vmatprep.subr.mxu0 0.0
    %6100 = vmatpush1.msra.mxu0 %v5511
    %6101 = vmatprep.subr.mxu0 0.0
    %6102 = vmatpush1.msra.mxu0 %v5514
    %6103 = vmatprep.subr.mxu0 0.0
    %6104 = vmatpush1.msra.mxu0 %v5517
    %6105 = vmatprep.subr.mxu0 0.0
    %6106 = vmatpush1.msra.mxu0 %v5520
    %6107 = vmatprep.subr.mxu0 0.0
    %6108 = vmatpush1.msra.mxu0 0.0
    %6109 = vmatprep.subr.mxu0 0.0
    %6110 = vmatpush1.msra.mxu0 0.0
    %6111 = vmatprep.subr.mxu0 0.0
    %6112 = vmatpush1.msra.mxu0 0.0
    %6113 = vmatprep.subr.mxu0 0.0
    %6114 = vmatpush1.msra.mxu0 0.0
    %6115 = vmatprep.subr.mxu0 0.0
    %6116 = vmatpush1.msra.mxu0 0.0
    %6117 = vmatprep.subr.mxu0 0.0
    %6118 = vmatpush1.msra.mxu0 0.0
    %6119 = vmatprep.subr.mxu0 0.0
    %6120 = vmatpush1.msra.mxu0 0.0
    %6121 = vmatprep.subr.mxu0 0.0
    %6122 = vmatpush1.msra.mxu0 0.0
    %6123 = vmatprep.subr.mxu0 0.0
    %6124 = vmatpush1.msra.mxu0 0.0
    %6125 = vmatprep.subr.mxu0 0.0
    %6126 = vmatpush1.msra.mxu0 0.0
    %6127 = vmatprep.subr.mxu0 0.0
    %6128 = vmatpush1.msra.mxu0 0.0
    %6129 = vmatprep.subr.mxu0 0.0
    %6130 = vmatpush1.msra.mxu0 0.0
    %6131 = vmatprep.subr.mxu0 0.0
    %6132 = vmatpush1.msra.mxu0 0.0
    %6133 = vmatprep.subr.mxu0 0.0
    %6134 = vmatpush1.msra.mxu0 0.0
    %6135 = vmatprep.subr.mxu0 0.0
    %6136 = vmatpush1.msra.mxu0 0.0
    %6137 = vmatprep.subr.mxu0 0.0
    %6138 = vmatpush1.msra.mxu0 0.0
    %6139 = vmatprep.subr.mxu0 0.0
    %6140 = vmatpush1.msra.mxu0 0.0
    %6141 = vmatprep.subr.mxu0 0.0
    %6142 = vmatpush1.msra.mxu0 0.0
    %6143 = vmatprep.subr.mxu0 0.0
    %6144 = vmatpush1.msra.mxu0 0.0
    %6145 = vmatprep.subr.mxu0 0.0
    %6146 = vmatpush1.msra.mxu0 0.0
    %6147 = vmatprep.mubr.f32.mxu0 0.0
    %6148 = vmatmul.mubr.f32.gmra.mrb[0].mxu0 %v6010
    %v6149 = vpop.f32.mrb[0].mxu0
    %v6150 = vadd.f32 0.0, %v6149
    %v6151 = vpop.f32.mrb[0].mxu0
    %6152 = vdwg.mxu0
    %v6153 = vadd.f32 %v6007, %v6079
    %v6154 = vadd.f32 %v6008, %v6081
    %v6155 = vadd.f32 %v6009, %v6150
    %v6156 = vxor.u32 %v6153, 2147483648
    %v6157 = vxor.u32 %v6154, 2147483648
    %v6158 = vxor.u32 %v6155, 2147483648
    %v6159 = vmul.f32 %v6156, 1.442695
    %v6160 = vpow.pop %v6159
    %v6161 = vmul.f32 %v6157, 1.442695
    %v6162 = vpow.pop %v6161
    %v6163 = vmul.f32 %v6158, 1.442695
    %v6164 = vpow.pop %v6163
    %v6165 = vadd.f32 %v6160, 1.0
    %v6166 = vadd.f32 %v6162, 1.0
    %v6167 = vadd.f32 %v6164, 1.0
    %v6168 = vrcp.pop %v6165
    %v6169 = vmul.f32 1.0, %v6168
    %v6170 = vrcp.pop %v6166
    %v6171 = vmul.f32 1.0, %v6170
    %v6172 = vrcp.pop %v6167
    %v6173 = vmul.f32 1.0, %v6172
    %v6174 = vtanh.pop %v6155
    %v6175 = vmul.f32 %v6169, %v5698
    %v6176 = vmul.f32 %v6171, %v5699
    %6178 = vrot.lane.b32.xlu0 %v6174, 96
    %v6179 = vpop.permute.xlu0 %6178
    %v6181 = vmul.f32 %v6169, %v6179
    %6183 = vrot.lane.b32.xlu0 %v6181, 96
    %v6184 = vpop.permute.xlu0 %6183
    %v6186 = vadd.f32 %v6175, %v6184
    %v6187 = vadd.f32 %v6176, %v6184
    %v6188 = vtanh.pop %v6186
    %v6189 = vtanh.pop %v6187
    %6192 = vrot.lane.b32.xlu0 %v6188, 96
    %v6193 = vpop.permute.xlu0 %6192
    %6194 = vrot.lane.b32.xlu0 %v6189, 96
    %v6195 = vpop.permute.xlu0 %6194
    %v6196 = vsel %vm5312, %v6193, %v6195
    %v6199 = vmul.f32 %v6171, %v6196
    %v6200 = vmul.f32 %v6173, %v6195
    %6203 = vrot.lane.b32.xlu0 %v6199, 64
    %v6204 = vpop.permute.xlu0 %6203
    %6205 = vrot.lane.b32.xlu0 %v6200, 64
    %v6206 = vpop.permute.xlu0 %6205
    %v6207 = vsel %vm5253, %v6204, %v6206
    %6211 = vrot.lane.b32.xlu0 %v5996, 32
    %v6212 = vpop.permute.xlu0 %6211
    %6213 = vrot.lane.b32.xlu0 %v5997, 32
    %v6214 = vpop.permute.xlu0 %6213
    %v6215 = vsel %vm5247, %v6212, %v6214
    %v6217 = vsel %vm5312, %v6207, %v6212
    %v6218 = vsel %vm5253, %v6215, 0
    %6220 = vmatprep.subr.mxu0 %v5723
    %6221 = vmatpush1.msra.mxu0 %v5722
    %6222 = vmatprep.subr.mxu0 %v5726
    %6223 = vmatpush1.msra.mxu0 %v5725
    %6224 = vmatprep.subr.mxu0 %v5729
    %6225 = vmatpush1.msra.mxu0 %v5728
    %6226 = vmatprep.subr.mxu0 %v5732
    %6227 = vmatpush1.msra.mxu0 %v5731
    %6228 = vmatprep.subr.mxu0 %v5735
    %6229 = vmatpush1.msra.mxu0 %v5734
    %6230 = vmatprep.subr.mxu0 %v5738
    %6231 = vmatpush1.msra.mxu0 %v5737
    %6232 = vmatprep.subr.mxu0 %v5741
    %6233 = vmatpush1.msra.mxu0 %v5740
    %6234 = vmatprep.subr.mxu0 %v5744
    %6235 = vmatpush1.msra.mxu0 %v5743
    %6236 = vmatprep.subr.mxu0 %v5747
    %6237 = vmatpush1.msra.mxu0 %v5746
    %6238 = vmatprep.subr.mxu0 %v5750
    %6239 = vmatpush1.msra.mxu0 %v5749
    %6240 = vmatprep.subr.mxu0 %v5753
    %6241 = vmatpush1.msra.mxu0 %v5752
    %6242 = vmatprep.subr.mxu0 %v5756
    %6243 = vmatpush1.msra.mxu0 %v5755
    %6244 = vmatprep.subr.mxu0 %v5759
    %6245 = vmatpush1.msra.mxu0 %v5758
    %6246 = vmatprep.subr.mxu0 %v5762
    %6247 = vmatpush1.msra.mxu0 %v5761
    %6248 = vmatprep.subr.mxu0 %v5765
    %6249 = vmatpush1.msra.mxu0 %v5764
    %6250 = vmatprep.subr.mxu0 %v5768
    %6251 = vmatpush1.msra.mxu0 %v5767
    %6252 = vmatprep.subr.mxu0 %v5771
    %6253 = vmatpush1.msra.mxu0 %v5770
    %6254 = vmatprep.subr.mxu0 %v5774
    %6255 = vmatpush1.msra.mxu0 %v5773
    %6256 = vmatprep.subr.mxu0 %v5777
    %6257 = vmatpush1.msra.mxu0 %v5776
    %6258 = vmatprep.subr.mxu0 %v5780
    %6259 = vmatpush1.msra.mxu0 %v5779
    %6260 = vmatprep.subr.mxu0 %v5783
    %6261 = vmatpush1.msra.mxu0 %v5782
    %6262 = vmatprep.subr.mxu0 %v5786
    %6263 = vmatpush1.msra.mxu0 %v5785
    %6264 = vmatprep.subr.mxu0 %v5789
    %6265 = vmatpush1.msra.mxu0 %v5788
    %6266 = vmatprep.subr.mxu0 %v5792
    %6267 = vmatpush1.msra.mxu0 %v5791
    %6268 = vmatprep.subr.mxu0 0.0
    %6269 = vmatpush1.msra.mxu0 0.0
    %6270 = vmatprep.subr.mxu0 0.0
    %6271 = vmatpush1.msra.mxu0 0.0
    %6272 = vmatprep.subr.mxu0 0.0
    %6273 = vmatpush1.msra.mxu0 0.0
    %6274 = vmatprep.subr.mxu0 0.0
    %6275 = vmatpush1.msra.mxu0 0.0
    %6276 = vmatprep.subr.mxu0 0.0
    %6277 = vmatpush1.msra.mxu0 0.0
    %6278 = vmatprep.subr.mxu0 0.0
    %6279 = vmatpush1.msra.mxu0 0.0
    %6280 = vmatprep.subr.mxu0 0.0
    %6281 = vmatpush1.msra.mxu0 0.0
    %6282 = vmatprep.subr.mxu0 0.0
    %6283 = vmatpush1.msra.mxu0 0.0
    %6284 = vmatprep.mubr.f32.mxu0 %v6218
    %6285 = vmatmul.mubr.f32.gmra.mrb[0].mxu0 %v6217
    %v6286 = vpop.f32.mrb[0].mxu0
    %v6287 = vadd.f32 %v5798, %v6286
    %v6288 = vpop.f32.mrb[0].mxu0
    %v6289 = vadd.f32 %v5802, %v6288
    %6290 = vdwg.mxu0
    %6291 = vmatprep.subr.mxu0 0.0
    %6292 = vmatpush1.msra.mxu0 %v5724
    %6293 = vmatprep.subr.mxu0 0.0
    %6294 = vmatpush1.msra.mxu0 %v5727
    %6295 = vmatprep.subr.mxu0 0.0
    %6296 = vmatpush1.msra.mxu0 %v5730
    %6297 = vmatprep.subr.mxu0 0.0
    %6298 = vmatpush1.msra.mxu0 %v5733
    %6299 = vmatprep.subr.mxu0 0.0
    %6300 = vmatpush1.msra.mxu0 %v5736
    %6301 = vmatprep.subr.mxu0 0.0
    %6302 = vmatpush1.msra.mxu0 %v5739
    %6303 = vmatprep.subr.mxu0 0.0
    %6304 = vmatpush1.msra.mxu0 %v5742
    %6305 = vmatprep.subr.mxu0 0.0
    %6306 = vmatpush1.msra.mxu0 %v5745
    %6307 = vmatprep.subr.mxu0 0.0
    %6308 = vmatpush1.msra.mxu0 %v5748
    %6309 = vmatprep.subr.mxu0 0.0
    %6310 = vmatpush1.msra.mxu0 %v5751
    %6311 = vmatprep.subr.mxu0 0.0
    %6312 = vmatpush1.msra.mxu0 %v5754
    %6313 = vmatprep.subr.mxu0 0.0
    %6314 = vmatpush1.msra.mxu0 %v5757
    %6315 = vmatprep.subr.mxu0 0.0
    %6316 = vmatpush1.msra.mxu0 %v5760
    %6317 = vmatprep.subr.mxu0 0.0
    %6318 = vmatpush1.msra.mxu0 %v5763
    %6319 = vmatprep.subr.mxu0 0.0
    %6320 = vmatpush1.msra.mxu0 %v5766
    %6321 = vmatprep.subr.mxu0 0.0
    %6322 = vmatpush1.msra.mxu0 %v5769
    %6323 = vmatprep.subr.mxu0 0.0
    %6324 = vmatpush1.msra.mxu0 %v5772
    %6325 = vmatprep.subr.mxu0 0.0
    %6326 = vmatpush1.msra.mxu0 %v5775
    %6327 = vmatprep.subr.mxu0 0.0
    %6328 = vmatpush1.msra.mxu0 %v5778
    %6329 = vmatprep.subr.mxu0 0.0
    %6330 = vmatpush1.msra.mxu0 %v5781
    %6331 = vmatprep.subr.mxu0 0.0
    %6332 = vmatpush1.msra.mxu0 %v5784
    %6333 = vmatprep.subr.mxu0 0.0
    %6334 = vmatpush1.msra.mxu0 %v5787
    %6335 = vmatprep.subr.mxu0 0.0
    %6336 = vmatpush1.msra.mxu0 %v5790
    %6337 = vmatprep.subr.mxu0 0.0
    %6338 = vmatpush1.msra.mxu0 %v5793
    %6339 = vmatprep.subr.mxu0 0.0
    %6340 = vmatpush1.msra.mxu0 0.0
    %6341 = vmatprep.subr.mxu0 0.0
    %6342 = vmatpush1.msra.mxu0 0.0
    %6343 = vmatprep.subr.mxu0 0.0
    %6344 = vmatpush1.msra.mxu0 0.0
    %6345 = vmatprep.subr.mxu0 0.0
    %6346 = vmatpush1.msra.mxu0 0.0
    %6347 = vmatprep.subr.mxu0 0.0
    %6348 = vmatpush1.msra.mxu0 0.0
    %6349 = vmatprep.subr.mxu0 0.0
    %6350 = vmatpush1.msra.mxu0 0.0
    %6351 = vmatprep.subr.mxu0 0.0
    %6352 = vmatpush1.msra.mxu0 0.0
    %6353 = vmatprep.subr.mxu0 0.0
    %6354 = vmatpush1.msra.mxu0 0.0
    %6355 = vmatprep.mubr.f32.mxu0 %v6218
    %6356 = vmatmul.mubr.f32.gmra.mrb[0].mxu0 %v6217
    %v6357 = vpop.f32.mrb[0].mxu0
    %v6358 = vadd.f32 %v5806, %v6357
    %v6359 = vpop.f32.mrb[0].mxu0
    %6360 = vdwg.mxu0
    %v6361 = vxor.u32 %v6287, 2147483648
    %v6362 = vxor.u32 %v6289, 2147483648
    %v6363 = vxor.u32 %v6358, 2147483648
    %v6364 = vmul.f32 %v6361, 1.442695
    %v6365 = vpow.pop %v6364
    %v6366 = vmul.f32 %v6362, 1.442695
    %v6367 = vpow.pop %v6366
    %v6368 = vmul.f32 %v6363, 1.442695
    %v6369 = vpow.pop %v6368
    %v6370 = vadd.f32 %v6365, 1.0
    %v6371 = vadd.f32 %v6367, 1.0
    %v6372 = vadd.f32 %v6369, 1.0
    %v6373 = vrcp.pop %v6370
    %v6374 = vmul.f32 1.0, %v6373
    %v6375 = vrcp.pop %v6371
    %v6376 = vmul.f32 1.0, %v6375
    %v6377 = vrcp.pop %v6372
    %v6378 = vmul.f32 1.0, %v6377
    %v6379 = vtanh.pop %v6358
    %v6380 = vmul.f32 %v6374, %v5983
    %v6381 = vmul.f32 %v6376, %v5984
    %6383 = vrot.lane.b32.xlu0 %v6379, 96
    %v6384 = vpop.permute.xlu0 %6383
    %v6386 = vmul.f32 %v6374, %v6384
    %6388 = vrot.lane.b32.xlu0 %v6386, 96
    %v6389 = vpop.permute.xlu0 %6388
    %v6391 = vadd.f32 %v6380, %v6389
    %v6392 = vadd.f32 %v6381, %v6389
    %v6393 = vtanh.pop %v6391
    %v6394 = vtanh.pop %v6392
    %6397 = vrot.lane.b32.xlu0 %v6393, 96
    %v6398 = vpop.permute.xlu0 %6397
    %6399 = vrot.lane.b32.xlu0 %v6394, 96
    %v6400 = vpop.permute.xlu0 %6399
    %v6401 = vsel %vm5312, %v6398, %v6400
    %v6404 = vmul.f32 %v6376, %v6401
    %v6405 = vmul.f32 %v6378, %v6400
    %v6406 = vrot.slane %v5386, 2
    %v6407 = vrot.slane %v5388, 2
    %v6408 = vrot.slane %v5463, 2
    %v6412 = vrot.slane %v5392, 1
    %v6413 = vrot.slane %v5394, 1
    %v6414 = vrot.slane %v5468, 1
    %v6418 = vsel %vm5481, %v6406, %v6412
    %v6419 = vsel %vm5481, %v6407, %v6413
    %v6420 = vsel %vm5481, %v6408, %v6414
    %v6421 = vsel %vm5312, %v6207, 0
    %6423 = vmatprep.subr.mxu0 %v5486
    %6424 = vmatpush1.msra.mxu0 %v5485
    %6425 = vmatprep.subr.mxu0 %v5489
    %6426 = vmatpush1.msra.mxu0 %v5488
    %6427 = vmatprep.subr.mxu0 %v5492
    %6428 = vmatpush1.msra.mxu0 %v5491
    %6429 = vmatprep.subr.mxu0 %v5495
    %6430 = vmatpush1.msra.mxu0 %v5494
    %6431 = vmatprep.subr.mxu0 %v5498
    %6432 = vmatpush1.msra.mxu0 %v5497
    %6433 = vmatprep.subr.mxu0 %v5501
    %6434 = vmatpush1.msra.mxu0 %v5500
    %6435 = vmatprep.subr.mxu0 %v5504
    %6436 = vmatpush1.msra.mxu0 %v5503
    %6437 = vmatprep.subr.mxu0 %v5507
    %6438 = vmatpush1.msra.mxu0 %v5506
    %6439 = vmatprep.subr.mxu0 %v5510
    %6440 = vmatpush1.msra.mxu0 %v5509
    %6441 = vmatprep.subr.mxu0 %v5513
    %6442 = vmatpush1.msra.mxu0 %v5512
    %6443 = vmatprep.subr.mxu0 %v5516
    %6444 = vmatpush1.msra.mxu0 %v5515
    %6445 = vmatprep.subr.mxu0 %v5519
    %6446 = vmatpush1.msra.mxu0 %v5518
    %6447 = vmatprep.subr.mxu0 0.0
    %6448 = vmatpush1.msra.mxu0 0.0
    %6449 = vmatprep.subr.mxu0 0.0
    %6450 = vmatpush1.msra.mxu0 0.0
    %6451 = vmatprep.subr.mxu0 0.0
    %6452 = vmatpush1.msra.mxu0 0.0
    %6453 = vmatprep.subr.mxu0 0.0
    %6454 = vmatpush1.msra.mxu0 0.0
    %6455 = vmatprep.subr.mxu0 0.0
    %6456 = vmatpush1.msra.mxu0 0.0
    %6457 = vmatprep.subr.mxu0 0.0
    %6458 = vmatpush1.msra.mxu0 0.0
    %6459 = vmatprep.subr.mxu0 0.0
    %6460 = vmatpush1.msra.mxu0 0.0
    %6461 = vmatprep.subr.mxu0 0.0
    %6462 = vmatpush1.msra.mxu0 0.0
    %6463 = vmatprep.subr.mxu0 0.0
    %6464 = vmatpush1.msra.mxu0 0.0
    %6465 = vmatprep.subr.mxu0 0.0
    %6466 = vmatpush1.msra.mxu0 0.0
    %6467 = vmatprep.subr.mxu0 0.0
    %6468 = vmatpush1.msra.mxu0 0.0
    %6469 = vmatprep.subr.mxu0 0.0
    %6470 = vmatpush1.msra.mxu0 0.0
    %6471 = vmatprep.subr.mxu0 0.0
    %6472 = vmatpush1.msra.mxu0 0.0
    %6473 = vmatprep.subr.mxu0 0.0
    %6474 = vmatpush1.msra.mxu0 0.0
    %6475 = vmatprep.subr.mxu0 0.0
    %6476 = vmatpush1.msra.mxu0 0.0
    %6477 = vmatprep.subr.mxu0 0.0
    %6478 = vmatpush1.msra.mxu0 0.0
    %6479 = vmatprep.subr.mxu0 0.0
    %6480 = vmatpush1.msra.mxu0 0.0
    %6481 = vmatprep.subr.mxu0 0.0
    %6482 = vmatpush1.msra.mxu0 0.0
    %6483 = vmatprep.subr.mxu0 0.0
    %6484 = vmatpush1.msra.mxu0 0.0
    %6485 = vmatprep.subr.mxu0 0.0
    %6486 = vmatpush1.msra.mxu0 0.0
    %6487 = vmatprep.mubr.f32.mxu0 0.0
    %6488 = vmatmul.mubr.f32.gmra.mrb[0].mxu0 %v6421
    %v6489 = vpop.f32.mrb[0].mxu0
    %v6490 = vadd.f32 0.0, %v6489
    %v6491 = vpop.f32.mrb[0].mxu0
    %v6492 = vadd.f32 0.0, %v6491
    %6493 = vdwg.mxu0
    %6494 = vmatprep.subr.mxu0 0.0
    %6495 = vmatpush1.msra.mxu0 %v5487
    %6496 = vmatprep.subr.mxu0 0.0
    %6497 = vmatpush1.msra.mxu0 %v5490
    %6498 = vmatprep.subr.mxu0 0.0
    %6499 = vmatpush1.msra.mxu0 %v5493
    %6500 = vmatprep.subr.mxu0 0.0
    %6501 = vmatpush1.msra.mxu0 %v5496
    %6502 = vmatprep.subr.mxu0 0.0
    %6503 = vmatpush1.msra.mxu0 %v5499
    %6504 = vmatprep.subr.mxu0 0.0
    %6505 = vmatpush1.msra.mxu0 %v5502
    %6506 = vmatprep.subr.mxu0 0.0
    %6507 = vmatpush1.msra.mxu0 %v5505
    %6508 = vmatprep.subr.mxu0 0.0
    %6509 = vmatpush1.msra.mxu0 %v5508
    %6510 = vmatprep.subr.mxu0 0.0
    %6511 = vmatpush1.msra.mxu0 %v5511
    %6512 = vmatprep.subr.mxu0 0.0
    %6513 = vmatpush1.msra.mxu0 %v5514
    %6514 = vmatprep.subr.mxu0 0.0
    %6515 = vmatpush1.msra.mxu0 %v5517
    %6516 = vmatprep.subr.mxu0 0.0
    %6517 = vmatpush1.msra.mxu0 %v5520
    %6518 = vmatprep.subr.mxu0 0.0
    %6519 = vmatpush1.msra.mxu0 0.0
    %6520 = vmatprep.subr.mxu0 0.0
    %6521 = vmatpush1.msra.mxu0 0.0
    %6522 = vmatprep.subr.mxu0 0.0
    %6523 = vmatpush1.msra.mxu0 0.0
    %6524 = vmatprep.subr.mxu0 0.0
    %6525 = vmatpush1.msra.mxu0 0.0
    %6526 = vmatprep.subr.mxu0 0.0
    %6527 = vmatpush1.msra.mxu0 0.0
    %6528 = vmatprep.subr.mxu0 0.0
    %6529 = vmatpush1.msra.mxu0 0.0
    %6530 = vmatprep.subr.mxu0 0.0
    %6531 = vmatpush1.msra.mxu0 0.0
    %6532 = vmatprep.subr.mxu0 0.0
    %6533 = vmatpush1.msra.mxu0 0.0
    %6534 = vmatprep.subr.mxu0 0.0
    %6535 = vmatpush1.msra.mxu0 0.0
    %6536 = vmatprep.subr.mxu0 0.0
    %6537 = vmatpush1.msra.mxu0 0.0
    %6538 = vmatprep.subr.mxu0 0.0
    %6539 = vmatpush1.msra.mxu0 0.0
    %6540 = vmatprep.subr.mxu0 0.0
    %6541 = vmatpush1.msra.mxu0 0.0
    %6542 = vmatprep.subr.mxu0 0.0
    %6543 = vmatpush1.msra.mxu0 0.0
    %6544 = vmatprep.subr.mxu0 0.0
    %6545 = vmatpush1.msra.mxu0 0.0
    %6546 = vmatprep.subr.mxu0 0.0
    %6547 = vmatpush1.msra.mxu0 0.0
    %6548 = vmatprep.subr.mxu0 0.0
    %6549 = vmatpush1.msra.mxu0 0.0
    %6550 = vmatprep.subr.mxu0 0.0
    %6551 = vmatpush1.msra.mxu0 0.0
    %6552 = vmatprep.subr.mxu0 0.0
    %6553 = vmatpush1.msra.mxu0 0.0
    %6554 = vmatprep.subr.mxu0 0.0
    %6555 = vmatpush1.msra.mxu0 0.0
    %6556 = vmatprep.subr.mxu0 0.0
    %6557 = vmatpush1.msra.mxu0 0.0
    %6558 = vmatprep.mubr.f32.mxu0 0.0
    %6559 = vmatmul.mubr.f32.gmra.mrb[0].mxu0 %v6421
    %v6560 = vpop.f32.mrb[0].mxu0
    %v6561 = vadd.f32 0.0, %v6560
    %v6562 = vpop.f32.mrb[0].mxu0
    %6563 = vdwg.mxu0
    %v6564 = vadd.f32 %v6418, %v6490
    %v6565 = vadd.f32 %v6419, %v6492
    %v6566 = vadd.f32 %v6420, %v6561
    %v6567 = vxor.u32 %v6564, 2147483648
    %v6568 = vxor.u32 %v6565, 2147483648
    %v6569 = vxor.u32 %v6566, 2147483648
    %v6570 = vmul.f32 %v6567, 1.442695
    %v6571 = vpow.pop %v6570
    %v6572 = vmul.f32 %v6568, 1.442695
    %v6573 = vpow.pop %v6572
    %v6574 = vmul.f32 %v6569, 1.442695
    %v6575 = vpow.pop %v6574
    %v6576 = vadd.f32 %v6571, 1.0
    %v6577 = vadd.f32 %v6573, 1.0
    %v6578 = vadd.f32 %v6575, 1.0
    %v6579 = vrcp.pop %v6576
    %v6580 = vmul.f32 1.0, %v6579
    %v6581 = vrcp.pop %v6577
    %v6582 = vmul.f32 1.0, %v6581
    %v6583 = vrcp.pop %v6578
    %v6584 = vmul.f32 1.0, %v6583
    %v6585 = vtanh.pop %v6566
    %v6586 = vmul.f32 %v6580, %v6186
    %v6587 = vmul.f32 %v6582, %v6187
    %6589 = vrot.lane.b32.xlu0 %v6585, 96
    %v6590 = vpop.permute.xlu0 %6589
    %v6592 = vmul.f32 %v6580, %v6590
    %6594 = vrot.lane.b32.xlu0 %v6592, 96
    %v6595 = vpop.permute.xlu0 %6594
    %v6597 = vadd.f32 %v6586, %v6595
    %v6598 = vadd.f32 %v6587, %v6595
    %v6599 = vtanh.pop %v6597
    %v6600 = vtanh.pop %v6598
    %6603 = vrot.lane.b32.xlu0 %v6599, 96
    %v6604 = vpop.permute.xlu0 %6603
    %6605 = vrot.lane.b32.xlu0 %v6600, 96
    %v6606 = vpop.permute.xlu0 %6605
    %v6607 = vsel %vm5312, %v6604, %v6606
    %v6610 = vmul.f32 %v6582, %v6607
    %v6611 = vmul.f32 %v6584, %v6606
    %6614 = vrot.lane.b32.xlu0 %v6610, 64
    %v6615 = vpop.permute.xlu0 %6614
    %6616 = vrot.lane.b32.xlu0 %v6611, 64
    %v6617 = vpop.permute.xlu0 %6616
    %v6618 = vsel %vm5253, %v6615, %v6617
    %6622 = vrot.lane.b32.xlu0 %v6404, 32
    %v6623 = vpop.permute.xlu0 %6622
    %6624 = vrot.lane.b32.xlu0 %v6405, 32
    %v6625 = vpop.permute.xlu0 %6624
    %v6626 = vsel %vm5247, %v6623, %v6625
    %v6628 = vsel %vm5312, %v6618, %v6623
    %v6629 = vsel %vm5253, %v6626, 0
    %6631 = vmatprep.subr.mxu0 %v5723
    %6632 = vmatpush1.msra.mxu0 %v5722
    %6633 = vmatprep.subr.mxu0 %v5726
    %6634 = vmatpush1.msra.mxu0 %v5725
    %6635 = vmatprep.subr.mxu0 %v5729
    %6636 = vmatpush1.msra.mxu0 %v5728
    %6637 = vmatprep.subr.mxu0 %v5732
    %6638 = vmatpush1.msra.mxu0 %v5731
    %6639 = vmatprep.subr.mxu0 %v5735
    %6640 = vmatpush1.msra.mxu0 %v5734
    %6641 = vmatprep.subr.mxu0 %v5738
    %6642 = vmatpush1.msra.mxu0 %v5737
    %6643 = vmatprep.subr.mxu0 %v5741
    %6644 = vmatpush1.msra.mxu0 %v5740
    %6645 = vmatprep.subr.mxu0 %v5744
    %6646 = vmatpush1.msra.mxu0 %v5743
    %6647 = vmatprep.subr.mxu0 %v5747
    %6648 = vmatpush1.msra.mxu0 %v5746
    %6649 = vmatprep.subr.mxu0 %v5750
    %6650 = vmatpush1.msra.mxu0 %v5749
    %6651 = vmatprep.subr.mxu0 %v5753
    %6652 = vmatpush1.msra.mxu0 %v5752
    %6653 = vmatprep.subr.mxu0 %v5756
    %6654 = vmatpush1.msra.mxu0 %v5755
    %6655 = vmatprep.subr.mxu0 %v5759
    %6656 = vmatpush1.msra.mxu0 %v5758
    %6657 = vmatprep.subr.mxu0 %v5762
    %6658 = vmatpush1.msra.mxu0 %v5761
    %6659 = vmatprep.subr.mxu0 %v5765
    %6660 = vmatpush1.msra.mxu0 %v5764
    %6661 = vmatprep.subr.mxu0 %v5768
    %6662 = vmatpush1.msra.mxu0 %v5767
    %6663 = vmatprep.subr.mxu0 %v5771
    %6664 = vmatpush1.msra.mxu0 %v5770
    %6665 = vmatprep.subr.mxu0 %v5774
    %6666 = vmatpush1.msra.mxu0 %v5773
    %6667 = vmatprep.subr.mxu0 %v5777
    %6668 = vmatpush1.msra.mxu0 %v5776
    %6669 = vmatprep.subr.mxu0 %v5780
    %6670 = vmatpush1.msra.mxu0 %v5779
    %6671 = vmatprep.subr.mxu0 %v5783
    %6672 = vmatpush1.msra.mxu0 %v5782
    %6673 = vmatprep.subr.mxu0 %v5786
    %6674 = vmatpush1.msra.mxu0 %v5785
    %6675 = vmatprep.subr.mxu0 %v5789
    %6676 = vmatpush1.msra.mxu0 %v5788
    %6677 = vmatprep.subr.mxu0 %v5792
    %6678 = vmatpush1.msra.mxu0 %v5791
    %6679 = vmatprep.subr.mxu0 0.0
    %6680 = vmatpush1.msra.mxu0 0.0
    %6681 = vmatprep.subr.mxu0 0.0
    %6682 = vmatpush1.msra.mxu0 0.0
    %6683 = vmatprep.subr.mxu0 0.0
    %6684 = vmatpush1.msra.mxu0 0.0
    %6685 = vmatprep.subr.mxu0 0.0
    %6686 = vmatpush1.msra.mxu0 0.0
    %6687 = vmatprep.subr.mxu0 0.0
    %6688 = vmatpush1.msra.mxu0 0.0
    %6689 = vmatprep.subr.mxu0 0.0
    %6690 = vmatpush1.msra.mxu0 0.0
    %6691 = vmatprep.subr.mxu0 0.0
    %6692 = vmatpush1.msra.mxu0 0.0
    %6693 = vmatprep.subr.mxu0 0.0
    %6694 = vmatpush1.msra.mxu0 0.0
    %6695 = vmatprep.mubr.f32.mxu0 %v6629
    %6696 = vmatmul.mubr.f32.gmra.mrb[0].mxu0 %v6628
    %v6697 = vpop.f32.mrb[0].mxu0
    %v6698 = vadd.f32 %v5798, %v6697
    %v6699 = vpop.f32.mrb[0].mxu0
    %v6700 = vadd.f32 %v5802, %v6699
    %6701 = vdwg.mxu0
    %6702 = vmatprep.subr.mxu0 0.0
    %6703 = vmatpush1.msra.mxu0 %v5724
    %6704 = vmatprep.subr.mxu0 0.0
    %6705 = vmatpush1.msra.mxu0 %v5727
    %6706 = vmatprep.subr.mxu0 0.0
    %6707 = vmatpush1.msra.mxu0 %v5730
    %6708 = vmatprep.subr.mxu0 0.0
    %6709 = vmatpush1.msra.mxu0 %v5733
    %6710 = vmatprep.subr.mxu0 0.0
    %6711 = vmatpush1.msra.mxu0 %v5736
    %6712 = vmatprep.subr.mxu0 0.0
    %6713 = vmatpush1.msra.mxu0 %v5739
    %6714 = vmatprep.subr.mxu0 0.0
    %6715 = vmatpush1.msra.mxu0 %v5742
    %6716 = vmatprep.subr.mxu0 0.0
    %6717 = vmatpush1.msra.mxu0 %v5745
    %6718 = vmatprep.subr.mxu0 0.0
    %6719 = vmatpush1.msra.mxu0 %v5748
    %6720 = vmatprep.subr.mxu0 0.0
    %6721 = vmatpush1.msra.mxu0 %v5751
    %6722 = vmatprep.subr.mxu0 0.0
    %6723 = vmatpush1.msra.mxu0 %v5754
    %6724 = vmatprep.subr.mxu0 0.0
    %6725 = vmatpush1.msra.mxu0 %v5757
    %6726 = vmatprep.subr.mxu0 0.0
    %6727 = vmatpush1.msra.mxu0 %v5760
    %6728 = vmatprep.subr.mxu0 0.0
    %6729 = vmatpush1.msra.mxu0 %v5763
    %6730 = vmatprep.subr.mxu0 0.0
    %6731 = vmatpush1.msra.mxu0 %v5766
    %6732 = vmatprep.subr.mxu0 0.0
    %6733 = vmatpush1.msra.mxu0 %v5769
    %6734 = vmatprep.subr.mxu0 0.0
    %6735 = vmatpush1.msra.mxu0 %v5772
    %6736 = vmatprep.subr.mxu0 0.0
    %6737 = vmatpush1.msra.mxu0 %v5775
    %6738 = vmatprep.subr.mxu0 0.0
    %6739 = vmatpush1.msra.mxu0 %v5778
    %6740 = vmatprep.subr.mxu0 0.0
    %6741 = vmatpush1.msra.mxu0 %v5781
    %6742 = vmatprep.subr.mxu0 0.0
    %6743 = vmatpush1.msra.mxu0 %v5784
    %6744 = vmatprep.subr.mxu0 0.0
    %6745 = vmatpush1.msra.mxu0 %v5787
    %6746 = vmatprep.subr.mxu0 0.0
    %6747 = vmatpush1.msra.mxu0 %v5790
    %6748 = vmatprep.subr.mxu0 0.0
    %6749 = vmatpush1.msra.mxu0 %v5793
    %6750 = vmatprep.subr.mxu0 0.0
    %6751 = vmatpush1.msra.mxu0 0.0
    %6752 = vmatprep.subr.mxu0 0.0
    %6753 = vmatpush1.msra.mxu0 0.0
    %6754 = vmatprep.subr.mxu0 0.0
    %6755 = vmatpush1.msra.mxu0 0.0
    %6756 = vmatprep.subr.mxu0 0.0
    %6757 = vmatpush1.msra.mxu0 0.0
    %6758 = vmatprep.subr.mxu0 0.0
    %6759 = vmatpush1.msra.mxu0 0.0
    %6760 = vmatprep.subr.mxu0 0.0
    %6761 = vmatpush1.msra.mxu0 0.0
    %6762 = vmatprep.subr.mxu0 0.0
    %6763 = vmatpush1.msra.mxu0 0.0
    %6764 = vmatprep.subr.mxu0 0.0
    %6765 = vmatpush1.msra.mxu0 0.0
    %6766 = vmatprep.mubr.f32.mxu0 %v6629
    %6767 = vmatmul.mubr.f32.gmra.mrb[0].mxu0 %v6628
    %v6768 = vpop.f32.mrb[0].mxu0
    %v6769 = vadd.f32 %v5806, %v6768
    %v6770 = vpop.f32.mrb[0].mxu0
    %6771 = vdwg.mxu0
    %v6772 = vxor.u32 %v6698, 2147483648
    %v6773 = vxor.u32 %v6700, 2147483648
    %v6774 = vxor.u32 %v6769, 2147483648
    %v6775 = vmul.f32 %v6772, 1.442695
    %v6776 = vpow.pop %v6775
    %v6777 = vmul.f32 %v6773, 1.442695
    %v6778 = vpow.pop %v6777
    %v6779 = vmul.f32 %v6774, 1.442695
    %v6780 = vpow.pop %v6779
    %v6781 = vadd.f32 %v6776, 1.0
    %v6782 = vadd.f32 %v6778, 1.0
    %v6783 = vadd.f32 %v6780, 1.0
    %v6784 = vrcp.pop %v6781
    %v6785 = vmul.f32 1.0, %v6784
    %v6786 = vrcp.pop %v6782
    %v6787 = vmul.f32 1.0, %v6786
    %v6788 = vrcp.pop %v6783
    %v6789 = vmul.f32 1.0, %v6788
    %v6790 = vtanh.pop %v6769
    %v6791 = vmul.f32 %v6785, %v6391
    %v6792 = vmul.f32 %v6787, %v6392
    %6794 = vrot.lane.b32.xlu0 %v6790, 96
    %v6795 = vpop.permute.xlu0 %6794
    %v6797 = vmul.f32 %v6785, %v6795
    %6799 = vrot.lane.b32.xlu0 %v6797, 96
    %v6800 = vpop.permute.xlu0 %6799
    %v6802 = vadd.f32 %v6791, %v6800
    %v6803 = vadd.f32 %v6792, %v6800
    %v6804 = vtanh.pop %v6802
    %v6805 = vtanh.pop %v6803
    %6808 = vrot.lane.b32.xlu0 %v6804, 96
    %v6809 = vpop.permute.xlu0 %6808
    %6810 = vrot.lane.b32.xlu0 %v6805, 96
    %v6811 = vpop.permute.xlu0 %6810
    %v6812 = vsel %vm5312, %v6809, %v6811
    %v6815 = vmul.f32 %v6787, %v6812
    %v6816 = vmul.f32 %v6789, %v6811
    %v6817 = vrot.slane %v5386, 3
    %v6818 = vrot.slane %v5388, 3
    %v6819 = vrot.slane %v5463, 3
    %v6823 = vrot.slane %v5392, 2
    %v6824 = vrot.slane %v5394, 2
    %v6825 = vrot.slane %v5468, 2
    %v6829 = vsel %vm5481, %v6817, %v6823
    %v6830 = vsel %vm5481, %v6818, %v6824
    %v6831 = vsel %vm5481, %v6819, %v6825
    %v6832 = vsel %vm5312, %v6618, 0
    %6834 = vmatprep.subr.mxu0 %v5486
    %6835 = vmatpush1.msra.mxu0 %v5485
    %6836 = vmatprep.subr.mxu0 %v5489
    %6837 = vmatpush1.msra.mxu0 %v5488
    %6838 = vmatprep.subr.mxu0 %v5492
    %6839 = vmatpush1.msra.mxu0 %v5491
    %6840 = vmatprep.subr.mxu0 %v5495
    %6841 = vmatpush1.msra.mxu0 %v5494
    %6842 = vmatprep.subr.mxu0 %v5498
    %6843 = vmatpush1.msra.mxu0 %v5497
    %6844 = vmatprep.subr.mxu0 %v5501
    %6845 = vmatpush1.msra.mxu0 %v5500
    %6846 = vmatprep.subr.mxu0 %v5504
    %6847 = vmatpush1.msra.mxu0 %v5503
    %6848 = vmatprep.subr.mxu0 %v5507
    %6849 = vmatpush1.msra.mxu0 %v5506
    %6850 = vmatprep.subr.mxu0 %v5510
    %6851 = vmatpush1.msra.mxu0 %v5509
    %6852 = vmatprep.subr.mxu0 %v5513
    %6853 = vmatpush1.msra.mxu0 %v5512
    %6854 = vmatprep.subr.mxu0 %v5516
    %6855 = vmatpush1.msra.mxu0 %v5515
    %6856 = vmatprep.subr.mxu0 %v5519
    %6857 = vmatpush1.msra.mxu0 %v5518
    %6858 = vmatprep.subr.mxu0 0.0
    %6859 = vmatpush1.msra.mxu0 0.0
    %6860 = vmatprep.subr.mxu0 0.0
    %6861 = vmatpush1.msra.mxu0 0.0
    %6862 = vmatprep.subr.mxu0 0.0
    %6863 = vmatpush1.msra.mxu0 0.0
    %6864 = vmatprep.subr.mxu0 0.0
    %6865 = vmatpush1.msra.mxu0 0.0
    %6866 = vmatprep.subr.mxu0 0.0
    %6867 = vmatpush1.msra.mxu0 0.0
    %6868 = vmatprep.subr.mxu0 0.0
    %6869 = vmatpush1.msra.mxu0 0.0
    %6870 = vmatprep.subr.mxu0 0.0
    %6871 = vmatpush1.msra.mxu0 0.0
    %6872 = vmatprep.subr.mxu0 0.0
    %6873 = vmatpush1.msra.mxu0 0.0
    %6874 = vmatprep.subr.mxu0 0.0
    %6875 = vmatpush1.msra.mxu0 0.0
    %6876 = vmatprep.subr.mxu0 0.0
    %6877 = vmatpush1.msra.mxu0 0.0
    %6878 = vmatprep.subr.mxu0 0.0
    %6879 = vmatpush1.msra.mxu0 0.0
    %6880 = vmatprep.subr.mxu0 0.0
    %6881 = vmatpush1.msra.mxu0 0.0
    %6882 = vmatprep.subr.mxu0 0.0
    %6883 = vmatpush1.msra.mxu0 0.0
    %6884 = vmatprep.subr.mxu0 0.0
    %6885 = vmatpush1.msra.mxu0 0.0
    %6886 = vmatprep.subr.mxu0 0.0
    %6887 = vmatpush1.msra.mxu0 0.0
    %6888 = vmatprep.subr.mxu0 0.0
    %6889 = vmatpush1.msra.mxu0 0.0
    %6890 = vmatprep.subr.mxu0 0.0
    %6891 = vmatpush1.msra.mxu0 0.0
    %6892 = vmatprep.subr.mxu0 0.0
    %6893 = vmatpush1.msra.mxu0 0.0
    %6894 = vmatprep.subr.mxu0 0.0
    %6895 = vmatpush1.msra.mxu0 0.0
    %6896 = vmatprep.subr.mxu0 0.0
    %6897 = vmatpush1.msra.mxu0 0.0
    %6898 = vmatprep.mubr.f32.mxu0 0.0
    %6899 = vmatmul.mubr.f32.gmra.mrb[0].mxu0 %v6832
    %v6900 = vpop.f32.mrb[0].mxu0
    %v6901 = vadd.f32 0.0, %v6900
    %v6902 = vpop.f32.mrb[0].mxu0
    %v6903 = vadd.f32 0.0, %v6902
    %6904 = vdwg.mxu0
    %6905 = vmatprep.subr.mxu0 0.0
    %6906 = vmatpush1.msra.mxu0 %v5487
    %6907 = vmatprep.subr.mxu0 0.0
    %6908 = vmatpush1.msra.mxu0 %v5490
    %6909 = vmatprep.subr.mxu0 0.0
    %6910 = vmatpush1.msra.mxu0 %v5493
    %6911 = vmatprep.subr.mxu0 0.0
    %6912 = vmatpush1.msra.mxu0 %v5496
    %6913 = vmatprep.subr.mxu0 0.0
    %6914 = vmatpush1.msra.mxu0 %v5499
    %6915 = vmatprep.subr.mxu0 0.0
    %6916 = vmatpush1.msra.mxu0 %v5502
    %6917 = vmatprep.subr.mxu0 0.0
    %6918 = vmatpush1.msra.mxu0 %v5505
    %6919 = vmatprep.subr.mxu0 0.0
    %6920 = vmatpush1.msra.mxu0 %v5508
    %6921 = vmatprep.subr.mxu0 0.0
    %6922 = vmatpush1.msra.mxu0 %v5511
    %6923 = vmatprep.subr.mxu0 0.0
    %6924 = vmatpush1.msra.mxu0 %v5514
    %6925 = vmatprep.subr.mxu0 0.0
    %6926 = vmatpush1.msra.mxu0 %v5517
    %6927 = vmatprep.subr.mxu0 0.0
    %6928 = vmatpush1.msra.mxu0 %v5520
    %6929 = vmatprep.subr.mxu0 0.0
    %6930 = vmatpush1.msra.mxu0 0.0
    %6931 = vmatprep.subr.mxu0 0.0
    %6932 = vmatpush1.msra.mxu0 0.0
    %6933 = vmatprep.subr.mxu0 0.0
    %6934 = vmatpush1.msra.mxu0 0.0
    %6935 = vmatprep.subr.mxu0 0.0
    %6936 = vmatpush1.msra.mxu0 0.0
    %6937 = vmatprep.subr.mxu0 0.0
    %6938 = vmatpush1.msra.mxu0 0.0
    %6939 = vmatprep.subr.mxu0 0.0
    %6940 = vmatpush1.msra.mxu0 0.0
    %6941 = vmatprep.subr.mxu0 0.0
    %6942 = vmatpush1.msra.mxu0 0.0
    %6943 = vmatprep.subr.mxu0 0.0
    %6944 = vmatpush1.msra.mxu0 0.0
    %6945 = vmatprep.subr.mxu0 0.0
    %6946 = vmatpush1.msra.mxu0 0.0
    %6947 = vmatprep.subr.mxu0 0.0
    %6948 = vmatpush1.msra.mxu0 0.0
    %6949 = vmatprep.subr.mxu0 0.0
    %6950 = vmatpush1.msra.mxu0 0.0
    %6951 = vmatprep.subr.mxu0 0.0
    %6952 = vmatpush1.msra.mxu0 0.0
    %6953 = vmatprep.subr.mxu0 0.0
    %6954 = vmatpush1.msra.mxu0 0.0
    %6955 = vmatprep.subr.mxu0 0.0
    %6956 = vmatpush1.msra.mxu0 0.0
    %6957 = vmatprep.subr.mxu0 0.0
    %6958 = vmatpush1.msra.mxu0 0.0
    %6959 = vmatprep.subr.mxu0 0.0
    %6960 = vmatpush1.msra.mxu0 0.0
    %6961 = vmatprep.subr.mxu0 0.0
    %6962 = vmatpush1.msra.mxu0 0.0
    %6963 = vmatprep.subr.mxu0 0.0
    %6964 = vmatpush1.msra.mxu0 0.0
    %6965 = vmatprep.subr.mxu0 0.0
    %6966 = vmatpush1.msra.mxu0 0.0
    %6967 = vmatprep.subr.mxu0 0.0
    %6968 = vmatpush1.msra.mxu0 0.0
    %6969 = vmatprep.mubr.f32.mxu0 0.0
    %6970 = vmatmul.mubr.f32.gmra.mrb[0].mxu0 %v6832
    %v6971 = vpop.f32.mrb[0].mxu0
    %v6972 = vadd.f32 0.0, %v6971
    %v6973 = vpop.f32.mrb[0].mxu0
    %6974 = vdwg.mxu0
    %v6975 = vadd.f32 %v6829, %v6901
    %v6976 = vadd.f32 %v6830, %v6903
    %v6977 = vadd.f32 %v6831, %v6972
    %v6978 = vxor.u32 %v6975, 2147483648
    %v6979 = vxor.u32 %v6976, 2147483648
    %v6980 = vxor.u32 %v6977, 2147483648
    %v6981 = vmul.f32 %v6978, 1.442695
    %v6982 = vpow.pop %v6981
    %v6983 = vmul.f32 %v6979, 1.442695
    %v6984 = vpow.pop %v6983
    %v6985 = vmul.f32 %v6980, 1.442695
    %v6986 = vpow.pop %v6985
    %v6987 = vadd.f32 %v6982, 1.0
    %v6988 = vadd.f32 %v6984, 1.0
    %v6989 = vadd.f32 %v6986, 1.0
    %v6990 = vrcp.pop %v6987
    %v6991 = vmul.f32 1.0, %v6990
    %v6992 = vrcp.pop %v6988
    %v6993 = vmul.f32 1.0, %v6992
    %v6994 = vrcp.pop %v6989
    %v6995 = vmul.f32 1.0, %v6994
    %v6996 = vtanh.pop %v6977
    %v6997 = vmul.f32 %v6991, %v6597
    %v6998 = vmul.f32 %v6993, %v6598
    %7000 = vrot.lane.b32.xlu0 %v6996, 96
    %v7001 = vpop.permute.xlu0 %7000
    %v7003 = vmul.f32 %v6991, %v7001
    %7005 = vrot.lane.b32.xlu0 %v7003, 96
    %v7006 = vpop.permute.xlu0 %7005
    %v7008 = vadd.f32 %v6997, %v7006
    %v7009 = vadd.f32 %v6998, %v7006
    %v7010 = vtanh.pop %v7008
    %v7011 = vtanh.pop %v7009
    %7014 = vrot.lane.b32.xlu0 %v7010, 96
    %v7015 = vpop.permute.xlu0 %7014
    %7016 = vrot.lane.b32.xlu0 %v7011, 96
    %v7017 = vpop.permute.xlu0 %7016
    %v7018 = vsel %vm5312, %v7015, %v7017
    %v7021 = vmul.f32 %v6993, %v7018
    %v7022 = vmul.f32 %v6995, %v7017
    %7025 = vrot.lane.b32.xlu0 %v7021, 64
    %v7026 = vpop.permute.xlu0 %7025
    %7027 = vrot.lane.b32.xlu0 %v7022, 64
    %v7028 = vpop.permute.xlu0 %7027
    %v7029 = vsel %vm5253, %v7026, %v7028
    %7033 = vrot.lane.b32.xlu0 %v6815, 32
    %v7034 = vpop.permute.xlu0 %7033
    %7035 = vrot.lane.b32.xlu0 %v6816, 32
    %v7036 = vpop.permute.xlu0 %7035
    %v7037 = vsel %vm5247, %v7034, %v7036
    %v7039 = vsel %vm5312, %v7029, %v7034
    %v7040 = vsel %vm5253, %v7037, 0
    %7042 = vmatprep.subr.mxu0 %v5723
    %7043 = vmatpush1.msra.mxu0 %v5722
    %7044 = vmatprep.subr.mxu0 %v5726
    %7045 = vmatpush1.msra.mxu0 %v5725
    %7046 = vmatprep.subr.mxu0 %v5729
    %7047 = vmatpush1.msra.mxu0 %v5728
    %7048 = vmatprep.subr.mxu0 %v5732
    %7049 = vmatpush1.msra.mxu0 %v5731
    %7050 = vmatprep.subr.mxu0 %v5735
    %7051 = vmatpush1.msra.mxu0 %v5734
    %7052 = vmatprep.subr.mxu0 %v5738
    %7053 = vmatpush1.msra.mxu0 %v5737
    %7054 = vmatprep.subr.mxu0 %v5741
    %7055 = vmatpush1.msra.mxu0 %v5740
    %7056 = vmatprep.subr.mxu0 %v5744
    %7057 = vmatpush1.msra.mxu0 %v5743
    %7058 = vmatprep.subr.mxu0 %v5747
    %7059 = vmatpush1.msra.mxu0 %v5746
    %7060 = vmatprep.subr.mxu0 %v5750
    %7061 = vmatpush1.msra.mxu0 %v5749
    %7062 = vmatprep.subr.mxu0 %v5753
    %7063 = vmatpush1.msra.mxu0 %v5752
    %7064 = vmatprep.subr.mxu0 %v5756
    %7065 = vmatpush1.msra.mxu0 %v5755
    %7066 = vmatprep.subr.mxu0 %v5759
    %7067 = vmatpush1.msra.mxu0 %v5758
    %7068 = vmatprep.subr.mxu0 %v5762
    %7069 = vmatpush1.msra.mxu0 %v5761
    %7070 = vmatprep.subr.mxu0 %v5765
    %7071 = vmatpush1.msra.mxu0 %v5764
    %7072 = vmatprep.subr.mxu0 %v5768
    %7073 = vmatpush1.msra.mxu0 %v5767
    %7074 = vmatprep.subr.mxu0 %v5771
    %7075 = vmatpush1.msra.mxu0 %v5770
    %7076 = vmatprep.subr.mxu0 %v5774
    %7077 = vmatpush1.msra.mxu0 %v5773
    %7078 = vmatprep.subr.mxu0 %v5777
    %7079 = vmatpush1.msra.mxu0 %v5776
    %7080 = vmatprep.subr.mxu0 %v5780
    %7081 = vmatpush1.msra.mxu0 %v5779
    %7082 = vmatprep.subr.mxu0 %v5783
    %7083 = vmatpush1.msra.mxu0 %v5782
    %7084 = vmatprep.subr.mxu0 %v5786
    %7085 = vmatpush1.msra.mxu0 %v5785
    %7086 = vmatprep.subr.mxu0 %v5789
    %7087 = vmatpush1.msra.mxu0 %v5788
    %7088 = vmatprep.subr.mxu0 %v5792
    %7089 = vmatpush1.msra.mxu0 %v5791
    %7090 = vmatprep.subr.mxu0 0.0
    %7091 = vmatpush1.msra.mxu0 0.0
    %7092 = vmatprep.subr.mxu0 0.0
    %7093 = vmatpush1.msra.mxu0 0.0
    %7094 = vmatprep.subr.mxu0 0.0
    %7095 = vmatpush1.msra.mxu0 0.0
    %7096 = vmatprep.subr.mxu0 0.0
    %7097 = vmatpush1.msra.mxu0 0.0
    %7098 = vmatprep.subr.mxu0 0.0
    %7099 = vmatpush1.msra.mxu0 0.0
    %7100 = vmatprep.subr.mxu0 0.0
    %7101 = vmatpush1.msra.mxu0 0.0
    %7102 = vmatprep.subr.mxu0 0.0
    %7103 = vmatpush1.msra.mxu0 0.0
    %7104 = vmatprep.subr.mxu0 0.0
    %7105 = vmatpush1.msra.mxu0 0.0
    %7106 = vmatprep.mubr.f32.mxu0 %v7040
    %7107 = vmatmul.mubr.f32.gmra.mrb[0].mxu0 %v7039
    %v7108 = vpop.f32.mrb[0].mxu0
    %v7109 = vadd.f32 %v5798, %v7108
    %v7110 = vpop.f32.mrb[0].mxu0
    %v7111 = vadd.f32 %v5802, %v7110
    %7112 = vdwg.mxu0
    %7113 = vmatprep.subr.mxu0 0.0
    %7114 = vmatpush1.msra.mxu0 %v5724
    %7115 = vmatprep.subr.mxu0 0.0
    %7116 = vmatpush1.msra.mxu0 %v5727
    %7117 = vmatprep.subr.mxu0 0.0
    %7118 = vmatpush1.msra.mxu0 %v5730
    %7119 = vmatprep.subr.mxu0 0.0
    %7120 = vmatpush1.msra.mxu0 %v5733
    %7121 = vmatprep.subr.mxu0 0.0
    %7122 = vmatpush1.msra.mxu0 %v5736
    %7123 = vmatprep.subr.mxu0 0.0
    %7124 = vmatpush1.msra.mxu0 %v5739
    %7125 = vmatprep.subr.mxu0 0.0
    %7126 = vmatpush1.msra.mxu0 %v5742
    %7127 = vmatprep.subr.mxu0 0.0
    %7128 = vmatpush1.msra.mxu0 %v5745
    %7129 = vmatprep.subr.mxu0 0.0
    %7130 = vmatpush1.msra.mxu0 %v5748
    %7131 = vmatprep.subr.mxu0 0.0
    %7132 = vmatpush1.msra.mxu0 %v5751
    %7133 = vmatprep.subr.mxu0 0.0
    %7134 = vmatpush1.msra.mxu0 %v5754
    %7135 = vmatprep.subr.mxu0 0.0
    %7136 = vmatpush1.msra.mxu0 %v5757
    %7137 = vmatprep.subr.mxu0 0.0
    %7138 = vmatpush1.msra.mxu0 %v5760
    %7139 = vmatprep.subr.mxu0 0.0
    %7140 = vmatpush1.msra.mxu0 %v5763
    %7141 = vmatprep.subr.mxu0 0.0
    %7142 = vmatpush1.msra.mxu0 %v5766
    %7143 = vmatprep.subr.mxu0 0.0
    %7144 = vmatpush1.msra.mxu0 %v5769
    %7145 = vmatprep.subr.mxu0 0.0
    %7146 = vmatpush1.msra.mxu0 %v5772
    %7147 = vmatprep.subr.mxu0 0.0
    %7148 = vmatpush1.msra.mxu0 %v5775
    %7149 = vmatprep.subr.mxu0 0.0
    %7150 = vmatpush1.msra.mxu0 %v5778
    %7151 = vmatprep.subr.mxu0 0.0
    %7152 = vmatpush1.msra.mxu0 %v5781
    %7153 = vmatprep.subr.mxu0 0.0
    %7154 = vmatpush1.msra.mxu0 %v5784
    %7155 = vmatprep.subr.mxu0 0.0
    %7156 = vmatpush1.msra.mxu0 %v5787
    %7157 = vmatprep.subr.mxu0 0.0
    %7158 = vmatpush1.msra.mxu0 %v5790
    %7159 = vmatprep.subr.mxu0 0.0
    %7160 = vmatpush1.msra.mxu0 %v5793
    %7161 = vmatprep.subr.mxu0 0.0
    %7162 = vmatpush1.msra.mxu0 0.0
    %7163 = vmatprep.subr.mxu0 0.0
    %7164 = vmatpush1.msra.mxu0 0.0
    %7165 = vmatprep.subr.mxu0 0.0
    %7166 = vmatpush1.msra.mxu0 0.0
    %7167 = vmatprep.subr.mxu0 0.0
    %7168 = vmatpush1.msra.mxu0 0.0
    %7169 = vmatprep.subr.mxu0 0.0
    %7170 = vmatpush1.msra.mxu0 0.0
    %7171 = vmatprep.subr.mxu0 0.0
    %7172 = vmatpush1.msra.mxu0 0.0
    %7173 = vmatprep.subr.mxu0 0.0
    %7174 = vmatpush1.msra.mxu0 0.0
    %7175 = vmatprep.subr.mxu0 0.0
    %7176 = vmatpush1.msra.mxu0 0.0
    %7177 = vmatprep.mubr.f32.mxu0 %v7040
    %7178 = vmatmul.mubr.f32.gmra.mrb[0].mxu0 %v7039
    %v7179 = vpop.f32.mrb[0].mxu0
    %v7180 = vadd.f32 %v5806, %v7179
    %v7181 = vpop.f32.mrb[0].mxu0
    %7182 = vdwg.mxu0
    %v7183 = vxor.u32 %v7109, 2147483648
    %v7184 = vxor.u32 %v7111, 2147483648
    %v7185 = vxor.u32 %v7180, 2147483648
    %v7186 = vmul.f32 %v7183, 1.442695
    %v7187 = vpow.pop %v7186
    %v7188 = vmul.f32 %v7184, 1.442695
    %v7189 = vpow.pop %v7188
    %v7190 = vmul.f32 %v7185, 1.442695
    %v7191 = vpow.pop %v7190
    %v7192 = vadd.f32 %v7187, 1.0
    %v7193 = vadd.f32 %v7189, 1.0
    %v7194 = vadd.f32 %v7191, 1.0
    %v7195 = vrcp.pop %v7192
    %v7196 = vmul.f32 1.0, %v7195
    %v7197 = vrcp.pop %v7193
    %v7198 = vmul.f32 1.0, %v7197
    %v7199 = vrcp.pop %v7194
    %v7200 = vmul.f32 1.0, %v7199
    %v7201 = vtanh.pop %v7180
    %v7202 = vmul.f32 %v7196, %v6802
    %v7203 = vmul.f32 %v7198, %v6803
    %7205 = vrot.lane.b32.xlu0 %v7201, 96
    %v7206 = vpop.permute.xlu0 %7205
    %v7208 = vmul.f32 %v7196, %v7206
    %7210 = vrot.lane.b32.xlu0 %v7208, 96
    %v7211 = vpop.permute.xlu0 %7210
    %v7213 = vadd.f32 %v7202, %v7211
    %v7214 = vadd.f32 %v7203, %v7211
    %v7215 = vtanh.pop %v7213
    %v7216 = vtanh.pop %v7214
    %7219 = vrot.lane.b32.xlu0 %v7215, 96
    %v7220 = vpop.permute.xlu0 %7219
    %7221 = vrot.lane.b32.xlu0 %v7216, 96
    %v7222 = vpop.permute.xlu0 %7221
    %v7223 = vsel %vm5312, %v7220, %v7222
    %v7226 = vmul.f32 %v7198, %v7223
    %v7227 = vmul.f32 %v7200, %v7222
    %v7228 = vrot.slane %v5386, 4
    %v7229 = vrot.slane %v5388, 4
    %v7230 = vrot.slane %v5463, 4
    %v7234 = vrot.slane %v5392, 3
    %v7235 = vrot.slane %v5394, 3
    %v7236 = vrot.slane %v5468, 3
    %v7240 = vsel %vm5481, %v7228, %v7234
    %v7241 = vsel %vm5481, %v7229, %v7235
    %v7242 = vsel %vm5481, %v7230, %v7236
    %v7243 = vsel %vm5312, %v7029, 0
    %7245 = vmatprep.subr.mxu0 %v5486
    %7246 = vmatpush1.msra.mxu0 %v5485
    %7247 = vmatprep.subr.mxu0 %v5489
    %7248 = vmatpush1.msra.mxu0 %v5488
    %7249 = vmatprep.subr.mxu0 %v5492
    %7250 = vmatpush1.msra.mxu0 %v5491
    %7251 = vmatprep.subr.mxu0 %v5495
    %7252 = vmatpush1.msra.mxu0 %v5494
    %7253 = vmatprep.subr.mxu0 %v5498
    %7254 = vmatpush1.msra.mxu0 %v5497
    %7255 = vmatprep.subr.mxu0 %v5501
    %7256 = vmatpush1.msra.mxu0 %v5500
    %7257 = vmatprep.subr.mxu0 %v5504
    %7258 = vmatpush1.msra.mxu0 %v5503
    %7259 = vmatprep.subr.mxu0 %v5507
    %7260 = vmatpush1.msra.mxu0 %v5506
    %7261 = vmatprep.subr.mxu0 %v5510
    %7262 = vmatpush1.msra.mxu0 %v5509
    %7263 = vmatprep.subr.mxu0 %v5513
    %7264 = vmatpush1.msra.mxu0 %v5512
    %7265 = vmatprep.subr.mxu0 %v5516
    %7266 = vmatpush1.msra.mxu0 %v5515
    %7267 = vmatprep.subr.mxu0 %v5519
    %7268 = vmatpush1.msra.mxu0 %v5518
    %7269 = vmatprep.subr.mxu0 0.0
    %7270 = vmatpush1.msra.mxu0 0.0
    %7271 = vmatprep.subr.mxu0 0.0
    %7272 = vmatpush1.msra.mxu0 0.0
    %7273 = vmatprep.subr.mxu0 0.0
    %7274 = vmatpush1.msra.mxu0 0.0
    %7275 = vmatprep.subr.mxu0 0.0
    %7276 = vmatpush1.msra.mxu0 0.0
    %7277 = vmatprep.subr.mxu0 0.0
    %7278 = vmatpush1.msra.mxu0 0.0
    %7279 = vmatprep.subr.mxu0 0.0
    %7280 = vmatpush1.msra.mxu0 0.0
    %7281 = vmatprep.subr.mxu0 0.0
    %7282 = vmatpush1.msra.mxu0 0.0
    %7283 = vmatprep.subr.mxu0 0.0
    %7284 = vmatpush1.msra.mxu0 0.0
    %7285 = vmatprep.subr.mxu0 0.0
    %7286 = vmatpush1.msra.mxu0 0.0
    %7287 = vmatprep.subr.mxu0 0.0
    %7288 = vmatpush1.msra.mxu0 0.0
    %7289 = vmatprep.subr.mxu0 0.0
    %7290 = vmatpush1.msra.mxu0 0.0
    %7291 = vmatprep.subr.mxu0 0.0
    %7292 = vmatpush1.msra.mxu0 0.0
    %7293 = vmatprep.subr.mxu0 0.0
    %7294 = vmatpush1.msra.mxu0 0.0
    %7295 = vmatprep.subr.mxu0 0.0
    %7296 = vmatpush1.msra.mxu0 0.0
    %7297 = vmatprep.subr.mxu0 0.0
    %7298 = vmatpush1.msra.mxu0 0.0
    %7299 = vmatprep.subr.mxu0 0.0
    %7300 = vmatpush1.msra.mxu0 0.0
    %7301 = vmatprep.subr.mxu0 0.0
    %7302 = vmatpush1.msra.mxu0 0.0
    %7303 = vmatprep.subr.mxu0 0.0
    %7304 = vmatpush1.msra.mxu0 0.0
    %7305 = vmatprep.subr.mxu0 0.0
    %7306 = vmatpush1.msra.mxu0 0.0
    %7307 = vmatprep.subr.mxu0 0.0
    %7308 = vmatpush1.msra.mxu0 0.0
    %7309 = vmatprep.mubr.f32.mxu0 0.0
    %7310 = vmatmul.mubr.f32.gmra.mrb[0].mxu0 %v7243
    %v7311 = vpop.f32.mrb[0].mxu0
    %v7312 = vadd.f32 0.0, %v7311
    %v7313 = vpop.f32.mrb[0].mxu0
    %v7314 = vadd.f32 0.0, %v7313
    %7315 = vdwg.mxu0
    %7316 = vmatprep.subr.mxu0 0.0
    %7317 = vmatpush1.msra.mxu0 %v5487
    %7318 = vmatprep.subr.mxu0 0.0
    %7319 = vmatpush1.msra.mxu0 %v5490
    %7320 = vmatprep.subr.mxu0 0.0
    %7321 = vmatpush1.msra.mxu0 %v5493
    %7322 = vmatprep.subr.mxu0 0.0
    %7323 = vmatpush1.msra.mxu0 %v5496
    %7324 = vmatprep.subr.mxu0 0.0
    %7325 = vmatpush1.msra.mxu0 %v5499
    %7326 = vmatprep.subr.mxu0 0.0
    %7327 = vmatpush1.msra.mxu0 %v5502
    %7328 = vmatprep.subr.mxu0 0.0
    %7329 = vmatpush1.msra.mxu0 %v5505
    %7330 = vmatprep.subr.mxu0 0.0
    %7331 = vmatpush1.msra.mxu0 %v5508
    %7332 = vmatprep.subr.mxu0 0.0
    %7333 = vmatpush1.msra.mxu0 %v5511
    %7334 = vmatprep.subr.mxu0 0.0
    %7335 = vmatpush1.msra.mxu0 %v5514
    %7336 = vmatprep.subr.mxu0 0.0
    %7337 = vmatpush1.msra.mxu0 %v5517
    %7338 = vmatprep.subr.mxu0 0.0
    %7339 = vmatpush1.msra.mxu0 %v5520
    %7340 = vmatprep.subr.mxu0 0.0
    %7341 = vmatpush1.msra.mxu0 0.0
    %7342 = vmatprep.subr.mxu0 0.0
    %7343 = vmatpush1.msra.mxu0 0.0
    %7344 = vmatprep.subr.mxu0 0.0
    %7345 = vmatpush1.msra.mxu0 0.0
    %7346 = vmatprep.subr.mxu0 0.0
    %7347 = vmatpush1.msra.mxu0 0.0
    %7348 = vmatprep.subr.mxu0 0.0
    %7349 = vmatpush1.msra.mxu0 0.0
    %7350 = vmatprep.subr.mxu0 0.0
    %7351 = vmatpush1.msra.mxu0 0.0
    %7352 = vmatprep.subr.mxu0 0.0
    %7353 = vmatpush1.msra.mxu0 0.0
    %7354 = vmatprep.subr.mxu0 0.0
    %7355 = vmatpush1.msra.mxu0 0.0
    %7356 = vmatprep.subr.mxu0 0.0
    %7357 = vmatpush1.msra.mxu0 0.0
    %7358 = vmatprep.subr.mxu0 0.0
    %7359 = vmatpush1.msra.mxu0 0.0
    %7360 = vmatprep.subr.mxu0 0.0
    %7361 = vmatpush1.msra.mxu0 0.0
    %7362 = vmatprep.subr.mxu0 0.0
    %7363 = vmatpush1.msra.mxu0 0.0
    %7364 = vmatprep.subr.mxu0 0.0
    %7365 = vmatpush1.msra.mxu0 0.0
    %7366 = vmatprep.subr.mxu0 0.0
    %7367 = vmatpush1.msra.mxu0 0.0
    %7368 = vmatprep.subr.mxu0 0.0
    %7369 = vmatpush1.msra.mxu0 0.0
    %7370 = vmatprep.subr.mxu0 0.0
    %7371 = vmatpush1.msra.mxu0 0.0
    %7372 = vmatprep.subr.mxu0 0.0
    %7373 = vmatpush1.msra.mxu0 0.0
    %7374 = vmatprep.subr.mxu0 0.0
    %7375 = vmatpush1.msra.mxu0 0.0
    %7376 = vmatprep.subr.mxu0 0.0
    %7377 = vmatpush1.msra.mxu0 0.0
    %7378 = vmatprep.subr.mxu0 0.0
    %7379 = vmatpush1.msra.mxu0 0.0
    %7380 = vmatprep.mubr.f32.mxu0 0.0
    %7381 = vmatmul.mubr.f32.gmra.mrb[0].mxu0 %v7243
    %v7382 = vpop.f32.mrb[0].mxu0
    %v7383 = vadd.f32 0.0, %v7382
    %v7384 = vpop.f32.mrb[0].mxu0
    %7385 = vdwg.mxu0
    %v7386 = vadd.f32 %v7240, %v7312
    %v7387 = vadd.f32 %v7241, %v7314
    %v7388 = vadd.f32 %v7242, %v7383
    %v7389 = vxor.u32 %v7386, 2147483648
    %v7390 = vxor.u32 %v7387, 2147483648
    %v7391 = vxor.u32 %v7388, 2147483648
    %v7392 = vmul.f32 %v7389, 1.442695
    %v7393 = vpow.pop %v7392
    %v7394 = vmul.f32 %v7390, 1.442695
    %v7395 = vpow.pop %v7394
    %v7396 = vmul.f32 %v7391, 1.442695
    %v7397 = vpow.pop %v7396
    %v7398 = vadd.f32 %v7393, 1.0
    %v7399 = vadd.f32 %v7395, 1.0
    %v7400 = vadd.f32 %v7397, 1.0
    %v7401 = vrcp.pop %v7398
    %v7402 = vmul.f32 1.0, %v7401
    %v7403 = vrcp.pop %v7399
    %v7404 = vmul.f32 1.0, %v7403
    %v7405 = vrcp.pop %v7400
    %v7406 = vmul.f32 1.0, %v7405
    %v7407 = vtanh.pop %v7388
    %v7408 = vmul.f32 %v7402, %v7008
    %v7409 = vmul.f32 %v7404, %v7009
    %7411 = vrot.lane.b32.xlu0 %v7407, 96
    %v7412 = vpop.permute.xlu0 %7411
    %v7414 = vmul.f32 %v7402, %v7412
    %7416 = vrot.lane.b32.xlu0 %v7414, 96
    %v7417 = vpop.permute.xlu0 %7416
    %v7419 = vadd.f32 %v7408, %v7417
    %v7420 = vadd.f32 %v7409, %v7417
    %v7421 = vtanh.pop %v7419
    %v7422 = vtanh.pop %v7420
    %7425 = vrot.lane.b32.xlu0 %v7421, 96
    %v7426 = vpop.permute.xlu0 %7425
    %7427 = vrot.lane.b32.xlu0 %v7422, 96
    %v7428 = vpop.permute.xlu0 %7427
    %v7429 = vsel %vm5312, %v7426, %v7428
    %v7432 = vmul.f32 %v7404, %v7429
    %v7433 = vmul.f32 %v7406, %v7428
    %7436 = vrot.lane.b32.xlu0 %v7432, 64
    %v7437 = vpop.permute.xlu0 %7436
    %7438 = vrot.lane.b32.xlu0 %v7433, 64
    %v7439 = vpop.permute.xlu0 %7438
    %v7440 = vsel %vm5253, %v7437, %v7439
    %7444 = vrot.lane.b32.xlu0 %v7226, 32
    %v7445 = vpop.permute.xlu0 %7444
    %7446 = vrot.lane.b32.xlu0 %v7227, 32
    %v7447 = vpop.permute.xlu0 %7446
    %v7448 = vsel %vm5247, %v7445, %v7447
    %v7450 = vsel %vm5312, %v7440, %v7445
    %v7451 = vsel %vm5253, %v7448, 0
    %7453 = vmatprep.subr.mxu0 %v5723
    %7454 = vmatpush1.msra.mxu0 %v5722
    %7455 = vmatprep.subr.mxu0 %v5726
    %7456 = vmatpush1.msra.mxu0 %v5725
    %7457 = vmatprep.subr.mxu0 %v5729
    %7458 = vmatpush1.msra.mxu0 %v5728
    %7459 = vmatprep.subr.mxu0 %v5732
    %7460 = vmatpush1.msra.mxu0 %v5731
    %7461 = vmatprep.subr.mxu0 %v5735
    %7462 = vmatpush1.msra.mxu0 %v5734
    %7463 = vmatprep.subr.mxu0 %v5738
    %7464 = vmatpush1.msra.mxu0 %v5737
    %7465 = vmatprep.subr.mxu0 %v5741
    %7466 = vmatpush1.msra.mxu0 %v5740
    %7467 = vmatprep.subr.mxu0 %v5744
    %7468 = vmatpush1.msra.mxu0 %v5743
    %7469 = vmatprep.subr.mxu0 %v5747
    %7470 = vmatpush1.msra.mxu0 %v5746
    %7471 = vmatprep.subr.mxu0 %v5750
    %7472 = vmatpush1.msra.mxu0 %v5749
    %7473 = vmatprep.subr.mxu0 %v5753
    %7474 = vmatpush1.msra.mxu0 %v5752
    %7475 = vmatprep.subr.mxu0 %v5756
    %7476 = vmatpush1.msra.mxu0 %v5755
    %7477 = vmatprep.subr.mxu0 %v5759
    %7478 = vmatpush1.msra.mxu0 %v5758
    %7479 = vmatprep.subr.mxu0 %v5762
    %7480 = vmatpush1.msra.mxu0 %v5761
    %7481 = vmatprep.subr.mxu0 %v5765
    %7482 = vmatpush1.msra.mxu0 %v5764
    %7483 = vmatprep.subr.mxu0 %v5768
    %7484 = vmatpush1.msra.mxu0 %v5767
    %7485 = vmatprep.subr.mxu0 %v5771
    %7486 = vmatpush1.msra.mxu0 %v5770
    %7487 = vmatprep.subr.mxu0 %v5774
    %7488 = vmatpush1.msra.mxu0 %v5773
    %7489 = vmatprep.subr.mxu0 %v5777
    %7490 = vmatpush1.msra.mxu0 %v5776
    %7491 = vmatprep.subr.mxu0 %v5780
    %7492 = vmatpush1.msra.mxu0 %v5779
    %7493 = vmatprep.subr.mxu0 %v5783
    %7494 = vmatpush1.msra.mxu0 %v5782
    %7495 = vmatprep.subr.mxu0 %v5786
    %7496 = vmatpush1.msra.mxu0 %v5785
    %7497 = vmatprep.subr.mxu0 %v5789
    %7498 = vmatpush1.msra.mxu0 %v5788
    %7499 = vmatprep.subr.mxu0 %v5792
    %7500 = vmatpush1.msra.mxu0 %v5791
    %7501 = vmatprep.subr.mxu0 0.0
    %7502 = vmatpush1.msra.mxu0 0.0
    %7503 = vmatprep.subr.mxu0 0.0
    %7504 = vmatpush1.msra.mxu0 0.0
    %7505 = vmatprep.subr.mxu0 0.0
    %7506 = vmatpush1.msra.mxu0 0.0
    %7507 = vmatprep.subr.mxu0 0.0
    %7508 = vmatpush1.msra.mxu0 0.0
    %7509 = vmatprep.subr.mxu0 0.0
    %7510 = vmatpush1.msra.mxu0 0.0
    %7511 = vmatprep.subr.mxu0 0.0
    %7512 = vmatpush1.msra.mxu0 0.0
    %7513 = vmatprep.subr.mxu0 0.0
    %7514 = vmatpush1.msra.mxu0 0.0
    %7515 = vmatprep.subr.mxu0 0.0
    %7516 = vmatpush1.msra.mxu0 0.0
    %7517 = vmatprep.mubr.f32.mxu0 %v7451
    %7518 = vmatmul.mubr.f32.gmra.mrb[0].mxu0 %v7450
    %v7519 = vpop.f32.mrb[0].mxu0
    %v7520 = vadd.f32 %v5798, %v7519
    %v7521 = vpop.f32.mrb[0].mxu0
    %v7522 = vadd.f32 %v5802, %v7521
    %7523 = vdwg.mxu0
    %7524 = vmatprep.subr.mxu0 0.0
    %7525 = vmatpush1.msra.mxu0 %v5724
    %7526 = vmatprep.subr.mxu0 0.0
    %7527 = vmatpush1.msra.mxu0 %v5727
    %7528 = vmatprep.subr.mxu0 0.0
    %7529 = vmatpush1.msra.mxu0 %v5730
    %7530 = vmatprep.subr.mxu0 0.0
    %7531 = vmatpush1.msra.mxu0 %v5733
    %7532 = vmatprep.subr.mxu0 0.0
    %7533 = vmatpush1.msra.mxu0 %v5736
    %7534 = vmatprep.subr.mxu0 0.0
    %7535 = vmatpush1.msra.mxu0 %v5739
    %7536 = vmatprep.subr.mxu0 0.0
    %7537 = vmatpush1.msra.mxu0 %v5742
    %7538 = vmatprep.subr.mxu0 0.0
    %7539 = vmatpush1.msra.mxu0 %v5745
    %7540 = vmatprep.subr.mxu0 0.0
    %7541 = vmatpush1.msra.mxu0 %v5748
    %7542 = vmatprep.subr.mxu0 0.0
    %7543 = vmatpush1.msra.mxu0 %v5751
    %7544 = vmatprep.subr.mxu0 0.0
    %7545 = vmatpush1.msra.mxu0 %v5754
    %7546 = vmatprep.subr.mxu0 0.0
    %7547 = vmatpush1.msra.mxu0 %v5757
    %7548 = vmatprep.subr.mxu0 0.0
    %7549 = vmatpush1.msra.mxu0 %v5760
    %7550 = vmatprep.subr.mxu0 0.0
    %7551 = vmatpush1.msra.mxu0 %v5763
    %7552 = vmatprep.subr.mxu0 0.0
    %7553 = vmatpush1.msra.mxu0 %v5766
    %7554 = vmatprep.subr.mxu0 0.0
    %7555 = vmatpush1.msra.mxu0 %v5769
    %7556 = vmatprep.subr.mxu0 0.0
    %7557 = vmatpush1.msra.mxu0 %v5772
    %7558 = vmatprep.subr.mxu0 0.0
    %7559 = vmatpush1.msra.mxu0 %v5775
    %7560 = vmatprep.subr.mxu0 0.0
    %7561 = vmatpush1.msra.mxu0 %v5778
    %7562 = vmatprep.subr.mxu0 0.0
    %7563 = vmatpush1.msra.mxu0 %v5781
    %7564 = vmatprep.subr.mxu0 0.0
    %7565 = vmatpush1.msra.mxu0 %v5784
    %7566 = vmatprep.subr.mxu0 0.0
    %7567 = vmatpush1.msra.mxu0 %v5787
    %7568 = vmatprep.subr.mxu0 0.0
    %7569 = vmatpush1.msra.mxu0 %v5790
    %7570 = vmatprep.subr.mxu0 0.0
    %7571 = vmatpush1.msra.mxu0 %v5793
    %7572 = vmatprep.subr.mxu0 0.0
    %7573 = vmatpush1.msra.mxu0 0.0
    %7574 = vmatprep.subr.mxu0 0.0
    %7575 = vmatpush1.msra.mxu0 0.0
    %7576 = vmatprep.subr.mxu0 0.0
    %7577 = vmatpush1.msra.mxu0 0.0
    %7578 = vmatprep.subr.mxu0 0.0
    %7579 = vmatpush1.msra.mxu0 0.0
    %7580 = vmatprep.subr.mxu0 0.0
    %7581 = vmatpush1.msra.mxu0 0.0
    %7582 = vmatprep.subr.mxu0 0.0
    %7583 = vmatpush1.msra.mxu0 0.0
    %7584 = vmatprep.subr.mxu0 0.0
    %7585 = vmatpush1.msra.mxu0 0.0
    %7586 = vmatprep.subr.mxu0 0.0
    %7587 = vmatpush1.msra.mxu0 0.0
    %7588 = vmatprep.mubr.f32.mxu0 %v7451
    %7589 = vmatmul.mubr.f32.gmra.mrb[0].mxu0 %v7450
    %v7590 = vpop.f32.mrb[0].mxu0
    %v7591 = vadd.f32 %v5806, %v7590
    %v7592 = vpop.f32.mrb[0].mxu0
    %7593 = vdwg.mxu0
    %v7594 = vxor.u32 %v7520, 2147483648
    %v7595 = vxor.u32 %v7522, 2147483648
    %v7596 = vxor.u32 %v7591, 2147483648
    %v7597 = vmul.f32 %v7594, 1.442695
    %v7598 = vpow.pop %v7597
    %v7599 = vmul.f32 %v7595, 1.442695
    %v7600 = vpow.pop %v7599
    %v7601 = vmul.f32 %v7596, 1.442695
    %v7602 = vpow.pop %v7601
    %v7603 = vadd.f32 %v7598, 1.0
    %v7604 = vadd.f32 %v7600, 1.0
    %v7605 = vadd.f32 %v7602, 1.0
    %v7606 = vrcp.pop %v7603
    %v7607 = vmul.f32 1.0, %v7606
    %v7608 = vrcp.pop %v7604
    %v7609 = vmul.f32 1.0, %v7608
    %v7610 = vrcp.pop %v7605
    %v7611 = vmul.f32 1.0, %v7610
    %v7612 = vtanh.pop %v7591
    %v7613 = vmul.f32 %v7607, %v7213
    %v7614 = vmul.f32 %v7609, %v7214
    %7616 = vrot.lane.b32.xlu0 %v7612, 96
    %v7617 = vpop.permute.xlu0 %7616
    %v7619 = vmul.f32 %v7607, %v7617
    %7621 = vrot.lane.b32.xlu0 %v7619, 96
    %v7622 = vpop.permute.xlu0 %7621
    %v7624 = vadd.f32 %v7613, %v7622
    %v7625 = vadd.f32 %v7614, %v7622
    %v7626 = vtanh.pop %v7624
    %v7627 = vtanh.pop %v7625
    %7630 = vrot.lane.b32.xlu0 %v7626, 96
    %v7631 = vpop.permute.xlu0 %7630
    %7632 = vrot.lane.b32.xlu0 %v7627, 96
    %v7633 = vpop.permute.xlu0 %7632
    %v7634 = vsel %vm5312, %v7631, %v7633
    %v7637 = vmul.f32 %v7609, %v7634
    %v7638 = vmul.f32 %v7611, %v7633
    %v7639 = vrot.slane %v5386, 5
    %v7640 = vrot.slane %v5388, 5
    %v7641 = vrot.slane %v5463, 5
    %v7645 = vrot.slane %v5392, 4
    %v7646 = vrot.slane %v5394, 4
    %v7647 = vrot.slane %v5468, 4
    %v7651 = vsel %vm5481, %v7639, %v7645
    %v7652 = vsel %vm5481, %v7640, %v7646
    %v7653 = vsel %vm5481, %v7641, %v7647
    %v7654 = vsel %vm5312, %v7440, 0
    %7656 = vmatprep.subr.mxu0 %v5486
    %7657 = vmatpush1.msra.mxu0 %v5485
    %7658 = vmatprep.subr.mxu0 %v5489
    %7659 = vmatpush1.msra.mxu0 %v5488
    %7660 = vmatprep.subr.mxu0 %v5492
    %7661 = vmatpush1.msra.mxu0 %v5491
    %7662 = vmatprep.subr.mxu0 %v5495
    %7663 = vmatpush1.msra.mxu0 %v5494
    %7664 = vmatprep.subr.mxu0 %v5498
    %7665 = vmatpush1.msra.mxu0 %v5497
    %7666 = vmatprep.subr.mxu0 %v5501
    %7667 = vmatpush1.msra.mxu0 %v5500
    %7668 = vmatprep.subr.mxu0 %v5504
    %7669 = vmatpush1.msra.mxu0 %v5503
    %7670 = vmatprep.subr.mxu0 %v5507
    %7671 = vmatpush1.msra.mxu0 %v5506
    %7672 = vmatprep.subr.mxu0 %v5510
    %7673 = vmatpush1.msra.mxu0 %v5509
    %7674 = vmatprep.subr.mxu0 %v5513
    %7675 = vmatpush1.msra.mxu0 %v5512
    %7676 = vmatprep.subr.mxu0 %v5516
    %7677 = vmatpush1.msra.mxu0 %v5515
    %7678 = vmatprep.subr.mxu0 %v5519
    %7679 = vmatpush1.msra.mxu0 %v5518
    %7680 = vmatprep.subr.mxu0 0.0
    %7681 = vmatpush1.msra.mxu0 0.0
    %7682 = vmatprep.subr.mxu0 0.0
    %7683 = vmatpush1.msra.mxu0 0.0
    %7684 = vmatprep.subr.mxu0 0.0
    %7685 = vmatpush1.msra.mxu0 0.0
    %7686 = vmatprep.subr.mxu0 0.0
    %7687 = vmatpush1.msra.mxu0 0.0
    %7688 = vmatprep.subr.mxu0 0.0
    %7689 = vmatpush1.msra.mxu0 0.0
    %7690 = vmatprep.subr.mxu0 0.0
    %7691 = vmatpush1.msra.mxu0 0.0
    %7692 = vmatprep.subr.mxu0 0.0
    %7693 = vmatpush1.msra.mxu0 0.0
    %7694 = vmatprep.subr.mxu0 0.0
    %7695 = vmatpush1.msra.mxu0 0.0
    %7696 = vmatprep.subr.mxu0 0.0
    %7697 = vmatpush1.msra.mxu0 0.0
    %7698 = vmatprep.subr.mxu0 0.0
    %7699 = vmatpush1.msra.mxu0 0.0
    %7700 = vmatprep.subr.mxu0 0.0
    %7701 = vmatpush1.msra.mxu0 0.0
    %7702 = vmatprep.subr.mxu0 0.0
    %7703 = vmatpush1.msra.mxu0 0.0
    %7704 = vmatprep.subr.mxu0 0.0
    %7705 = vmatpush1.msra.mxu0 0.0
    %7706 = vmatprep.subr.mxu0 0.0
    %7707 = vmatpush1.msra.mxu0 0.0
    %7708 = vmatprep.subr.mxu0 0.0
    %7709 = vmatpush1.msra.mxu0 0.0
    %7710 = vmatprep.subr.mxu0 0.0
    %7711 = vmatpush1.msra.mxu0 0.0
    %7712 = vmatprep.subr.mxu0 0.0
    %7713 = vmatpush1.msra.mxu0 0.0
    %7714 = vmatprep.subr.mxu0 0.0
    %7715 = vmatpush1.msra.mxu0 0.0
    %7716 = vmatprep.subr.mxu0 0.0
    %7717 = vmatpush1.msra.mxu0 0.0
    %7718 = vmatprep.subr.mxu0 0.0
    %7719 = vmatpush1.msra.mxu0 0.0
    %7720 = vmatprep.mubr.f32.mxu0 0.0
    %7721 = vmatmul.mubr.f32.gmra.mrb[0].mxu0 %v7654
    %v7722 = vpop.f32.mrb[0].mxu0
    %v7723 = vadd.f32 0.0, %v7722
    %v7724 = vpop.f32.mrb[0].mxu0
    %v7725 = vadd.f32 0.0, %v7724
    %7726 = vdwg.mxu0
    %7727 = vmatprep.subr.mxu0 0.0
    %7728 = vmatpush1.msra.mxu0 %v5487
    %7729 = vmatprep.subr.mxu0 0.0
    %7730 = vmatpush1.msra.mxu0 %v5490
    %7731 = vmatprep.subr.mxu0 0.0
    %7732 = vmatpush1.msra.mxu0 %v5493
    %7733 = vmatprep.subr.mxu0 0.0
    %7734 = vmatpush1.msra.mxu0 %v5496
    %7735 = vmatprep.subr.mxu0 0.0
    %7736 = vmatpush1.msra.mxu0 %v5499
    %7737 = vmatprep.subr.mxu0 0.0
    %7738 = vmatpush1.msra.mxu0 %v5502
    %7739 = vmatprep.subr.mxu0 0.0
    %7740 = vmatpush1.msra.mxu0 %v5505
    %7741 = vmatprep.subr.mxu0 0.0
    %7742 = vmatpush1.msra.mxu0 %v5508
    %7743 = vmatprep.subr.mxu0 0.0
    %7744 = vmatpush1.msra.mxu0 %v5511
    %7745 = vmatprep.subr.mxu0 0.0
    %7746 = vmatpush1.msra.mxu0 %v5514
    %7747 = vmatprep.subr.mxu0 0.0
    %7748 = vmatpush1.msra.mxu0 %v5517
    %7749 = vmatprep.subr.mxu0 0.0
    %7750 = vmatpush1.msra.mxu0 %v5520
    %7751 = vmatprep.subr.mxu0 0.0
    %7752 = vmatpush1.msra.mxu0 0.0
    %7753 = vmatprep.subr.mxu0 0.0
    %7754 = vmatpush1.msra.mxu0 0.0
    %7755 = vmatprep.subr.mxu0 0.0
    %7756 = vmatpush1.msra.mxu0 0.0
    %7757 = vmatprep.subr.mxu0 0.0
    %7758 = vmatpush1.msra.mxu0 0.0
    %7759 = vmatprep.subr.mxu0 0.0
    %7760 = vmatpush1.msra.mxu0 0.0
    %7761 = vmatprep.subr.mxu0 0.0
    %7762 = vmatpush1.msra.mxu0 0.0
    %7763 = vmatprep.subr.mxu0 0.0
    %7764 = vmatpush1.msra.mxu0 0.0
    %7765 = vmatprep.subr.mxu0 0.0
    %7766 = vmatpush1.msra.mxu0 0.0
    %7767 = vmatprep.subr.mxu0 0.0
    %7768 = vmatpush1.msra.mxu0 0.0
    %7769 = vmatprep.subr.mxu0 0.0
    %7770 = vmatpush1.msra.mxu0 0.0
    %7771 = vmatprep.subr.mxu0 0.0
    %7772 = vmatpush1.msra.mxu0 0.0
    %7773 = vmatprep.subr.mxu0 0.0
    %7774 = vmatpush1.msra.mxu0 0.0
    %7775 = vmatprep.subr.mxu0 0.0
    %7776 = vmatpush1.msra.mxu0 0.0
    %7777 = vmatprep.subr.mxu0 0.0
    %7778 = vmatpush1.msra.mxu0 0.0
    %7779 = vmatprep.subr.mxu0 0.0
    %7780 = vmatpush1.msra.mxu0 0.0
    %7781 = vmatprep.subr.mxu0 0.0
    %7782 = vmatpush1.msra.mxu0 0.0
    %7783 = vmatprep.subr.mxu0 0.0
    %7784 = vmatpush1.msra.mxu0 0.0
    %7785 = vmatprep.subr.mxu0 0.0
    %7786 = vmatpush1.msra.mxu0 0.0
    %7787 = vmatprep.subr.mxu0 0.0
    %7788 = vmatpush1.msra.mxu0 0.0
    %7789 = vmatprep.subr.mxu0 0.0
    %7790 = vmatpush1.msra.mxu0 0.0
    %7791 = vmatprep.mubr.f32.mxu0 0.0
    %7792 = vmatmul.mubr.f32.gmra.mrb[0].mxu0 %v7654
    %v7793 = vpop.f32.mrb[0].mxu0
    %v7794 = vadd.f32 0.0, %v7793
    %v7795 = vpop.f32.mrb[0].mxu0
    %7796 = vdwg.mxu0
    %v7797 = vadd.f32 %v7651, %v7723
    %v7798 = vadd.f32 %v7652, %v7725
    %v7799 = vadd.f32 %v7653, %v7794
    %v7800 = vxor.u32 %v7797, 2147483648
    %v7801 = vxor.u32 %v7798, 2147483648
    %v7802 = vxor.u32 %v7799, 2147483648
    %v7803 = vmul.f32 %v7800, 1.442695
    %v7804 = vpow.pop %v7803
    %v7805 = vmul.f32 %v7801, 1.442695
    %v7806 = vpow.pop %v7805
    %v7807 = vmul.f32 %v7802, 1.442695
    %v7808 = vpow.pop %v7807
    %v7809 = vadd.f32 %v7804, 1.0
    %v7810 = vadd.f32 %v7806, 1.0
    %v7811 = vadd.f32 %v7808, 1.0
    %v7812 = vrcp.pop %v7809
    %v7813 = vmul.f32 1.0, %v7812
    %v7814 = vrcp.pop %v7810
    %v7815 = vmul.f32 1.0, %v7814
    %v7816 = vrcp.pop %v7811
    %v7817 = vmul.f32 1.0, %v7816
    %v7818 = vtanh.pop %v7799
    %v7819 = vmul.f32 %v7813, %v7419
    %v7820 = vmul.f32 %v7815, %v7420
    %7822 = vrot.lane.b32.xlu0 %v7818, 96
    %v7823 = vpop.permute.xlu0 %7822
    %v7825 = vmul.f32 %v7813, %v7823
    %7827 = vrot.lane.b32.xlu0 %v7825, 96
    %v7828 = vpop.permute.xlu0 %7827
    %v7830 = vadd.f32 %v7819, %v7828
    %v7831 = vadd.f32 %v7820, %v7828
    %v7832 = vtanh.pop %v7830
    %v7833 = vtanh.pop %v7831
    %7836 = vrot.lane.b32.xlu0 %v7832, 96
    %v7837 = vpop.permute.xlu0 %7836
    %7838 = vrot.lane.b32.xlu0 %v7833, 96
    %v7839 = vpop.permute.xlu0 %7838
    %v7840 = vsel %vm5312, %v7837, %v7839
    %v7843 = vmul.f32 %v7815, %v7840
    %v7844 = vmul.f32 %v7817, %v7839
    %7847 = vrot.lane.b32.xlu0 %v7843, 64
    %v7848 = vpop.permute.xlu0 %7847
    %7849 = vrot.lane.b32.xlu0 %v7844, 64
    %v7850 = vpop.permute.xlu0 %7849
    %v7851 = vsel %vm5253, %v7848, %v7850
    %7855 = vrot.lane.b32.xlu0 %v7637, 32
    %v7856 = vpop.permute.xlu0 %7855
    %7857 = vrot.lane.b32.xlu0 %v7638, 32
    %v7858 = vpop.permute.xlu0 %7857
    %v7859 = vsel %vm5247, %v7856, %v7858
    %v7861 = vsel %vm5312, %v7851, %v7856
    %v7862 = vsel %vm5253, %v7859, 0
    %7864 = vmatprep.subr.mxu0 %v5723
    %7865 = vmatpush1.msra.mxu0 %v5722
    %7866 = vmatprep.subr.mxu0 %v5726
    %7867 = vmatpush1.msra.mxu0 %v5725
    %7868 = vmatprep.subr.mxu0 %v5729
    %7869 = vmatpush1.msra.mxu0 %v5728
    %7870 = vmatprep.subr.mxu0 %v5732
    %7871 = vmatpush1.msra.mxu0 %v5731
    %7872 = vmatprep.subr.mxu0 %v5735
    %7873 = vmatpush1.msra.mxu0 %v5734
    %7874 = vmatprep.subr.mxu0 %v5738
    %7875 = vmatpush1.msra.mxu0 %v5737
    %7876 = vmatprep.subr.mxu0 %v5741
    %7877 = vmatpush1.msra.mxu0 %v5740
    %7878 = vmatprep.subr.mxu0 %v5744
    %7879 = vmatpush1.msra.mxu0 %v5743
    %7880 = vmatprep.subr.mxu0 %v5747
    %7881 = vmatpush1.msra.mxu0 %v5746
    %7882 = vmatprep.subr.mxu0 %v5750
    %7883 = vmatpush1.msra.mxu0 %v5749
    %7884 = vmatprep.subr.mxu0 %v5753
    %7885 = vmatpush1.msra.mxu0 %v5752
    %7886 = vmatprep.subr.mxu0 %v5756
    %7887 = vmatpush1.msra.mxu0 %v5755
    %7888 = vmatprep.subr.mxu0 %v5759
    %7889 = vmatpush1.msra.mxu0 %v5758
    %7890 = vmatprep.subr.mxu0 %v5762
    %7891 = vmatpush1.msra.mxu0 %v5761
    %7892 = vmatprep.subr.mxu0 %v5765
    %7893 = vmatpush1.msra.mxu0 %v5764
    %7894 = vmatprep.subr.mxu0 %v5768
    %7895 = vmatpush1.msra.mxu0 %v5767
    %7896 = vmatprep.subr.mxu0 %v5771
    %7897 = vmatpush1.msra.mxu0 %v5770
    %7898 = vmatprep.subr.mxu0 %v5774
    %7899 = vmatpush1.msra.mxu0 %v5773
    %7900 = vmatprep.subr.mxu0 %v5777
    %7901 = vmatpush1.msra.mxu0 %v5776
    %7902 = vmatprep.subr.mxu0 %v5780
    %7903 = vmatpush1.msra.mxu0 %v5779
    %7904 = vmatprep.subr.mxu0 %v5783
    %7905 = vmatpush1.msra.mxu0 %v5782
    %7906 = vmatprep.subr.mxu0 %v5786
    %7907 = vmatpush1.msra.mxu0 %v5785
    %7908 = vmatprep.subr.mxu0 %v5789
    %7909 = vmatpush1.msra.mxu0 %v5788
    %7910 = vmatprep.subr.mxu0 %v5792
    %7911 = vmatpush1.msra.mxu0 %v5791
    %7912 = vmatprep.subr.mxu0 0.0
    %7913 = vmatpush1.msra.mxu0 0.0
    %7914 = vmatprep.subr.mxu0 0.0
    %7915 = vmatpush1.msra.mxu0 0.0
    %7916 = vmatprep.subr.mxu0 0.0
    %7917 = vmatpush1.msra.mxu0 0.0
    %7918 = vmatprep.subr.mxu0 0.0
    %7919 = vmatpush1.msra.mxu0 0.0
    %7920 = vmatprep.subr.mxu0 0.0
    %7921 = vmatpush1.msra.mxu0 0.0
    %7922 = vmatprep.subr.mxu0 0.0
    %7923 = vmatpush1.msra.mxu0 0.0
    %7924 = vmatprep.subr.mxu0 0.0
    %7925 = vmatpush1.msra.mxu0 0.0
    %7926 = vmatprep.subr.mxu0 0.0
    %7927 = vmatpush1.msra.mxu0 0.0
    %7928 = vmatprep.mubr.f32.mxu0 %v7862
    %7929 = vmatmul.mubr.f32.gmra.mrb[0].mxu0 %v7861
    %v7930 = vpop.f32.mrb[0].mxu0
    %v7931 = vadd.f32 %v5798, %v7930
    %v7932 = vpop.f32.mrb[0].mxu0
    %v7933 = vadd.f32 %v5802, %v7932
    %7934 = vdwg.mxu0
    %7935 = vmatprep.subr.mxu0 0.0
    %7936 = vmatpush1.msra.mxu0 %v5724
    %7937 = vmatprep.subr.mxu0 0.0
    %7938 = vmatpush1.msra.mxu0 %v5727
    %7939 = vmatprep.subr.mxu0 0.0
    %7940 = vmatpush1.msra.mxu0 %v5730
    %7941 = vmatprep.subr.mxu0 0.0
    %7942 = vmatpush1.msra.mxu0 %v5733
    %7943 = vmatprep.subr.mxu0 0.0
    %7944 = vmatpush1.msra.mxu0 %v5736
    %7945 = vmatprep.subr.mxu0 0.0
    %7946 = vmatpush1.msra.mxu0 %v5739
    %7947 = vmatprep.subr.mxu0 0.0
    %7948 = vmatpush1.msra.mxu0 %v5742
    %7949 = vmatprep.subr.mxu0 0.0
    %7950 = vmatpush1.msra.mxu0 %v5745
    %7951 = vmatprep.subr.mxu0 0.0
    %7952 = vmatpush1.msra.mxu0 %v5748
    %7953 = vmatprep.subr.mxu0 0.0
    %7954 = vmatpush1.msra.mxu0 %v5751
    %7955 = vmatprep.subr.mxu0 0.0
    %7956 = vmatpush1.msra.mxu0 %v5754
    %7957 = vmatprep.subr.mxu0 0.0
    %7958 = vmatpush1.msra.mxu0 %v5757
    %7959 = vmatprep.subr.mxu0 0.0
    %7960 = vmatpush1.msra.mxu0 %v5760
    %7961 = vmatprep.subr.mxu0 0.0
    %7962 = vmatpush1.msra.mxu0 %v5763
    %7963 = vmatprep.subr.mxu0 0.0
    %7964 = vmatpush1.msra.mxu0 %v5766
    %7965 = vmatprep.subr.mxu0 0.0
    %7966 = vmatpush1.msra.mxu0 %v5769
    %7967 = vmatprep.subr.mxu0 0.0
    %7968 = vmatpush1.msra.mxu0 %v5772
    %7969 = vmatprep.subr.mxu0 0.0
    %7970 = vmatpush1.msra.mxu0 %v5775
    %7971 = vmatprep.subr.mxu0 0.0
    %7972 = vmatpush1.msra.mxu0 %v5778
    %7973 = vmatprep.subr.mxu0 0.0
    %7974 = vmatpush1.msra.mxu0 %v5781
    %7975 = vmatprep.subr.mxu0 0.0
    %7976 = vmatpush1.msra.mxu0 %v5784
    %7977 = vmatprep.subr.mxu0 0.0
    %7978 = vmatpush1.msra.mxu0 %v5787
    %7979 = vmatprep.subr.mxu0 0.0
    %7980 = vmatpush1.msra.mxu0 %v5790
    %7981 = vmatprep.subr.mxu0 0.0
    %7982 = vmatpush1.msra.mxu0 %v5793
    %7983 = vmatprep.subr.mxu0 0.0
    %7984 = vmatpush1.msra.mxu0 0.0
    %7985 = vmatprep.subr.mxu0 0.0
    %7986 = vmatpush1.msra.mxu0 0.0
    %7987 = vmatprep.subr.mxu0 0.0
    %7988 = vmatpush1.msra.mxu0 0.0
    %7989 = vmatprep.subr.mxu0 0.0
    %7990 = vmatpush1.msra.mxu0 0.0
    %7991 = vmatprep.subr.mxu0 0.0
    %7992 = vmatpush1.msra.mxu0 0.0
    %7993 = vmatprep.subr.mxu0 0.0
    %7994 = vmatpush1.msra.mxu0 0.0
    %7995 = vmatprep.subr.mxu0 0.0
    %7996 = vmatpush1.msra.mxu0 0.0
    %7997 = vmatprep.subr.mxu0 0.0
    %7998 = vmatpush1.msra.mxu0 0.0
    %7999 = vmatprep.mubr.f32.mxu0 %v7862
    %8000 = vmatmul.mubr.f32.gmra.mrb[0].mxu0 %v7861
    %v8001 = vpop.f32.mrb[0].mxu0
    %v8002 = vadd.f32 %v5806, %v8001
    %v8003 = vpop.f32.mrb[0].mxu0
    %8004 = vdwg.mxu0
    %v8005 = vxor.u32 %v7931, 2147483648
    %v8006 = vxor.u32 %v7933, 2147483648
    %v8007 = vxor.u32 %v8002, 2147483648
    %v8008 = vmul.f32 %v8005, 1.442695
    %v8009 = vpow.pop %v8008
    %v8010 = vmul.f32 %v8006, 1.442695
    %v8011 = vpow.pop %v8010
    %v8012 = vmul.f32 %v8007, 1.442695
    %v8013 = vpow.pop %v8012
    %v8014 = vadd.f32 %v8009, 1.0
    %v8015 = vadd.f32 %v8011, 1.0
    %v8016 = vadd.f32 %v8013, 1.0
    %v8017 = vrcp.pop %v8014
    %v8018 = vmul.f32 1.0, %v8017
    %v8019 = vrcp.pop %v8015
    %v8020 = vmul.f32 1.0, %v8019
    %v8021 = vrcp.pop %v8016
    %v8022 = vmul.f32 1.0, %v8021
    %v8023 = vtanh.pop %v8002
    %v8024 = vmul.f32 %v8018, %v7624
    %v8025 = vmul.f32 %v8020, %v7625
    %8027 = vrot.lane.b32.xlu0 %v8023, 96
    %v8028 = vpop.permute.xlu0 %8027
    %v8030 = vmul.f32 %v8018, %v8028
    %8032 = vrot.lane.b32.xlu0 %v8030, 96
    %v8033 = vpop.permute.xlu0 %8032
    %v8035 = vadd.f32 %v8024, %v8033
    %v8036 = vadd.f32 %v8025, %v8033
    %v8037 = vtanh.pop %v8035
    %v8038 = vtanh.pop %v8036
    %8041 = vrot.lane.b32.xlu0 %v8037, 96
    %v8042 = vpop.permute.xlu0 %8041
    %8043 = vrot.lane.b32.xlu0 %v8038, 96
    %v8044 = vpop.permute.xlu0 %8043
    %v8045 = vsel %vm5312, %v8042, %v8044
    %v8048 = vmul.f32 %v8020, %v8045
    %v8049 = vmul.f32 %v8022, %v8044
    %v8050 = vrot.slane %v5386, 6
    %v8051 = vrot.slane %v5388, 6
    %v8052 = vrot.slane %v5463, 6
    %v8056 = vrot.slane %v5392, 5
    %v8057 = vrot.slane %v5394, 5
    %v8058 = vrot.slane %v5468, 5
    %v8062 = vsel %vm5481, %v8050, %v8056
    %v8063 = vsel %vm5481, %v8051, %v8057
    %v8064 = vsel %vm5481, %v8052, %v8058
    %v8065 = vsel %vm5312, %v7851, 0
    %8067 = vmatprep.subr.mxu0 %v5486
    %8068 = vmatpush1.msra.mxu0 %v5485
    %8069 = vmatprep.subr.mxu0 %v5489
    %8070 = vmatpush1.msra.mxu0 %v5488
    %8071 = vmatprep.subr.mxu0 %v5492
    %8072 = vmatpush1.msra.mxu0 %v5491
    %8073 = vmatprep.subr.mxu0 %v5495
    %8074 = vmatpush1.msra.mxu0 %v5494
    %8075 = vmatprep.subr.mxu0 %v5498
    %8076 = vmatpush1.msra.mxu0 %v5497
    %8077 = vmatprep.subr.mxu0 %v5501
    %8078 = vmatpush1.msra.mxu0 %v5500
    %8079 = vmatprep.subr.mxu0 %v5504
    %8080 = vmatpush1.msra.mxu0 %v5503
    %8081 = vmatprep.subr.mxu0 %v5507
    %8082 = vmatpush1.msra.mxu0 %v5506
    %8083 = vmatprep.subr.mxu0 %v5510
    %8084 = vmatpush1.msra.mxu0 %v5509
    %8085 = vmatprep.subr.mxu0 %v5513
    %8086 = vmatpush1.msra.mxu0 %v5512
    %8087 = vmatprep.subr.mxu0 %v5516
    %8088 = vmatpush1.msra.mxu0 %v5515
    %8089 = vmatprep.subr.mxu0 %v5519
    %8090 = vmatpush1.msra.mxu0 %v5518
    %8091 = vmatprep.subr.mxu0 0.0
    %8092 = vmatpush1.msra.mxu0 0.0
    %8093 = vmatprep.subr.mxu0 0.0
    %8094 = vmatpush1.msra.mxu0 0.0
    %8095 = vmatprep.subr.mxu0 0.0
    %8096 = vmatpush1.msra.mxu0 0.0
    %8097 = vmatprep.subr.mxu0 0.0
    %8098 = vmatpush1.msra.mxu0 0.0
    %8099 = vmatprep.subr.mxu0 0.0
    %8100 = vmatpush1.msra.mxu0 0.0
    %8101 = vmatprep.subr.mxu0 0.0
    %8102 = vmatpush1.msra.mxu0 0.0
    %8103 = vmatprep.subr.mxu0 0.0
    %8104 = vmatpush1.msra.mxu0 0.0
    %8105 = vmatprep.subr.mxu0 0.0
    %8106 = vmatpush1.msra.mxu0 0.0
    %8107 = vmatprep.subr.mxu0 0.0
    %8108 = vmatpush1.msra.mxu0 0.0
    %8109 = vmatprep.subr.mxu0 0.0
    %8110 = vmatpush1.msra.mxu0 0.0
    %8111 = vmatprep.subr.mxu0 0.0
    %8112 = vmatpush1.msra.mxu0 0.0
    %8113 = vmatprep.subr.mxu0 0.0
    %8114 = vmatpush1.msra.mxu0 0.0
    %8115 = vmatprep.subr.mxu0 0.0
    %8116 = vmatpush1.msra.mxu0 0.0
    %8117 = vmatprep.subr.mxu0 0.0
    %8118 = vmatpush1.msra.mxu0 0.0
    %8119 = vmatprep.subr.mxu0 0.0
    %8120 = vmatpush1.msra.mxu0 0.0
    %8121 = vmatprep.subr.mxu0 0.0
    %8122 = vmatpush1.msra.mxu0 0.0
    %8123 = vmatprep.subr.mxu0 0.0
    %8124 = vmatpush1.msra.mxu0 0.0
    %8125 = vmatprep.subr.mxu0 0.0
    %8126 = vmatpush1.msra.mxu0 0.0
    %8127 = vmatprep.subr.mxu0 0.0
    %8128 = vmatpush1.msra.mxu0 0.0
    %8129 = vmatprep.subr.mxu0 0.0
    %8130 = vmatpush1.msra.mxu0 0.0
    %8131 = vmatprep.mubr.f32.mxu0 0.0
    %8132 = vmatmul.mubr.f32.gmra.mrb[0].mxu0 %v8065
    %v8133 = vpop.f32.mrb[0].mxu0
    %v8134 = vadd.f32 0.0, %v8133
    %v8135 = vpop.f32.mrb[0].mxu0
    %v8136 = vadd.f32 0.0, %v8135
    %8137 = vdwg.mxu0
    %8138 = vmatprep.subr.mxu0 0.0
    %8139 = vmatpush1.msra.mxu0 %v5487
    %8140 = vmatprep.subr.mxu0 0.0
    %8141 = vmatpush1.msra.mxu0 %v5490
    %8142 = vmatprep.subr.mxu0 0.0
    %8143 = vmatpush1.msra.mxu0 %v5493
    %8144 = vmatprep.subr.mxu0 0.0
    %8145 = vmatpush1.msra.mxu0 %v5496
    %8146 = vmatprep.subr.mxu0 0.0
    %8147 = vmatpush1.msra.mxu0 %v5499
    %8148 = vmatprep.subr.mxu0 0.0
    %8149 = vmatpush1.msra.mxu0 %v5502
    %8150 = vmatprep.subr.mxu0 0.0
    %8151 = vmatpush1.msra.mxu0 %v5505
    %8152 = vmatprep.subr.mxu0 0.0
    %8153 = vmatpush1.msra.mxu0 %v5508
    %8154 = vmatprep.subr.mxu0 0.0
    %8155 = vmatpush1.msra.mxu0 %v5511
    %8156 = vmatprep.subr.mxu0 0.0
    %8157 = vmatpush1.msra.mxu0 %v5514
    %8158 = vmatprep.subr.mxu0 0.0
    %8159 = vmatpush1.msra.mxu0 %v5517
    %8160 = vmatprep.subr.mxu0 0.0
    %8161 = vmatpush1.msra.mxu0 %v5520
    %8162 = vmatprep.subr.mxu0 0.0
    %8163 = vmatpush1.msra.mxu0 0.0
    %8164 = vmatprep.subr.mxu0 0.0
    %8165 = vmatpush1.msra.mxu0 0.0
    %8166 = vmatprep.subr.mxu0 0.0
    %8167 = vmatpush1.msra.mxu0 0.0
    %8168 = vmatprep.subr.mxu0 0.0
    %8169 = vmatpush1.msra.mxu0 0.0
    %8170 = vmatprep.subr.mxu0 0.0
    %8171 = vmatpush1.msra.mxu0 0.0
    %8172 = vmatprep.subr.mxu0 0.0
    %8173 = vmatpush1.msra.mxu0 0.0
    %8174 = vmatprep.subr.mxu0 0.0
    %8175 = vmatpush1.msra.mxu0 0.0
    %8176 = vmatprep.subr.mxu0 0.0
    %8177 = vmatpush1.msra.mxu0 0.0
    %8178 = vmatprep.subr.mxu0 0.0
    %8179 = vmatpush1.msra.mxu0 0.0
    %8180 = vmatprep.subr.mxu0 0.0
    %8181 = vmatpush1.msra.mxu0 0.0
    %8182 = vmatprep.subr.mxu0 0.0
    %8183 = vmatpush1.msra.mxu0 0.0
    %8184 = vmatprep.subr.mxu0 0.0
    %8185 = vmatpush1.msra.mxu0 0.0
    %8186 = vmatprep.subr.mxu0 0.0
    %8187 = vmatpush1.msra.mxu0 0.0
    %8188 = vmatprep.subr.mxu0 0.0
    %8189 = vmatpush1.msra.mxu0 0.0
    %8190 = vmatprep.subr.mxu0 0.0
    %8191 = vmatpush1.msra.mxu0 0.0
    %8192 = vmatprep.subr.mxu0 0.0
    %8193 = vmatpush1.msra.mxu0 0.0
    %8194 = vmatprep.subr.mxu0 0.0
    %8195 = vmatpush1.msra.mxu0 0.0
    %8196 = vmatprep.subr.mxu0 0.0
    %8197 = vmatpush1.msra.mxu0 0.0
    %8198 = vmatprep.subr.mxu0 0.0
    %8199 = vmatpush1.msra.mxu0 0.0
    %8200 = vmatprep.subr.mxu0 0.0
    %8201 = vmatpush1.msra.mxu0 0.0
    %8202 = vmatprep.mubr.f32.mxu0 0.0
    %8203 = vmatmul.mubr.f32.gmra.mrb[0].mxu0 %v8065
    %v8204 = vpop.f32.mrb[0].mxu0
    %v8205 = vadd.f32 0.0, %v8204
    %v8206 = vpop.f32.mrb[0].mxu0
    %8207 = vdwg.mxu0
    %v8208 = vadd.f32 %v8062, %v8134
    %v8209 = vadd.f32 %v8063, %v8136
    %v8210 = vadd.f32 %v8064, %v8205
    %v8211 = vxor.u32 %v8208, 2147483648
    %v8212 = vxor.u32 %v8209, 2147483648
    %v8213 = vxor.u32 %v8210, 2147483648
    %v8214 = vmul.f32 %v8211, 1.442695
    %v8215 = vpow.pop %v8214
    %v8216 = vmul.f32 %v8212, 1.442695
    %v8217 = vpow.pop %v8216
    %v8218 = vmul.f32 %v8213, 1.442695
    %v8219 = vpow.pop %v8218
    %v8220 = vadd.f32 %v8215, 1.0
    %v8221 = vadd.f32 %v8217, 1.0
    %v8222 = vadd.f32 %v8219, 1.0
    %v8223 = vrcp.pop %v8220
    %v8224 = vmul.f32 1.0, %v8223
    %v8225 = vrcp.pop %v8221
    %v8226 = vmul.f32 1.0, %v8225
    %v8227 = vrcp.pop %v8222
    %v8228 = vmul.f32 1.0, %v8227
    %v8229 = vtanh.pop %v8210
    %v8230 = vmul.f32 %v8224, %v7830
    %v8231 = vmul.f32 %v8226, %v7831
    %8233 = vrot.lane.b32.xlu0 %v8229, 96
    %v8234 = vpop.permute.xlu0 %8233
    %v8236 = vmul.f32 %v8224, %v8234
    %8238 = vrot.lane.b32.xlu0 %v8236, 96
    %v8239 = vpop.permute.xlu0 %8238
    %v8241 = vadd.f32 %v8230, %v8239
    %v8242 = vadd.f32 %v8231, %v8239
    %v8243 = vtanh.pop %v8241
    %v8244 = vtanh.pop %v8242
    %8247 = vrot.lane.b32.xlu0 %v8243, 96
    %v8248 = vpop.permute.xlu0 %8247
    %8249 = vrot.lane.b32.xlu0 %v8244, 96
    %v8250 = vpop.permute.xlu0 %8249
    %v8251 = vsel %vm5312, %v8248, %v8250
    %v8254 = vmul.f32 %v8226, %v8251
    %v8255 = vmul.f32 %v8228, %v8250
    %8258 = vrot.lane.b32.xlu0 %v8254, 64
    %v8259 = vpop.permute.xlu0 %8258
    %8260 = vrot.lane.b32.xlu0 %v8255, 64
    %v8261 = vpop.permute.xlu0 %8260
    %v8262 = vsel %vm5253, %v8259, %v8261
    %8266 = vrot.lane.b32.xlu0 %v8048, 32
    %v8267 = vpop.permute.xlu0 %8266
    %8268 = vrot.lane.b32.xlu0 %v8049, 32
    %v8269 = vpop.permute.xlu0 %8268
    %v8270 = vsel %vm5247, %v8267, %v8269
    %v8272 = vsel %vm5312, %v8262, %v8267
    %v8273 = vsel %vm5253, %v8270, 0
    %8275 = vmatprep.subr.mxu0 %v5723
    %8276 = vmatpush1.msra.mxu0 %v5722
    %8277 = vmatprep.subr.mxu0 %v5726
    %8278 = vmatpush1.msra.mxu0 %v5725
    %8279 = vmatprep.subr.mxu0 %v5729
    %8280 = vmatpush1.msra.mxu0 %v5728
    %8281 = vmatprep.subr.mxu0 %v5732
    %8282 = vmatpush1.msra.mxu0 %v5731
    %8283 = vmatprep.subr.mxu0 %v5735
    %8284 = vmatpush1.msra.mxu0 %v5734
    %8285 = vmatprep.subr.mxu0 %v5738
    %8286 = vmatpush1.msra.mxu0 %v5737
    %8287 = vmatprep.subr.mxu0 %v5741
    %8288 = vmatpush1.msra.mxu0 %v5740
    %8289 = vmatprep.subr.mxu0 %v5744
    %8290 = vmatpush1.msra.mxu0 %v5743
    %8291 = vmatprep.subr.mxu0 %v5747
    %8292 = vmatpush1.msra.mxu0 %v5746
    %8293 = vmatprep.subr.mxu0 %v5750
    %8294 = vmatpush1.msra.mxu0 %v5749
    %8295 = vmatprep.subr.mxu0 %v5753
    %8296 = vmatpush1.msra.mxu0 %v5752
    %8297 = vmatprep.subr.mxu0 %v5756
    %8298 = vmatpush1.msra.mxu0 %v5755
    %8299 = vmatprep.subr.mxu0 %v5759
    %8300 = vmatpush1.msra.mxu0 %v5758
    %8301 = vmatprep.subr.mxu0 %v5762
    %8302 = vmatpush1.msra.mxu0 %v5761
    %8303 = vmatprep.subr.mxu0 %v5765
    %8304 = vmatpush1.msra.mxu0 %v5764
    %8305 = vmatprep.subr.mxu0 %v5768
    %8306 = vmatpush1.msra.mxu0 %v5767
    %8307 = vmatprep.subr.mxu0 %v5771
    %8308 = vmatpush1.msra.mxu0 %v5770
    %8309 = vmatprep.subr.mxu0 %v5774
    %8310 = vmatpush1.msra.mxu0 %v5773
    %8311 = vmatprep.subr.mxu0 %v5777
    %8312 = vmatpush1.msra.mxu0 %v5776
    %8313 = vmatprep.subr.mxu0 %v5780
    %8314 = vmatpush1.msra.mxu0 %v5779
    %8315 = vmatprep.subr.mxu0 %v5783
    %8316 = vmatpush1.msra.mxu0 %v5782
    %8317 = vmatprep.subr.mxu0 %v5786
    %8318 = vmatpush1.msra.mxu0 %v5785
    %8319 = vmatprep.subr.mxu0 %v5789
    %8320 = vmatpush1.msra.mxu0 %v5788
    %8321 = vmatprep.subr.mxu0 %v5792
    %8322 = vmatpush1.msra.mxu0 %v5791
    %8323 = vmatprep.subr.mxu0 0.0
    %8324 = vmatpush1.msra.mxu0 0.0
    %8325 = vmatprep.subr.mxu0 0.0
    %8326 = vmatpush1.msra.mxu0 0.0
    %8327 = vmatprep.subr.mxu0 0.0
    %8328 = vmatpush1.msra.mxu0 0.0
    %8329 = vmatprep.subr.mxu0 0.0
    %8330 = vmatpush1.msra.mxu0 0.0
    %8331 = vmatprep.subr.mxu0 0.0
    %8332 = vmatpush1.msra.mxu0 0.0
    %8333 = vmatprep.subr.mxu0 0.0
    %8334 = vmatpush1.msra.mxu0 0.0
    %8335 = vmatprep.subr.mxu0 0.0
    %8336 = vmatpush1.msra.mxu0 0.0
    %8337 = vmatprep.subr.mxu0 0.0
    %8338 = vmatpush1.msra.mxu0 0.0
    %8339 = vmatprep.mubr.f32.mxu0 %v8273
    %8340 = vmatmul.mubr.f32.gmra.mrb[0].mxu0 %v8272
    %v8341 = vpop.f32.mrb[0].mxu0
    %v8342 = vadd.f32 %v5798, %v8341
    %v8343 = vpop.f32.mrb[0].mxu0
    %v8344 = vadd.f32 %v5802, %v8343
    %8345 = vdwg.mxu0
    %8346 = vmatprep.subr.mxu0 0.0
    %8347 = vmatpush1.msra.mxu0 %v5724
    %8348 = vmatprep.subr.mxu0 0.0
    %8349 = vmatpush1.msra.mxu0 %v5727
    %8350 = vmatprep.subr.mxu0 0.0
    %8351 = vmatpush1.msra.mxu0 %v5730
    %8352 = vmatprep.subr.mxu0 0.0
    %8353 = vmatpush1.msra.mxu0 %v5733
    %8354 = vmatprep.subr.mxu0 0.0
    %8355 = vmatpush1.msra.mxu0 %v5736
    %8356 = vmatprep.subr.mxu0 0.0
    %8357 = vmatpush1.msra.mxu0 %v5739
    %8358 = vmatprep.subr.mxu0 0.0
    %8359 = vmatpush1.msra.mxu0 %v5742
    %8360 = vmatprep.subr.mxu0 0.0
    %8361 = vmatpush1.msra.mxu0 %v5745
    %8362 = vmatprep.subr.mxu0 0.0
    %8363 = vmatpush1.msra.mxu0 %v5748
    %8364 = vmatprep.subr.mxu0 0.0
    %8365 = vmatpush1.msra.mxu0 %v5751
    %8366 = vmatprep.subr.mxu0 0.0
    %8367 = vmatpush1.msra.mxu0 %v5754
    %8368 = vmatprep.subr.mxu0 0.0
    %8369 = vmatpush1.msra.mxu0 %v5757
    %8370 = vmatprep.subr.mxu0 0.0
    %8371 = vmatpush1.msra.mxu0 %v5760
    %8372 = vmatprep.subr.mxu0 0.0
    %8373 = vmatpush1.msra.mxu0 %v5763
    %8374 = vmatprep.subr.mxu0 0.0
    %8375 = vmatpush1.msra.mxu0 %v5766
    %8376 = vmatprep.subr.mxu0 0.0
    %8377 = vmatpush1.msra.mxu0 %v5769
    %8378 = vmatprep.subr.mxu0 0.0
    %8379 = vmatpush1.msra.mxu0 %v5772
    %8380 = vmatprep.subr.mxu0 0.0
    %8381 = vmatpush1.msra.mxu0 %v5775
    %8382 = vmatprep.subr.mxu0 0.0
    %8383 = vmatpush1.msra.mxu0 %v5778
    %8384 = vmatprep.subr.mxu0 0.0
    %8385 = vmatpush1.msra.mxu0 %v5781
    %8386 = vmatprep.subr.mxu0 0.0
    %8387 = vmatpush1.msra.mxu0 %v5784
    %8388 = vmatprep.subr.mxu0 0.0
    %8389 = vmatpush1.msra.mxu0 %v5787
    %8390 = vmatprep.subr.mxu0 0.0
    %8391 = vmatpush1.msra.mxu0 %v5790
    %8392 = vmatprep.subr.mxu0 0.0
    %8393 = vmatpush1.msra.mxu0 %v5793
    %8394 = vmatprep.subr.mxu0 0.0
    %8395 = vmatpush1.msra.mxu0 0.0
    %8396 = vmatprep.subr.mxu0 0.0
    %8397 = vmatpush1.msra.mxu0 0.0
    %8398 = vmatprep.subr.mxu0 0.0
    %8399 = vmatpush1.msra.mxu0 0.0
    %8400 = vmatprep.subr.mxu0 0.0
    %8401 = vmatpush1.msra.mxu0 0.0
    %8402 = vmatprep.subr.mxu0 0.0
    %8403 = vmatpush1.msra.mxu0 0.0
    %8404 = vmatprep.subr.mxu0 0.0
    %8405 = vmatpush1.msra.mxu0 0.0
    %8406 = vmatprep.subr.mxu0 0.0
    %8407 = vmatpush1.msra.mxu0 0.0
    %8408 = vmatprep.subr.mxu0 0.0
    %8409 = vmatpush1.msra.mxu0 0.0
    %8410 = vmatprep.mubr.f32.mxu0 %v8273
    %8411 = vmatmul.mubr.f32.gmra.mrb[0].mxu0 %v8272
    %v8412 = vpop.f32.mrb[0].mxu0
    %v8413 = vadd.f32 %v5806, %v8412
    %v8414 = vpop.f32.mrb[0].mxu0
    %8415 = vdwg.mxu0
    %v8416 = vxor.u32 %v8342, 2147483648
    %v8417 = vxor.u32 %v8344, 2147483648
    %v8418 = vxor.u32 %v8413, 2147483648
    %v8419 = vmul.f32 %v8416, 1.442695
    %v8420 = vpow.pop %v8419
    %v8421 = vmul.f32 %v8417, 1.442695
    %v8422 = vpow.pop %v8421
    %v8423 = vmul.f32 %v8418, 1.442695
    %v8424 = vpow.pop %v8423
    %v8425 = vadd.f32 %v8420, 1.0
    %v8426 = vadd.f32 %v8422, 1.0
    %v8427 = vadd.f32 %v8424, 1.0
    %v8428 = vrcp.pop %v8425
    %v8429 = vmul.f32 1.0, %v8428
    %v8430 = vrcp.pop %v8426
    %v8431 = vmul.f32 1.0, %v8430
    %v8432 = vrcp.pop %v8427
    %v8433 = vmul.f32 1.0, %v8432
    %v8434 = vtanh.pop %v8413
    %v8435 = vmul.f32 %v8429, %v8035
    %v8436 = vmul.f32 %v8431, %v8036
    %8438 = vrot.lane.b32.xlu0 %v8434, 96
    %v8439 = vpop.permute.xlu0 %8438
    %v8441 = vmul.f32 %v8429, %v8439
    %8443 = vrot.lane.b32.xlu0 %v8441, 96
    %v8444 = vpop.permute.xlu0 %8443
    %v8446 = vadd.f32 %v8435, %v8444
    %v8447 = vadd.f32 %v8436, %v8444
    %v8448 = vtanh.pop %v8446
    %v8449 = vtanh.pop %v8447
    %8452 = vrot.lane.b32.xlu0 %v8448, 96
    %v8453 = vpop.permute.xlu0 %8452
    %8454 = vrot.lane.b32.xlu0 %v8449, 96
    %v8455 = vpop.permute.xlu0 %8454
    %v8456 = vsel %vm5312, %v8453, %v8455
    %v8459 = vmul.f32 %v8431, %v8456
    %v8460 = vmul.f32 %v8433, %v8455
    %v8461 = vrot.slane %v5386, 7
    %v8462 = vrot.slane %v5388, 7
    %v8463 = vrot.slane %v5463, 7
    %v8467 = vrot.slane %v5392, 6
    %v8468 = vrot.slane %v5394, 6
    %v8469 = vrot.slane %v5468, 6
    %v8473 = vsel %vm5481, %v8461, %v8467
    %v8474 = vsel %vm5481, %v8462, %v8468
    %v8475 = vsel %vm5481, %v8463, %v8469
    %v8476 = vsel %vm5312, %v8262, 0
    %8478 = vmatprep.subr.mxu0 %v5486
    %8479 = vmatpush1.msra.mxu0 %v5485
    %8480 = vmatprep.subr.mxu0 %v5489
    %8481 = vmatpush1.msra.mxu0 %v5488
    %8482 = vmatprep.subr.mxu0 %v5492
    %8483 = vmatpush1.msra.mxu0 %v5491
    %8484 = vmatprep.subr.mxu0 %v5495
    %8485 = vmatpush1.msra.mxu0 %v5494
    %8486 = vmatprep.subr.mxu0 %v5498
    %8487 = vmatpush1.msra.mxu0 %v5497
    %8488 = vmatprep.subr.mxu0 %v5501
    %8489 = vmatpush1.msra.mxu0 %v5500
    %8490 = vmatprep.subr.mxu0 %v5504
    %8491 = vmatpush1.msra.mxu0 %v5503
    %8492 = vmatprep.subr.mxu0 %v5507
    %8493 = vmatpush1.msra.mxu0 %v5506
    %8494 = vmatprep.subr.mxu0 %v5510
    %8495 = vmatpush1.msra.mxu0 %v5509
    %8496 = vmatprep.subr.mxu0 %v5513
    %8497 = vmatpush1.msra.mxu0 %v5512
    %8498 = vmatprep.subr.mxu0 %v5516
    %8499 = vmatpush1.msra.mxu0 %v5515
    %8500 = vmatprep.subr.mxu0 %v5519
    %8501 = vmatpush1.msra.mxu0 %v5518
    %8502 = vmatprep.subr.mxu0 0.0
    %8503 = vmatpush1.msra.mxu0 0.0
    %8504 = vmatprep.subr.mxu0 0.0
    %8505 = vmatpush1.msra.mxu0 0.0
    %8506 = vmatprep.subr.mxu0 0.0
    %8507 = vmatpush1.msra.mxu0 0.0
    %8508 = vmatprep.subr.mxu0 0.0
    %8509 = vmatpush1.msra.mxu0 0.0
    %8510 = vmatprep.subr.mxu0 0.0
    %8511 = vmatpush1.msra.mxu0 0.0
    %8512 = vmatprep.subr.mxu0 0.0
    %8513 = vmatpush1.msra.mxu0 0.0
    %8514 = vmatprep.subr.mxu0 0.0
    %8515 = vmatpush1.msra.mxu0 0.0
    %8516 = vmatprep.subr.mxu0 0.0
    %8517 = vmatpush1.msra.mxu0 0.0
    %8518 = vmatprep.subr.mxu0 0.0
    %8519 = vmatpush1.msra.mxu0 0.0
    %8520 = vmatprep.subr.mxu0 0.0
    %8521 = vmatpush1.msra.mxu0 0.0
    %8522 = vmatprep.subr.mxu0 0.0
    %8523 = vmatpush1.msra.mxu0 0.0
    %8524 = vmatprep.subr.mxu0 0.0
    %8525 = vmatpush1.msra.mxu0 0.0
    %8526 = vmatprep.subr.mxu0 0.0
    %8527 = vmatpush1.msra.mxu0 0.0
    %8528 = vmatprep.subr.mxu0 0.0
    %8529 = vmatpush1.msra.mxu0 0.0
    %8530 = vmatprep.subr.mxu0 0.0
    %8531 = vmatpush1.msra.mxu0 0.0
    %8532 = vmatprep.subr.mxu0 0.0
    %8533 = vmatpush1.msra.mxu0 0.0
    %8534 = vmatprep.subr.mxu0 0.0
    %8535 = vmatpush1.msra.mxu0 0.0
    %8536 = vmatprep.subr.mxu0 0.0
    %8537 = vmatpush1.msra.mxu0 0.0
    %8538 = vmatprep.subr.mxu0 0.0
    %8539 = vmatpush1.msra.mxu0 0.0
    %8540 = vmatprep.subr.mxu0 0.0
    %8541 = vmatpush1.msra.mxu0 0.0
    %8542 = vmatprep.mubr.f32.mxu0 0.0
    %8543 = vmatmul.mubr.f32.gmra.mrb[0].mxu0 %v8476
    %v8544 = vpop.f32.mrb[0].mxu0
    %v8545 = vadd.f32 0.0, %v8544
    %v8546 = vpop.f32.mrb[0].mxu0
    %v8547 = vadd.f32 0.0, %v8546
    %8548 = vdwg.mxu0
    %8549 = vmatprep.subr.mxu0 0.0
    %8550 = vmatpush1.msra.mxu0 %v5487
    %8551 = vmatprep.subr.mxu0 0.0
    %8552 = vmatpush1.msra.mxu0 %v5490
    %8553 = vmatprep.subr.mxu0 0.0
    %8554 = vmatpush1.msra.mxu0 %v5493
    %8555 = vmatprep.subr.mxu0 0.0
    %8556 = vmatpush1.msra.mxu0 %v5496
    %8557 = vmatprep.subr.mxu0 0.0
    %8558 = vmatpush1.msra.mxu0 %v5499
    %8559 = vmatprep.subr.mxu0 0.0
    %8560 = vmatpush1.msra.mxu0 %v5502
    %8561 = vmatprep.subr.mxu0 0.0
    %8562 = vmatpush1.msra.mxu0 %v5505
    %8563 = vmatprep.subr.mxu0 0.0
    %8564 = vmatpush1.msra.mxu0 %v5508
    %8565 = vmatprep.subr.mxu0 0.0
    %8566 = vmatpush1.msra.mxu0 %v5511
    %8567 = vmatprep.subr.mxu0 0.0
    %8568 = vmatpush1.msra.mxu0 %v5514
    %8569 = vmatprep.subr.mxu0 0.0
    %8570 = vmatpush1.msra.mxu0 %v5517
    %8571 = vmatprep.subr.mxu0 0.0
    %8572 = vmatpush1.msra.mxu0 %v5520
    %8573 = vmatprep.subr.mxu0 0.0
    %8574 = vmatpush1.msra.mxu0 0.0
    %8575 = vmatprep.subr.mxu0 0.0
    %8576 = vmatpush1.msra.mxu0 0.0
    %8577 = vmatprep.subr.mxu0 0.0
    %8578 = vmatpush1.msra.mxu0 0.0
    %8579 = vmatprep.subr.mxu0 0.0
    %8580 = vmatpush1.msra.mxu0 0.0
    %8581 = vmatprep.subr.mxu0 0.0
    %8582 = vmatpush1.msra.mxu0 0.0
    %8583 = vmatprep.subr.mxu0 0.0
    %8584 = vmatpush1.msra.mxu0 0.0
    %8585 = vmatprep.subr.mxu0 0.0
    %8586 = vmatpush1.msra.mxu0 0.0
    %8587 = vmatprep.subr.mxu0 0.0
    %8588 = vmatpush1.msra.mxu0 0.0
    %8589 = vmatprep.subr.mxu0 0.0
    %8590 = vmatpush1.msra.mxu0 0.0
    %8591 = vmatprep.subr.mxu0 0.0
    %8592 = vmatpush1.msra.mxu0 0.0
    %8593 = vmatprep.subr.mxu0 0.0
    %8594 = vmatpush1.msra.mxu0 0.0
    %8595 = vmatprep.subr.mxu0 0.0
    %8596 = vmatpush1.msra.mxu0 0.0
    %8597 = vmatprep.subr.mxu0 0.0
    %8598 = vmatpush1.msra.mxu0 0.0
    %8599 = vmatprep.subr.mxu0 0.0
    %8600 = vmatpush1.msra.mxu0 0.0
    %8601 = vmatprep.subr.mxu0 0.0
    %8602 = vmatpush1.msra.mxu0 0.0
    %8603 = vmatprep.subr.mxu0 0.0
    %8604 = vmatpush1.msra.mxu0 0.0
    %8605 = vmatprep.subr.mxu0 0.0
    %8606 = vmatpush1.msra.mxu0 0.0
    %8607 = vmatprep.subr.mxu0 0.0
    %8608 = vmatpush1.msra.mxu0 0.0
    %8609 = vmatprep.subr.mxu0 0.0
    %8610 = vmatpush1.msra.mxu0 0.0
    %8611 = vmatprep.subr.mxu0 0.0
    %8612 = vmatpush1.msra.mxu0 0.0
    %8613 = vmatprep.mubr.f32.mxu0 0.0
    %8614 = vmatmul.mubr.f32.gmra.mrb[0].mxu0 %v8476
    %v8615 = vpop.f32.mrb[0].mxu0
    %v8616 = vadd.f32 0.0, %v8615
    %v8617 = vpop.f32.mrb[0].mxu0
    %8618 = vdwg.mxu0
    %v8619 = vadd.f32 %v8473, %v8545
    %v8620 = vadd.f32 %v8474, %v8547
    %v8621 = vadd.f32 %v8475, %v8616
    %v8622 = vxor.u32 %v8619, 2147483648
    %v8623 = vxor.u32 %v8620, 2147483648
    %v8624 = vxor.u32 %v8621, 2147483648
    %v8625 = vmul.f32 %v8622, 1.442695
    %v8626 = vpow.pop %v8625
    %v8627 = vmul.f32 %v8623, 1.442695
    %v8628 = vpow.pop %v8627
    %v8629 = vmul.f32 %v8624, 1.442695
    %v8630 = vpow.pop %v8629
    %v8631 = vadd.f32 %v8626, 1.0
    %v8632 = vadd.f32 %v8628, 1.0
    %v8633 = vadd.f32 %v8630, 1.0
    %v8634 = vrcp.pop %v8631
    %v8635 = vmul.f32 1.0, %v8634
    %v8636 = vrcp.pop %v8632
    %v8637 = vmul.f32 1.0, %v8636
    %v8638 = vrcp.pop %v8633
    %v8639 = vmul.f32 1.0, %v8638
    %v8640 = vtanh.pop %v8621
    %v8641 = vmul.f32 %v8635, %v8241
    %v8642 = vmul.f32 %v8637, %v8242
    %8644 = vrot.lane.b32.xlu0 %v8640, 96
    %v8645 = vpop.permute.xlu0 %8644
    %v8647 = vmul.f32 %v8635, %v8645
    %8649 = vrot.lane.b32.xlu0 %v8647, 96
    %v8650 = vpop.permute.xlu0 %8649
    %v8652 = vadd.f32 %v8641, %v8650
    %v8653 = vadd.f32 %v8642, %v8650
    %v8654 = vtanh.pop %v8652
    %v8655 = vtanh.pop %v8653
    %8658 = vrot.lane.b32.xlu0 %v8654, 96
    %v8659 = vpop.permute.xlu0 %8658
    %8660 = vrot.lane.b32.xlu0 %v8655, 96
    %v8661 = vpop.permute.xlu0 %8660
    %v8662 = vsel %vm5312, %v8659, %v8661
    %v8665 = vmul.f32 %v8637, %v8662
    %v8666 = vmul.f32 %v8639, %v8661
    %8669 = vrot.lane.b32.xlu0 %v8665, 64
    %v8670 = vpop.permute.xlu0 %8669
    %8671 = vrot.lane.b32.xlu0 %v8666, 64
    %v8672 = vpop.permute.xlu0 %8671
    %v8673 = vsel %vm5253, %v8670, %v8672
    %8677 = vrot.lane.b32.xlu0 %v8459, 32
    %v8678 = vpop.permute.xlu0 %8677
    %8679 = vrot.lane.b32.xlu0 %v8460, 32
    %v8680 = vpop.permute.xlu0 %8679
    %v8681 = vsel %vm5247, %v8678, %v8680
    %v8683 = vsel %vm5312, %v8673, %v8678
    %v8684 = vsel %vm5253, %v8681, 0
    %8686 = vmatprep.subr.mxu0 %v5723
    %8687 = vmatpush1.msra.mxu0 %v5722
    %8688 = vmatprep.subr.mxu0 %v5726
    %8689 = vmatpush1.msra.mxu0 %v5725
    %8690 = vmatprep.subr.mxu0 %v5729
    %8691 = vmatpush1.msra.mxu0 %v5728
    %8692 = vmatprep.subr.mxu0 %v5732
    %8693 = vmatpush1.msra.mxu0 %v5731
    %8694 = vmatprep.subr.mxu0 %v5735
    %8695 = vmatpush1.msra.mxu0 %v5734
    %8696 = vmatprep.subr.mxu0 %v5738
    %8697 = vmatpush1.msra.mxu0 %v5737
    %8698 = vmatprep.subr.mxu0 %v5741
    %8699 = vmatpush1.msra.mxu0 %v5740
    %8700 = vmatprep.subr.mxu0 %v5744
    %8701 = vmatpush1.msra.mxu0 %v5743
    %8702 = vmatprep.subr.mxu0 %v5747
    %8703 = vmatpush1.msra.mxu0 %v5746
    %8704 = vmatprep.subr.mxu0 %v5750
    %8705 = vmatpush1.msra.mxu0 %v5749
    %8706 = vmatprep.subr.mxu0 %v5753
    %8707 = vmatpush1.msra.mxu0 %v5752
    %8708 = vmatprep.subr.mxu0 %v5756
    %8709 = vmatpush1.msra.mxu0 %v5755
    %8710 = vmatprep.subr.mxu0 %v5759
    %8711 = vmatpush1.msra.mxu0 %v5758
    %8712 = vmatprep.subr.mxu0 %v5762
    %8713 = vmatpush1.msra.mxu0 %v5761
    %8714 = vmatprep.subr.mxu0 %v5765
    %8715 = vmatpush1.msra.mxu0 %v5764
    %8716 = vmatprep.subr.mxu0 %v5768
    %8717 = vmatpush1.msra.mxu0 %v5767
    %8718 = vmatprep.subr.mxu0 %v5771
    %8719 = vmatpush1.msra.mxu0 %v5770
    %8720 = vmatprep.subr.mxu0 %v5774
    %8721 = vmatpush1.msra.mxu0 %v5773
    %8722 = vmatprep.subr.mxu0 %v5777
    %8723 = vmatpush1.msra.mxu0 %v5776
    %8724 = vmatprep.subr.mxu0 %v5780
    %8725 = vmatpush1.msra.mxu0 %v5779
    %8726 = vmatprep.subr.mxu0 %v5783
    %8727 = vmatpush1.msra.mxu0 %v5782
    %8728 = vmatprep.subr.mxu0 %v5786
    %8729 = vmatpush1.msra.mxu0 %v5785
    %8730 = vmatprep.subr.mxu0 %v5789
    %8731 = vmatpush1.msra.mxu0 %v5788
    %8732 = vmatprep.subr.mxu0 %v5792
    %8733 = vmatpush1.msra.mxu0 %v5791
    %8734 = vmatprep.subr.mxu0 0.0
    %8735 = vmatpush1.msra.mxu0 0.0
    %8736 = vmatprep.subr.mxu0 0.0
    %8737 = vmatpush1.msra.mxu0 0.0
    %8738 = vmatprep.subr.mxu0 0.0
    %8739 = vmatpush1.msra.mxu0 0.0
    %8740 = vmatprep.subr.mxu0 0.0
    %8741 = vmatpush1.msra.mxu0 0.0
    %8742 = vmatprep.subr.mxu0 0.0
    %8743 = vmatpush1.msra.mxu0 0.0
    %8744 = vmatprep.subr.mxu0 0.0
    %8745 = vmatpush1.msra.mxu0 0.0
    %8746 = vmatprep.subr.mxu0 0.0
    %8747 = vmatpush1.msra.mxu0 0.0
    %8748 = vmatprep.subr.mxu0 0.0
    %8749 = vmatpush1.msra.mxu0 0.0
    %8750 = vmatprep.mubr.f32.mxu0 %v8684
    %8751 = vmatmul.mubr.f32.gmra.mrb[0].mxu0 %v8683
    %v8752 = vpop.f32.mrb[0].mxu0
    %v8753 = vadd.f32 %v5798, %v8752
    %v8754 = vpop.f32.mrb[0].mxu0
    %v8755 = vadd.f32 %v5802, %v8754
    %8756 = vdwg.mxu0
    %8757 = vmatprep.subr.mxu0 0.0
    %8758 = vmatpush1.msra.mxu0 %v5724
    %8759 = vmatprep.subr.mxu0 0.0
    %8760 = vmatpush1.msra.mxu0 %v5727
    %8761 = vmatprep.subr.mxu0 0.0
    %8762 = vmatpush1.msra.mxu0 %v5730
    %8763 = vmatprep.subr.mxu0 0.0
    %8764 = vmatpush1.msra.mxu0 %v5733
    %8765 = vmatprep.subr.mxu0 0.0
    %8766 = vmatpush1.msra.mxu0 %v5736
    %8767 = vmatprep.subr.mxu0 0.0
    %8768 = vmatpush1.msra.mxu0 %v5739
    %8769 = vmatprep.subr.mxu0 0.0
    %8770 = vmatpush1.msra.mxu0 %v5742
    %8771 = vmatprep.subr.mxu0 0.0
    %8772 = vmatpush1.msra.mxu0 %v5745
    %8773 = vmatprep.subr.mxu0 0.0
    %8774 = vmatpush1.msra.mxu0 %v5748
    %8775 = vmatprep.subr.mxu0 0.0
    %8776 = vmatpush1.msra.mxu0 %v5751
    %8777 = vmatprep.subr.mxu0 0.0
    %8778 = vmatpush1.msra.mxu0 %v5754
    %8779 = vmatprep.subr.mxu0 0.0
    %8780 = vmatpush1.msra.mxu0 %v5757
    %8781 = vmatprep.subr.mxu0 0.0
    %8782 = vmatpush1.msra.mxu0 %v5760
    %8783 = vmatprep.subr.mxu0 0.0
    %8784 = vmatpush1.msra.mxu0 %v5763
    %8785 = vmatprep.subr.mxu0 0.0
    %8786 = vmatpush1.msra.mxu0 %v5766
    %8787 = vmatprep.subr.mxu0 0.0
    %8788 = vmatpush1.msra.mxu0 %v5769
    %8789 = vmatprep.subr.mxu0 0.0
    %8790 = vmatpush1.msra.mxu0 %v5772
    %8791 = vmatprep.subr.mxu0 0.0
    %8792 = vmatpush1.msra.mxu0 %v5775
    %8793 = vmatprep.subr.mxu0 0.0
    %8794 = vmatpush1.msra.mxu0 %v5778
    %8795 = vmatprep.subr.mxu0 0.0
    %8796 = vmatpush1.msra.mxu0 %v5781
    %8797 = vmatprep.subr.mxu0 0.0
    %8798 = vmatpush1.msra.mxu0 %v5784
    %8799 = vmatprep.subr.mxu0 0.0
    %8800 = vmatpush1.msra.mxu0 %v5787
    %8801 = vmatprep.subr.mxu0 0.0
    %8802 = vmatpush1.msra.mxu0 %v5790
    %8803 = vmatprep.subr.mxu0 0.0
    %8804 = vmatpush1.msra.mxu0 %v5793
    %8805 = vmatprep.subr.mxu0 0.0
    %8806 = vmatpush1.msra.mxu0 0.0
    %8807 = vmatprep.subr.mxu0 0.0
    %8808 = vmatpush1.msra.mxu0 0.0
    %8809 = vmatprep.subr.mxu0 0.0
    %8810 = vmatpush1.msra.mxu0 0.0
    %8811 = vmatprep.subr.mxu0 0.0
    %8812 = vmatpush1.msra.mxu0 0.0
    %8813 = vmatprep.subr.mxu0 0.0
    %8814 = vmatpush1.msra.mxu0 0.0
    %8815 = vmatprep.subr.mxu0 0.0
    %8816 = vmatpush1.msra.mxu0 0.0
    %8817 = vmatprep.subr.mxu0 0.0
    %8818 = vmatpush1.msra.mxu0 0.0
    %8819 = vmatprep.subr.mxu0 0.0
    %8820 = vmatpush1.msra.mxu0 0.0
    %8821 = vmatprep.mubr.f32.mxu0 %v8684
    %8822 = vmatmul.mubr.f32.gmra.mrb[0].mxu0 %v8683
    %v8823 = vpop.f32.mrb[0].mxu0
    %v8824 = vadd.f32 %v5806, %v8823
    %v8825 = vpop.f32.mrb[0].mxu0
    %8826 = vdwg.mxu0
    %v8827 = vxor.u32 %v8753, 2147483648
    %v8828 = vxor.u32 %v8755, 2147483648
    %v8829 = vxor.u32 %v8824, 2147483648
    %v8830 = vmul.f32 %v8827, 1.442695
    %v8831 = vpow.pop %v8830
    %v8832 = vmul.f32 %v8828, 1.442695
    %v8833 = vpow.pop %v8832
    %v8834 = vmul.f32 %v8829, 1.442695
    %v8835 = vpow.pop %v8834
    %v8836 = vadd.f32 %v8831, 1.0
    %v8837 = vadd.f32 %v8833, 1.0
    %v8838 = vadd.f32 %v8835, 1.0
    %v8839 = vrcp.pop %v8836
    %v8840 = vmul.f32 1.0, %v8839
    %v8841 = vrcp.pop %v8837
    %v8842 = vmul.f32 1.0, %v8841
    %v8843 = vrcp.pop %v8838
    %v8844 = vmul.f32 1.0, %v8843
    %v8845 = vtanh.pop %v8824
    %v8846 = vmul.f32 %v8840, %v8446
    %v8847 = vmul.f32 %v8842, %v8447
    %8849 = vrot.lane.b32.xlu0 %v8845, 96
    %v8850 = vpop.permute.xlu0 %8849
    %v8852 = vmul.f32 %v8840, %v8850
    %8854 = vrot.lane.b32.xlu0 %v8852, 96
    %v8855 = vpop.permute.xlu0 %8854
    %v8857 = vadd.f32 %v8846, %v8855
    %v8858 = vadd.f32 %v8847, %v8855
    %v8859 = vtanh.pop %v8857
    %v8860 = vtanh.pop %v8858
    %8863 = vrot.lane.b32.xlu0 %v8859, 96
    %v8864 = vpop.permute.xlu0 %8863
    %8865 = vrot.lane.b32.xlu0 %v8860, 96
    %v8866 = vpop.permute.xlu0 %8865
    %v8867 = vsel %vm5312, %v8864, %v8866
    %v8870 = vmul.f32 %v8842, %v8867
    %v8871 = vmul.f32 %v8844, %v8866
    %v8872 = vcombine.low %v5996, %v5997
    %v8874 = vunpack.c.l.s4 1966171168
    %v8875 = vunpack.c.0.s8 %v8874
    %v8876 = vlaneseq
    %v8877 = vshrl.u32 %v8876, 7
    %v8878 = vsub.s32 %v8875, %v8877
    %v8879 = vrot.slane %v8872, %v8878
    %v8880 = vcombine.high %v8879, %v8879
    %v8882 = vunpack.c.l.s4 1966171168
    %v8883 = vunpack.c.0.s8 %v8882
    %v8884 = vlaneseq
    %v8885 = vshrl.u32 %v8884, 7
    %v8886 = vsub.s32 %v8883, %v8885
    %v8887 = vrot.slane %v8879, %v8886
    %v8889 = vunpack.c.l.s4 1966171168
    %v8890 = vunpack.c.0.s8 %v8889
    %v8891 = vlaneseq
    %v8892 = vshrl.u32 %v8891, 7
    %v8893 = vsub.s32 %v8890, %v8892
    %v8894 = vrot.slane %v8880, %v8893
    %v8895 = vcombine.low %v6404, %v6405
    %v8897 = vunpack.c.l.s4 1966171168
    %v8898 = vunpack.c.0.s8 %v8897
    %v8899 = vlaneseq
    %v8900 = vshrl.u32 %v8899, 7
    %v8901 = vsub.s32 %v8898, %v8900
    %v8902 = vrot.slane %v8895, %v8901
    %v8903 = vcombine.high %v8902, %v8902
    %v8905 = vunpack.c.l.s4 1966171168
    %v8906 = vunpack.c.0.s8 %v8905
    %v8907 = vlaneseq
    %v8908 = vshrl.u32 %v8907, 7
    %v8909 = vsub.s32 %v8906, %v8908
    %v8910 = vrot.slane %v8902, %v8909
    %v8912 = vunpack.c.l.s4 1966171168
    %v8913 = vunpack.c.0.s8 %v8912
    %v8914 = vlaneseq
    %v8915 = vshrl.u32 %v8914, 7
    %v8916 = vsub.s32 %v8913, %v8915
    %v8917 = vrot.slane %v8903, %v8916
    %v8918 = vcombine.low %v6815, %v6816
    %v8920 = vunpack.c.l.s4 1966171168
    %v8921 = vunpack.c.0.s8 %v8920
    %v8922 = vlaneseq
    %v8923 = vshrl.u32 %v8922, 7
    %v8924 = vsub.s32 %v8921, %v8923
    %v8925 = vrot.slane %v8918, %v8924
    %v8926 = vcombine.high %v8925, %v8925
    %v8928 = vunpack.c.l.s4 1966171168
    %v8929 = vunpack.c.0.s8 %v8928
    %v8930 = vlaneseq
    %v8931 = vshrl.u32 %v8930, 7
    %v8932 = vsub.s32 %v8929, %v8931
    %v8933 = vrot.slane %v8925, %v8932
    %v8935 = vunpack.c.l.s4 1966171168
    %v8936 = vunpack.c.0.s8 %v8935
    %v8937 = vlaneseq
    %v8938 = vshrl.u32 %v8937, 7
    %v8939 = vsub.s32 %v8936, %v8938
    %v8940 = vrot.slane %v8926, %v8939
    %v8941 = vcombine.low %v7226, %v7227
    %v8943 = vunpack.c.l.s4 1966171168
    %v8944 = vunpack.c.0.s8 %v8943
    %v8945 = vlaneseq
    %v8946 = vshrl.u32 %v8945, 7
    %v8947 = vsub.s32 %v8944, %v8946
    %v8948 = vrot.slane %v8941, %v8947
    %v8949 = vcombine.high %v8948, %v8948
    %v8951 = vunpack.c.l.s4 1966171168
    %v8952 = vunpack.c.0.s8 %v8951
    %v8953 = vlaneseq
    %v8954 = vshrl.u32 %v8953, 7
    %v8955 = vsub.s32 %v8952, %v8954
    %v8956 = vrot.slane %v8948, %v8955
    %v8958 = vunpack.c.l.s4 1966171168
    %v8959 = vunpack.c.0.s8 %v8958
    %v8960 = vlaneseq
    %v8961 = vshrl.u32 %v8960, 7
    %v8962 = vsub.s32 %v8959, %v8961
    %v8963 = vrot.slane %v8949, %v8962
    %v8964 = vcombine.low %v7637, %v7638
    %v8966 = vunpack.c.l.s4 1966171168
    %v8967 = vunpack.c.0.s8 %v8966
    %v8968 = vlaneseq
    %v8969 = vshrl.u32 %v8968, 7
    %v8970 = vsub.s32 %v8967, %v8969
    %v8971 = vrot.slane %v8964, %v8970
    %v8972 = vcombine.high %v8971, %v8971
    %v8974 = vunpack.c.l.s4 1966171168
    %v8975 = vunpack.c.0.s8 %v8974
    %v8976 = vlaneseq
    %v8977 = vshrl.u32 %v8976, 7
    %v8978 = vsub.s32 %v8975, %v8977
    %v8979 = vrot.slane %v8971, %v8978
    %v8981 = vunpack.c.l.s4 1966171168
    %v8982 = vunpack.c.0.s8 %v8981
    %v8983 = vlaneseq
    %v8984 = vshrl.u32 %v8983, 7
    %v8985 = vsub.s32 %v8982, %v8984
    %v8986 = vrot.slane %v8972, %v8985
    %v8987 = vcombine.low %v8048, %v8049
    %v8989 = vunpack.c.l.s4 1966171168
    %v8990 = vunpack.c.0.s8 %v8989
    %v8991 = vlaneseq
    %v8992 = vshrl.u32 %v8991, 7
    %v8993 = vsub.s32 %v8990, %v8992
    %v8994 = vrot.slane %v8987, %v8993
    %v8995 = vcombine.high %v8994, %v8994
    %v8997 = vunpack.c.l.s4 1966171168
    %v8998 = vunpack.c.0.s8 %v8997
    %v8999 = vlaneseq
    %v9000 = vshrl.u32 %v8999, 7
    %v9001 = vsub.s32 %v8998, %v9000
    %v9002 = vrot.slane %v8994, %v9001
    %v9004 = vunpack.c.l.s4 1966171168
    %v9005 = vunpack.c.0.s8 %v9004
    %v9006 = vlaneseq
    %v9007 = vshrl.u32 %v9006, 7
    %v9008 = vsub.s32 %v9005, %v9007
    %v9009 = vrot.slane %v8995, %v9008
    %v9010 = vcombine.low %v8459, %v8460
    %v9012 = vunpack.c.l.s4 1966171168
    %v9013 = vunpack.c.0.s8 %v9012
    %v9014 = vlaneseq
    %v9015 = vshrl.u32 %v9014, 7
    %v9016 = vsub.s32 %v9013, %v9015
    %v9017 = vrot.slane %v9010, %v9016
    %v9018 = vcombine.high %v9017, %v9017
    %v9020 = vunpack.c.l.s4 1966171168
    %v9021 = vunpack.c.0.s8 %v9020
    %v9022 = vlaneseq
    %v9023 = vshrl.u32 %v9022, 7
    %v9024 = vsub.s32 %v9021, %v9023
    %v9025 = vrot.slane %v9017, %v9024
    %v9027 = vunpack.c.l.s4 1966171168
    %v9028 = vunpack.c.0.s8 %v9027
    %v9029 = vlaneseq
    %v9030 = vshrl.u32 %v9029, 7
    %v9031 = vsub.s32 %v9028, %v9030
    %v9032 = vrot.slane %v9018, %v9031
    %v9035 = vcombine.low %v8870, %v8871
    %v9037 = vunpack.c.l.s4 1966171168
    %v9038 = vunpack.c.0.s8 %v9037
    %v9039 = vlaneseq
    %v9040 = vshrl.u32 %v9039, 7
    %v9041 = vsub.s32 %v9038, %v9040
    %v9042 = vrot.slane %v9035, %v9041
    %v9043 = vcombine.high %v9042, %v9042
    %v9045 = vunpack.c.l.s4 1966171168
    %v9046 = vunpack.c.0.s8 %v9045
    %v9047 = vlaneseq
    %v9048 = vshrl.u32 %v9047, 7
    %v9049 = vsub.s32 %v9046, %v9048
    %v9050 = vrot.slane %v9042, %v9049
    %v9052 = vunpack.c.l.s4 1966171168
    %v9053 = vunpack.c.0.s8 %v9052
    %v9054 = vlaneseq
    %v9055 = vshrl.u32 %v9054, 7
    %v9056 = vsub.s32 %v9053, %v9055
    %v9057 = vrot.slane %v9043, %v9056
    %v9058 = vlaneseq
    %v9059 = vshrl.u32 %v9058, 7
    %v9060 = vsub.s32 0, %v9059
    %v9061 = vrot.slane %v8887, %v9060
    %v9062 = vlaneseq
    %v9063 = vshrl.u32 %v9062, 7
    %v9064 = vsub.s32 1, %v9063
    %v9065 = vrot.slane %v8887, %v9064
    %v9066 = vlaneseq
    %v9067 = vshrl.u32 %v9066, 7
    %v9068 = vsub.s32 0, %v9067
    %v9069 = vrot.slane %v8894, %v9068
    %v9070 = vlaneseq
    %v9071 = vshrl.u32 %v9070, 7
    %v9072 = vsub.s32 1, %v9071
    %v9073 = vrot.slane %v8894, %v9072
    %v9078 = vlaneseq
    %v9079 = vshrl.u32 %v9078, 7
    %v9080 = vsub.s32 0, %v9079
    %v9081 = vrot.slane %v8910, %v9080
    %v9082 = vlaneseq
    %v9083 = vshrl.u32 %v9082, 7
    %v9084 = vsub.s32 1, %v9083
    %v9085 = vrot.slane %v8910, %v9084
    %v9086 = vlaneseq
    %v9087 = vshrl.u32 %v9086, 7
    %v9088 = vsub.s32 0, %v9087
    %v9089 = vrot.slane %v8917, %v9088
    %v9090 = vlaneseq
    %v9091 = vshrl.u32 %v9090, 7
    %v9092 = vsub.s32 1, %v9091
    %v9093 = vrot.slane %v8917, %v9092
    %v9098 = vlaneseq
    %v9099 = vshrl.u32 %v9098, 7
    %v9100 = vsub.s32 0, %v9099
    %v9101 = vrot.slane %v8933, %v9100
    %v9102 = vlaneseq
    %v9103 = vshrl.u32 %v9102, 7
    %v9104 = vsub.s32 1, %v9103
    %v9105 = vrot.slane %v8933, %v9104
    %v9106 = vlaneseq
    %v9107 = vshrl.u32 %v9106, 7
    %v9108 = vsub.s32 0, %v9107
    %v9109 = vrot.slane %v8940, %v9108
    %v9110 = vlaneseq
    %v9111 = vshrl.u32 %v9110, 7
    %v9112 = vsub.s32 1, %v9111
    %v9113 = vrot.slane %v8940, %v9112
    %v9118 = vlaneseq
    %v9119 = vshrl.u32 %v9118, 7
    %v9120 = vsub.s32 0, %v9119
    %v9121 = vrot.slane %v8956, %v9120
    %v9122 = vlaneseq
    %v9123 = vshrl.u32 %v9122, 7
    %v9124 = vsub.s32 1, %v9123
    %v9125 = vrot.slane %v8956, %v9124
    %v9126 = vlaneseq
    %v9127 = vshrl.u32 %v9126, 7
    %v9128 = vsub.s32 0, %v9127
    %v9129 = vrot.slane %v8963, %v9128
    %v9130 = vlaneseq
    %v9131 = vshrl.u32 %v9130, 7
    %v9132 = vsub.s32 1, %v9131
    %v9133 = vrot.slane %v8963, %v9132
    %v9138 = vlaneseq
    %v9139 = vshrl.u32 %v9138, 7
    %v9140 = vsub.s32 0, %v9139
    %v9141 = vrot.slane %v8979, %v9140
    %v9142 = vlaneseq
    %v9143 = vshrl.u32 %v9142, 7
    %v9144 = vsub.s32 1, %v9143
    %v9145 = vrot.slane %v8979, %v9144
    %v9146 = vlaneseq
    %v9147 = vshrl.u32 %v9146, 7
    %v9148 = vsub.s32 0, %v9147
    %v9149 = vrot.slane %v8986, %v9148
    %v9150 = vlaneseq
    %v9151 = vshrl.u32 %v9150, 7
    %v9152 = vsub.s32 1, %v9151
    %v9153 = vrot.slane %v8986, %v9152
    %v9158 = vlaneseq
    %v9159 = vshrl.u32 %v9158, 7
    %v9160 = vsub.s32 0, %v9159
    %v9161 = vrot.slane %v9002, %v9160
    %v9162 = vlaneseq
    %v9163 = vshrl.u32 %v9162, 7
    %v9164 = vsub.s32 1, %v9163
    %v9165 = vrot.slane %v9002, %v9164
    %v9166 = vlaneseq
    %v9167 = vshrl.u32 %v9166, 7
    %v9168 = vsub.s32 0, %v9167
    %v9169 = vrot.slane %v9009, %v9168
    %v9170 = vlaneseq
    %v9171 = vshrl.u32 %v9170, 7
    %v9172 = vsub.s32 1, %v9171
    %v9173 = vrot.slane %v9009, %v9172
    %v9178 = vlaneseq
    %v9179 = vshrl.u32 %v9178, 7
    %v9180 = vsub.s32 0, %v9179
    %v9181 = vrot.slane %v9025, %v9180
    %v9182 = vlaneseq
    %v9183 = vshrl.u32 %v9182, 7
    %v9184 = vsub.s32 1, %v9183
    %v9185 = vrot.slane %v9025, %v9184
    %v9186 = vlaneseq
    %v9187 = vshrl.u32 %v9186, 7
    %v9188 = vsub.s32 0, %v9187
    %v9189 = vrot.slane %v9032, %v9188
    %v9190 = vlaneseq
    %v9191 = vshrl.u32 %v9190, 7
    %v9192 = vsub.s32 1, %v9191
    %v9193 = vrot.slane %v9032, %v9192
    %v9198 = vlaneseq
    %v9199 = vshrl.u32 %v9198, 7
    %v9200 = vsub.s32 0, %v9199
    %v9201 = vrot.slane %v9050, %v9200
    %v9202 = vlaneseq
    %v9203 = vshrl.u32 %v9202, 7
    %v9204 = vsub.s32 1, %v9203
    %v9205 = vrot.slane %v9050, %v9204
    %v9206 = vlaneseq
    %v9207 = vshrl.u32 %v9206, 7
    %v9208 = vsub.s32 0, %v9207
    %v9209 = vrot.slane %v9057, %v9208
    %v9210 = vlaneseq
    %v9211 = vshrl.u32 %v9210, 7
    %v9212 = vsub.s32 1, %v9211
    %v9213 = vrot.slane %v9057, %v9212
    %v9218 = vsel %vm5481, %v9061, %v9081
    %v9219 = vsel %vm5481, %v9065, %v9085
    %v9220 = vsel %vm5481, %v9069, %v9089
    %v9221 = vsel %vm5481, %v9073, %v9093
    %vm9222 = vcmask 1041408
    %v9223 = vsel %vm9222, %v9218, %v9101
    %v9224 = vsel %vm9222, %v9219, %v9105
    %v9225 = vsel %vm9222, %v9220, %v9109
    %v9226 = vsel %vm9222, %v9221, %v9113
    %vm9227 = vcmask 1042432
    %v9228 = vsel %vm9227, %v9223, %v9121
    %v9229 = vsel %vm9227, %v9224, %v9125
    %v9230 = vsel %vm9227, %v9225, %v9129
    %v9231 = vsel %vm9227, %v9226, %v9133
    %vm9232 = vcmask 1043456
    %v9233 = vsel %vm9232, %v9228, %v9141
    %v9234 = vsel %vm9232, %v9229, %v9145
    %v9235 = vsel %vm9232, %v9230, %v9149
    %v9236 = vsel %vm9232, %v9231, %v9153
    %vm9237 = vcmask 1044480
    %v9238 = vsel %vm9237, %v9233, %v9161
    %v9239 = vsel %vm9237, %v9234, %v9165
    %v9240 = vsel %vm9237, %v9235, %v9169
    %v9241 = vsel %vm9237, %v9236, %v9173
    %vm9242 = vcmask 1045504
    %v9243 = vsel %vm9242, %v9238, %v9181
    %v9244 = vsel %vm9242, %v9239, %v9185
    %v9245 = vsel %vm9242, %v9240, %v9189
    %v9246 = vsel %vm9242, %v9241, %v9193
    %vm9247 = vcmask 1046528
    %v9248 = vsel %vm9247, %v9243, %v9201
    %v9249 = vsel %vm9247, %v9244, %v9205
    %v9250 = vsel %vm9247, %v9245, %v9209
    %v9251 = vsel %vm9247, %v9246, %v9213
    %v9252 = vld [vmem:[#allocation16] sm:$0x1]
    %v9254 = vlaneseq
    %v9255 = vshrl.u32 %v9254, 7
    %v9256 = vsub.s32 0, %v9255
    %v9257 = vrot.slane %v9252, %v9256
    %9258 = vrot.lane.b32.xlu0 %v9257, 64
    %v9259 = vpop.permute.xlu0 %9258
    %v9261 = vmul.f32 %v9248, %v9259
    %v9262 = vmul.f32 %v9249, %v9259
    %v9263 = vmul.f32 %v9250, %v9259
    %v9264 = vmul.f32 %v9251, %v9259
    %9267 = vrot.lane.b32.xlu0 %v9261, 64
    %v9268 = vpop.permute.xlu0 %9267
    %9269 = vrot.lane.b32.xlu0 %v9263, 64
    %v9270 = vpop.permute.xlu0 %9269
    %v9273 = vsel %vm5247, %v9268, 0.0
    %9274 = vadd.xlane.f32.xlu0 %v9273
    %v9275 = vpop.xlane.xlu0 %9274
    %v9276 = vsel %vm5247, %v9270, 0.0
    %9277 = vadd.xlane.f32.xlu0 %v9276
    %v9278 = vpop.xlane.xlu0 %9277
    %v9279 = vrot.slane %v9275, 4
    %v9280 = vmax.f32 %v9275, %v9279
    %v9281 = vrot.slane %v9280, 2
    %v9282 = vmax.f32 %v9280, %v9281
    %v9283 = vrot.slane %v9282, 1
    %v9284 = vmax.f32 %v9282, %v9283
    %v9285 = vrot.slane %v9278, 4
    %v9286 = vmax.f32 %v9278, %v9285
    %v9287 = vrot.slane %v9286, 2
    %v9288 = vmax.f32 %v9286, %v9287
    %v9289 = vrot.slane %v9288, 1
    %v9290 = vmax.f32 %v9288, %v9289
    %v9291 = vsub.f32 %v9275, %v9284
    %v9292 = vsub.f32 %v9278, %v9290
    %v9293 = vmul.f32 %v9291, 1.442695
    %v9294 = vpow.pop %v9293
    %v9295 = vmul.f32 %v9292, 1.442695
    %v9296 = vpow.pop %v9295
    %v9297 = vrot.slane %v9294, 4
    %v9298 = vadd.f32 %v9294, %v9297
    %v9299 = vrot.slane %v9298, 2
    %v9300 = vadd.f32 %v9298, %v9299
    %v9301 = vrot.slane %v9300, 1
    %v9302 = vadd.f32 %v9300, %v9301
    %v9303 = vrot.slane %v9296, 4
    %v9304 = vadd.f32 %v9296, %v9303
    %v9305 = vrot.slane %v9304, 2
    %v9306 = vadd.f32 %v9304, %v9305
    %v9307 = vrot.slane %v9306, 1
    %v9308 = vadd.f32 %v9306, %v9307
    %v9309 = vrcp.pop %v9302
    %v9310 = vrcp.pop %v9308
    %v9311 = vmul.f32 %v9294, %v9309
    %v9312 = vmul.f32 %v9296, %v9310
    %v9313 = vmul.f32 %v9311, %v9248
    %v9314 = vmul.f32 %v9312, %v9250
    %vm9315 = vcmask 785920
    %v9316 = vsel %vm9315, %v9313, 0.0
    %v9317 = vrot.slane %v9316, 4
    %v9318 = vadd.f32 %v9316, %v9317
    %v9319 = vrot.slane %v9318, 2
    %v9320 = vadd.f32 %v9318, %v9319
    %v9321 = vrot.slane %v9320, 1
    %v9322 = vadd.f32 %v9320, %v9321
    %v9323 = vsel %vm9315, %v9314, 0.0
    %v9324 = vrot.slane %v9323, 4
    %v9325 = vadd.f32 %v9323, %v9324
    %v9326 = vrot.slane %v9325, 2
    %v9327 = vadd.f32 %v9325, %v9326
    %v9328 = vrot.slane %v9327, 1
    %v9329 = vadd.f32 %v9327, %v9328
    %9330 = vrot.lane.b32.xlu0 %v9261, 32
    %v9331 = vpop.permute.xlu0 %9330
    %9332 = vrot.lane.b32.xlu0 %v9263, 32
    %v9333 = vpop.permute.xlu0 %9332
    %v9336 = vsel %vm5247, %v9331, 0.0
    %9337 = vadd.xlane.f32.xlu0 %v9336
    %v9338 = vpop.xlane.xlu0 %9337
    %v9339 = vsel %vm5247, %v9333, 0.0
    %9340 = vadd.xlane.f32.xlu0 %v9339
    %v9341 = vpop.xlane.xlu0 %9340
    %v9342 = vrot.slane %v9338, 4
    %v9343 = vmax.f32 %v9338, %v9342
    %v9344 = vrot.slane %v9343, 2
    %v9345 = vmax.f32 %v9343, %v9344
    %v9346 = vrot.slane %v9345, 1
    %v9347 = vmax.f32 %v9345, %v9346
    %v9348 = vrot.slane %v9341, 4
    %v9349 = vmax.f32 %v9341, %v9348
    %v9350 = vrot.slane %v9349, 2
    %v9351 = vmax.f32 %v9349, %v9350
    %v9352 = vrot.slane %v9351, 1
    %v9353 = vmax.f32 %v9351, %v9352
    %v9354 = vsub.f32 %v9338, %v9347
    %v9355 = vsub.f32 %v9341, %v9353
    %v9356 = vmul.f32 %v9354, 1.442695
    %v9357 = vpow.pop %v9356
    %v9358 = vmul.f32 %v9355, 1.442695
    %v9359 = vpow.pop %v9358
    %v9360 = vrot.slane %v9357, 4
    %v9361 = vadd.f32 %v9357, %v9360
    %v9362 = vrot.slane %v9361, 2
    %v9363 = vadd.f32 %v9361, %v9362
    %v9364 = vrot.slane %v9363, 1
    %v9365 = vadd.f32 %v9363, %v9364
    %v9366 = vrot.slane %v9359, 4
    %v9367 = vadd.f32 %v9359, %v9366
    %v9368 = vrot.slane %v9367, 2
    %v9369 = vadd.f32 %v9367, %v9368
    %v9370 = vrot.slane %v9369, 1
    %v9371 = vadd.f32 %v9369, %v9370
    %v9372 = vrcp.pop %v9365
    %v9373 = vrcp.pop %v9371
    %v9374 = vmul.f32 %v9357, %v9372
    %v9375 = vmul.f32 %v9359, %v9373
    %v9376 = vmul.f32 %v9374, %v9248
    %v9377 = vmul.f32 %v9375, %v9250
    %vm9378 = vcmask 1048320
    %v9379 = vsel %vm9378, %v9376, 0.0
    %v9380 = vrot.slane %v9379, 4
    %v9381 = vadd.f32 %v9379, %v9380
    %v9382 = vrot.slane %v9381, 2
    %v9383 = vadd.f32 %v9381, %v9382
    %v9384 = vrot.slane %v9383, 1
    %v9385 = vadd.f32 %v9383, %v9384
    %v9386 = vsel %vm9378, %v9377, 0.0
    %v9387 = vrot.slane %v9386, 4
    %v9388 = vadd.f32 %v9386, %v9387
    %v9389 = vrot.slane %v9388, 2
    %v9390 = vadd.f32 %v9388, %v9389
    %v9391 = vrot.slane %v9390, 1
    %v9392 = vadd.f32 %v9390, %v9391
    %v9393 = vsel %vm5247, %v9262, 0.0
    %9394 = vadd.xlane.f32.xlu0 %v9393
    %v9395 = vpop.xlane.xlu0 %9394
    %v9396 = vsel %vm5247, %v9264, 0.0
    %9397 = vadd.xlane.f32.xlu0 %v9396
    %v9398 = vpop.xlane.xlu0 %9397
    %v9399 = vrot.slane %v9395, 4
    %v9400 = vmax.f32 %v9395, %v9399
    %v9401 = vrot.slane %v9400, 2
    %v9402 = vmax.f32 %v9400, %v9401
    %v9403 = vrot.slane %v9402, 1
    %v9404 = vmax.f32 %v9402, %v9403
    %v9405 = vrot.slane %v9398, 4
    %v9406 = vmax.f32 %v9398, %v9405
    %v9407 = vrot.slane %v9406, 2
    %v9408 = vmax.f32 %v9406, %v9407
    %v9409 = vrot.slane %v9408, 1
    %v9410 = vmax.f32 %v9408, %v9409
    %v9411 = vsub.f32 %v9395, %v9404
    %v9412 = vsub.f32 %v9398, %v9410
    %v9413 = vmul.f32 %v9411, 1.442695
    %v9414 = vpow.pop %v9413
    %v9415 = vmul.f32 %v9412, 1.442695
    %v9416 = vpow.pop %v9415
    %v9417 = vrot.slane %v9414, 4
    %v9418 = vadd.f32 %v9414, %v9417
    %v9419 = vrot.slane %v9418, 2
    %v9420 = vadd.f32 %v9418, %v9419
    %v9421 = vrot.slane %v9420, 1
    %v9422 = vadd.f32 %v9420, %v9421
    %v9423 = vrot.slane %v9416, 4
    %v9424 = vadd.f32 %v9416, %v9423
    %v9425 = vrot.slane %v9424, 2
    %v9426 = vadd.f32 %v9424, %v9425
    %v9427 = vrot.slane %v9426, 1
    %v9428 = vadd.f32 %v9426, %v9427
    %v9429 = vrcp.pop %v9422
    %v9430 = vrcp.pop %v9428
    %v9431 = vmul.f32 %v9414, %v9429
    %v9432 = vmul.f32 %v9416, %v9430
    %v9433 = vmul.f32 %v9431, %v9249
    %v9434 = vmul.f32 %v9432, %v9251
    %v9435 = vsel %vm5247, %v9433, 0.0
    %v9436 = vrot.slane %v9435, 4
    %v9437 = vadd.f32 %v9435, %v9436
    %v9438 = vrot.slane %v9437, 2
    %v9439 = vadd.f32 %v9437, %v9438
    %v9440 = vrot.slane %v9439, 1
    %v9441 = vadd.f32 %v9439, %v9440
    %v9442 = vsel %vm5247, %v9434, 0.0
    %v9443 = vrot.slane %v9442, 4
    %v9444 = vadd.f32 %v9442, %v9443
    %v9445 = vrot.slane %v9444, 2
    %v9446 = vadd.f32 %v9444, %v9445
    %v9447 = vrot.slane %v9446, 1
    %v9448 = vadd.f32 %v9446, %v9447
    %v9451 = vsel %vm554, %v9329, %v9322
    %9452 = vrot.lane.b32.xlu0 %v9451, 64
    %v9453 = vpop.permute.xlu0 %9452
    %v9457 = vsel %vm554, %v9392, %v9385
    %9458 = vrot.lane.b32.xlu0 %v9457, 64
    %v9459 = vpop.permute.xlu0 %9458
    %v9463 = vsel %vm554, %v9448, %v9441
    %9464 = vrot.lane.b32.xlu0 %v9463, 64
    %v9465 = vpop.permute.xlu0 %9464
    %v9467 = vsel %vm5247, %v9453, %v9459
    %v9468 = vsel %vm5253, %v9467, %v9465
    %v9469 = vld [vmem:[%s14] sm:$0xff]
    %v9470 = vld [vmem:[%s14 + $0x8] sm:$0xff]
    %v9471 = vld [vmem:[%s14 + $0x10] sm:$0xff]
    %v9472 = vld [vmem:[%s14 + $0x18] sm:$0xff]
    %v9473 = vld [vmem:[%s14 + $0x20] sm:$0xff]
    %v9474 = vld [vmem:[%s14 + $0x28] sm:$0xff]
    %v9475 = vld [vmem:[%s14 + $0x30] sm:$0xff]
    %v9476 = vld [vmem:[%s14 + $0x38] sm:$0xff]
    %v9477 = vld [vmem:[%s14 + $0x40] sm:$0xff]
    %v9478 = vld [vmem:[%s14 + $0x48] sm:$0xff]
    %v9479 = vld [vmem:[%s14 + $0x50] sm:$0xff]
    %v9480 = vld [vmem:[%s14 + $0x58] sm:$0xff]
    %v9481 = vld [vmem:[#allocation17] sm:$0x1]
    %v9483 = vlaneseq
    %v9484 = vshrl.u32 %v9483, 7
    %v9485 = vsub.s32 0, %v9484
    %v9486 = vrot.slane %v9481, %v9485
    %v9489 = vsel %vm5312, %v9468, 0
    %9491 = vmatprep.subr.mxu0 0.0
    %9492 = vmatpush1.msra.mxu0 %v9469
    %9493 = vmatprep.subr.mxu0 0.0
    %9494 = vmatpush1.msra.mxu0 %v9470
    %9495 = vmatprep.subr.mxu0 0.0
    %9496 = vmatpush1.msra.mxu0 %v9471
    %9497 = vmatprep.subr.mxu0 0.0
    %9498 = vmatpush1.msra.mxu0 %v9472
    %9499 = vmatprep.subr.mxu0 0.0
    %9500 = vmatpush1.msra.mxu0 %v9473
    %9501 = vmatprep.subr.mxu0 0.0
    %9502 = vmatpush1.msra.mxu0 %v9474
    %9503 = vmatprep.subr.mxu0 0.0
    %9504 = vmatpush1.msra.mxu0 %v9475
    %9505 = vmatprep.subr.mxu0 0.0
    %9506 = vmatpush1.msra.mxu0 %v9476
    %9507 = vmatprep.subr.mxu0 0.0
    %9508 = vmatpush1.msra.mxu0 %v9477
    %9509 = vmatprep.subr.mxu0 0.0
    %9510 = vmatpush1.msra.mxu0 %v9478
    %9511 = vmatprep.subr.mxu0 0.0
    %9512 = vmatpush1.msra.mxu0 %v9479
    %9513 = vmatprep.subr.mxu0 0.0
    %9514 = vmatpush1.msra.mxu0 %v9480
    %9515 = vmatprep.subr.mxu0 0.0
    %9516 = vmatpush1.msra.mxu0 0.0
    %9517 = vmatprep.subr.mxu0 0.0
    %9518 = vmatpush1.msra.mxu0 0.0
    %9519 = vmatprep.subr.mxu0 0.0
    %9520 = vmatpush1.msra.mxu0 0.0
    %9521 = vmatprep.subr.mxu0 0.0
    %9522 = vmatpush1.msra.mxu0 0.0
    %9523 = vmatprep.subr.mxu0 0.0
    %9524 = vmatpush1.msra.mxu0 0.0
    %9525 = vmatprep.subr.mxu0 0.0
    %9526 = vmatpush1.msra.mxu0 0.0
    %9527 = vmatprep.subr.mxu0 0.0
    %9528 = vmatpush1.msra.mxu0 0.0
    %9529 = vmatprep.subr.mxu0 0.0
    %9530 = vmatpush1.msra.mxu0 0.0
    %9531 = vmatprep.subr.mxu0 0.0
    %9532 = vmatpush1.msra.mxu0 0.0
    %9533 = vmatprep.subr.mxu0 0.0
    %9534 = vmatpush1.msra.mxu0 0.0
    %9535 = vmatprep.subr.mxu0 0.0
    %9536 = vmatpush1.msra.mxu0 0.0
    %9537 = vmatprep.subr.mxu0 0.0
    %9538 = vmatpush1.msra.mxu0 0.0
    %9539 = vmatprep.subr.mxu0 0.0
    %9540 = vmatpush1.msra.mxu0 0.0
    %9541 = vmatprep.subr.mxu0 0.0
    %9542 = vmatpush1.msra.mxu0 0.0
    %9543 = vmatprep.subr.mxu0 0.0
    %9544 = vmatpush1.msra.mxu0 0.0
    %9545 = vmatprep.subr.mxu0 0.0
    %9546 = vmatpush1.msra.mxu0 0.0
    %9547 = vmatprep.subr.mxu0 0.0
    %9548 = vmatpush1.msra.mxu0 0.0
    %9549 = vmatprep.subr.mxu0 0.0
    %9550 = vmatpush1.msra.mxu0 0.0
    %9551 = vmatprep.subr.mxu0 0.0
    %9552 = vmatpush1.msra.mxu0 0.0
    %9553 = vmatprep.subr.mxu0 0.0
    %9554 = vmatpush1.msra.mxu0 0.0
    %9555 = vmatprep.mubr.f32.mxu0 0.0
    %9556 = vmatmul.mubr.f32.gmra.mrb[0].mxu0 %v9489
    %v9557 = vpop.f32.mrb[0].mxu0
    %v9558 = vadd.f32 %v9486, %v9557
    %v9559 = vpop.f32.mrb[0].mxu0
    %9560 = vdwg.mxu0
    %9562 = vrot.lane.b32.xlu0 %v9558, 96
    %v9563 = vpop.permute.xlu0 %9562
    %v9565 = vadd.f32 %v9558, %v9563
    %9566 = vrot.lane.b32.xlu0 %v9558, 112
    %v9567 = vpop.permute.xlu0 %9566
    %v9569 = vadd.f32 %v9558, %v9567
    %9571 = vrot.lane.b32.xlu0 %v9565, 16
    %v9572 = vpop.permute.xlu0 %9571
    %9575 = vrot.lane.b32.xlu0 %v9569, 16
    %v9576 = vpop.permute.xlu0 %9575
    %9578 = vrot.lane.b32.xlu0 %v9569, 32
    %v9579 = vpop.permute.xlu0 %9578
    %v9581 = vsel %vm705, %v9565, %v9572
    %v9582 = vsel %vm5247, %v9581, %v9576
    %v9583 = vsel %vm5250, %v9582, %v9579
    %v9584 = vld [vmem:[%s16] sm:$0xff]
    %v9585 = vld [vmem:[%s16 + $0x8] sm:$0xff]
    %v9586 = vld [vmem:[%s16 + $0x10] sm:$0xff]
    %v9587 = vld [vmem:[%s16 + $0x18] sm:$0xff]
    %v9588 = vld [vmem:[%s16 + $0x20] sm:$0xff]
    %v9589 = vld [vmem:[%s16 + $0x28] sm:$0xff]
    %v9590 = vld [vmem:[%s16 + $0x30] sm:$0xff]
    %v9591 = vld [vmem:[%s16 + $0x38] sm:$0xff]
    %v9592 = vld [vmem:[#allocation19] sm:$0x1]
    %v9594 = vlaneseq
    %v9595 = vshrl.u32 %v9594, 7
    %v9596 = vsub.s32 0, %v9595
    %v9597 = vrot.slane %v9592, %v9596
    %v9600 = vsel %vm5253, %v9583, 0
    %9602 = vmatprep.subr.mxu0 0.0
    %9603 = vmatpush1.msra.mxu0 %v9584
    %9604 = vmatprep.subr.mxu0 0.0
    %9605 = vmatpush1.msra.mxu0 %v9585
    %9606 = vmatprep.subr.mxu0 0.0
    %9607 = vmatpush1.msra.mxu0 %v9586
    %9608 = vmatprep.subr.mxu0 0.0
    %9609 = vmatpush1.msra.mxu0 %v9587
    %9610 = vmatprep.subr.mxu0 0.0
    %9611 = vmatpush1.msra.mxu0 %v9588
    %9612 = vmatprep.subr.mxu0 0.0
    %9613 = vmatpush1.msra.mxu0 %v9589
    %9614 = vmatprep.subr.mxu0 0.0
    %9615 = vmatpush1.msra.mxu0 %v9590
    %9616 = vmatprep.subr.mxu0 0.0
    %9617 = vmatpush1.msra.mxu0 %v9591
    %9618 = vmatprep.subr.mxu0 0.0
    %9619 = vmatpush1.msra.mxu0 0.0
    %9620 = vmatprep.subr.mxu0 0.0
    %9621 = vmatpush1.msra.mxu0 0.0
    %9622 = vmatprep.subr.mxu0 0.0
    %9623 = vmatpush1.msra.mxu0 0.0
    %9624 = vmatprep.subr.mxu0 0.0
    %9625 = vmatpush1.msra.mxu0 0.0
    %9626 = vmatprep.subr.mxu0 0.0
    %9627 = vmatpush1.msra.mxu0 0.0
    %9628 = vmatprep.subr.mxu0 0.0
    %9629 = vmatpush1.msra.mxu0 0.0
    %9630 = vmatprep.subr.mxu0 0.0
    %9631 = vmatpush1.msra.mxu0 0.0
    %9632 = vmatprep.subr.mxu0 0.0
    %9633 = vmatpush1.msra.mxu0 0.0
    %9634 = vmatprep.subr.mxu0 0.0
    %9635 = vmatpush1.msra.mxu0 0.0
    %9636 = vmatprep.subr.mxu0 0.0
    %9637 = vmatpush1.msra.mxu0 0.0
    %9638 = vmatprep.subr.mxu0 0.0
    %9639 = vmatpush1.msra.mxu0 0.0
    %9640 = vmatprep.subr.mxu0 0.0
    %9641 = vmatpush1.msra.mxu0 0.0
    %9642 = vmatprep.subr.mxu0 0.0
    %9643 = vmatpush1.msra.mxu0 0.0
    %9644 = vmatprep.subr.mxu0 0.0
    %9645 = vmatpush1.msra.mxu0 0.0
    %9646 = vmatprep.subr.mxu0 0.0
    %9647 = vmatpush1.msra.mxu0 0.0
    %9648 = vmatprep.subr.mxu0 0.0
    %9649 = vmatpush1.msra.mxu0 0.0
    %9650 = vmatprep.subr.mxu0 0.0
    %9651 = vmatpush1.msra.mxu0 0.0
    %9652 = vmatprep.subr.mxu0 0.0
    %9653 = vmatpush1.msra.mxu0 0.0
    %9654 = vmatprep.subr.mxu0 0.0
    %9655 = vmatpush1.msra.mxu0 0.0
    %9656 = vmatprep.subr.mxu0 0.0
    %9657 = vmatpush1.msra.mxu0 0.0
    %9658 = vmatprep.subr.mxu0 0.0
    %9659 = vmatpush1.msra.mxu0 0.0
    %9660 = vmatprep.subr.mxu0 0.0
    %9661 = vmatpush1.msra.mxu0 0.0
    %9662 = vmatprep.subr.mxu0 0.0
    %9663 = vmatpush1.msra.mxu0 0.0
    %9664 = vmatprep.subr.mxu0 0.0
    %9665 = vmatpush1.msra.mxu0 0.0
    %9666 = vmatprep.mubr.f32.mxu0 0.0
    %9667 = vmatmul.mubr.f32.gmra.mrb[0].mxu0 %v9600
    %v9668 = vpop.f32.mrb[0].mxu0
    %v9669 = vadd.f32 %v9597, %v9668
    %v9670 = vpop.f32.mrb[0].mxu0
    %9671 = vdwg.mxu0
    %v9672 = vmax.f32 %v9669, 0.0
    %9673 = vrot.lane.b32.xlu0 %v9558, 16
    %v9674 = vpop.permute.xlu0 %9673
    %9676 = vrot.lane.b32.xlu0 %v9558, 32
    %v9677 = vpop.permute.xlu0 %9676
    %v9679 = vsel %vm705, %v9558, %v9674
    %v9680 = vsel %vm5247, %v9679, %v9674
    %v9681 = vsel %vm5250, %v9680, %v9677
    %v9682 = vadd.f32 %v9681, %v9672
    %v9683 = vld [vmem:[%s18] sm:$0xff]
    %v9684 = vld [vmem:[%s18 + $0x8] sm:$0xff]
    %v9685 = vld [vmem:[%s18 + $0x10] sm:$0xff]
    %v9686 = vld [vmem:[%s18 + $0x18] sm:$0xff]
    %v9687 = vld [vmem:[%s18 + $0x20] sm:$0xff]
    %v9688 = vld [vmem:[%s18 + $0x28] sm:$0xff]
    %v9689 = vld [vmem:[%s18 + $0x30] sm:$0xff]
    %v9690 = vld [vmem:[%s18 + $0x38] sm:$0xff]
    %v9691 = vld [vmem:[#allocation20] sm:$0x1]
    %v9693 = vlaneseq
    %v9694 = vshrl.u32 %v9693, 7
    %v9695 = vsub.s32 0, %v9694
    %v9696 = vrot.slane %v9691, %v9695
    %v9699 = vsel %vm5253, %v9682, 0
    %9701 = vmatprep.subr.mxu0 0.0
    %9702 = vmatpush1.msra.mxu0 %v9683
    %9703 = vmatprep.subr.mxu0 0.0
    %9704 = vmatpush1.msra.mxu0 %v9684
    %9705 = vmatprep.subr.mxu0 0.0
    %9706 = vmatpush1.msra.mxu0 %v9685
    %9707 = vmatprep.subr.mxu0 0.0
    %9708 = vmatpush1.msra.mxu0 %v9686
    %9709 = vmatprep.subr.mxu0 0.0
    %9710 = vmatpush1.msra.mxu0 %v9687
    %9711 = vmatprep.subr.mxu0 0.0
    %9712 = vmatpush1.msra.mxu0 %v9688
    %9713 = vmatprep.subr.mxu0 0.0
    %9714 = vmatpush1.msra.mxu0 %v9689
    %9715 = vmatprep.subr.mxu0 0.0
    %9716 = vmatpush1.msra.mxu0 %v9690
    %9717 = vmatprep.subr.mxu0 0.0
    %9718 = vmatpush1.msra.mxu0 0.0
    %9719 = vmatprep.subr.mxu0 0.0
    %9720 = vmatpush1.msra.mxu0 0.0
    %9721 = vmatprep.subr.mxu0 0.0
    %9722 = vmatpush1.msra.mxu0 0.0
    %9723 = vmatprep.subr.mxu0 0.0
    %9724 = vmatpush1.msra.mxu0 0.0
    %9725 = vmatprep.subr.mxu0 0.0
    %9726 = vmatpush1.msra.mxu0 0.0
    %9727 = vmatprep.subr.mxu0 0.0
    %9728 = vmatpush1.msra.mxu0 0.0
    %9729 = vmatprep.subr.mxu0 0.0
    %9730 = vmatpush1.msra.mxu0 0.0
    %9731 = vmatprep.subr.mxu0 0.0
    %9732 = vmatpush1.msra.mxu0 0.0
    %9733 = vmatprep.subr.mxu0 0.0
    %9734 = vmatpush1.msra.mxu0 0.0
    %9735 = vmatprep.subr.mxu0 0.0
    %9736 = vmatpush1.msra.mxu0 0.0
    %9737 = vmatprep.subr.mxu0 0.0
    %9738 = vmatpush1.msra.mxu0 0.0
    %9739 = vmatprep.subr.mxu0 0.0
    %9740 = vmatpush1.msra.mxu0 0.0
    %9741 = vmatprep.subr.mxu0 0.0
    %9742 = vmatpush1.msra.mxu0 0.0
    %9743 = vmatprep.subr.mxu0 0.0
    %9744 = vmatpush1.msra.mxu0 0.0
    %9745 = vmatprep.subr.mxu0 0.0
    %9746 = vmatpush1.msra.mxu0 0.0
    %9747 = vmatprep.subr.mxu0 0.0
    %9748 = vmatpush1.msra.mxu0 0.0
    %9749 = vmatprep.subr.mxu0 0.0
    %9750 = vmatpush1.msra.mxu0 0.0
    %9751 = vmatprep.subr.mxu0 0.0
    %9752 = vmatpush1.msra.mxu0 0.0
    %9753 = vmatprep.subr.mxu0 0.0
    %9754 = vmatpush1.msra.mxu0 0.0
    %9755 = vmatprep.subr.mxu0 0.0
    %9756 = vmatpush1.msra.mxu0 0.0
    %9757 = vmatprep.subr.mxu0 0.0
    %9758 = vmatpush1.msra.mxu0 0.0
    %9759 = vmatprep.subr.mxu0 0.0
    %9760 = vmatpush1.msra.mxu0 0.0
    %9761 = vmatprep.subr.mxu0 0.0
    %9762 = vmatpush1.msra.mxu0 0.0
    %9763 = vmatprep.subr.mxu0 0.0
    %9764 = vmatpush1.msra.mxu0 0.0
    %9765 = vmatprep.mubr.f32.mxu0 0.0
    %9766 = vmatmul.mubr.f32.gmra.mrb[0].mxu0 %v9699
    %v9767 = vpop.f32.mrb[0].mxu0
    %v9768 = vadd.f32 %v9696, %v9767
    %v9769 = vpop.f32.mrb[0].mxu0
    %9770 = vdwg.mxu0
    %v9771 = vmax.f32 %v9768, 0.0
    %v9774 = vlaneseq
    %v9775 = vshrl.u32 %v9774, 7
    %v9776 = vsub.s32 %v407, %v9775
    %v9777 = vrot.slane %v3822, %v9776
    %v9778 = vlaneseq
    %v9779 = vshrl.u32 %v9778, 7
    %v9780 = vsub.s32 %v412, %v9779
    %v9781 = vrot.slane %v3823, %v9780
    %v9782 = vsel %vm417, %v9781, %v9777
    %v9786 = vlaneseq
    %v9787 = vshrl.u32 %v9786, 7
    %v9788 = vsub.s32 %v4302, %v9787
    %v9789 = vrot.slane %v3824, %v9788
    %v9790 = vlaneseq
    %v9791 = vshrl.u32 %v9790, 7
    %v9792 = vsub.s32 %v4307, %v9791
    %v9793 = vrot.slane %v3825, %v9792
    %v9794 = vsel %vm4312, %v9793, %v9789
    %v9798 = vlaneseq
    %v9799 = vshrl.u32 %v9798, 7
    %v9800 = vsub.s32 %v4497, %v9799
    %v9801 = vrot.slane %v3826, %v9800
    %v9802 = vlaneseq
    %v9803 = vshrl.u32 %v9802, 7
    %v9804 = vsub.s32 %v4502, %v9803
    %v9805 = vrot.slane %v3827, %v9804
    %v9806 = vsel %vm4507, %v9805, %v9801
    %v9810 = vlaneseq
    %v9811 = vshrl.u32 %v9810, 7
    %v9812 = vsub.s32 %v4692, %v9811
    %v9813 = vrot.slane %v3828, %v9812
    %v9814 = vlaneseq
    %v9815 = vshrl.u32 %v9814, 7
    %v9816 = vsub.s32 %v4697, %v9815
    %v9817 = vrot.slane %v3829, %v9816
    %v9818 = vsel %vm4702, %v9817, %v9813
    %v9822 = vlaneseq
    %v9823 = vshrl.u32 %v9822, 7
    %v9824 = vsub.s32 %v4887, %v9823
    %v9825 = vrot.slane %v3830, %v9824
    %v9826 = vlaneseq
    %v9827 = vshrl.u32 %v9826, 7
    %v9828 = vsub.s32 %v4892, %v9827
    %v9829 = vrot.slane %v3831, %v9828
    %v9830 = vsel %vm4897, %v9829, %v9825
    %v9834 = vlaneseq
    %v9835 = vshrl.u32 %v9834, 7
    %v9836 = vsub.s32 %v5082, %v9835
    %v9837 = vrot.slane %v3832, %v9836
    %v9838 = vlaneseq
    %v9839 = vshrl.u32 %v9838, 7
    %v9840 = vsub.s32 %v5087, %v9839
    %v9841 = vrot.slane %v3833, %v9840
    %v9842 = vsel %vm5092, %v9841, %v9837
    %v9846 = vadd.s32 %v407, 4294967200
    %v9847 = vlaneseq
    %v9848 = vshrl.u32 %v9847, 7
    %v9849 = vsub.s32 %v9846, %v9848
    %v9850 = vrot.slane %v3834, %v9849
    %v9851 = vadd.s32 %v407, 4294967192
    %v9852 = vlaneseq
    %v9853 = vshrl.u32 %v9852, 7
    %v9854 = vsub.s32 %v9851, %v9853
    %v9855 = vrot.slane %v3835, %v9854
    %vm9856 = vcmask 917312
    %v9857 = vsel %vm9856, %v9855, %v9850
    %v9861 = vadd.s32 %v407, 4294967184
    %v9862 = vlaneseq
    %v9863 = vshrl.u32 %v9862, 7
    %v9864 = vsub.s32 %v9861, %v9863
    %v9865 = vrot.slane %v3836, %v9864
    %v9866 = vadd.s32 %v407, 4294967176
    %v9867 = vlaneseq
    %v9868 = vshrl.u32 %v9867, 7
    %v9869 = vsub.s32 %v9866, %v9868
    %v9870 = vrot.slane %v3837, %v9869
    %vm9871 = vcmask 1048512
    %v9872 = vsel %vm9871, %v9870, %v9865
    %v9874 = vsel %vm705, %v9782, %v9794
    %v9875 = vsel %vm5247, %v9874, %v9806
    %v9876 = vsel %vm5250, %v9875, %v9818
    %v9877 = vsel %vm5253, %v9876, %v9830
    %v9878 = vsel %vm5256, %v9877, %v9842
    %v9879 = vsel %vm5312, %v9878, %v9857
    %vm9880 = vcmask 916480
    %v9881 = vsel %vm9880, %v9879, %v9872
    %v9884 = vlaneseq
    %v9885 = vshrl.u32 %v9884, 7
    %v9886 = vsub.s32 %v407, %v9885
    %v9887 = vrot.slane %v3838, %v9886
    %v9888 = vlaneseq
    %v9889 = vshrl.u32 %v9888, 7
    %v9890 = vsub.s32 %v412, %v9889
    %v9891 = vrot.slane %v3839, %v9890
    %v9892 = vsel %vm417, %v9891, %v9887
    %v9896 = vlaneseq
    %v9897 = vshrl.u32 %v9896, 7
    %v9898 = vsub.s32 %v4302, %v9897
    %v9899 = vrot.slane %v3840, %v9898
    %v9900 = vlaneseq
    %v9901 = vshrl.u32 %v9900, 7
    %v9902 = vsub.s32 %v4307, %v9901
    %v9903 = vrot.slane %v3841, %v9902
    %v9904 = vsel %vm4312, %v9903, %v9899
    %v9908 = vlaneseq
    %v9909 = vshrl.u32 %v9908, 7
    %v9910 = vsub.s32 %v4497, %v9909
    %v9911 = vrot.slane %v3842, %v9910
    %v9912 = vlaneseq
    %v9913 = vshrl.u32 %v9912, 7
    %v9914 = vsub.s32 %v4502, %v9913
    %v9915 = vrot.slane %v3843, %v9914
    %v9916 = vsel %vm4507, %v9915, %v9911
    %v9920 = vlaneseq
    %v9921 = vshrl.u32 %v9920, 7
    %v9922 = vsub.s32 %v4692, %v9921
    %v9923 = vrot.slane %v3844, %v9922
    %v9924 = vlaneseq
    %v9925 = vshrl.u32 %v9924, 7
    %v9926 = vsub.s32 %v4697, %v9925
    %v9927 = vrot.slane %v3845, %v9926
    %v9928 = vsel %vm4702, %v9927, %v9923
    %v9932 = vlaneseq
    %v9933 = vshrl.u32 %v9932, 7
    %v9934 = vsub.s32 %v4887, %v9933
    %v9935 = vrot.slane %v3846, %v9934
    %v9936 = vlaneseq
    %v9937 = vshrl.u32 %v9936, 7
    %v9938 = vsub.s32 %v4892, %v9937
    %v9939 = vrot.slane %v3847, %v9938
    %v9940 = vsel %vm4897, %v9939, %v9935
    %v9944 = vlaneseq
    %v9945 = vshrl.u32 %v9944, 7
    %v9946 = vsub.s32 %v5082, %v9945
    %v9947 = vrot.slane %v3848, %v9946
    %v9948 = vlaneseq
    %v9949 = vshrl.u32 %v9948, 7
    %v9950 = vsub.s32 %v5087, %v9949
    %v9951 = vrot.slane %v3849, %v9950
    %v9952 = vsel %vm5092, %v9951, %v9947
    %v9956 = vlaneseq
    %v9957 = vshrl.u32 %v9956, 7
    %v9958 = vsub.s32 %v9846, %v9957
    %v9959 = vrot.slane %v3850, %v9958
    %v9960 = vlaneseq
    %v9961 = vshrl.u32 %v9960, 7
    %v9962 = vsub.s32 %v9851, %v9961
    %v9963 = vrot.slane %v3851, %v9962
    %v9964 = vsel %vm9856, %v9963, %v9959
    %v9968 = vlaneseq
    %v9969 = vshrl.u32 %v9968, 7
    %v9970 = vsub.s32 %v9861, %v9969
    %v9971 = vrot.slane %v3852, %v9970
    %v9972 = vlaneseq
    %v9973 = vshrl.u32 %v9972, 7
    %v9974 = vsub.s32 %v9866, %v9973
    %v9975 = vrot.slane %v3853, %v9974
    %v9976 = vsel %vm9871, %v9975, %v9971
    %v9978 = vsel %vm705, %v9892, %v9904
    %v9979 = vsel %vm5247, %v9978, %v9916
    %v9980 = vsel %vm5250, %v9979, %v9928
    %v9981 = vsel %vm5253, %v9980, %v9940
    %v9982 = vsel %vm5256, %v9981, %v9952
    %v9983 = vsel %vm5312, %v9982, %v9964
    %v9984 = vsel %vm9880, %v9983, %v9976
    %v9986 = vrot.slane %v9984, 7
    %v9988 = vsel %vm5481, %v9881, %v9986
    %v9991 = vlaneseq
    %v9992 = vshrl.u32 %v9991, 7
    %v9993 = vsub.s32 %v407, %v9992
    %v9994 = vrot.slane %v3854, %v9993
    %v9995 = vlaneseq
    %v9996 = vshrl.u32 %v9995, 7
    %v9997 = vsub.s32 %v412, %v9996
    %v9998 = vrot.slane %v3855, %v9997
    %v9999 = vsel %vm417, %v9998, %v9994
    %v10003 = vlaneseq
    %v10004 = vshrl.u32 %v10003, 7
    %v10005 = vsub.s32 %v4302, %v10004
    %v10006 = vrot.slane %v3856, %v10005
    %v10007 = vlaneseq
    %v10008 = vshrl.u32 %v10007, 7
    %v10009 = vsub.s32 %v4307, %v10008
    %v10010 = vrot.slane %v3857, %v10009
    %v10011 = vsel %vm4312, %v10010, %v10006
    %v10015 = vlaneseq
    %v10016 = vshrl.u32 %v10015, 7
    %v10017 = vsub.s32 %v4497, %v10016
    %v10018 = vrot.slane %v3858, %v10017
    %v10019 = vlaneseq
    %v10020 = vshrl.u32 %v10019, 7
    %v10021 = vsub.s32 %v4502, %v10020
    %v10022 = vrot.slane %v3859, %v10021
    %v10023 = vsel %vm4507, %v10022, %v10018
    %v10027 = vlaneseq
    %v10028 = vshrl.u32 %v10027, 7
    %v10029 = vsub.s32 %v4692, %v10028
    %v10030 = vrot.slane %v3860, %v10029
    %v10031 = vlaneseq
    %v10032 = vshrl.u32 %v10031, 7
    %v10033 = vsub.s32 %v4697, %v10032
    %v10034 = vrot.slane %v3861, %v10033
    %v10035 = vsel %vm4702, %v10034, %v10030
    %v10039 = vlaneseq
    %v10040 = vshrl.u32 %v10039, 7
    %v10041 = vsub.s32 %v4887, %v10040
    %v10042 = vrot.slane %v3862, %v10041
    %v10043 = vlaneseq
    %v10044 = vshrl.u32 %v10043, 7
    %v10045 = vsub.s32 %v4892, %v10044
    %v10046 = vrot.slane %v3863, %v10045
    %v10047 = vsel %vm4897, %v10046, %v10042
    %v10051 = vlaneseq
    %v10052 = vshrl.u32 %v10051, 7
    %v10053 = vsub.s32 %v5082, %v10052
    %v10054 = vrot.slane %v3864, %v10053
    %v10055 = vlaneseq
    %v10056 = vshrl.u32 %v10055, 7
    %v10057 = vsub.s32 %v5087, %v10056
    %v10058 = vrot.slane %v3865, %v10057
    %v10059 = vsel %vm5092, %v10058, %v10054
    %v10063 = vlaneseq
    %v10064 = vshrl.u32 %v10063, 7
    %v10065 = vsub.s32 %v9846, %v10064
    %v10066 = vrot.slane %v3866, %v10065
    %v10067 = vlaneseq
    %v10068 = vshrl.u32 %v10067, 7
    %v10069 = vsub.s32 %v9851, %v10068
    %v10070 = vrot.slane %v3867, %v10069
    %v10071 = vsel %vm9856, %v10070, %v10066
    %v10075 = vlaneseq
    %v10076 = vshrl.u32 %v10075, 7
    %v10077 = vsub.s32 %v9861, %v10076
    %v10078 = vrot.slane %v3868, %v10077
    %v10079 = vlaneseq
    %v10080 = vshrl.u32 %v10079, 7
    %v10081 = vsub.s32 %v9866, %v10080
    %v10082 = vrot.slane %v3869, %v10081
    %v10083 = vsel %vm9871, %v10082, %v10078
    %v10085 = vsel %vm705, %v9999, %v10011
    %v10086 = vsel %vm5247, %v10085, %v10023
    %v10087 = vsel %vm5250, %v10086, %v10035
    %v10088 = vsel %vm5253, %v10087, %v10047
    %v10089 = vsel %vm5256, %v10088, %v10059
    %v10090 = vsel %vm5312, %v10089, %v10071
    %v10091 = vsel %vm9880, %v10090, %v10083
    %v10094 = vlaneseq
    %v10095 = vshrl.u32 %v10094, 7
    %v10096 = vsub.s32 %v407, %v10095
    %v10097 = vrot.slane %v3870, %v10096
    %v10098 = vlaneseq
    %v10099 = vshrl.u32 %v10098, 7
    %v10100 = vsub.s32 %v412, %v10099
    %v10101 = vrot.slane %v3871, %v10100
    %v10102 = vsel %vm417, %v10101, %v10097
    %v10106 = vlaneseq
    %v10107 = vshrl.u32 %v10106, 7
    %v10108 = vsub.s32 %v4302, %v10107
    %v10109 = vrot.slane %v3872, %v10108
    %v10110 = vlaneseq
    %v10111 = vshrl.u32 %v10110, 7
    %v10112 = vsub.s32 %v4307, %v10111
    %v10113 = vrot.slane %v3873, %v10112
    %v10114 = vsel %vm4312, %v10113, %v10109
    %v10118 = vlaneseq
    %v10119 = vshrl.u32 %v10118, 7
    %v10120 = vsub.s32 %v4497, %v10119
    %v10121 = vrot.slane %v3874, %v10120
    %v10122 = vlaneseq
    %v10123 = vshrl.u32 %v10122, 7
    %v10124 = vsub.s32 %v4502, %v10123
    %v10125 = vrot.slane %v3875, %v10124
    %v10126 = vsel %vm4507, %v10125, %v10121
    %v10130 = vlaneseq
    %v10131 = vshrl.u32 %v10130, 7
    %v10132 = vsub.s32 %v4692, %v10131
    %v10133 = vrot.slane %v3876, %v10132
    %v10134 = vlaneseq
    %v10135 = vshrl.u32 %v10134, 7
    %v10136 = vsub.s32 %v4697, %v10135
    %v10137 = vrot.slane %v3877, %v10136
    %v10138 = vsel %vm4702, %v10137, %v10133
    %v10142 = vlaneseq
    %v10143 = vshrl.u32 %v10142, 7
    %v10144 = vsub.s32 %v4887, %v10143
    %v10145 = vrot.slane %v3878, %v10144
    %v10146 = vlaneseq
    %v10147 = vshrl.u32 %v10146, 7
    %v10148 = vsub.s32 %v4892, %v10147
    %v10149 = vrot.slane %v3879, %v10148
    %v10150 = vsel %vm4897, %v10149, %v10145
    %v10154 = vlaneseq
    %v10155 = vshrl.u32 %v10154, 7
    %v10156 = vsub.s32 %v5082, %v10155
    %v10157 = vrot.slane %v3880, %v10156
    %v10158 = vlaneseq
    %v10159 = vshrl.u32 %v10158, 7
    %v10160 = vsub.s32 %v5087, %v10159
    %v10161 = vrot.slane %v3881, %v10160
    %v10162 = vsel %vm5092, %v10161, %v10157
    %v10166 = vlaneseq
    %v10167 = vshrl.u32 %v10166, 7
    %v10168 = vsub.s32 %v9846, %v10167
    %v10169 = vrot.slane %v3882, %v10168
    %v10170 = vlaneseq
    %v10171 = vshrl.u32 %v10170, 7
    %v10172 = vsub.s32 %v9851, %v10171
    %v10173 = vrot.slane %v3883, %v10172
    %v10174 = vsel %vm9856, %v10173, %v10169
    %v10178 = vlaneseq
    %v10179 = vshrl.u32 %v10178, 7
    %v10180 = vsub.s32 %v9861, %v10179
    %v10181 = vrot.slane %v3884, %v10180
    %v10182 = vlaneseq
    %v10183 = vshrl.u32 %v10182, 7
    %v10184 = vsub.s32 %v9866, %v10183
    %v10185 = vrot.slane %v3885, %v10184
    %v10186 = vsel %vm9871, %v10185, %v10181
    %v10188 = vsel %vm705, %v10102, %v10114
    %v10189 = vsel %vm5247, %v10188, %v10126
    %v10190 = vsel %vm5250, %v10189, %v10138
    %v10191 = vsel %vm5253, %v10190, %v10150
    %v10192 = vsel %vm5256, %v10191, %v10162
    %v10193 = vsel %vm5312, %v10192, %v10174
    %v10194 = vsel %vm9880, %v10193, %v10186
    %v10196 = vrot.slane %v10194, 7
    %v10198 = vsel %vm5481, %v10091, %v10196
    %v10199 = vsel %vm5253, %v9771, 0.0
    %v10203 = vcombine.low %v9988, %v10198
    %v10205 = vunpack.c.l.s4 1983009808
    %v10206 = vunpack.c.0.s8 %v10205
    %v10207 = vlaneseq
    %v10208 = vshrl.u32 %v10207, 7
    %v10209 = vsub.s32 %v10206, %v10208
    %v10210 = vrot.slane %v10203, %v10209
    %v10212 = vunpack.c.l.s4 1983009808
    %v10213 = vunpack.c.0.s8 %v10212
    %v10214 = vlaneseq
    %v10215 = vshrl.u32 %v10214, 7
    %v10216 = vsub.s32 %v10213, %v10215
    %v10217 = vrot.slane %v10199, %v10216
    %v10218 = vcombine.low %v10210, %v10217
    %10220 = vst [vmem:[%s20] sm:$0x3f] %v10218
    // Predicated region
    $region130: #{netimp_forward.1} parent=1 // pred_check
      _
    $region131: #{netimp_forward.1} parent=1 // pred_check_branch
      %10222 = sbr.rel (0) target = $region133
    $region132: #{netimp_forward.1} parent=1 // pred_region
      _
    $region133: #{netimp_forward.1} parent=1 // pred_fallthru
      _
    // Predicated region
    $region134: #{netimp_forward.1} parent=1 // pred_check
      _
    $region135: #{netimp_forward.1} parent=1 // pred_check_branch
      %10224 = sbr.rel (0) target = $region137
    $region136: #{netimp_forward.1} parent=1 // pred_region
      _
    $region137: #{netimp_forward.1} parent=1 // pred_fallthru
      _
    %10225 = vsyncpa [#allocation3], 1
    %10226 = vsyncpa [#allocation6], 1
    %10227 = vsyncpa [#allocation15], 1
    %10228 = vsyncpa [#allocation18], 1
    %10229 = vsyncpa [#allocation21], 1
    %10230 = vsyncpa [#allocation4], 1
    %10231 = vsyncpa [#allocation9], 1
    %10232 = vsyncpa [#allocation12], 1

</llo_original>
